<compile_context>
chip_gen: v7x
topology: tpu7x:2x2x1
jax: 0.10.0
libtpu: 0.0.40
codegen_flags: <defaults>
</compile_context>

<pallas_src>
import functools
import math

import jax
import jax.numpy as jnp
from jax.experimental import pallas as pl
from jax.experimental.pallas import tpu as pltpu


def _decoder_seq_kernel(
    emb_ref,    # (T, BT, H)    f32  word_linear(embedding(word_t)) per step
    h0_ref,     # (BT, H)       f32  initial hidden for this batch tile
    g0_ref,     # (BT, H)       f32  h0 @ Wa_h (initial attention projection)
    ge_ref,     # (BT, L, H)    f32  enc @ Wa_e + b_attn (timestep-invariant)
    enc_ref,    # (BT, L, C)    f32  encoder outputs, batch-major
    v_ref,      # (1, 1, H)     f32  attention score vector
    w_big_ref,  # (2H + C, 4H)  f32  packed GRU gate weights
    b_big_ref,  # (1, 4H)       f32  packed GRU gate biases
    w_ob_ref,   # (H, O + H)    f32  [W_out^T | Wa_h]
    b_ob_ref,   # (1, O + H)    f32  [b_out | 0]
    slab_ref,   # (T, BT, SLAB) f32  output: [out | h_new | attn_w | pad]
    *,
    training,
):
    f32 = jnp.float32
    T, BT, H = emb_ref.shape
    L = enc_ref.shape[1]
    O = w_ob_ref.shape[1] - H
    SLAB = slab_ref.shape[2]
    pad = SLAB - (O + H + L)

    # VMEM-resident invariants, loaded once for the whole sequence.
    enc = enc_ref[...]
    ge = ge_ref[...]
    v = v_ref[...]
    w_big = w_big_ref[...]
    b_big = b_big_ref[...]
    w_ob = w_ob_ref[...]
    b_ob = b_ob_ref[...]
    zpad = jnp.zeros((BT, pad), f32)          # hoisted out of the loop

    h = h0_ref[...]                           # (BT, H) hidden carry
    g_attn = g0_ref[...]                      # (BT, H) = h @ Wa_h carry

    # T is small & static for this module -> trace-time unrolled loop.  For very
    # long sequences, chunk T through an extra ("arbitrary") grid axis instead.
    for t in range(T):
        word_emb = emb_ref[t]                                      # (BT, H)

        # ---- Bahdanau attention --------------------------------------------
        energy = jnp.tanh(ge + g_attn[:, None, :])                 # (BT, L, H)
        scores = jnp.sum(energy * v, axis=-1)                      # (BT, L)
        m = jnp.max(scores, axis=1, keepdims=True)
        e = jnp.exp(scores - m)
        # exact divide: attention weights feed the GRU recurrence, so the
        # approximate reciprocal would compound over T steps.
        attn_w = e / jnp.sum(e, axis=1, keepdims=True)             # (BT, L)
        context = jnp.sum(attn_w[:, :, None] * enc, axis=1)        # (BT, C)

        # ---- GRUCell: ONE packed MXU matmul ---------------------------------
        rnn_in = jnp.concatenate([word_emb, context, h], axis=-1)  # (BT, 2H+C)
        gates = jnp.dot(rnn_in, w_big, preferred_element_type=f32) + b_big
        r = jax.nn.sigmoid(gates[:, 0:H])
        z = jax.nn.sigmoid(gates[:, H:2 * H])
        n = jnp.tanh(gates[:, 2 * H:3 * H] + r * gates[:, 3 * H:4 * H])
        h_new = (1.0 - z) * n + z * h                              # (BT, H)

        # ---- output projection + NEXT step's attention projection ----------
        ob = jnp.dot(h_new, w_ob, preferred_element_type=f32) + b_ob  # (BT, O+H)
        logits = ob[:, :O]
        g_attn = ob[:, O:]

        lm = jnp.max(logits, axis=1, keepdims=True)
        le = jnp.exp(logits - lm)
        ls = jnp.sum(le, axis=1, keepdims=True)
        if training:
            out = (logits - lm) - jnp.log(ls)                      # log_softmax
        else:
            out = le * pl.reciprocal(ls, approx=True)              # softmax

        # ---- single unmasked 128-lane-aligned store per step ----------------
        slab_ref[t] = jnp.concatenate([out, h_new, attn_w, zpad], axis=-1)

        h = h_new


def _prep_params(params):
    """Fold / split / pack all weights outside the kernel (pure XLA)."""
    f32 = jnp.float32
    w_word = params["w_word"].astype(f32)              # (H, E)
    H = w_word.shape[0]
    emb = params["emb"].astype(f32)                    # (V, E) identity here
    wa_t = params["w_attn"].astype(f32).T              # (H + C, H)
    wa_h = wa_t[:H]                                    # (H, H)
    wa_e = wa_t[H:]                                    # (C, H)
    C = wa_e.shape[0]
    w_ih_t = params["w_ih"].astype(f32).T              # (H + C, 3H)
    w_hh_t = params["w_hh"].astype(f32).T              # (H, 3H)
    b_ih = params["b_ih"].astype(f32)
    b_hh = params["b_hh"].astype(f32)

    # Packed GRU gate weight: rows = [x = (word_emb | context) | h_prev],
    # columns = [a_r | a_z | gi_n | gh_n].  r/z gates get the x- and h-parts
    # summed directly inside the matmul; only the n gate keeps gi/gh separate
    # (needed for r * gh_n).
    K = 2 * H + C
    w_big = jnp.zeros((K, 4 * H), f32)
    w_big = w_big.at[:H + C, 0:H].set(w_ih_t[:, 0:H])
    w_big = w_big.at[:H + C, H:2 * H].set(w_ih_t[:, H:2 * H])
    w_big = w_big.at[:H + C, 2 * H:3 * H].set(w_ih_t[:, 2 * H:3 * H])
    w_big = w_big.at[H + C:, 0:H].set(w_hh_t[:, 0:H])
    w_big = w_big.at[H + C:, H:2 * H].set(w_hh_t[:, H:2 * H])
    w_big = w_big.at[H + C:, 3 * H:4 * H].set(w_hh_t[:, 2 * H:3 * H])
    b_big = jnp.concatenate([
        b_ih[0:H] + b_hh[0:H],
        b_ih[H:2 * H] + b_hh[H:2 * H],
        b_ih[2 * H:3 * H],
        b_hh[2 * H:3 * H],
    ]).reshape(1, 4 * H)

    w_out_t = params["w_out"].astype(f32).T            # (H, O)
    O = w_out_t.shape[1]
    w_ob = jnp.concatenate([w_out_t, wa_h], axis=1)    # (H, O + H)
    b_ob = jnp.concatenate([params["b_out"].astype(f32),
                            jnp.zeros((H,), f32)]).reshape(1, O + H)

    return dict(
        word_table=emb @ w_word.T,                     # (V, H) identity emb folded in
        b_word=params["b_word"].astype(f32),
        wa_h=wa_h, wa_e=wa_e,
        b_attn=params["b_attn"].astype(f32),
        v=params["v"].astype(f32).reshape(1, 1, H),
        w_big=w_big, b_big=b_big, w_ob=w_ob, b_ob=b_ob,
        hidden=H, ctx=C, out=O,
    )


def bahdanau_attn_decoder_sequence(word_inputs, init_hidden, encoder_outputs,
                                   params, *, training=False, batch_tile=8):
    """Runs T teacher-forced decoder steps in one fused pallas_call.

    word_inputs:     (T, B)    int
    init_hidden:     (B, H)    f32
    encoder_outputs: (L, B, C) f32  with C = H + onehot_total
    returns (outputs (T, B, O), hiddens (T, B, H), attn_weights (T, B, 1, L))
    """
    T, B = word_inputs.shape
    L = encoder_outputs.shape[0]
    H = init_hidden.shape[1]
    p = _prep_params(params)
    O = p["out"]
    C = p["ctx"]
    f32 = jnp.float32

    BT = batch_tile
    Bp = ((B + BT - 1) // BT) * BT
    nbt = Bp // BT
    SLAB = ((O + H + L + 127) // 128) * 128     # lane-aligned output slab width

    enc = jnp.transpose(encoder_outputs, (1, 0, 2)).astype(f32)     # (B, L, C)
    enc = jnp.pad(enc, ((0, Bp - B), (0, 0), (0, 0)))
    h0 = jnp.pad(init_hidden.astype(f32), ((0, Bp - B), (0, 0)))

    # Hoisted, timestep-invariant XLA work:
    #   embedding gather + word_linear, enc @ Wa_e + b_attn, h0 @ Wa_h.
    emb_all = p["word_table"][word_inputs.astype(jnp.int32)] + p["b_word"]  # (T, B, H)
    emb_all = jnp.pad(emb_all, ((0, 0), (0, Bp - B), (0, 0)))               # (T, Bp, H)
    ge = jnp.einsum("blc,ch->blh", enc, p["wa_e"]) + p["b_attn"]            # (Bp, L, H)
    g0 = h0 @ p["wa_h"]                                                     # (Bp, H)

    in_specs = [
        pl.BlockSpec((T, BT, H), lambda b: (0, b, 0)),        # emb_all (per batch tile)
        pl.BlockSpec((BT, H), lambda b: (b, 0)),              # h0
        pl.BlockSpec((BT, H), lambda b: (b, 0)),              # g0
        pl.BlockSpec((BT, L, H), lambda b: (b, 0, 0)),        # ge
        pl.BlockSpec((BT, L, C), lambda b: (b, 0, 0)),        # enc
        pl.BlockSpec(p["v"].shape, lambda b: (0, 0, 0)),      # v        (resident)
        pl.BlockSpec(p["w_big"].shape, lambda b: (0, 0)),     # w_big    (resident)
        pl.BlockSpec(p["b_big"].shape, lambda b: (0, 0)),     # b_big    (resident)
        pl.BlockSpec(p["w_ob"].shape, lambda b: (0, 0)),      # w_ob     (resident)
        pl.BlockSpec(p["b_ob"].shape, lambda b: (0, 0)),      # b_ob     (resident)
    ]
    out_specs = pl.BlockSpec((T, BT, SLAB), lambda b: (0, b, 0))

    kernel = functools.partial(_decoder_seq_kernel, training=training)
    slab = pl.pallas_call(
        kernel,
        grid=(nbt,),
        in_specs=in_specs,
        out_specs=out_specs,
        out_shape=jax.ShapeDtypeStruct((T, Bp, SLAB), f32),
        compiler_params=pltpu.CompilerParams(
            # Batch tiles are fully independent -> parallel axis (uses both
            # TensorCores on v7x once the batch spans >= 2 tiles).
            dimension_semantics=("parallel",),
            vmem_limit_bytes=32 * 1024 * 1024),
    )(emb_all, h0, g0, ge, enc, p["v"], p["w_big"], p["b_big"], p["w_ob"], p["b_ob"])

    out = slab[:, :B, 0:O]
    hid = slab[:, :B, O:O + H]
    attn = slab[:, :B, O + H:O + H + L].reshape(T, B, 1, L)
    return out, hid, attn


def bahdanau_attn_decoder_step(word_input, last_hidden, encoder_outputs,
                               params, *, training=False):
    """Single-step forward, matching BahdanauAttnDecoderRNN.forward exactly."""
    out, hid, attn = bahdanau_attn_decoder_sequence(
        word_input.reshape(1, -1), last_hidden, encoder_outputs, params,
        training=training)
    return out[0], hid[0], attn[0]


# ----------------------------- pure-JAX reference -----------------------------
def _reference_step(word_input, last_hidden, encoder_outputs, params, *, training=False):
    B = word_input.shape[0]
    H = last_hidden.shape[1]
    onehot = jax.nn.one_hot(word_input, params["emb"].shape[0], dtype=jnp.float32)
    word_emb = onehot @ params["emb"] @ params["w_word"].T + params["b_word"]  # (B,H)

    enc = jnp.transpose(encoder_outputs, (1, 0, 2))                   # (B, L, C)
    Hrep = jnp.broadcast_to(last_hidden[:, None, :], (B, enc.shape[1], H))
    cat = jnp.concatenate([Hrep, enc], axis=2)                        # (B, L, H+C)
    energy = jnp.tanh(jnp.einsum("blk,hk->blh", cat, params["w_attn"])
                      + params["b_attn"])
    scores = jnp.einsum("blh,h->bl", energy, params["v"])
    attn = jax.nn.softmax(scores, axis=1)                             # (B, L)
    context = jnp.einsum("bl,blc->bc", attn, enc)

    rnn_in = jnp.concatenate([word_emb, context], axis=1)
    gi = rnn_in @ params["w_ih"].T + params["b_ih"]
    gh = last_hidden @ params["w_hh"].T + params["b_hh"]
    r = jax.nn.sigmoid(gi[:, :H] + gh[:, :H])
    z = jax.nn.sigmoid(gi[:, H:2 * H] + gh[:, H:2 * H])
    n = jnp.tanh(gi[:, 2 * H:] + r * gh[:, 2 * H:])
    h_new = (1.0 - z) * n + z * last_hidden
    logits = h_new @ params["w_out"].T + params["b_out"]
    out = jax.nn.log_softmax(logits, axis=1) if training else jax.nn.softmax(logits, axis=1)
    return out, h_new, attn[:, None, :]


def _reference_sequence(word_inputs, h0, encoder_outputs, params, *, training=False):
    outs, hids, attns = [], [], []
    h = h0
    for t in range(word_inputs.shape[0]):
        o, h, a = _reference_step(word_inputs[t], h, encoder_outputs, params,
                                  training=training)
        outs.append(o), hids.append(h), attns.append(a)
    return jnp.stack(outs), jnp.stack(hids), jnp.stack(attns)


def make_params(key, hidden_size, embed_size, output_size, onehot_total):
    H, E, O = hidden_size, embed_size, output_size
    C = H + onehot_total
    ks = jax.random.split(key, 10)
    stdv = 1.0 / math.sqrt(H)
    return {
        "emb":    jnp.eye(E, dtype=jnp.float32),                        # identity embedding
        "w_word": jax.random.normal(ks[0], (H, E), jnp.float32) * 0.05,
        "b_word": jax.random.normal(ks[1], (H,), jnp.float32) * 0.05,
        "w_attn": jax.random.normal(ks[2], (H, 2 * H + onehot_total), jnp.float32) * 0.05,
        "b_attn": jax.random.normal(ks[3], (H,), jnp.float32) * 0.05,
        "v":      jax.random.normal(ks[4], (H,), jnp.float32) * stdv,
        "w_ih":   jax.random.normal(ks[5], (3 * H, H + C), jnp.float32) * 0.05,
        "b_ih":   jax.random.normal(ks[6], (3 * H,), jnp.float32) * 0.05,
        "w_hh":   jax.random.normal(ks[7], (3 * H, H), jnp.float32) * 0.05,
        "b_hh":   jnp.zeros((3 * H,), jnp.float32),
        "w_out":  jax.random.normal(ks[8], (O, H), jnp.float32) * 0.05,
        "b_out":  jax.random.normal(ks[9], (O,), jnp.float32) * 0.05,
    }


if __name__ == "__main__":
    # Shapes implied by the forward: B=2, hidden=embed=output=32 (identity
    # embedding needs O==E), onehot_size=(8,32) -> 40, C=72, L=H*W=16, T=8 steps.
    B, H, E, O = 2, 32, 32, 32
    ONEHOT = 8 + 32
    C = H + ONEHOT
    L = 16
    T = 8

    key = jax.random.PRNGKey(0)
    k_in, k_h, k_enc, k_p = jax.random.split(key, 4)

    word_inputs = jax.random.randint(k_in, (T, B), 0, O, dtype=jnp.int32)
    last_hidden = jax.random.normal(k_h, (B, H), jnp.float32)
    encoder_outputs = jax.random.normal(k_enc, (L, B, C), jnp.float32)
    params = make_params(k_p, H, E, O, ONEHOT)

    # fused T-step decode in one pallas_call (eval mode -> softmax output)
    out_seq, hid_seq, attn_seq = bahdanau_attn_decoder_sequence(
        word_inputs, last_hidden, encoder_outputs, params, training=False)
    jax.block_until_ready((out_seq, hid_seq, attn_seq))

    ref_out, ref_hid, ref_attn = _reference_sequence(
        word_inputs, last_hidden, encoder_outputs, params, training=False)

    assert out_seq.shape == (T, B, O)
    assert hid_seq.shape == (T, B, H)
    assert attn_seq.shape == (T, B, 1, L)
    assert jnp.allclose(out_seq, ref_out, atol=2e-3, rtol=2e-3)
    assert jnp.allclose(hid_seq, ref_hid, atol=2e-3, rtol=2e-3)
    assert jnp.allclose(attn_seq, ref_attn, atol=2e-3, rtol=2e-3)

    # single-step path (the module's exact forward signature), eval mode
    o1, h1, a1 = bahdanau_attn_decoder_step(
        word_inputs[0], last_hidden, encoder_outputs, params, training=False)
    r1o, r1h, r1a = _reference_step(
        word_inputs[0], last_hidden, encoder_outputs, params, training=False)
    assert jnp.allclose(o1, r1o, atol=2e-3, rtol=2e-3)
    assert jnp.allclose(h1, r1h, atol=2e-3, rtol=2e-3)
    assert jnp.allclose(a1, r1a, atol=2e-3, rtol=2e-3)

    # training mode (log_softmax output branch)
    o2, h2, a2 = bahdanau_attn_decoder_step(
        word_inputs[0], last_hidden, encoder_outputs, params, training=True)
    r2o, r2h, r2a = _reference_step(
        word_inputs[0], last_hidden, encoder_outputs, params, training=True)
    assert jnp.allclose(o2, r2o, atol=2e-3, rtol=2e-3)
    assert jnp.allclose(h2, r2h, atol=2e-3, rtol=2e-3)
    assert jnp.allclose(a2, r2a, atol=2e-3, rtol=2e-3)

    print("KERNEL_OK")
</pallas_src>

<mosaic_0001>
module attributes {stable_mosaic.version = 11 : i64} {
  func.func @_decoder_seq_kernel(%arg0: i32, %arg1: memref<8x8x32xf32, #tpu.memory_space<vmem>>, %arg2: memref<8x32xf32, #tpu.memory_space<vmem>>, %arg3: memref<8x32xf32, #tpu.memory_space<vmem>>, %arg4: memref<8x16x32xf32, #tpu.memory_space<vmem>>, %arg5: memref<8x16x72xf32, #tpu.memory_space<vmem>>, %arg6: memref<1x1x32xf32, #tpu.memory_space<vmem>>, %arg7: memref<136x128xf32, #tpu.memory_space<vmem>>, %arg8: memref<1x128xf32, #tpu.memory_space<vmem>>, %arg9: memref<32x64xf32, #tpu.memory_space<vmem>>, %arg10: memref<1x64xf32, #tpu.memory_space<vmem>>, %arg11: memref<8x8x128xf32, #tpu.memory_space<vmem>>) attributes {dimension_semantics = [#tpu.dimension_semantics<parallel>], iteration_bounds = array<i64: 1>, scalar_prefetch = 0 : i64, scratch_operands = 0 : i64, tpu.core_type = #tpu.core_type<tc>, window_params = [{transform_indices = @transform_0, window_bounds = array<i64: 8, 8, 32>}, {transform_indices = @transform_1, window_bounds = array<i64: 8, 32>}, {transform_indices = @transform_2, window_bounds = array<i64: 8, 32>}, {transform_indices = @transform_3, window_bounds = array<i64: 8, 16, 32>}, {transform_indices = @transform_4, window_bounds = array<i64: 8, 16, 72>}, {pipeline_mode = #tpu.pipeline_mode<synchronous>, transform_indices = @transform_5, window_bounds = array<i64: 1, 1, 32>}, {pipeline_mode = #tpu.pipeline_mode<synchronous>, transform_indices = @transform_6, window_bounds = array<i64: 136, 128>}, {pipeline_mode = #tpu.pipeline_mode<synchronous>, transform_indices = @transform_7, window_bounds = array<i64: 1, 128>}, {pipeline_mode = #tpu.pipeline_mode<synchronous>, transform_indices = @transform_8, window_bounds = array<i64: 32, 64>}, {pipeline_mode = #tpu.pipeline_mode<synchronous>, transform_indices = @transform_9, window_bounds = array<i64: 1, 64>}, {transform_indices = @transform_10, window_bounds = array<i64: 8, 8, 128>}]} {
    %c0 = arith.constant 0 : index
    %c0_0 = arith.constant 0 : index
    %c0_1 = arith.constant 0 : index
    %0 = vector.load %arg5[%c0, %c0_0, %c0_1] : memref<8x16x72xf32, #tpu.memory_space<vmem>>, vector<8x16x72xf32>
    %c0_2 = arith.constant 0 : index
    %c0_3 = arith.constant 0 : index
    %c0_4 = arith.constant 0 : index
    %1 = vector.load %arg4[%c0_2, %c0_3, %c0_4] : memref<8x16x32xf32, #tpu.memory_space<vmem>>, vector<8x16x32xf32>
    %c0_5 = arith.constant 0 : index
    %c0_6 = arith.constant 0 : index
    %c0_7 = arith.constant 0 : index
    %2 = vector.load %arg6[%c0_5, %c0_6, %c0_7] : memref<1x1x32xf32, #tpu.memory_space<vmem>>, vector<1x1x32xf32>
    %c0_8 = arith.constant 0 : index
    %c0_9 = arith.constant 0 : index
    %3 = vector.load %arg7[%c0_8, %c0_9] : memref<136x128xf32, #tpu.memory_space<vmem>>, vector<136x128xf32>
    %c0_10 = arith.constant 0 : index
    %c0_11 = arith.constant 0 : index
    %4 = vector.load %arg8[%c0_10, %c0_11] : memref<1x128xf32, #tpu.memory_space<vmem>>, vector<1x128xf32>
    %c0_12 = arith.constant 0 : index
    %c0_13 = arith.constant 0 : index
    %5 = vector.load %arg9[%c0_12, %c0_13] : memref<32x64xf32, #tpu.memory_space<vmem>>, vector<32x64xf32>
    %c0_14 = arith.constant 0 : index
    %c0_15 = arith.constant 0 : index
    %6 = vector.load %arg10[%c0_14, %c0_15] : memref<1x64xf32, #tpu.memory_space<vmem>>, vector<1x64xf32>
    %cst = arith.constant 0.000000e+00 : f32
    %7 = vector.broadcast %cst : f32 to vector<8x48xf32>
    %c0_16 = arith.constant 0 : index
    %c0_17 = arith.constant 0 : index
    %8 = vector.load %arg2[%c0_16, %c0_17] : memref<8x32xf32, #tpu.memory_space<vmem>>, vector<8x32xf32>
    %c0_18 = arith.constant 0 : index
    %c0_19 = arith.constant 0 : index
    %9 = vector.load %arg3[%c0_18, %c0_19] : memref<8x32xf32, #tpu.memory_space<vmem>>, vector<8x32xf32>
    %c0_20 = arith.constant 0 : index
    %c0_21 = arith.constant 0 : index
    %c0_22 = arith.constant 0 : index
    %10 = vector.load %arg1[%c0_20, %c0_21, %c0_22] : memref<8x8x32xf32, #tpu.memory_space<vmem>>, vector<1x8x32xf32>
    %11 = vector.shape_cast %10 : vector<1x8x32xf32> to vector<8x32xf32>
    %12 = vector.shape_cast %9 : vector<8x32xf32> to vector<8x1x32xf32>
    %13 = vector.broadcast %12 : vector<8x1x32xf32> to vector<8x16x32xf32>
    %14 = arith.addf %1, %13 : vector<8x16x32xf32>
    %15 = math.tanh %14 : vector<8x16x32xf32>
    %16 = vector.broadcast %2 : vector<1x1x32xf32> to vector<8x16x32xf32>
    %17 = arith.mulf %15, %16 : vector<8x16x32xf32>
    %cst_23 = arith.constant dense<0.000000e+00> : vector<8x16xf32>
    %18 = vector.multi_reduction <add>, %17, %cst_23 [2] : vector<8x16x32xf32> to vector<8x16xf32>
    %cst_24 = arith.constant dense<0xFF800000> : vector<8xf32>
    %19 = vector.multi_reduction <maximumf>, %18, %cst_24 [1] : vector<8x16xf32> to vector<8xf32>
    %20 = vector.shape_cast %19 : vector<8xf32> to vector<8x1xf32>
    %21 = vector.broadcast %20 : vector<8x1xf32> to vector<8x16xf32>
    %22 = arith.subf %18, %21 : vector<8x16xf32>
    %23 = math.exp %22 : vector<8x16xf32>
    %cst_25 = arith.constant dense<0.000000e+00> : vector<8xf32>
    %24 = vector.multi_reduction <add>, %23, %cst_25 [1] : vector<8x16xf32> to vector<8xf32>
    %25 = vector.shape_cast %24 : vector<8xf32> to vector<8x1xf32>
    %26 = vector.broadcast %25 : vector<8x1xf32> to vector<8x16xf32>
    %27 = arith.divf %23, %26 : vector<8x16xf32>
    %28 = vector.shape_cast %27 : vector<8x16xf32> to vector<8x16x1xf32>
    %29 = vector.broadcast %28 : vector<8x16x1xf32> to vector<8x16x72xf32>
    %30 = arith.mulf %29, %0 : vector<8x16x72xf32>
    %cst_26 = arith.constant dense<0.000000e+00> : vector<8x72xf32>
    %31 = vector.multi_reduction <add>, %30, %cst_26 [1] : vector<8x16x72xf32> to vector<8x72xf32>
    %32 = tpu.concatenate %11, %31, %8 in 1 : vector<8x32xf32>, vector<8x72xf32>, vector<8x32xf32> -> vector<8x136xf32>
    %cst_27 = arith.constant dense<0.000000e+00> : vector<8x128xf32>
    %33 = tpu.matmul %32, %3, %cst_27 {dimension_numbers = #tpu.dot_dimension_numbers<[1], [0], [0], [1], [0, 0, 1, 1], [], []>} : vector<8x136xf32>, vector<136x128xf32>, vector<8x128xf32> -> vector<8x128xf32>
    %34 = vector.broadcast %4 : vector<1x128xf32> to vector<8x128xf32>
    %35 = arith.addf %33, %34 : vector<8x128xf32>
    %36 = vector.extract_strided_slice %35 {offsets = [0, 0], sizes = [8, 32], strides = [1, 1]} : vector<8x128xf32> to vector<8x32xf32>
    %37 = arith.negf %36 : vector<8x32xf32>
    %38 = math.exp %37 : vector<8x32xf32>
    %cst_28 = arith.constant 1.000000e+00 : f32
    %39 = vector.broadcast %cst_28 : f32 to vector<8x32xf32>
    %40 = arith.addf %39, %38 : vector<8x32xf32>
    %41 = arith.divf %39, %40 : vector<8x32xf32>
    %42 = vector.extract_strided_slice %35 {offsets = [0, 32], sizes = [8, 32], strides = [1, 1]} : vector<8x128xf32> to vector<8x32xf32>
    %43 = arith.negf %42 : vector<8x32xf32>
    %44 = math.exp %43 : vector<8x32xf32>
    %cst_29 = arith.constant 1.000000e+00 : f32
    %45 = vector.broadcast %cst_29 : f32 to vector<8x32xf32>
    %46 = arith.addf %45, %44 : vector<8x32xf32>
    %47 = arith.divf %45, %46 : vector<8x32xf32>
    %48 = vector.extract_strided_slice %35 {offsets = [0, 64], sizes = [8, 32], strides = [1, 1]} : vector<8x128xf32> to vector<8x32xf32>
    %49 = vector.extract_strided_slice %35 {offsets = [0, 96], sizes = [8, 32], strides = [1, 1]} : vector<8x128xf32> to vector<8x32xf32>
    %50 = arith.mulf %41, %49 : vector<8x32xf32>
    %51 = arith.addf %48, %50 : vector<8x32xf32>
    %52 = math.tanh %51 : vector<8x32xf32>
    %cst_30 = arith.constant 1.000000e+00 : f32
    %53 = vector.broadcast %cst_30 : f32 to vector<8x32xf32>
    %54 = arith.subf %53, %47 : vector<8x32xf32>
    %55 = arith.mulf %54, %52 : vector<8x32xf32>
    %56 = arith.mulf %47, %8 : vector<8x32xf32>
    %57 = arith.addf %55, %56 : vector<8x32xf32>
    %cst_31 = arith.constant dense<0.000000e+00> : vector<8x64xf32>
    %58 = tpu.matmul %57, %5, %cst_31 {dimension_numbers = #tpu.dot_dimension_numbers<[1], [0], [0], [1], [0, 0, 1, 1], [], []>} : vector<8x32xf32>, vector<32x64xf32>, vector<8x64xf32> -> vector<8x64xf32>
    %59 = vector.broadcast %6 : vector<1x64xf32> to vector<8x64xf32>
    %60 = arith.addf %58, %59 : vector<8x64xf32>
    %61 = vector.extract_strided_slice %60 {offsets = [0, 0], sizes = [8, 32], strides = [1, 1]} : vector<8x64xf32> to vector<8x32xf32>
    %62 = vector.extract_strided_slice %60 {offsets = [0, 32], sizes = [8, 32], strides = [1, 1]} : vector<8x64xf32> to vector<8x32xf32>
    %cst_32 = arith.constant dense<0xFF800000> : vector<8xf32>
    %63 = vector.multi_reduction <maximumf>, %61, %cst_32 [1] : vector<8x32xf32> to vector<8xf32>
    %64 = vector.shape_cast %63 : vector<8xf32> to vector<8x1xf32>
    %65 = vector.broadcast %64 : vector<8x1xf32> to vector<8x32xf32>
    %66 = arith.subf %61, %65 : vector<8x32xf32>
    %67 = math.exp %66 : vector<8x32xf32>
    %cst_33 = arith.constant dense<0.000000e+00> : vector<8xf32>
    %68 = vector.multi_reduction <add>, %67, %cst_33 [1] : vector<8x32xf32> to vector<8xf32>
    %69 = vector.shape_cast %68 : vector<8xf32> to vector<8x1xf32>
    %70 = tpu.reciprocal %69 {approx = true} : vector<8x1xf32> -> vector<8x1xf32>
    %71 = vector.broadcast %70 : vector<8x1xf32> to vector<8x32xf32>
    %72 = arith.mulf %67, %71 : vector<8x32xf32>
    %73 = tpu.concatenate %72, %57, %27, %7 in 1 : vector<8x32xf32>, vector<8x32xf32>, vector<8x16xf32>, vector<8x48xf32> -> vector<8x128xf32>
    %c0_34 = arith.constant 0 : index
    %c0_35 = arith.constant 0 : index
    %c0_36 = arith.constant 0 : index
    %74 = vector.load %arg11[%c0_34, %c0_35, %c0_36] : memref<8x8x128xf32, #tpu.memory_space<vmem>>, vector<1x8x128xf32>
    %75 = vector.shape_cast %74 : vector<1x8x128xf32> to vector<8x128xf32>
    %76 = vector.shape_cast %73 : vector<8x128xf32> to vector<1x8x128xf32>
    tpu.vector_store %arg11[%c0_34, %c0_35, %c0_36], %76 {strides = array<i32>} : memref<8x8x128xf32, #tpu.memory_space<vmem>>, vector<1x8x128xf32>,
    %c1 = arith.constant 1 : index
    %c0_37 = arith.constant 0 : index
    %c0_38 = arith.constant 0 : index
    %77 = vector.load %arg1[%c1, %c0_37, %c0_38] : memref<8x8x32xf32, #tpu.memory_space<vmem>>, vector<1x8x32xf32>
    %78 = vector.shape_cast %77 : vector<1x8x32xf32> to vector<8x32xf32>
    %79 = vector.shape_cast %62 : vector<8x32xf32> to vector<8x1x32xf32>
    %80 = vector.broadcast %79 : vector<8x1x32xf32> to vector<8x16x32xf32>
    %81 = arith.addf %1, %80 : vector<8x16x32xf32>
    %82 = math.tanh %81 : vector<8x16x32xf32>
    %83 = vector.broadcast %2 : vector<1x1x32xf32> to vector<8x16x32xf32>
    %84 = arith.mulf %82, %83 : vector<8x16x32xf32>
    %cst_39 = arith.constant dense<0.000000e+00> : vector<8x16xf32>
    %85 = vector.multi_reduction <add>, %84, %cst_39 [2] : vector<8x16x32xf32> to vector<8x16xf32>
    %cst_40 = arith.constant dense<0xFF800000> : vector<8xf32>
    %86 = vector.multi_reduction <maximumf>, %85, %cst_40 [1] : vector<8x16xf32> to vector<8xf32>
    %87 = vector.shape_cast %86 : vector<8xf32> to vector<8x1xf32>
    %88 = vector.broadcast %87 : vector<8x1xf32> to vector<8x16xf32>
    %89 = arith.subf %85, %88 : vector<8x16xf32>
    %90 = math.exp %89 : vector<8x16xf32>
    %cst_41 = arith.constant dense<0.000000e+00> : vector<8xf32>
    %91 = vector.multi_reduction <add>, %90, %cst_41 [1] : vector<8x16xf32> to vector<8xf32>
    %92 = vector.shape_cast %91 : vector<8xf32> to vector<8x1xf32>
    %93 = vector.broadcast %92 : vector<8x1xf32> to vector<8x16xf32>
    %94 = arith.divf %90, %93 : vector<8x16xf32>
    %95 = vector.shape_cast %94 : vector<8x16xf32> to vector<8x16x1xf32>
    %96 = vector.broadcast %95 : vector<8x16x1xf32> to vector<8x16x72xf32>
    %97 = arith.mulf %96, %0 : vector<8x16x72xf32>
    %cst_42 = arith.constant dense<0.000000e+00> : vector<8x72xf32>
    %98 = vector.multi_reduction <add>, %97, %cst_42 [1] : vector<8x16x72xf32> to vector<8x72xf32>
    %99 = tpu.concatenate %78, %98, %57 in 1 : vector<8x32xf32>, vector<8x72xf32>, vector<8x32xf32> -> vector<8x136xf32>
    %cst_43 = arith.constant dense<0.000000e+00> : vector<8x128xf32>
    %100 = tpu.matmul %99, %3, %cst_43 {dimension_numbers = #tpu.dot_dimension_numbers<[1], [0], [0], [1], [0, 0, 1, 1], [], []>} : vector<8x136xf32>, vector<136x128xf32>, vector<8x128xf32> -> vector<8x128xf32>
    %101 = vector.broadcast %4 : vector<1x128xf32> to vector<8x128xf32>
    %102 = arith.addf %100, %101 : vector<8x128xf32>
    %103 = vector.extract_strided_slice %102 {offsets = [0, 0], sizes = [8, 32], strides = [1, 1]} : vector<8x128xf32> to vector<8x32xf32>
    %104 = arith.negf %103 : vector<8x32xf32>
    %105 = math.exp %104 : vector<8x32xf32>
    %cst_44 = arith.constant 1.000000e+00 : f32
    %106 = vector.broadcast %cst_44 : f32 to vector<8x32xf32>
    %107 = arith.addf %106, %105 : vector<8x32xf32>
    %108 = arith.divf %106, %107 : vector<8x32xf32>
    %109 = vector.extract_strided_slice %102 {offsets = [0, 32], sizes = [8, 32], strides = [1, 1]} : vector<8x128xf32> to vector<8x32xf32>
    %110 = arith.negf %109 : vector<8x32xf32>
    %111 = math.exp %110 : vector<8x32xf32>
    %cst_45 = arith.constant 1.000000e+00 : f32
    %112 = vector.broadcast %cst_45 : f32 to vector<8x32xf32>
    %113 = arith.addf %112, %111 : vector<8x32xf32>
    %114 = arith.divf %112, %113 : vector<8x32xf32>
    %115 = vector.extract_strided_slice %102 {offsets = [0, 64], sizes = [8, 32], strides = [1, 1]} : vector<8x128xf32> to vector<8x32xf32>
    %116 = vector.extract_strided_slice %102 {offsets = [0, 96], sizes = [8, 32], strides = [1, 1]} : vector<8x128xf32> to vector<8x32xf32>
    %117 = arith.mulf %108, %116 : vector<8x32xf32>
    %118 = arith.addf %115, %117 : vector<8x32xf32>
    %119 = math.tanh %118 : vector<8x32xf32>
    %cst_46 = arith.constant 1.000000e+00 : f32
    %120 = vector.broadcast %cst_46 : f32 to vector<8x32xf32>
    %121 = arith.subf %120, %114 : vector<8x32xf32>
    %122 = arith.mulf %121, %119 : vector<8x32xf32>
    %123 = arith.mulf %114, %57 : vector<8x32xf32>
    %124 = arith.addf %122, %123 : vector<8x32xf32>
    %cst_47 = arith.constant dense<0.000000e+00> : vector<8x64xf32>
    %125 = tpu.matmul %124, %5, %cst_47 {dimension_numbers = #tpu.dot_dimension_numbers<[1], [0], [0], [1], [0, 0, 1, 1], [], []>} : vector<8x32xf32>, vector<32x64xf32>, vector<8x64xf32> -> vector<8x64xf32>
    %126 = vector.broadcast %6 : vector<1x64xf32> to vector<8x64xf32>
    %127 = arith.addf %125, %126 : vector<8x64xf32>
    %128 = vector.extract_strided_slice %127 {offsets = [0, 0], sizes = [8, 32], strides = [1, 1]} : vector<8x64xf32> to vector<8x32xf32>
    %129 = vector.extract_strided_slice %127 {offsets = [0, 32], sizes = [8, 32], strides = [1, 1]} : vector<8x64xf32> to vector<8x32xf32>
    %cst_48 = arith.constant dense<0xFF800000> : vector<8xf32>
    %130 = vector.multi_reduction <maximumf>, %128, %cst_48 [1] : vector<8x32xf32> to vector<8xf32>
    %131 = vector.shape_cast %130 : vector<8xf32> to vector<8x1xf32>
    %132 = vector.broadcast %131 : vector<8x1xf32> to vector<8x32xf32>
    %133 = arith.subf %128, %132 : vector<8x32xf32>
    %134 = math.exp %133 : vector<8x32xf32>
    %cst_49 = arith.constant dense<0.000000e+00> : vector<8xf32>
    %135 = vector.multi_reduction <add>, %134, %cst_49 [1] : vector<8x32xf32> to vector<8xf32>
    %136 = vector.shape_cast %135 : vector<8xf32> to vector<8x1xf32>
    %137 = tpu.reciprocal %136 {approx = true} : vector<8x1xf32> -> vector<8x1xf32>
    %138 = vector.broadcast %137 : vector<8x1xf32> to vector<8x32xf32>
    %139 = arith.mulf %134, %138 : vector<8x32xf32>
    %140 = tpu.concatenate %139, %124, %94, %7 in 1 : vector<8x32xf32>, vector<8x32xf32>, vector<8x16xf32>, vector<8x48xf32> -> vector<8x128xf32>
    %c1_50 = arith.constant 1 : index
    %c0_51 = arith.constant 0 : index
    %c0_52 = arith.constant 0 : index
    %141 = vector.load %arg11[%c1_50, %c0_51, %c0_52] : memref<8x8x128xf32, #tpu.memory_space<vmem>>, vector<1x8x128xf32>
    %142 = vector.shape_cast %141 : vector<1x8x128xf32> to vector<8x128xf32>
    %143 = vector.shape_cast %140 : vector<8x128xf32> to vector<1x8x128xf32>
    tpu.vector_store %arg11[%c1_50, %c0_51, %c0_52], %143 {strides = array<i32>} : memref<8x8x128xf32, #tpu.memory_space<vmem>>, vector<1x8x128xf32>,
    %c2 = arith.constant 2 : index
    %c0_53 = arith.constant 0 : index
    %c0_54 = arith.constant 0 : index
    %144 = vector.load %arg1[%c2, %c0_53, %c0_54] : memref<8x8x32xf32, #tpu.memory_space<vmem>>, vector<1x8x32xf32>
    %145 = vector.shape_cast %144 : vector<1x8x32xf32> to vector<8x32xf32>
    %146 = vector.shape_cast %129 : vector<8x32xf32> to vector<8x1x32xf32>
    %147 = vector.broadcast %146 : vector<8x1x32xf32> to vector<8x16x32xf32>
    %148 = arith.addf %1, %147 : vector<8x16x32xf32>
    %149 = math.tanh %148 : vector<8x16x32xf32>
    %150 = vector.broadcast %2 : vector<1x1x32xf32> to vector<8x16x32xf32>
    %151 = arith.mulf %149, %150 : vector<8x16x32xf32>
    %cst_55 = arith.constant dense<0.000000e+00> : vector<8x16xf32>
    %152 = vector.multi_reduction <add>, %151, %cst_55 [2] : vector<8x16x32xf32> to vector<8x16xf32>
    %cst_56 = arith.constant dense<0xFF800000> : vector<8xf32>
    %153 = vector.multi_reduction <maximumf>, %152, %cst_56 [1] : vector<8x16xf32> to vector<8xf32>
    %154 = vector.shape_cast %153 : vector<8xf32> to vector<8x1xf32>
    %155 = vector.broadcast %154 : vector<8x1xf32> to vector<8x16xf32>
    %156 = arith.subf %152, %155 : vector<8x16xf32>
    %157 = math.exp %156 : vector<8x16xf32>
    %cst_57 = arith.constant dense<0.000000e+00> : vector<8xf32>
    %158 = vector.multi_reduction <add>, %157, %cst_57 [1] : vector<8x16xf32> to vector<8xf32>
    %159 = vector.shape_cast %158 : vector<8xf32> to vector<8x1xf32>
    %160 = vector.broadcast %159 : vector<8x1xf32> to vector<8x16xf32>
    %161 = arith.divf %157, %160 : vector<8x16xf32>
    %162 = vector.shape_cast %161 : vector<8x16xf32> to vector<8x16x1xf32>
    %163 = vector.broadcast %162 : vector<8x16x1xf32> to vector<8x16x72xf32>
    %164 = arith.mulf %163, %0 : vector<8x16x72xf32>
    %cst_58 = arith.constant dense<0.000000e+00> : vector<8x72xf32>
    %165 = vector.multi_reduction <add>, %164, %cst_58 [1] : vector<8x16x72xf32> to vector<8x72xf32>
    %166 = tpu.concatenate %145, %165, %124 in 1 : vector<8x32xf32>, vector<8x72xf32>, vector<8x32xf32> -> vector<8x136xf32>
    %cst_59 = arith.constant dense<0.000000e+00> : vector<8x128xf32>
    %167 = tpu.matmul %166, %3, %cst_59 {dimension_numbers = #tpu.dot_dimension_numbers<[1], [0], [0], [1], [0, 0, 1, 1], [], []>} : vector<8x136xf32>, vector<136x128xf32>, vector<8x128xf32> -> vector<8x128xf32>
    %168 = vector.broadcast %4 : vector<1x128xf32> to vector<8x128xf32>
    %169 = arith.addf %167, %168 : vector<8x128xf32>
    %170 = vector.extract_strided_slice %169 {offsets = [0, 0], sizes = [8, 32], strides = [1, 1]} : vector<8x128xf32> to vector<8x32xf32>
    %171 = arith.negf %170 : vector<8x32xf32>
    %172 = math.exp %171 : vector<8x32xf32>
    %cst_60 = arith.constant 1.000000e+00 : f32
    %173 = vector.broadcast %cst_60 : f32 to vector<8x32xf32>
    %174 = arith.addf %173, %172 : vector<8x32xf32>
    %175 = arith.divf %173, %174 : vector<8x32xf32>
    %176 = vector.extract_strided_slice %169 {offsets = [0, 32], sizes = [8, 32], strides = [1, 1]} : vector<8x128xf32> to vector<8x32xf32>
    %177 = arith.negf %176 : vector<8x32xf32>
    %178 = math.exp %177 : vector<8x32xf32>
    %cst_61 = arith.constant 1.000000e+00 : f32
    %179 = vector.broadcast %cst_61 : f32 to vector<8x32xf32>
    %180 = arith.addf %179, %178 : vector<8x32xf32>
    %181 = arith.divf %179, %180 : vector<8x32xf32>
    %182 = vector.extract_strided_slice %169 {offsets = [0, 64], sizes = [8, 32], strides = [1, 1]} : vector<8x128xf32> to vector<8x32xf32>
    %183 = vector.extract_strided_slice %169 {offsets = [0, 96], sizes = [8, 32], strides = [1, 1]} : vector<8x128xf32> to vector<8x32xf32>
    %184 = arith.mulf %175, %183 : vector<8x32xf32>
    %185 = arith.addf %182, %184 : vector<8x32xf32>
    %186 = math.tanh %185 : vector<8x32xf32>
    %cst_62 = arith.constant 1.000000e+00 : f32
    %187 = vector.broadcast %cst_62 : f32 to vector<8x32xf32>
    %188 = arith.subf %187, %181 : vector<8x32xf32>
    %189 = arith.mulf %188, %186 : vector<8x32xf32>
    %190 = arith.mulf %181, %124 : vector<8x32xf32>
    %191 = arith.addf %189, %190 : vector<8x32xf32>
    %cst_63 = arith.constant dense<0.000000e+00> : vector<8x64xf32>
    %192 = tpu.matmul %191, %5, %cst_63 {dimension_numbers = #tpu.dot_dimension_numbers<[1], [0], [0], [1], [0, 0, 1, 1], [], []>} : vector<8x32xf32>, vector<32x64xf32>, vector<8x64xf32> -> vector<8x64xf32>
    %193 = vector.broadcast %6 : vector<1x64xf32> to vector<8x64xf32>
    %194 = arith.addf %192, %193 : vector<8x64xf32>
    %195 = vector.extract_strided_slice %194 {offsets = [0, 0], sizes = [8, 32], strides = [1, 1]} : vector<8x64xf32> to vector<8x32xf32>
    %196 = vector.extract_strided_slice %194 {offsets = [0, 32], sizes = [8, 32], strides = [1, 1]} : vector<8x64xf32> to vector<8x32xf32>
    %cst_64 = arith.constant dense<0xFF800000> : vector<8xf32>
    %197 = vector.multi_reduction <maximumf>, %195, %cst_64 [1] : vector<8x32xf32> to vector<8xf32>
    %198 = vector.shape_cast %197 : vector<8xf32> to vector<8x1xf32>
    %199 = vector.broadcast %198 : vector<8x1xf32> to vector<8x32xf32>
    %200 = arith.subf %195, %199 : vector<8x32xf32>
    %201 = math.exp %200 : vector<8x32xf32>
    %cst_65 = arith.constant dense<0.000000e+00> : vector<8xf32>
    %202 = vector.multi_reduction <add>, %201, %cst_65 [1] : vector<8x32xf32> to vector<8xf32>
    %203 = vector.shape_cast %202 : vector<8xf32> to vector<8x1xf32>
    %204 = tpu.reciprocal %203 {approx = true} : vector<8x1xf32> -> vector<8x1xf32>
    %205 = vector.broadcast %204 : vector<8x1xf32> to vector<8x32xf32>
    %206 = arith.mulf %201, %205 : vector<8x32xf32>
    %207 = tpu.concatenate %206, %191, %161, %7 in 1 : vector<8x32xf32>, vector<8x32xf32>, vector<8x16xf32>, vector<8x48xf32> -> vector<8x128xf32>
    %c2_66 = arith.constant 2 : index
    %c0_67 = arith.constant 0 : index
    %c0_68 = arith.constant 0 : index
    %208 = vector.load %arg11[%c2_66, %c0_67, %c0_68] : memref<8x8x128xf32, #tpu.memory_space<vmem>>, vector<1x8x128xf32>
    %209 = vector.shape_cast %208 : vector<1x8x128xf32> to vector<8x128xf32>
    %210 = vector.shape_cast %207 : vector<8x128xf32> to vector<1x8x128xf32>
    tpu.vector_store %arg11[%c2_66, %c0_67, %c0_68], %210 {strides = array<i32>} : memref<8x8x128xf32, #tpu.memory_space<vmem>>, vector<1x8x128xf32>,
    %c3 = arith.constant 3 : index
    %c0_69 = arith.constant 0 : index
    %c0_70 = arith.constant 0 : index
    %211 = vector.load %arg1[%c3, %c0_69, %c0_70] : memref<8x8x32xf32, #tpu.memory_space<vmem>>, vector<1x8x32xf32>
    %212 = vector.shape_cast %211 : vector<1x8x32xf32> to vector<8x32xf32>
    %213 = vector.shape_cast %196 : vector<8x32xf32> to vector<8x1x32xf32>
    %214 = vector.broadcast %213 : vector<8x1x32xf32> to vector<8x16x32xf32>
    %215 = arith.addf %1, %214 : vector<8x16x32xf32>
    %216 = math.tanh %215 : vector<8x16x32xf32>
    %217 = vector.broadcast %2 : vector<1x1x32xf32> to vector<8x16x32xf32>
    %218 = arith.mulf %216, %217 : vector<8x16x32xf32>
    %cst_71 = arith.constant dense<0.000000e+00> : vector<8x16xf32>
    %219 = vector.multi_reduction <add>, %218, %cst_71 [2] : vector<8x16x32xf32> to vector<8x16xf32>
    %cst_72 = arith.constant dense<0xFF800000> : vector<8xf32>
    %220 = vector.multi_reduction <maximumf>, %219, %cst_72 [1] : vector<8x16xf32> to vector<8xf32>
    %221 = vector.shape_cast %220 : vector<8xf32> to vector<8x1xf32>
    %222 = vector.broadcast %221 : vector<8x1xf32> to vector<8x16xf32>
    %223 = arith.subf %219, %222 : vector<8x16xf32>
    %224 = math.exp %223 : vector<8x16xf32>
    %cst_73 = arith.constant dense<0.000000e+00> : vector<8xf32>
    %225 = vector.multi_reduction <add>, %224, %cst_73 [1] : vector<8x16xf32> to vector<8xf32>
    %226 = vector.shape_cast %225 : vector<8xf32> to vector<8x1xf32>
    %227 = vector.broadcast %226 : vector<8x1xf32> to vector<8x16xf32>
    %228 = arith.divf %224, %227 : vector<8x16xf32>
    %229 = vector.shape_cast %228 : vector<8x16xf32> to vector<8x16x1xf32>
    %230 = vector.broadcast %229 : vector<8x16x1xf32> to vector<8x16x72xf32>
    %231 = arith.mulf %230, %0 : vector<8x16x72xf32>
    %cst_74 = arith.constant dense<0.000000e+00> : vector<8x72xf32>
    %232 = vector.multi_reduction <add>, %231, %cst_74 [1] : vector<8x16x72xf32> to vector<8x72xf32>
    %233 = tpu.concatenate %212, %232, %191 in 1 : vector<8x32xf32>, vector<8x72xf32>, vector<8x32xf32> -> vector<8x136xf32>
    %cst_75 = arith.constant dense<0.000000e+00> : vector<8x128xf32>
    %234 = tpu.matmul %233, %3, %cst_75 {dimension_numbers = #tpu.dot_dimension_numbers<[1], [0], [0], [1], [0, 0, 1, 1], [], []>} : vector<8x136xf32>, vector<136x128xf32>, vector<8x128xf32> -> vector<8x128xf32>
    %235 = vector.broadcast %4 : vector<1x128xf32> to vector<8x128xf32>
    %236 = arith.addf %234, %235 : vector<8x128xf32>
    %237 = vector.extract_strided_slice %236 {offsets = [0, 0], sizes = [8, 32], strides = [1, 1]} : vector<8x128xf32> to vector<8x32xf32>
    %238 = arith.negf %237 : vector<8x32xf32>
    %239 = math.exp %238 : vector<8x32xf32>
    %cst_76 = arith.constant 1.000000e+00 : f32
    %240 = vector.broadcast %cst_76 : f32 to vector<8x32xf32>
    %241 = arith.addf %240, %239 : vector<8x32xf32>
    %242 = arith.divf %240, %241 : vector<8x32xf32>
    %243 = vector.extract_strided_slice %236 {offsets = [0, 32], sizes = [8, 32], strides = [1, 1]} : vector<8x128xf32> to vector<8x32xf32>
    %244 = arith.negf %243 : vector<8x32xf32>
    %245 = math.exp %244 : vector<8x32xf32>
    %cst_77 = arith.constant 1.000000e+00 : f32
    %246 = vector.broadcast %cst_77 : f32 to vector<8x32xf32>
    %247 = arith.addf %246, %245 : vector<8x32xf32>
    %248 = arith.divf %246, %247 : vector<8x32xf32>
    %249 = vector.extract_strided_slice %236 {offsets = [0, 64], sizes = [8, 32], strides = [1, 1]} : vector<8x128xf32> to vector<8x32xf32>
    %250 = vector.extract_strided_slice %236 {offsets = [0, 96], sizes = [8, 32], strides = [1, 1]} : vector<8x128xf32> to vector<8x32xf32>
    %251 = arith.mulf %242, %250 : vector<8x32xf32>
    %252 = arith.addf %249, %251 : vector<8x32xf32>
    %253 = math.tanh %252 : vector<8x32xf32>
    %cst_78 = arith.constant 1.000000e+00 : f32
    %254 = vector.broadcast %cst_78 : f32 to vector<8x32xf32>
    %255 = arith.subf %254, %248 : vector<8x32xf32>
    %256 = arith.mulf %255, %253 : vector<8x32xf32>
    %257 = arith.mulf %248, %191 : vector<8x32xf32>
    %258 = arith.addf %256, %257 : vector<8x32xf32>
    %cst_79 = arith.constant dense<0.000000e+00> : vector<8x64xf32>
    %259 = tpu.matmul %258, %5, %cst_79 {dimension_numbers = #tpu.dot_dimension_numbers<[1], [0], [0], [1], [0, 0, 1, 1], [], []>} : vector<8x32xf32>, vector<32x64xf32>, vector<8x64xf32> -> vector<8x64xf32>
    %260 = vector.broadcast %6 : vector<1x64xf32> to vector<8x64xf32>
    %261 = arith.addf %259, %260 : vector<8x64xf32>
    %262 = vector.extract_strided_slice %261 {offsets = [0, 0], sizes = [8, 32], strides = [1, 1]} : vector<8x64xf32> to vector<8x32xf32>
    %263 = vector.extract_strided_slice %261 {offsets = [0, 32], sizes = [8, 32], strides = [1, 1]} : vector<8x64xf32> to vector<8x32xf32>
    %cst_80 = arith.constant dense<0xFF800000> : vector<8xf32>
    %264 = vector.multi_reduction <maximumf>, %262, %cst_80 [1] : vector<8x32xf32> to vector<8xf32>
    %265 = vector.shape_cast %264 : vector<8xf32> to vector<8x1xf32>
    %266 = vector.broadcast %265 : vector<8x1xf32> to vector<8x32xf32>
    %267 = arith.subf %262, %266 : vector<8x32xf32>
    %268 = math.exp %267 : vector<8x32xf32>
    %cst_81 = arith.constant dense<0.000000e+00> : vector<8xf32>
    %269 = vector.multi_reduction <add>, %268, %cst_81 [1] : vector<8x32xf32> to vector<8xf32>
    %270 = vector.shape_cast %269 : vector<8xf32> to vector<8x1xf32>
    %271 = tpu.reciprocal %270 {approx = true} : vector<8x1xf32> -> vector<8x1xf32>
    %272 = vector.broadcast %271 : vector<8x1xf32> to vector<8x32xf32>
    %273 = arith.mulf %268, %272 : vector<8x32xf32>
    %274 = tpu.concatenate %273, %258, %228, %7 in 1 : vector<8x32xf32>, vector<8x32xf32>, vector<8x16xf32>, vector<8x48xf32> -> vector<8x128xf32>
    %c3_82 = arith.constant 3 : index
    %c0_83 = arith.constant 0 : index
    %c0_84 = arith.constant 0 : index
    %275 = vector.load %arg11[%c3_82, %c0_83, %c0_84] : memref<8x8x128xf32, #tpu.memory_space<vmem>>, vector<1x8x128xf32>
    %276 = vector.shape_cast %275 : vector<1x8x128xf32> to vector<8x128xf32>
    %277 = vector.shape_cast %274 : vector<8x128xf32> to vector<1x8x128xf32>
    tpu.vector_store %arg11[%c3_82, %c0_83, %c0_84], %277 {strides = array<i32>} : memref<8x8x128xf32, #tpu.memory_space<vmem>>, vector<1x8x128xf32>,
    %c4 = arith.constant 4 : index
    %c0_85 = arith.constant 0 : index
    %c0_86 = arith.constant 0 : index
    %278 = vector.load %arg1[%c4, %c0_85, %c0_86] : memref<8x8x32xf32, #tpu.memory_space<vmem>>, vector<1x8x32xf32>
    %279 = vector.shape_cast %278 : vector<1x8x32xf32> to vector<8x32xf32>
    %280 = vector.shape_cast %263 : vector<8x32xf32> to vector<8x1x32xf32>
    %281 = vector.broadcast %280 : vector<8x1x32xf32> to vector<8x16x32xf32>
    %282 = arith.addf %1, %281 : vector<8x16x32xf32>
    %283 = math.tanh %282 : vector<8x16x32xf32>
    %284 = vector.broadcast %2 : vector<1x1x32xf32> to vector<8x16x32xf32>
    %285 = arith.mulf %283, %284 : vector<8x16x32xf32>
    %cst_87 = arith.constant dense<0.000000e+00> : vector<8x16xf32>
    %286 = vector.multi_reduction <add>, %285, %cst_87 [2] : vector<8x16x32xf32> to vector<8x16xf32>
    %cst_88 = arith.constant dense<0xFF800000> : vector<8xf32>
    %287 = vector.multi_reduction <maximumf>, %286, %cst_88 [1] : vector<8x16xf32> to vector<8xf32>
    %288 = vector.shape_cast %287 : vector<8xf32> to vector<8x1xf32>
    %289 = vector.broadcast %288 : vector<8x1xf32> to vector<8x16xf32>
    %290 = arith.subf %286, %289 : vector<8x16xf32>
    %291 = math.exp %290 : vector<8x16xf32>
    %cst_89 = arith.constant dense<0.000000e+00> : vector<8xf32>
    %292 = vector.multi_reduction <add>, %291, %cst_89 [1] : vector<8x16xf32> to vector<8xf32>
    %293 = vector.shape_cast %292 : vector<8xf32> to vector<8x1xf32>
    %294 = vector.broadcast %293 : vector<8x1xf32> to vector<8x16xf32>
    %295 = arith.divf %291, %294 : vector<8x16xf32>
    %296 = vector.shape_cast %295 : vector<8x16xf32> to vector<8x16x1xf32>
    %297 = vector.broadcast %296 : vector<8x16x1xf32> to vector<8x16x72xf32>
    %298 = arith.mulf %297, %0 : vector<8x16x72xf32>
    %cst_90 = arith.constant dense<0.000000e+00> : vector<8x72xf32>
    %299 = vector.multi_reduction <add>, %298, %cst_90 [1] : vector<8x16x72xf32> to vector<8x72xf32>
    %300 = tpu.concatenate %279, %299, %258 in 1 : vector<8x32xf32>, vector<8x72xf32>, vector<8x32xf32> -> vector<8x136xf32>
    %cst_91 = arith.constant dense<0.000000e+00> : vector<8x128xf32>
    %301 = tpu.matmul %300, %3, %cst_91 {dimension_numbers = #tpu.dot_dimension_numbers<[1], [0], [0], [1], [0, 0, 1, 1], [], []>} : vector<8x136xf32>, vector<136x128xf32>, vector<8x128xf32> -> vector<8x128xf32>
    %302 = vector.broadcast %4 : vector<1x128xf32> to vector<8x128xf32>
    %303 = arith.addf %301, %302 : vector<8x128xf32>
    %304 = vector.extract_strided_slice %303 {offsets = [0, 0], sizes = [8, 32], strides = [1, 1]} : vector<8x128xf32> to vector<8x32xf32>
    %305 = arith.negf %304 : vector<8x32xf32>
    %306 = math.exp %305 : vector<8x32xf32>
    %cst_92 = arith.constant 1.000000e+00 : f32
    %307 = vector.broadcast %cst_92 : f32 to vector<8x32xf32>
    %308 = arith.addf %307, %306 : vector<8x32xf32>
    %309 = arith.divf %307, %308 : vector<8x32xf32>
    %310 = vector.extract_strided_slice %303 {offsets = [0, 32], sizes = [8, 32], strides = [1, 1]} : vector<8x128xf32> to vector<8x32xf32>
    %311 = arith.negf %310 : vector<8x32xf32>
    %312 = math.exp %311 : vector<8x32xf32>
    %cst_93 = arith.constant 1.000000e+00 : f32
    %313 = vector.broadcast %cst_93 : f32 to vector<8x32xf32>
    %314 = arith.addf %313, %312 : vector<8x32xf32>
    %315 = arith.divf %313, %314 : vector<8x32xf32>
    %316 = vector.extract_strided_slice %303 {offsets = [0, 64], sizes = [8, 32], strides = [1, 1]} : vector<8x128xf32> to vector<8x32xf32>
    %317 = vector.extract_strided_slice %303 {offsets = [0, 96], sizes = [8, 32], strides = [1, 1]} : vector<8x128xf32> to vector<8x32xf32>
    %318 = arith.mulf %309, %317 : vector<8x32xf32>
    %319 = arith.addf %316, %318 : vector<8x32xf32>
    %320 = math.tanh %319 : vector<8x32xf32>
    %cst_94 = arith.constant 1.000000e+00 : f32
    %321 = vector.broadcast %cst_94 : f32 to vector<8x32xf32>
    %322 = arith.subf %321, %315 : vector<8x32xf32>
    %323 = arith.mulf %322, %320 : vector<8x32xf32>
    %324 = arith.mulf %315, %258 : vector<8x32xf32>
    %325 = arith.addf %323, %324 : vector<8x32xf32>
    %cst_95 = arith.constant dense<0.000000e+00> : vector<8x64xf32>
    %326 = tpu.matmul %325, %5, %cst_95 {dimension_numbers = #tpu.dot_dimension_numbers<[1], [0], [0], [1], [0, 0, 1, 1], [], []>} : vector<8x32xf32>, vector<32x64xf32>, vector<8x64xf32> -> vector<8x64xf32>
    %327 = vector.broadcast %6 : vector<1x64xf32> to vector<8x64xf32>
    %328 = arith.addf %326, %327 : vector<8x64xf32>
    %329 = vector.extract_strided_slice %328 {offsets = [0, 0], sizes = [8, 32], strides = [1, 1]} : vector<8x64xf32> to vector<8x32xf32>
    %330 = vector.extract_strided_slice %328 {offsets = [0, 32], sizes = [8, 32], strides = [1, 1]} : vector<8x64xf32> to vector<8x32xf32>
    %cst_96 = arith.constant dense<0xFF800000> : vector<8xf32>
    %331 = vector.multi_reduction <maximumf>, %329, %cst_96 [1] : vector<8x32xf32> to vector<8xf32>
    %332 = vector.shape_cast %331 : vector<8xf32> to vector<8x1xf32>
    %333 = vector.broadcast %332 : vector<8x1xf32> to vector<8x32xf32>
    %334 = arith.subf %329, %333 : vector<8x32xf32>
    %335 = math.exp %334 : vector<8x32xf32>
    %cst_97 = arith.constant dense<0.000000e+00> : vector<8xf32>
    %336 = vector.multi_reduction <add>, %335, %cst_97 [1] : vector<8x32xf32> to vector<8xf32>
    %337 = vector.shape_cast %336 : vector<8xf32> to vector<8x1xf32>
    %338 = tpu.reciprocal %337 {approx = true} : vector<8x1xf32> -> vector<8x1xf32>
    %339 = vector.broadcast %338 : vector<8x1xf32> to vector<8x32xf32>
    %340 = arith.mulf %335, %339 : vector<8x32xf32>
    %341 = tpu.concatenate %340, %325, %295, %7 in 1 : vector<8x32xf32>, vector<8x32xf32>, vector<8x16xf32>, vector<8x48xf32> -> vector<8x128xf32>
    %c4_98 = arith.constant 4 : index
    %c0_99 = arith.constant 0 : index
    %c0_100 = arith.constant 0 : index
    %342 = vector.load %arg11[%c4_98, %c0_99, %c0_100] : memref<8x8x128xf32, #tpu.memory_space<vmem>>, vector<1x8x128xf32>
    %343 = vector.shape_cast %342 : vector<1x8x128xf32> to vector<8x128xf32>
    %344 = vector.shape_cast %341 : vector<8x128xf32> to vector<1x8x128xf32>
    tpu.vector_store %arg11[%c4_98, %c0_99, %c0_100], %344 {strides = array<i32>} : memref<8x8x128xf32, #tpu.memory_space<vmem>>, vector<1x8x128xf32>,
    %c5 = arith.constant 5 : index
    %c0_101 = arith.constant 0 : index
    %c0_102 = arith.constant 0 : index
    %345 = vector.load %arg1[%c5, %c0_101, %c0_102] : memref<8x8x32xf32, #tpu.memory_space<vmem>>, vector<1x8x32xf32>
    %346 = vector.shape_cast %345 : vector<1x8x32xf32> to vector<8x32xf32>
    %347 = vector.shape_cast %330 : vector<8x32xf32> to vector<8x1x32xf32>
    %348 = vector.broadcast %347 : vector<8x1x32xf32> to vector<8x16x32xf32>
    %349 = arith.addf %1, %348 : vector<8x16x32xf32>
    %350 = math.tanh %349 : vector<8x16x32xf32>
    %351 = vector.broadcast %2 : vector<1x1x32xf32> to vector<8x16x32xf32>
    %352 = arith.mulf %350, %351 : vector<8x16x32xf32>
    %cst_103 = arith.constant dense<0.000000e+00> : vector<8x16xf32>
    %353 = vector.multi_reduction <add>, %352, %cst_103 [2] : vector<8x16x32xf32> to vector<8x16xf32>
    %cst_104 = arith.constant dense<0xFF800000> : vector<8xf32>
    %354 = vector.multi_reduction <maximumf>, %353, %cst_104 [1] : vector<8x16xf32> to vector<8xf32>
    %355 = vector.shape_cast %354 : vector<8xf32> to vector<8x1xf32>
    %356 = vector.broadcast %355 : vector<8x1xf32> to vector<8x16xf32>
    %357 = arith.subf %353, %356 : vector<8x16xf32>
    %358 = math.exp %357 : vector<8x16xf32>
    %cst_105 = arith.constant dense<0.000000e+00> : vector<8xf32>
    %359 = vector.multi_reduction <add>, %358, %cst_105 [1] : vector<8x16xf32> to vector<8xf32>
    %360 = vector.shape_cast %359 : vector<8xf32> to vector<8x1xf32>
    %361 = vector.broadcast %360 : vector<8x1xf32> to vector<8x16xf32>
    %362 = arith.divf %358, %361 : vector<8x16xf32>
    %363 = vector.shape_cast %362 : vector<8x16xf32> to vector<8x16x1xf32>
    %364 = vector.broadcast %363 : vector<8x16x1xf32> to vector<8x16x72xf32>
    %365 = arith.mulf %364, %0 : vector<8x16x72xf32>
    %cst_106 = arith.constant dense<0.000000e+00> : vector<8x72xf32>
    %366 = vector.multi_reduction <add>, %365, %cst_106 [1] : vector<8x16x72xf32> to vector<8x72xf32>
    %367 = tpu.concatenate %346, %366, %325 in 1 : vector<8x32xf32>, vector<8x72xf32>, vector<8x32xf32> -> vector<8x136xf32>
    %cst_107 = arith.constant dense<0.000000e+00> : vector<8x128xf32>
    %368 = tpu.matmul %367, %3, %cst_107 {dimension_numbers = #tpu.dot_dimension_numbers<[1], [0], [0], [1], [0, 0, 1, 1], [], []>} : vector<8x136xf32>, vector<136x128xf32>, vector<8x128xf32> -> vector<8x128xf32>
    %369 = vector.broadcast %4 : vector<1x128xf32> to vector<8x128xf32>
    %370 = arith.addf %368, %369 : vector<8x128xf32>
    %371 = vector.extract_strided_slice %370 {offsets = [0, 0], sizes = [8, 32], strides = [1, 1]} : vector<8x128xf32> to vector<8x32xf32>
    %372 = arith.negf %371 : vector<8x32xf32>
    %373 = math.exp %372 : vector<8x32xf32>
    %cst_108 = arith.constant 1.000000e+00 : f32
    %374 = vector.broadcast %cst_108 : f32 to vector<8x32xf32>
    %375 = arith.addf %374, %373 : vector<8x32xf32>
    %376 = arith.divf %374, %375 : vector<8x32xf32>
    %377 = vector.extract_strided_slice %370 {offsets = [0, 32], sizes = [8, 32], strides = [1, 1]} : vector<8x128xf32> to vector<8x32xf32>
    %378 = arith.negf %377 : vector<8x32xf32>
    %379 = math.exp %378 : vector<8x32xf32>
    %cst_109 = arith.constant 1.000000e+00 : f32
    %380 = vector.broadcast %cst_109 : f32 to vector<8x32xf32>
    %381 = arith.addf %380, %379 : vector<8x32xf32>
    %382 = arith.divf %380, %381 : vector<8x32xf32>
    %383 = vector.extract_strided_slice %370 {offsets = [0, 64], sizes = [8, 32], strides = [1, 1]} : vector<8x128xf32> to vector<8x32xf32>
    %384 = vector.extract_strided_slice %370 {offsets = [0, 96], sizes = [8, 32], strides = [1, 1]} : vector<8x128xf32> to vector<8x32xf32>
    %385 = arith.mulf %376, %384 : vector<8x32xf32>
    %386 = arith.addf %383, %385 : vector<8x32xf32>
    %387 = math.tanh %386 : vector<8x32xf32>
    %cst_110 = arith.constant 1.000000e+00 : f32
    %388 = vector.broadcast %cst_110 : f32 to vector<8x32xf32>
    %389 = arith.subf %388, %382 : vector<8x32xf32>
    %390 = arith.mulf %389, %387 : vector<8x32xf32>
    %391 = arith.mulf %382, %325 : vector<8x32xf32>
    %392 = arith.addf %390, %391 : vector<8x32xf32>
    %cst_111 = arith.constant dense<0.000000e+00> : vector<8x64xf32>
    %393 = tpu.matmul %392, %5, %cst_111 {dimension_numbers = #tpu.dot_dimension_numbers<[1], [0], [0], [1], [0, 0, 1, 1], [], []>} : vector<8x32xf32>, vector<32x64xf32>, vector<8x64xf32> -> vector<8x64xf32>
    %394 = vector.broadcast %6 : vector<1x64xf32> to vector<8x64xf32>
    %395 = arith.addf %393, %394 : vector<8x64xf32>
    %396 = vector.extract_strided_slice %395 {offsets = [0, 0], sizes = [8, 32], strides = [1, 1]} : vector<8x64xf32> to vector<8x32xf32>
    %397 = vector.extract_strided_slice %395 {offsets = [0, 32], sizes = [8, 32], strides = [1, 1]} : vector<8x64xf32> to vector<8x32xf32>
    %cst_112 = arith.constant dense<0xFF800000> : vector<8xf32>
    %398 = vector.multi_reduction <maximumf>, %396, %cst_112 [1] : vector<8x32xf32> to vector<8xf32>
    %399 = vector.shape_cast %398 : vector<8xf32> to vector<8x1xf32>
    %400 = vector.broadcast %399 : vector<8x1xf32> to vector<8x32xf32>
    %401 = arith.subf %396, %400 : vector<8x32xf32>
    %402 = math.exp %401 : vector<8x32xf32>
    %cst_113 = arith.constant dense<0.000000e+00> : vector<8xf32>
    %403 = vector.multi_reduction <add>, %402, %cst_113 [1] : vector<8x32xf32> to vector<8xf32>
    %404 = vector.shape_cast %403 : vector<8xf32> to vector<8x1xf32>
    %405 = tpu.reciprocal %404 {approx = true} : vector<8x1xf32> -> vector<8x1xf32>
    %406 = vector.broadcast %405 : vector<8x1xf32> to vector<8x32xf32>
    %407 = arith.mulf %402, %406 : vector<8x32xf32>
    %408 = tpu.concatenate %407, %392, %362, %7 in 1 : vector<8x32xf32>, vector<8x32xf32>, vector<8x16xf32>, vector<8x48xf32> -> vector<8x128xf32>
    %c5_114 = arith.constant 5 : index
    %c0_115 = arith.constant 0 : index
    %c0_116 = arith.constant 0 : index
    %409 = vector.load %arg11[%c5_114, %c0_115, %c0_116] : memref<8x8x128xf32, #tpu.memory_space<vmem>>, vector<1x8x128xf32>
    %410 = vector.shape_cast %409 : vector<1x8x128xf32> to vector<8x128xf32>
    %411 = vector.shape_cast %408 : vector<8x128xf32> to vector<1x8x128xf32>
    tpu.vector_store %arg11[%c5_114, %c0_115, %c0_116], %411 {strides = array<i32>} : memref<8x8x128xf32, #tpu.memory_space<vmem>>, vector<1x8x128xf32>,
    %c6 = arith.constant 6 : index
    %c0_117 = arith.constant 0 : index
    %c0_118 = arith.constant 0 : index
    %412 = vector.load %arg1[%c6, %c0_117, %c0_118] : memref<8x8x32xf32, #tpu.memory_space<vmem>>, vector<1x8x32xf32>
    %413 = vector.shape_cast %412 : vector<1x8x32xf32> to vector<8x32xf32>
    %414 = vector.shape_cast %397 : vector<8x32xf32> to vector<8x1x32xf32>
    %415 = vector.broadcast %414 : vector<8x1x32xf32> to vector<8x16x32xf32>
    %416 = arith.addf %1, %415 : vector<8x16x32xf32>
    %417 = math.tanh %416 : vector<8x16x32xf32>
    %418 = vector.broadcast %2 : vector<1x1x32xf32> to vector<8x16x32xf32>
    %419 = arith.mulf %417, %418 : vector<8x16x32xf32>
    %cst_119 = arith.constant dense<0.000000e+00> : vector<8x16xf32>
    %420 = vector.multi_reduction <add>, %419, %cst_119 [2] : vector<8x16x32xf32> to vector<8x16xf32>
    %cst_120 = arith.constant dense<0xFF800000> : vector<8xf32>
    %421 = vector.multi_reduction <maximumf>, %420, %cst_120 [1] : vector<8x16xf32> to vector<8xf32>
    %422 = vector.shape_cast %421 : vector<8xf32> to vector<8x1xf32>
    %423 = vector.broadcast %422 : vector<8x1xf32> to vector<8x16xf32>
    %424 = arith.subf %420, %423 : vector<8x16xf32>
    %425 = math.exp %424 : vector<8x16xf32>
    %cst_121 = arith.constant dense<0.000000e+00> : vector<8xf32>
    %426 = vector.multi_reduction <add>, %425, %cst_121 [1] : vector<8x16xf32> to vector<8xf32>
    %427 = vector.shape_cast %426 : vector<8xf32> to vector<8x1xf32>
    %428 = vector.broadcast %427 : vector<8x1xf32> to vector<8x16xf32>
    %429 = arith.divf %425, %428 : vector<8x16xf32>
    %430 = vector.shape_cast %429 : vector<8x16xf32> to vector<8x16x1xf32>
    %431 = vector.broadcast %430 : vector<8x16x1xf32> to vector<8x16x72xf32>
    %432 = arith.mulf %431, %0 : vector<8x16x72xf32>
    %cst_122 = arith.constant dense<0.000000e+00> : vector<8x72xf32>
    %433 = vector.multi_reduction <add>, %432, %cst_122 [1] : vector<8x16x72xf32> to vector<8x72xf32>
    %434 = tpu.concatenate %413, %433, %392 in 1 : vector<8x32xf32>, vector<8x72xf32>, vector<8x32xf32> -> vector<8x136xf32>
    %cst_123 = arith.constant dense<0.000000e+00> : vector<8x128xf32>
    %435 = tpu.matmul %434, %3, %cst_123 {dimension_numbers = #tpu.dot_dimension_numbers<[1], [0], [0], [1], [0, 0, 1, 1], [], []>} : vector<8x136xf32>, vector<136x128xf32>, vector<8x128xf32> -> vector<8x128xf32>
    %436 = vector.broadcast %4 : vector<1x128xf32> to vector<8x128xf32>
    %437 = arith.addf %435, %436 : vector<8x128xf32>
    %438 = vector.extract_strided_slice %437 {offsets = [0, 0], sizes = [8, 32], strides = [1, 1]} : vector<8x128xf32> to vector<8x32xf32>
    %439 = arith.negf %438 : vector<8x32xf32>
    %440 = math.exp %439 : vector<8x32xf32>
    %cst_124 = arith.constant 1.000000e+00 : f32
    %441 = vector.broadcast %cst_124 : f32 to vector<8x32xf32>
    %442 = arith.addf %441, %440 : vector<8x32xf32>
    %443 = arith.divf %441, %442 : vector<8x32xf32>
    %444 = vector.extract_strided_slice %437 {offsets = [0, 32], sizes = [8, 32], strides = [1, 1]} : vector<8x128xf32> to vector<8x32xf32>
    %445 = arith.negf %444 : vector<8x32xf32>
    %446 = math.exp %445 : vector<8x32xf32>
    %cst_125 = arith.constant 1.000000e+00 : f32
    %447 = vector.broadcast %cst_125 : f32 to vector<8x32xf32>
    %448 = arith.addf %447, %446 : vector<8x32xf32>
    %449 = arith.divf %447, %448 : vector<8x32xf32>
    %450 = vector.extract_strided_slice %437 {offsets = [0, 64], sizes = [8, 32], strides = [1, 1]} : vector<8x128xf32> to vector<8x32xf32>
    %451 = vector.extract_strided_slice %437 {offsets = [0, 96], sizes = [8, 32], strides = [1, 1]} : vector<8x128xf32> to vector<8x32xf32>
    %452 = arith.mulf %443, %451 : vector<8x32xf32>
    %453 = arith.addf %450, %452 : vector<8x32xf32>
    %454 = math.tanh %453 : vector<8x32xf32>
    %cst_126 = arith.constant 1.000000e+00 : f32
    %455 = vector.broadcast %cst_126 : f32 to vector<8x32xf32>
    %456 = arith.subf %455, %449 : vector<8x32xf32>
    %457 = arith.mulf %456, %454 : vector<8x32xf32>
    %458 = arith.mulf %449, %392 : vector<8x32xf32>
    %459 = arith.addf %457, %458 : vector<8x32xf32>
    %cst_127 = arith.constant dense<0.000000e+00> : vector<8x64xf32>
    %460 = tpu.matmul %459, %5, %cst_127 {dimension_numbers = #tpu.dot_dimension_numbers<[1], [0], [0], [1], [0, 0, 1, 1], [], []>} : vector<8x32xf32>, vector<32x64xf32>, vector<8x64xf32> -> vector<8x64xf32>
    %461 = vector.broadcast %6 : vector<1x64xf32> to vector<8x64xf32>
    %462 = arith.addf %460, %461 : vector<8x64xf32>
    %463 = vector.extract_strided_slice %462 {offsets = [0, 0], sizes = [8, 32], strides = [1, 1]} : vector<8x64xf32> to vector<8x32xf32>
    %464 = vector.extract_strided_slice %462 {offsets = [0, 32], sizes = [8, 32], strides = [1, 1]} : vector<8x64xf32> to vector<8x32xf32>
    %cst_128 = arith.constant dense<0xFF800000> : vector<8xf32>
    %465 = vector.multi_reduction <maximumf>, %463, %cst_128 [1] : vector<8x32xf32> to vector<8xf32>
    %466 = vector.shape_cast %465 : vector<8xf32> to vector<8x1xf32>
    %467 = vector.broadcast %466 : vector<8x1xf32> to vector<8x32xf32>
    %468 = arith.subf %463, %467 : vector<8x32xf32>
    %469 = math.exp %468 : vector<8x32xf32>
    %cst_129 = arith.constant dense<0.000000e+00> : vector<8xf32>
    %470 = vector.multi_reduction <add>, %469, %cst_129 [1] : vector<8x32xf32> to vector<8xf32>
    %471 = vector.shape_cast %470 : vector<8xf32> to vector<8x1xf32>
    %472 = tpu.reciprocal %471 {approx = true} : vector<8x1xf32> -> vector<8x1xf32>
    %473 = vector.broadcast %472 : vector<8x1xf32> to vector<8x32xf32>
    %474 = arith.mulf %469, %473 : vector<8x32xf32>
    %475 = tpu.concatenate %474, %459, %429, %7 in 1 : vector<8x32xf32>, vector<8x32xf32>, vector<8x16xf32>, vector<8x48xf32> -> vector<8x128xf32>
    %c6_130 = arith.constant 6 : index
    %c0_131 = arith.constant 0 : index
    %c0_132 = arith.constant 0 : index
    %476 = vector.load %arg11[%c6_130, %c0_131, %c0_132] : memref<8x8x128xf32, #tpu.memory_space<vmem>>, vector<1x8x128xf32>
    %477 = vector.shape_cast %476 : vector<1x8x128xf32> to vector<8x128xf32>
    %478 = vector.shape_cast %475 : vector<8x128xf32> to vector<1x8x128xf32>
    tpu.vector_store %arg11[%c6_130, %c0_131, %c0_132], %478 {strides = array<i32>} : memref<8x8x128xf32, #tpu.memory_space<vmem>>, vector<1x8x128xf32>,
    %c7 = arith.constant 7 : index
    %c0_133 = arith.constant 0 : index
    %c0_134 = arith.constant 0 : index
    %479 = vector.load %arg1[%c7, %c0_133, %c0_134] : memref<8x8x32xf32, #tpu.memory_space<vmem>>, vector<1x8x32xf32>
    %480 = vector.shape_cast %479 : vector<1x8x32xf32> to vector<8x32xf32>
    %481 = vector.shape_cast %464 : vector<8x32xf32> to vector<8x1x32xf32>
    %482 = vector.broadcast %481 : vector<8x1x32xf32> to vector<8x16x32xf32>
    %483 = arith.addf %1, %482 : vector<8x16x32xf32>
    %484 = math.tanh %483 : vector<8x16x32xf32>
    %485 = vector.broadcast %2 : vector<1x1x32xf32> to vector<8x16x32xf32>
    %486 = arith.mulf %484, %485 : vector<8x16x32xf32>
    %cst_135 = arith.constant dense<0.000000e+00> : vector<8x16xf32>
    %487 = vector.multi_reduction <add>, %486, %cst_135 [2] : vector<8x16x32xf32> to vector<8x16xf32>
    %cst_136 = arith.constant dense<0xFF800000> : vector<8xf32>
    %488 = vector.multi_reduction <maximumf>, %487, %cst_136 [1] : vector<8x16xf32> to vector<8xf32>
    %489 = vector.shape_cast %488 : vector<8xf32> to vector<8x1xf32>
    %490 = vector.broadcast %489 : vector<8x1xf32> to vector<8x16xf32>
    %491 = arith.subf %487, %490 : vector<8x16xf32>
    %492 = math.exp %491 : vector<8x16xf32>
    %cst_137 = arith.constant dense<0.000000e+00> : vector<8xf32>
    %493 = vector.multi_reduction <add>, %492, %cst_137 [1] : vector<8x16xf32> to vector<8xf32>
    %494 = vector.shape_cast %493 : vector<8xf32> to vector<8x1xf32>
    %495 = vector.broadcast %494 : vector<8x1xf32> to vector<8x16xf32>
    %496 = arith.divf %492, %495 : vector<8x16xf32>
    %497 = vector.shape_cast %496 : vector<8x16xf32> to vector<8x16x1xf32>
    %498 = vector.broadcast %497 : vector<8x16x1xf32> to vector<8x16x72xf32>
    %499 = arith.mulf %498, %0 : vector<8x16x72xf32>
    %cst_138 = arith.constant dense<0.000000e+00> : vector<8x72xf32>
    %500 = vector.multi_reduction <add>, %499, %cst_138 [1] : vector<8x16x72xf32> to vector<8x72xf32>
    %501 = tpu.concatenate %480, %500, %459 in 1 : vector<8x32xf32>, vector<8x72xf32>, vector<8x32xf32> -> vector<8x136xf32>
    %cst_139 = arith.constant dense<0.000000e+00> : vector<8x128xf32>
    %502 = tpu.matmul %501, %3, %cst_139 {dimension_numbers = #tpu.dot_dimension_numbers<[1], [0], [0], [1], [0, 0, 1, 1], [], []>} : vector<8x136xf32>, vector<136x128xf32>, vector<8x128xf32> -> vector<8x128xf32>
    %503 = vector.broadcast %4 : vector<1x128xf32> to vector<8x128xf32>
    %504 = arith.addf %502, %503 : vector<8x128xf32>
    %505 = vector.extract_strided_slice %504 {offsets = [0, 0], sizes = [8, 32], strides = [1, 1]} : vector<8x128xf32> to vector<8x32xf32>
    %506 = arith.negf %505 : vector<8x32xf32>
    %507 = math.exp %506 : vector<8x32xf32>
    %cst_140 = arith.constant 1.000000e+00 : f32
    %508 = vector.broadcast %cst_140 : f32 to vector<8x32xf32>
    %509 = arith.addf %508, %507 : vector<8x32xf32>
    %510 = arith.divf %508, %509 : vector<8x32xf32>
    %511 = vector.extract_strided_slice %504 {offsets = [0, 32], sizes = [8, 32], strides = [1, 1]} : vector<8x128xf32> to vector<8x32xf32>
    %512 = arith.negf %511 : vector<8x32xf32>
    %513 = math.exp %512 : vector<8x32xf32>
    %cst_141 = arith.constant 1.000000e+00 : f32
    %514 = vector.broadcast %cst_141 : f32 to vector<8x32xf32>
    %515 = arith.addf %514, %513 : vector<8x32xf32>
    %516 = arith.divf %514, %515 : vector<8x32xf32>
    %517 = vector.extract_strided_slice %504 {offsets = [0, 64], sizes = [8, 32], strides = [1, 1]} : vector<8x128xf32> to vector<8x32xf32>
    %518 = vector.extract_strided_slice %504 {offsets = [0, 96], sizes = [8, 32], strides = [1, 1]} : vector<8x128xf32> to vector<8x32xf32>
    %519 = arith.mulf %510, %518 : vector<8x32xf32>
    %520 = arith.addf %517, %519 : vector<8x32xf32>
    %521 = math.tanh %520 : vector<8x32xf32>
    %cst_142 = arith.constant 1.000000e+00 : f32
    %522 = vector.broadcast %cst_142 : f32 to vector<8x32xf32>
    %523 = arith.subf %522, %516 : vector<8x32xf32>
    %524 = arith.mulf %523, %521 : vector<8x32xf32>
    %525 = arith.mulf %516, %459 : vector<8x32xf32>
    %526 = arith.addf %524, %525 : vector<8x32xf32>
    %cst_143 = arith.constant dense<0.000000e+00> : vector<8x64xf32>
    %527 = tpu.matmul %526, %5, %cst_143 {dimension_numbers = #tpu.dot_dimension_numbers<[1], [0], [0], [1], [0, 0, 1, 1], [], []>} : vector<8x32xf32>, vector<32x64xf32>, vector<8x64xf32> -> vector<8x64xf32>
    %528 = vector.broadcast %6 : vector<1x64xf32> to vector<8x64xf32>
    %529 = arith.addf %527, %528 : vector<8x64xf32>
    %530 = vector.extract_strided_slice %529 {offsets = [0, 0], sizes = [8, 32], strides = [1, 1]} : vector<8x64xf32> to vector<8x32xf32>
    %cst_144 = arith.constant dense<0xFF800000> : vector<8xf32>
    %531 = vector.multi_reduction <maximumf>, %530, %cst_144 [1] : vector<8x32xf32> to vector<8xf32>
    %532 = vector.shape_cast %531 : vector<8xf32> to vector<8x1xf32>
    %533 = vector.broadcast %532 : vector<8x1xf32> to vector<8x32xf32>
    %534 = arith.subf %530, %533 : vector<8x32xf32>
    %535 = math.exp %534 : vector<8x32xf32>
    %cst_145 = arith.constant dense<0.000000e+00> : vector<8xf32>
    %536 = vector.multi_reduction <add>, %535, %cst_145 [1] : vector<8x32xf32> to vector<8xf32>
    %537 = vector.shape_cast %536 : vector<8xf32> to vector<8x1xf32>
    %538 = tpu.reciprocal %537 {approx = true} : vector<8x1xf32> -> vector<8x1xf32>
    %539 = vector.broadcast %538 : vector<8x1xf32> to vector<8x32xf32>
    %540 = arith.mulf %535, %539 : vector<8x32xf32>
    %541 = tpu.concatenate %540, %526, %496, %7 in 1 : vector<8x32xf32>, vector<8x32xf32>, vector<8x16xf32>, vector<8x48xf32> -> vector<8x128xf32>
    %c7_146 = arith.constant 7 : index
    %c0_147 = arith.constant 0 : index
    %c0_148 = arith.constant 0 : index
    %542 = vector.load %arg11[%c7_146, %c0_147, %c0_148] : memref<8x8x128xf32, #tpu.memory_space<vmem>>, vector<1x8x128xf32>
    %543 = vector.shape_cast %542 : vector<1x8x128xf32> to vector<8x128xf32>
    %544 = vector.shape_cast %541 : vector<8x128xf32> to vector<1x8x128xf32>
    tpu.vector_store %arg11[%c7_146, %c0_147, %c0_148], %544 {strides = array<i32>} : memref<8x8x128xf32, #tpu.memory_space<vmem>>, vector<1x8x128xf32>,
    return
  }
  func.func @transform_0(%arg0: i32) -> (i32, i32, i32) {
    %c0_i32 = arith.constant 0 : i32
    %c0_i32_0 = arith.constant 0 : i32
    %c0_i32_1 = arith.constant 0 : i32
    return %c0_i32, %arg0, %c0_i32_0 : i32, i32, i32
  }
  func.func @transform_1(%arg0: i32) -> (i32, i32) {
    %c0_i32 = arith.constant 0 : i32
    %c0_i32_0 = arith.constant 0 : i32
    return %arg0, %c0_i32 : i32, i32
  }
  func.func @transform_2(%arg0: i32) -> (i32, i32) {
    %c0_i32 = arith.constant 0 : i32
    %c0_i32_0 = arith.constant 0 : i32
    return %arg0, %c0_i32 : i32, i32
  }
  func.func @transform_3(%arg0: i32) -> (i32, i32, i32) {
    %c0_i32 = arith.constant 0 : i32
    %c0_i32_0 = arith.constant 0 : i32
    %c0_i32_1 = arith.constant 0 : i32
    return %arg0, %c0_i32, %c0_i32_0 : i32, i32, i32
  }
  func.func @transform_4(%arg0: i32) -> (i32, i32, i32) {
    %c0_i32 = arith.constant 0 : i32
    %c0_i32_0 = arith.constant 0 : i32
    %c0_i32_1 = arith.constant 0 : i32
    return %arg0, %c0_i32, %c0_i32_0 : i32, i32, i32
  }
  func.func @transform_5(%arg0: i32) -> (i32, i32, i32) {
    %c0_i32 = arith.constant 0 : i32
    %c0_i32_0 = arith.constant 0 : i32
    %c0_i32_1 = arith.constant 0 : i32
    %c0_i32_2 = arith.constant 0 : i32
    return %c0_i32, %c0_i32_0, %c0_i32_1 : i32, i32, i32
  }
  func.func @transform_6(%arg0: i32) -> (i32, i32) {
    %c0_i32 = arith.constant 0 : i32
    %c0_i32_0 = arith.constant 0 : i32
    %c0_i32_1 = arith.constant 0 : i32
    return %c0_i32, %c0_i32_0 : i32, i32
  }
  func.func @transform_7(%arg0: i32) -> (i32, i32) {
    %c0_i32 = arith.constant 0 : i32
    %c0_i32_0 = arith.constant 0 : i32
    %c0_i32_1 = arith.constant 0 : i32
    return %c0_i32, %c0_i32_0 : i32, i32
  }
  func.func @transform_8(%arg0: i32) -> (i32, i32) {
    %c0_i32 = arith.constant 0 : i32
    %c0_i32_0 = arith.constant 0 : i32
    %c0_i32_1 = arith.constant 0 : i32
    return %c0_i32, %c0_i32_0 : i32, i32
  }
  func.func @transform_9(%arg0: i32) -> (i32, i32) {
    %c0_i32 = arith.constant 0 : i32
    %c0_i32_0 = arith.constant 0 : i32
    %c0_i32_1 = arith.constant 0 : i32
    return %c0_i32, %c0_i32_0 : i32, i32
  }
  func.func @transform_10(%arg0: i32) -> (i32, i32, i32) {
    %c0_i32 = arith.constant 0 : i32
    %c0_i32_0 = arith.constant 0 : i32
    %c0_i32_1 = arith.constant 0 : i32
    return %c0_i32, %arg0, %c0_i32_0 : i32, i32, i32
  }
}

</mosaic_0001>

<llo_original>
// kernel: tpu_custom_call.1
$region0: #{tpu_custom_call.1}
  #allocation0 [shape = 'u32[]', space=smem, size = 0x4, offset = 0x4, fixed_abs, tag = 'smem constant byte address 0x4 - core index']
  #allocation1 [shape = 'u32[144,128]{1,0:T(1,128)}', space=vmem, size = 0x12000, scoped, tag = 'internal scratch']
  %s0 = inlined_call_operand.hbm [shape: f32[8,8,32], index: 0, kind: input, shape index: {}]
  %s1 = inlined_call_operand.hbm [shape: f32[8,32], index: 1, kind: input, shape index: {}]
  %s2 = inlined_call_operand.hbm [shape: f32[8,32], index: 2, kind: input, shape index: {}]
  %s3 = inlined_call_operand.hbm [shape: f32[8,16,32], index: 3, kind: input, shape index: {}]
  %s4 = inlined_call_operand.hbm [shape: f32[8,16,72], index: 4, kind: input, shape index: {}]
  %s5 = inlined_call_operand.vmem [shape: f32[1,1,32], index: 5, kind: input, shape index: {}]
  %s6 = inlined_call_operand.hbm [shape: f32[136,128], index: 6, kind: input, shape index: {}]
  %s7 = inlined_call_operand.vmem [shape: f32[1,128], index: 7, kind: input, shape index: {}]
  %s8 = inlined_call_operand.hbm [shape: f32[32,64], index: 8, kind: input, shape index: {}]
  %s9 = inlined_call_operand.vmem [shape: f32[1,64], index: 9, kind: input, shape index: {}]
  %s10 = inlined_call_operand.hbm [shape: f32[8,8,128], index: 10, kind: output, shape index: {}]
  %s11 = sld [smem:[#allocation0]]
  $region78: #{tpu_custom_call.1} parent=0
    _
  %s13 = ssub.s32 1, %s11
  %s14 = scalar_select 0, %s13, %s11
  $region1: #{tpu_custom_call.1} parent=0
    #allocation2 [shape = 'u8[32768]{0}', space=vmem, size = 0x8000, scoped, tag = 'input window, operand 0, single buffered']
    #allocation3 [shape = 's32[1]{0}', space=sflag, size = 0x4, scoped, tag = 'scoped memory for tpu_custom_call.1']
    #allocation4 [shape = 's32[1]{0}', space=sflag, size = 0x4, scoped, tag = 'scoped memory for tpu_custom_call.1']
    #allocation5 [shape = 'u8[4096]{0}', space=vmem, size = 0x1000, scoped, tag = 'input window, operand 1, single buffered']
    #allocation6 [shape = 's32[1]{0}', space=sflag, size = 0x4, scoped, tag = 'scoped memory for tpu_custom_call.1']
    #allocation7 [shape = 'u8[4096]{0}', space=vmem, size = 0x1000, scoped, tag = 'input window, operand 2, single buffered']
    #allocation8 [shape = 'u8[65536]{0}', space=vmem, size = 0x10000, scoped, tag = 'input window, operand 3, single buffered']
    #allocation9 [shape = 's32[1]{0}', space=sflag, size = 0x4, scoped, tag = 'scoped memory for tpu_custom_call.1']
    #allocation10 [shape = 'u8[65536]{0}', space=vmem, size = 0x10000, scoped, tag = 'input window, operand 4, single buffered']
    #allocation11 [shape = 'u8[69632]{0}', space=vmem, size = 0x11000, scoped, tag = 'input window, operand 6, single buffered']
    #allocation12 [shape = 's32[1]{0}', space=sflag, size = 0x4, scoped, tag = 'scoped memory for tpu_custom_call.1']
    #allocation13 [shape = 'u8[16384]{0}', space=vmem, size = 0x4000, scoped, tag = 'input window, operand 8, single buffered']
    #allocation14 [shape = 'u8[32768]{0}', space=vmem, size = 0x8000, scoped, tag = 'output window, operand 0, single buffered']
    %15 = vsyncpa [#allocation3], 0
    %16 = vsyncpa [#allocation6], 0
    %17 = vsyncpa [#allocation9], 0
    %18 = vsyncpa [#allocation12], 0
    %19 = vsyncpa [#allocation4], 0
    // Predicated region
    $region2: #{tpu_custom_call.1} parent=1 // pred_check
      _
    $region3: #{tpu_custom_call.1} parent=1 // pred_check_branch
      %21 = sbr.rel (0) target = $region5
    $region4: #{tpu_custom_call.1} parent=1 // pred_region
      %s23 = ssub.s32 1024, 1024
      %24 = vsyncadd [#allocation3], %s23
      %s25 = sshll.u32 [#allocation2], 4
      %s26 = int_to_ptr.vmem [resolvable:$true] %s25
      %31 = dma.hbm_to_vmem [thread:$0]  %s0, 1024, %s26, [#allocation3], 128, 128, 8
    $region5: #{tpu_custom_call.1} parent=1 // pred_fallthru
      _
    // Predicated region
    $region6: #{tpu_custom_call.1} parent=1 // pred_check
      _
    $region7: #{tpu_custom_call.1} parent=1 // pred_check_branch
      %33 = sbr.rel (0) target = $region9
    $region8: #{tpu_custom_call.1} parent=1 // pred_region
      %s35 = ssub.s32 128, 128
      %36 = vsyncadd [#allocation6], %s35
      %s38 = sshll.u32 [#allocation5], 4
      %s39 = int_to_ptr.vmem [resolvable:$true] %s38
      %41 = dma.hbm_to_vmem [thread:$0]  %s1, 128, %s39, [#allocation6]
    $region9: #{tpu_custom_call.1} parent=1 // pred_fallthru
      _
    // Predicated region
    $region10: #{tpu_custom_call.1} parent=1 // pred_check
      _
    $region11: #{tpu_custom_call.1} parent=1 // pred_check_branch
      %43 = sbr.rel (0) target = $region13
    $region12: #{tpu_custom_call.1} parent=1 // pred_region
      %s45 = ssub.s32 128, 128
      %46 = vsyncadd [#allocation6], %s45
      %s48 = sshll.u32 [#allocation7], 4
      %s49 = int_to_ptr.vmem [resolvable:$true] %s48
      %51 = dma.hbm_to_vmem [thread:$0]  %s2, 128, %s49, [#allocation6]
    $region13: #{tpu_custom_call.1} parent=1 // pred_fallthru
      _
    // Predicated region
    $region14: #{tpu_custom_call.1} parent=1 // pred_check
      _
    $region15: #{tpu_custom_call.1} parent=1 // pred_check_branch
      %53 = sbr.rel (0) target = $region17
    $region16: #{tpu_custom_call.1} parent=1 // pred_region
      %s55 = ssub.s32 2048, 2048
      %56 = vsyncadd [#allocation9], %s55
      %s57 = sshll.u32 [#allocation8], 4
      %s58 = int_to_ptr.vmem [resolvable:$true] %s57
      %63 = dma.hbm_to_vmem [thread:$0]  %s3, 2048, %s58, [#allocation9], 128, 128, 8
    $region17: #{tpu_custom_call.1} parent=1 // pred_fallthru
      _
    // Predicated region
    $region18: #{tpu_custom_call.1} parent=1 // pred_check
      _
    $region19: #{tpu_custom_call.1} parent=1 // pred_check_branch
      %65 = sbr.rel (0) target = $region21
    $region20: #{tpu_custom_call.1} parent=1 // pred_region
      %s67 = ssub.s32 2048, 2048
      %68 = vsyncadd [#allocation9], %s67
      %s69 = sshll.u32 [#allocation10], 4
      %s70 = int_to_ptr.vmem [resolvable:$true] %s69
      %75 = dma.hbm_to_vmem [thread:$0]  %s4, 2048, %s70, [#allocation9], 128, 128, 8
    $region21: #{tpu_custom_call.1} parent=1 // pred_fallthru
      _
    // Predicated region
    $region22: #{tpu_custom_call.1} parent=1 // pred_check
      _
    $region23: #{tpu_custom_call.1} parent=1 // pred_check_branch
      %77 = sbr.rel (0) target = $region25
    $region24: #{tpu_custom_call.1} parent=1 // pred_region
      _
    $region25: #{tpu_custom_call.1} parent=1 // pred_fallthru
      _
    // Predicated region
    $region26: #{tpu_custom_call.1} parent=1 // pred_check
      _
    $region27: #{tpu_custom_call.1} parent=1 // pred_check_branch
      %79 = sbr.rel (0) target = $region29
    $region28: #{tpu_custom_call.1} parent=1 // pred_region
      %s81 = ssub.s32 2176, 2176
      %82 = vsyncadd [#allocation12], %s81
      %s83 = sshll.u32 [#allocation11], 4
      %s84 = int_to_ptr.vmem [resolvable:$true] %s83
      %89 = dma.hbm_to_vmem [thread:$0]  %s6, 2176, %s84, [#allocation12], 128, 128, 8
    $region29: #{tpu_custom_call.1} parent=1 // pred_fallthru
      _
    // Predicated region
    $region30: #{tpu_custom_call.1} parent=1 // pred_check
      _
    $region31: #{tpu_custom_call.1} parent=1 // pred_check_branch
      %91 = sbr.rel (0) target = $region33
    $region32: #{tpu_custom_call.1} parent=1 // pred_region
      _
    $region33: #{tpu_custom_call.1} parent=1 // pred_fallthru
      _
    // Predicated region
    $region34: #{tpu_custom_call.1} parent=1 // pred_check
      _
    $region35: #{tpu_custom_call.1} parent=1 // pred_check_branch
      %93 = sbr.rel (0) target = $region37
    $region36: #{tpu_custom_call.1} parent=1 // pred_region
      %s95 = ssub.s32 512, 512
      %96 = vsyncadd [#allocation12], %s95
      %s97 = sshll.u32 [#allocation13], 4
      %s98 = int_to_ptr.vmem [resolvable:$true] %s97
      %103 = dma.hbm_to_vmem [thread:$0]  %s8, 512, %s98, [#allocation12], 128, 128, 8
    $region37: #{tpu_custom_call.1} parent=1 // pred_fallthru
      _
    // Predicated region
    $region38: #{tpu_custom_call.1} parent=1 // pred_check
      _
    $region39: #{tpu_custom_call.1} parent=1 // pred_check_branch
      %105 = sbr.rel (0) target = $region41
    $region40: #{tpu_custom_call.1} parent=1 // pred_region
      _
    $region41: #{tpu_custom_call.1} parent=1 // pred_fallthru
      _
    // Predicated region
    $region42: #{tpu_custom_call.1} parent=1 // pred_check
      _
    $region43: #{tpu_custom_call.1} parent=1 // pred_check_branch
      %107 = sbr.rel (0) target = $region45
    $region44: #{tpu_custom_call.1} parent=1 // pred_region
      %108 = dma.done [#allocation3], 1024
    $region45: #{tpu_custom_call.1} parent=1 // pred_fallthru
      _
    // Predicated region
    $region46: #{tpu_custom_call.1} parent=1 // pred_check
      _
    $region47: #{tpu_custom_call.1} parent=1 // pred_check_branch
      %110 = sbr.rel (0) target = $region49
    $region48: #{tpu_custom_call.1} parent=1 // pred_region
      %111 = dma.done [#allocation6], 128
    $region49: #{tpu_custom_call.1} parent=1 // pred_fallthru
      _
    // Predicated region
    $region50: #{tpu_custom_call.1} parent=1 // pred_check
      _
    $region51: #{tpu_custom_call.1} parent=1 // pred_check_branch
      %113 = sbr.rel (0) target = $region53
    $region52: #{tpu_custom_call.1} parent=1 // pred_region
      %114 = dma.done [#allocation6], 128
    $region53: #{tpu_custom_call.1} parent=1 // pred_fallthru
      _
    // Predicated region
    $region54: #{tpu_custom_call.1} parent=1 // pred_check
      _
    $region55: #{tpu_custom_call.1} parent=1 // pred_check_branch
      %116 = sbr.rel (0) target = $region57
    $region56: #{tpu_custom_call.1} parent=1 // pred_region
      %117 = dma.done [#allocation9], 2048
    $region57: #{tpu_custom_call.1} parent=1 // pred_fallthru
      _
    // Predicated region
    $region58: #{tpu_custom_call.1} parent=1 // pred_check
      _
    $region59: #{tpu_custom_call.1} parent=1 // pred_check_branch
      %119 = sbr.rel (0) target = $region61
    $region60: #{tpu_custom_call.1} parent=1 // pred_region
      %120 = dma.done [#allocation9], 2048
    $region61: #{tpu_custom_call.1} parent=1 // pred_fallthru
      _
    // Predicated region
    $region62: #{tpu_custom_call.1} parent=1 // pred_check
      _
    $region63: #{tpu_custom_call.1} parent=1 // pred_check_branch
      %122 = sbr.rel (0) target = $region65
    $region64: #{tpu_custom_call.1} parent=1 // pred_region
      %123 = dma.done [#allocation12], 2176
    $region65: #{tpu_custom_call.1} parent=1 // pred_fallthru
      _
    // Predicated region
    $region66: #{tpu_custom_call.1} parent=1 // pred_check
      _
    $region67: #{tpu_custom_call.1} parent=1 // pred_check_branch
      %125 = sbr.rel (0) target = $region69
    $region68: #{tpu_custom_call.1} parent=1 // pred_region
      %126 = dma.done [#allocation12], 512
    $region69: #{tpu_custom_call.1} parent=1 // pred_fallthru
      _
    %v127 = vld [vmem:[#allocation10] sm:$0xff]
    %v128 = vld [vmem:[#allocation10 + $0x8] sm:$0xff]
    %v129 = vld [vmem:[#allocation10 + $0x10] sm:$0xff]
    %v130 = vld [vmem:[#allocation10 + $0x18] sm:$0xff]
    %v131 = vld [vmem:[#allocation10 + $0x20] sm:$0xff]
    %v132 = vld [vmem:[#allocation10 + $0x28] sm:$0xff]
    %v133 = vld [vmem:[#allocation10 + $0x30] sm:$0xff]
    %v134 = vld [vmem:[#allocation10 + $0x38] sm:$0xff]
    %v135 = vld [vmem:[#allocation10 + $0x40] sm:$0xff]
    %v136 = vld [vmem:[#allocation10 + $0x48] sm:$0xff]
    %v137 = vld [vmem:[#allocation10 + $0x50] sm:$0xff]
    %v138 = vld [vmem:[#allocation10 + $0x58] sm:$0xff]
    %v139 = vld [vmem:[#allocation10 + $0x60] sm:$0xff]
    %v140 = vld [vmem:[#allocation10 + $0x68] sm:$0xff]
    %v141 = vld [vmem:[#allocation10 + $0x70] sm:$0xff]
    %v142 = vld [vmem:[#allocation10 + $0x78] sm:$0xff]
    %v143 = vld [vmem:[#allocation8] sm:$0xff]
    %v144 = vld [vmem:[#allocation8 + $0x8] sm:$0xff]
    %v145 = vld [vmem:[#allocation8 + $0x10] sm:$0xff]
    %v146 = vld [vmem:[#allocation8 + $0x18] sm:$0xff]
    %v147 = vld [vmem:[#allocation8 + $0x20] sm:$0xff]
    %v148 = vld [vmem:[#allocation8 + $0x28] sm:$0xff]
    %v149 = vld [vmem:[#allocation8 + $0x30] sm:$0xff]
    %v150 = vld [vmem:[#allocation8 + $0x38] sm:$0xff]
    %v151 = vld [vmem:[#allocation8 + $0x40] sm:$0xff]
    %v152 = vld [vmem:[#allocation8 + $0x48] sm:$0xff]
    %v153 = vld [vmem:[#allocation8 + $0x50] sm:$0xff]
    %v154 = vld [vmem:[#allocation8 + $0x58] sm:$0xff]
    %v155 = vld [vmem:[#allocation8 + $0x60] sm:$0xff]
    %v156 = vld [vmem:[#allocation8 + $0x68] sm:$0xff]
    %v157 = vld [vmem:[#allocation8 + $0x70] sm:$0xff]
    %v158 = vld [vmem:[#allocation8 + $0x78] sm:$0xff]
    %v159 = vld [vmem:[%s5] sm:$0x1]
    %v160 = vld [vmem:[#allocation11] sm:$0xff]
    %v161 = vld [vmem:[#allocation11 + $0x8] sm:$0xff]
    %v162 = vld [vmem:[#allocation11 + $0x10] sm:$0xff]
    %v163 = vld [vmem:[#allocation11 + $0x18] sm:$0xff]
    %v164 = vld [vmem:[#allocation11 + $0x20] sm:$0xff]
    %v165 = vld [vmem:[#allocation11 + $0x28] sm:$0xff]
    %v166 = vld [vmem:[#allocation11 + $0x30] sm:$0xff]
    %v167 = vld [vmem:[#allocation11 + $0x38] sm:$0xff]
    %v168 = vld [vmem:[#allocation11 + $0x40] sm:$0xff]
    %v169 = vld [vmem:[#allocation11 + $0x48] sm:$0xff]
    %v170 = vld [vmem:[#allocation11 + $0x50] sm:$0xff]
    %v171 = vld [vmem:[#allocation11 + $0x58] sm:$0xff]
    %v172 = vld [vmem:[#allocation11 + $0x60] sm:$0xff]
    %v173 = vld [vmem:[#allocation11 + $0x68] sm:$0xff]
    %v174 = vld [vmem:[#allocation11 + $0x70] sm:$0xff]
    %v175 = vld [vmem:[#allocation11 + $0x78] sm:$0xff]
    %v176 = vld [vmem:[#allocation11 + $0x80] sm:$0xff]
    %v177 = vld [vmem:[%s7] sm:$0x1]
    %v178 = vld [vmem:[#allocation13] sm:$0xff]
    %v179 = vld [vmem:[#allocation13 + $0x8] sm:$0xff]
    %v180 = vld [vmem:[#allocation13 + $0x10] sm:$0xff]
    %v181 = vld [vmem:[#allocation13 + $0x18] sm:$0xff]
    %v182 = vld [vmem:[%s9] sm:$0x1]
    %v183 = vld [vmem:[#allocation5] sm:$0xff]
    %v184 = vld [vmem:[#allocation7] sm:$0xff]
    %v185 = vld [vmem:[#allocation2] sm:$0xff]
    %v187 = vcombine.high %v184, %v184
    %v189 = vunpack.c.l.s4 1966171168
    %v190 = vunpack.c.0.s8 %v189
    %v191 = vlaneseq
    %v192 = vshrl.u32 %v191, 7
    %v193 = vsub.s32 %v190, %v192
    %v194 = vrot.slane %v184, %v193
    %v196 = vunpack.c.l.s4 1966171168
    %v197 = vunpack.c.0.s8 %v196
    %v198 = vlaneseq
    %v199 = vshrl.u32 %v198, 7
    %v200 = vsub.s32 %v197, %v199
    %v201 = vrot.slane %v187, %v200
    %v202 = vcombine.high %v194, %v194
    %v203 = vcombine.high %v201, %v201
    %v205 = vunpack.c.l.s4 1966171168
    %v206 = vunpack.c.0.s8 %v205
    %v207 = vlaneseq
    %v208 = vshrl.u32 %v207, 7
    %v209 = vsub.s32 %v206, %v208
    %v210 = vrot.slane %v194, %v209
    %v212 = vunpack.c.l.s4 1966171168
    %v213 = vunpack.c.0.s8 %v212
    %v214 = vlaneseq
    %v215 = vshrl.u32 %v214, 7
    %v216 = vsub.s32 %v213, %v215
    %v217 = vrot.slane %v201, %v216
    %v219 = vunpack.c.l.s4 1966171168
    %v220 = vunpack.c.0.s8 %v219
    %v221 = vlaneseq
    %v222 = vshrl.u32 %v221, 7
    %v223 = vsub.s32 %v220, %v222
    %v224 = vrot.slane %v202, %v223
    %v226 = vunpack.c.l.s4 1966171168
    %v227 = vunpack.c.0.s8 %v226
    %v228 = vlaneseq
    %v229 = vshrl.u32 %v228, 7
    %v230 = vsub.s32 %v227, %v229
    %v231 = vrot.slane %v203, %v230
    %v232 = vcombine.high %v210, %v210
    %v233 = vcombine.high %v217, %v217
    %v234 = vcombine.high %v224, %v224
    %v235 = vcombine.high %v231, %v231
    %v236 = vlaneseq
    %v237 = vshrl.u32 %v236, 7
    %v238 = vsub.s32 0, %v237
    %v239 = vrot.slane %v210, %v238
    %v240 = vlaneseq
    %v241 = vshrl.u32 %v240, 7
    %v242 = vsub.s32 0, %v241
    %v243 = vrot.slane %v224, %v242
    %v244 = vlaneseq
    %v245 = vshrl.u32 %v244, 7
    %v246 = vsub.s32 0, %v245
    %v247 = vrot.slane %v232, %v246
    %v248 = vlaneseq
    %v249 = vshrl.u32 %v248, 7
    %v250 = vsub.s32 0, %v249
    %v251 = vrot.slane %v234, %v250
    %v252 = vlaneseq
    %v253 = vshrl.u32 %v252, 7
    %v254 = vsub.s32 0, %v253
    %v255 = vrot.slane %v217, %v254
    %v256 = vlaneseq
    %v257 = vshrl.u32 %v256, 7
    %v258 = vsub.s32 0, %v257
    %v259 = vrot.slane %v231, %v258
    %v260 = vlaneseq
    %v261 = vshrl.u32 %v260, 7
    %v262 = vsub.s32 0, %v261
    %v263 = vrot.slane %v233, %v262
    %v264 = vlaneseq
    %v265 = vshrl.u32 %v264, 7
    %v266 = vsub.s32 0, %v265
    %v267 = vrot.slane %v235, %v266
    %v276 = vadd.f32 %v143, %v239
    %v277 = vadd.f32 %v144, %v239
    %v278 = vadd.f32 %v145, %v243
    %v279 = vadd.f32 %v146, %v243
    %v280 = vadd.f32 %v147, %v247
    %v281 = vadd.f32 %v148, %v247
    %v282 = vadd.f32 %v149, %v251
    %v283 = vadd.f32 %v150, %v251
    %v284 = vadd.f32 %v151, %v255
    %v285 = vadd.f32 %v152, %v255
    %v286 = vadd.f32 %v153, %v259
    %v287 = vadd.f32 %v154, %v259
    %v288 = vadd.f32 %v155, %v263
    %v289 = vadd.f32 %v156, %v263
    %v290 = vadd.f32 %v157, %v267
    %v291 = vadd.f32 %v158, %v267
    %v292 = vtanh.pop %v276
    %v293 = vtanh.pop %v277
    %v294 = vtanh.pop %v278
    %v295 = vtanh.pop %v279
    %v296 = vtanh.pop %v280
    %v297 = vtanh.pop %v281
    %v298 = vtanh.pop %v282
    %v299 = vtanh.pop %v283
    %v300 = vtanh.pop %v284
    %v301 = vtanh.pop %v285
    %v302 = vtanh.pop %v286
    %v303 = vtanh.pop %v287
    %v304 = vtanh.pop %v288
    %v305 = vtanh.pop %v289
    %v306 = vtanh.pop %v290
    %v307 = vtanh.pop %v291
    %v309 = vlaneseq
    %v310 = vshrl.u32 %v309, 7
    %v311 = vsub.s32 0, %v310
    %v312 = vrot.slane %v159, %v311
    %v314 = vmul.f32 %v292, %v312
    %v315 = vmul.f32 %v293, %v312
    %v316 = vmul.f32 %v294, %v312
    %v317 = vmul.f32 %v295, %v312
    %v318 = vmul.f32 %v296, %v312
    %v319 = vmul.f32 %v297, %v312
    %v320 = vmul.f32 %v298, %v312
    %v321 = vmul.f32 %v299, %v312
    %v322 = vmul.f32 %v300, %v312
    %v323 = vmul.f32 %v301, %v312
    %v324 = vmul.f32 %v302, %v312
    %v325 = vmul.f32 %v303, %v312
    %v326 = vmul.f32 %v304, %v312
    %v327 = vmul.f32 %v305, %v312
    %v328 = vmul.f32 %v306, %v312
    %v329 = vmul.f32 %v307, %v312
    %vm330 = vcmask 261120
    %v331 = vsel %vm330, %v314, 0.0
    %332 = vadd.xlane.f32.xlu0 %v331
    %v333 = vpop.xlane.xlu0 %332
    %v334 = vsel %vm330, %v315, 0.0
    %335 = vadd.xlane.f32.xlu0 %v334
    %v336 = vpop.xlane.xlu0 %335
    %v337 = vsel %vm330, %v316, 0.0
    %338 = vadd.xlane.f32.xlu0 %v337
    %v339 = vpop.xlane.xlu0 %338
    %v340 = vsel %vm330, %v317, 0.0
    %341 = vadd.xlane.f32.xlu0 %v340
    %v342 = vpop.xlane.xlu0 %341
    %v343 = vsel %vm330, %v318, 0.0
    %344 = vadd.xlane.f32.xlu0 %v343
    %v345 = vpop.xlane.xlu0 %344
    %v346 = vsel %vm330, %v319, 0.0
    %347 = vadd.xlane.f32.xlu0 %v346
    %v348 = vpop.xlane.xlu0 %347
    %v349 = vsel %vm330, %v320, 0.0
    %350 = vadd.xlane.f32.xlu0 %v349
    %v351 = vpop.xlane.xlu0 %350
    %v352 = vsel %vm330, %v321, 0.0
    %353 = vadd.xlane.f32.xlu0 %v352
    %v354 = vpop.xlane.xlu0 %353
    %v355 = vsel %vm330, %v322, 0.0
    %356 = vadd.xlane.f32.xlu0 %v355
    %v357 = vpop.xlane.xlu0 %356
    %v358 = vsel %vm330, %v323, 0.0
    %359 = vadd.xlane.f32.xlu0 %v358
    %v360 = vpop.xlane.xlu0 %359
    %v361 = vsel %vm330, %v324, 0.0
    %362 = vadd.xlane.f32.xlu0 %v361
    %v363 = vpop.xlane.xlu0 %362
    %v364 = vsel %vm330, %v325, 0.0
    %365 = vadd.xlane.f32.xlu0 %v364
    %v366 = vpop.xlane.xlu0 %365
    %v367 = vsel %vm330, %v326, 0.0
    %368 = vadd.xlane.f32.xlu0 %v367
    %v369 = vpop.xlane.xlu0 %368
    %v370 = vsel %vm330, %v327, 0.0
    %371 = vadd.xlane.f32.xlu0 %v370
    %v372 = vpop.xlane.xlu0 %371
    %v373 = vsel %vm330, %v328, 0.0
    %374 = vadd.xlane.f32.xlu0 %v373
    %v375 = vpop.xlane.xlu0 %374
    %v376 = vsel %vm330, %v329, 0.0
    %377 = vadd.xlane.f32.xlu0 %v376
    %v378 = vpop.xlane.xlu0 %377
    %v395 = vlaneseq
    %v396 = vand.u32 %v395, 127
    %v397 = vlaneseq
    %v398 = vshrl.u32 %v397, 7
    %v399 = vsub.s32 %v396, %v398
    %v400 = vrot.slane %v333, %v399
    %v401 = vadd.s32 %v396, 4294967288
    %v402 = vlaneseq
    %v403 = vshrl.u32 %v402, 7
    %v404 = vsub.s32 %v401, %v403
    %v405 = vrot.slane %v336, %v404
    %vm406 = vcmask 130112
    %v407 = vsel %vm406, %v405, %v400
    %v408 = vlaneseq
    %v409 = vshrl.u32 %v408, 7
    %v410 = vsub.s32 %v396, %v409
    %v411 = vrot.slane %v339, %v410
    %v412 = vlaneseq
    %v413 = vshrl.u32 %v412, 7
    %v414 = vsub.s32 %v401, %v413
    %v415 = vrot.slane %v342, %v414
    %v416 = vsel %vm406, %v415, %v411
    %v417 = vlaneseq
    %v418 = vshrl.u32 %v417, 7
    %v419 = vsub.s32 %v396, %v418
    %v420 = vrot.slane %v345, %v419
    %v421 = vlaneseq
    %v422 = vshrl.u32 %v421, 7
    %v423 = vsub.s32 %v401, %v422
    %v424 = vrot.slane %v348, %v423
    %v425 = vsel %vm406, %v424, %v420
    %v426 = vlaneseq
    %v427 = vshrl.u32 %v426, 7
    %v428 = vsub.s32 %v396, %v427
    %v429 = vrot.slane %v351, %v428
    %v430 = vlaneseq
    %v431 = vshrl.u32 %v430, 7
    %v432 = vsub.s32 %v401, %v431
    %v433 = vrot.slane %v354, %v432
    %v434 = vsel %vm406, %v433, %v429
    %v435 = vlaneseq
    %v436 = vshrl.u32 %v435, 7
    %v437 = vsub.s32 %v396, %v436
    %v438 = vrot.slane %v357, %v437
    %v439 = vlaneseq
    %v440 = vshrl.u32 %v439, 7
    %v441 = vsub.s32 %v401, %v440
    %v442 = vrot.slane %v360, %v441
    %v443 = vsel %vm406, %v442, %v438
    %v444 = vlaneseq
    %v445 = vshrl.u32 %v444, 7
    %v446 = vsub.s32 %v396, %v445
    %v447 = vrot.slane %v363, %v446
    %v448 = vlaneseq
    %v449 = vshrl.u32 %v448, 7
    %v450 = vsub.s32 %v401, %v449
    %v451 = vrot.slane %v366, %v450
    %v452 = vsel %vm406, %v451, %v447
    %v453 = vlaneseq
    %v454 = vshrl.u32 %v453, 7
    %v455 = vsub.s32 %v396, %v454
    %v456 = vrot.slane %v369, %v455
    %v457 = vlaneseq
    %v458 = vshrl.u32 %v457, 7
    %v459 = vsub.s32 %v401, %v458
    %v460 = vrot.slane %v372, %v459
    %v461 = vsel %vm406, %v460, %v456
    %v462 = vlaneseq
    %v463 = vshrl.u32 %v462, 7
    %v464 = vsub.s32 %v396, %v463
    %v465 = vrot.slane %v375, %v464
    %v466 = vlaneseq
    %v467 = vshrl.u32 %v466, 7
    %v468 = vsub.s32 %v401, %v467
    %v469 = vrot.slane %v378, %v468
    %v470 = vsel %vm406, %v469, %v465
    %vm471 = vcmask 1041409
    %v472 = vsel %vm471, %v416, %v407
    %vm473 = vcmask 1042434
    %v474 = vsel %vm473, %v425, %v472
    %vm475 = vcmask 1043459
    %v476 = vsel %vm475, %v434, %v474
    %vm477 = vcmask 1044484
    %v478 = vsel %vm477, %v443, %v476
    %vm479 = vcmask 1045509
    %v480 = vsel %vm479, %v452, %v478
    %vm481 = vcmask 1046534
    %v482 = vsel %vm481, %v461, %v480
    %vm483 = vcmask 1047559
    %v484 = vsel %vm483, %v470, %v482
    %vm486 = vcmask 130048
    %v487 = vsel %vm486, %v484, -inf
    %488 = vmax.xlane.f32.xlu0 %v487
    %v489 = vpop.xlane.xlu0 %488
    %v491 = vlaneseq
    %v492 = vshrl.u32 %v491, 7
    %v493 = vsub.s32 0, %v492
    %v494 = vrot.slane %v489, %v493
    %v495 = vlaneseq
    %v496 = vshrl.u32 %v495, 7
    %v497 = vsub.s32 1, %v496
    %v498 = vrot.slane %v489, %v497
    %v499 = vlaneseq
    %v500 = vshrl.u32 %v499, 7
    %v501 = vsub.s32 2, %v500
    %v502 = vrot.slane %v489, %v501
    %v503 = vlaneseq
    %v504 = vshrl.u32 %v503, 7
    %v505 = vsub.s32 3, %v504
    %v506 = vrot.slane %v489, %v505
    %v507 = vlaneseq
    %v508 = vshrl.u32 %v507, 7
    %v509 = vsub.s32 4, %v508
    %v510 = vrot.slane %v489, %v509
    %v511 = vlaneseq
    %v512 = vshrl.u32 %v511, 7
    %v513 = vsub.s32 5, %v512
    %v514 = vrot.slane %v489, %v513
    %v515 = vlaneseq
    %v516 = vshrl.u32 %v515, 7
    %v517 = vsub.s32 6, %v516
    %v518 = vrot.slane %v489, %v517
    %v519 = vlaneseq
    %v520 = vshrl.u32 %v519, 7
    %v521 = vsub.s32 7, %v520
    %v522 = vrot.slane %v489, %v521
    %v531 = vsub.f32 %v333, %v494
    %v532 = vsub.f32 %v336, %v494
    %v533 = vsub.f32 %v339, %v498
    %v534 = vsub.f32 %v342, %v498
    %v535 = vsub.f32 %v345, %v502
    %v536 = vsub.f32 %v348, %v502
    %v537 = vsub.f32 %v351, %v506
    %v538 = vsub.f32 %v354, %v506
    %v539 = vsub.f32 %v357, %v510
    %v540 = vsub.f32 %v360, %v510
    %v541 = vsub.f32 %v363, %v514
    %v542 = vsub.f32 %v366, %v514
    %v543 = vsub.f32 %v369, %v518
    %v544 = vsub.f32 %v372, %v518
    %v545 = vsub.f32 %v375, %v522
    %v546 = vsub.f32 %v378, %v522
    %v547 = vmul.f32 %v531, 1.442695
    %v548 = vpow.pop %v547
    %v549 = vmul.f32 %v532, 1.442695
    %v550 = vpow.pop %v549
    %v551 = vmul.f32 %v533, 1.442695
    %v552 = vpow.pop %v551
    %v553 = vmul.f32 %v534, 1.442695
    %v554 = vpow.pop %v553
    %v555 = vmul.f32 %v535, 1.442695
    %v556 = vpow.pop %v555
    %v557 = vmul.f32 %v536, 1.442695
    %v558 = vpow.pop %v557
    %v559 = vmul.f32 %v537, 1.442695
    %v560 = vpow.pop %v559
    %v561 = vmul.f32 %v538, 1.442695
    %v562 = vpow.pop %v561
    %v563 = vmul.f32 %v539, 1.442695
    %v564 = vpow.pop %v563
    %v565 = vmul.f32 %v540, 1.442695
    %v566 = vpow.pop %v565
    %v567 = vmul.f32 %v541, 1.442695
    %v568 = vpow.pop %v567
    %v569 = vmul.f32 %v542, 1.442695
    %v570 = vpow.pop %v569
    %v571 = vmul.f32 %v543, 1.442695
    %v572 = vpow.pop %v571
    %v573 = vmul.f32 %v544, 1.442695
    %v574 = vpow.pop %v573
    %v575 = vmul.f32 %v545, 1.442695
    %v576 = vpow.pop %v575
    %v577 = vmul.f32 %v546, 1.442695
    %v578 = vpow.pop %v577
    %595 = vset.pattern.permute.xlu0 0
    %596 = vperm.xlu0 %595, %v548
    %v597 = vpop.permute.xlu0 %596
    %598 = vset.pattern.permute.xlu0 0
    %599 = vperm.xlu0 %598, %v550
    %v600 = vpop.permute.xlu0 %599
    %601 = vset.pattern.permute.xlu0 0
    %602 = vperm.xlu0 %601, %v552
    %v603 = vpop.permute.xlu0 %602
    %604 = vset.pattern.permute.xlu0 0
    %605 = vperm.xlu0 %604, %v554
    %v606 = vpop.permute.xlu0 %605
    %607 = vset.pattern.permute.xlu0 0
    %608 = vperm.xlu0 %607, %v556
    %v609 = vpop.permute.xlu0 %608
    %610 = vset.pattern.permute.xlu0 0
    %611 = vperm.xlu0 %610, %v558
    %v612 = vpop.permute.xlu0 %611
    %613 = vset.pattern.permute.xlu0 0
    %614 = vperm.xlu0 %613, %v560
    %v615 = vpop.permute.xlu0 %614
    %616 = vset.pattern.permute.xlu0 0
    %617 = vperm.xlu0 %616, %v562
    %v618 = vpop.permute.xlu0 %617
    %619 = vset.pattern.permute.xlu0 0
    %620 = vperm.xlu0 %619, %v564
    %v621 = vpop.permute.xlu0 %620
    %622 = vset.pattern.permute.xlu0 0
    %623 = vperm.xlu0 %622, %v566
    %v624 = vpop.permute.xlu0 %623
    %625 = vset.pattern.permute.xlu0 0
    %626 = vperm.xlu0 %625, %v568
    %v627 = vpop.permute.xlu0 %626
    %628 = vset.pattern.permute.xlu0 0
    %629 = vperm.xlu0 %628, %v570
    %v630 = vpop.permute.xlu0 %629
    %631 = vset.pattern.permute.xlu0 0
    %632 = vperm.xlu0 %631, %v572
    %v633 = vpop.permute.xlu0 %632
    %634 = vset.pattern.permute.xlu0 0
    %635 = vperm.xlu0 %634, %v574
    %v636 = vpop.permute.xlu0 %635
    %637 = vset.pattern.permute.xlu0 0
    %638 = vperm.xlu0 %637, %v576
    %v639 = vpop.permute.xlu0 %638
    %640 = vset.pattern.permute.xlu0 0
    %641 = vperm.xlu0 %640, %v578
    %v642 = vpop.permute.xlu0 %641
    %v643 = vlaneseq
    %v644 = vshrl.u32 %v643, 7
    %v645 = vsub.s32 %v396, %v644
    %v646 = vrot.slane %v597, %v645
    %v647 = vlaneseq
    %v648 = vshrl.u32 %v647, 7
    %v649 = vsub.s32 %v401, %v648
    %v650 = vrot.slane %v600, %v649
    %v651 = vsel %vm406, %v650, %v646
    %v652 = vlaneseq
    %v653 = vshrl.u32 %v652, 7
    %v654 = vsub.s32 %v396, %v653
    %v655 = vrot.slane %v603, %v654
    %v656 = vlaneseq
    %v657 = vshrl.u32 %v656, 7
    %v658 = vsub.s32 %v401, %v657
    %v659 = vrot.slane %v606, %v658
    %v660 = vsel %vm406, %v659, %v655
    %v661 = vlaneseq
    %v662 = vshrl.u32 %v661, 7
    %v663 = vsub.s32 %v396, %v662
    %v664 = vrot.slane %v609, %v663
    %v665 = vlaneseq
    %v666 = vshrl.u32 %v665, 7
    %v667 = vsub.s32 %v401, %v666
    %v668 = vrot.slane %v612, %v667
    %v669 = vsel %vm406, %v668, %v664
    %v670 = vlaneseq
    %v671 = vshrl.u32 %v670, 7
    %v672 = vsub.s32 %v396, %v671
    %v673 = vrot.slane %v615, %v672
    %v674 = vlaneseq
    %v675 = vshrl.u32 %v674, 7
    %v676 = vsub.s32 %v401, %v675
    %v677 = vrot.slane %v618, %v676
    %v678 = vsel %vm406, %v677, %v673
    %v679 = vlaneseq
    %v680 = vshrl.u32 %v679, 7
    %v681 = vsub.s32 %v396, %v680
    %v682 = vrot.slane %v621, %v681
    %v683 = vlaneseq
    %v684 = vshrl.u32 %v683, 7
    %v685 = vsub.s32 %v401, %v684
    %v686 = vrot.slane %v624, %v685
    %v687 = vsel %vm406, %v686, %v682
    %v688 = vlaneseq
    %v689 = vshrl.u32 %v688, 7
    %v690 = vsub.s32 %v396, %v689
    %v691 = vrot.slane %v627, %v690
    %v692 = vlaneseq
    %v693 = vshrl.u32 %v692, 7
    %v694 = vsub.s32 %v401, %v693
    %v695 = vrot.slane %v630, %v694
    %v696 = vsel %vm406, %v695, %v691
    %v697 = vlaneseq
    %v698 = vshrl.u32 %v697, 7
    %v699 = vsub.s32 %v396, %v698
    %v700 = vrot.slane %v633, %v699
    %v701 = vlaneseq
    %v702 = vshrl.u32 %v701, 7
    %v703 = vsub.s32 %v401, %v702
    %v704 = vrot.slane %v636, %v703
    %v705 = vsel %vm406, %v704, %v700
    %v706 = vlaneseq
    %v707 = vshrl.u32 %v706, 7
    %v708 = vsub.s32 %v396, %v707
    %v709 = vrot.slane %v639, %v708
    %v710 = vlaneseq
    %v711 = vshrl.u32 %v710, 7
    %v712 = vsub.s32 %v401, %v711
    %v713 = vrot.slane %v642, %v712
    %v714 = vsel %vm406, %v713, %v709
    %v715 = vsel %vm471, %v660, %v651
    %v716 = vsel %vm473, %v669, %v715
    %v717 = vsel %vm475, %v678, %v716
    %v718 = vsel %vm477, %v687, %v717
    %v719 = vsel %vm479, %v696, %v718
    %v720 = vsel %vm481, %v705, %v719
    %v721 = vsel %vm483, %v714, %v720
    %v723 = vsel %vm486, %v721, 0.0
    %724 = vadd.xlane.f32.xlu0 %v723
    %v725 = vpop.xlane.xlu0 %724
    %v727 = vlaneseq
    %v728 = vshrl.u32 %v727, 7
    %v729 = vsub.s32 0, %v728
    %v730 = vrot.slane %v725, %v729
    %v731 = vlaneseq
    %v732 = vshrl.u32 %v731, 7
    %v733 = vsub.s32 1, %v732
    %v734 = vrot.slane %v725, %v733
    %v735 = vlaneseq
    %v736 = vshrl.u32 %v735, 7
    %v737 = vsub.s32 2, %v736
    %v738 = vrot.slane %v725, %v737
    %v739 = vlaneseq
    %v740 = vshrl.u32 %v739, 7
    %v741 = vsub.s32 3, %v740
    %v742 = vrot.slane %v725, %v741
    %v743 = vlaneseq
    %v744 = vshrl.u32 %v743, 7
    %v745 = vsub.s32 4, %v744
    %v746 = vrot.slane %v725, %v745
    %v747 = vlaneseq
    %v748 = vshrl.u32 %v747, 7
    %v749 = vsub.s32 5, %v748
    %v750 = vrot.slane %v725, %v749
    %v751 = vlaneseq
    %v752 = vshrl.u32 %v751, 7
    %v753 = vsub.s32 6, %v752
    %v754 = vrot.slane %v725, %v753
    %v755 = vlaneseq
    %v756 = vshrl.u32 %v755, 7
    %v757 = vsub.s32 7, %v756
    %v758 = vrot.slane %v725, %v757
    %v767 = vrcp.pop %v730
    %v768 = vmul.f32 %v548, %v767
    %v769 = vmul.f32 %v550, %v767
    %v770 = vrcp.pop %v734
    %v771 = vmul.f32 %v552, %v770
    %v772 = vmul.f32 %v554, %v770
    %v773 = vrcp.pop %v738
    %v774 = vmul.f32 %v556, %v773
    %v775 = vmul.f32 %v558, %v773
    %v776 = vrcp.pop %v742
    %v777 = vmul.f32 %v560, %v776
    %v778 = vmul.f32 %v562, %v776
    %v779 = vrcp.pop %v746
    %v780 = vmul.f32 %v564, %v779
    %v781 = vmul.f32 %v566, %v779
    %v782 = vrcp.pop %v750
    %v783 = vmul.f32 %v568, %v782
    %v784 = vmul.f32 %v570, %v782
    %v785 = vrcp.pop %v754
    %v786 = vmul.f32 %v572, %v785
    %v787 = vmul.f32 %v574, %v785
    %v788 = vrcp.pop %v758
    %v789 = vmul.f32 %v576, %v788
    %v790 = vmul.f32 %v578, %v788
    %792 = vset.pattern.permute.xlu0 0
    %793 = vperm.xlu0 %792, %v768
    %v794 = vpop.permute.xlu0 %793
    %797 = vset.pattern.permute.xlu0 0
    %798 = vperm.xlu0 %797, %v769
    %v799 = vpop.permute.xlu0 %798
    %802 = vset.pattern.permute.xlu0 0
    %803 = vperm.xlu0 %802, %v771
    %v804 = vpop.permute.xlu0 %803
    %807 = vset.pattern.permute.xlu0 0
    %808 = vperm.xlu0 %807, %v772
    %v809 = vpop.permute.xlu0 %808
    %812 = vset.pattern.permute.xlu0 0
    %813 = vperm.xlu0 %812, %v774
    %v814 = vpop.permute.xlu0 %813
    %817 = vset.pattern.permute.xlu0 0
    %818 = vperm.xlu0 %817, %v775
    %v819 = vpop.permute.xlu0 %818
    %822 = vset.pattern.permute.xlu0 0
    %823 = vperm.xlu0 %822, %v777
    %v824 = vpop.permute.xlu0 %823
    %827 = vset.pattern.permute.xlu0 0
    %828 = vperm.xlu0 %827, %v778
    %v829 = vpop.permute.xlu0 %828
    %832 = vset.pattern.permute.xlu0 0
    %833 = vperm.xlu0 %832, %v780
    %v834 = vpop.permute.xlu0 %833
    %837 = vset.pattern.permute.xlu0 0
    %838 = vperm.xlu0 %837, %v781
    %v839 = vpop.permute.xlu0 %838
    %842 = vset.pattern.permute.xlu0 0
    %843 = vperm.xlu0 %842, %v783
    %v844 = vpop.permute.xlu0 %843
    %847 = vset.pattern.permute.xlu0 0
    %848 = vperm.xlu0 %847, %v784
    %v849 = vpop.permute.xlu0 %848
    %852 = vset.pattern.permute.xlu0 0
    %853 = vperm.xlu0 %852, %v786
    %v854 = vpop.permute.xlu0 %853
    %857 = vset.pattern.permute.xlu0 0
    %858 = vperm.xlu0 %857, %v787
    %v859 = vpop.permute.xlu0 %858
    %862 = vset.pattern.permute.xlu0 0
    %863 = vperm.xlu0 %862, %v789
    %v864 = vpop.permute.xlu0 %863
    %867 = vset.pattern.permute.xlu0 0
    %868 = vperm.xlu0 %867, %v790
    %v869 = vpop.permute.xlu0 %868
    %v871 = vmul.f32 %v794, %v127
    %v872 = vmul.f32 %v799, %v128
    %v873 = vmul.f32 %v804, %v129
    %v874 = vmul.f32 %v809, %v130
    %v875 = vmul.f32 %v814, %v131
    %v876 = vmul.f32 %v819, %v132
    %v877 = vmul.f32 %v824, %v133
    %v878 = vmul.f32 %v829, %v134
    %v879 = vmul.f32 %v834, %v135
    %v880 = vmul.f32 %v839, %v136
    %v881 = vmul.f32 %v844, %v137
    %v882 = vmul.f32 %v849, %v138
    %v883 = vmul.f32 %v854, %v139
    %v884 = vmul.f32 %v859, %v140
    %v885 = vmul.f32 %v864, %v141
    %v886 = vmul.f32 %v869, %v142
    %vm887 = vcmask 588800
    %v888 = vsel %vm887, %v871, 0.0
    %v889 = vsel %vm887, %v872, 0.0
    %v890 = vadd.f32 %v888, %v889
    %v891 = vrot.slane %v890, 4
    %v892 = vadd.f32 %v890, %v891
    %v893 = vrot.slane %v892, 2
    %v894 = vadd.f32 %v892, %v893
    %v895 = vrot.slane %v894, 1
    %v896 = vadd.f32 %v894, %v895
    %v897 = vsel %vm887, %v873, 0.0
    %v898 = vsel %vm887, %v874, 0.0
    %v899 = vadd.f32 %v897, %v898
    %v900 = vrot.slane %v899, 4
    %v901 = vadd.f32 %v899, %v900
    %v902 = vrot.slane %v901, 2
    %v903 = vadd.f32 %v901, %v902
    %v904 = vrot.slane %v903, 1
    %v905 = vadd.f32 %v903, %v904
    %v906 = vsel %vm887, %v875, 0.0
    %v907 = vsel %vm887, %v876, 0.0
    %v908 = vadd.f32 %v906, %v907
    %v909 = vrot.slane %v908, 4
    %v910 = vadd.f32 %v908, %v909
    %v911 = vrot.slane %v910, 2
    %v912 = vadd.f32 %v910, %v911
    %v913 = vrot.slane %v912, 1
    %v914 = vadd.f32 %v912, %v913
    %v915 = vsel %vm887, %v877, 0.0
    %v916 = vsel %vm887, %v878, 0.0
    %v917 = vadd.f32 %v915, %v916
    %v918 = vrot.slane %v917, 4
    %v919 = vadd.f32 %v917, %v918
    %v920 = vrot.slane %v919, 2
    %v921 = vadd.f32 %v919, %v920
    %v922 = vrot.slane %v921, 1
    %v923 = vadd.f32 %v921, %v922
    %v924 = vsel %vm887, %v879, 0.0
    %v925 = vsel %vm887, %v880, 0.0
    %v926 = vadd.f32 %v924, %v925
    %v927 = vrot.slane %v926, 4
    %v928 = vadd.f32 %v926, %v927
    %v929 = vrot.slane %v928, 2
    %v930 = vadd.f32 %v928, %v929
    %v931 = vrot.slane %v930, 1
    %v932 = vadd.f32 %v930, %v931
    %v933 = vsel %vm887, %v881, 0.0
    %v934 = vsel %vm887, %v882, 0.0
    %v935 = vadd.f32 %v933, %v934
    %v936 = vrot.slane %v935, 4
    %v937 = vadd.f32 %v935, %v936
    %v938 = vrot.slane %v937, 2
    %v939 = vadd.f32 %v937, %v938
    %v940 = vrot.slane %v939, 1
    %v941 = vadd.f32 %v939, %v940
    %v942 = vsel %vm887, %v883, 0.0
    %v943 = vsel %vm887, %v884, 0.0
    %v944 = vadd.f32 %v942, %v943
    %v945 = vrot.slane %v944, 4
    %v946 = vadd.f32 %v944, %v945
    %v947 = vrot.slane %v946, 2
    %v948 = vadd.f32 %v946, %v947
    %v949 = vrot.slane %v948, 1
    %v950 = vadd.f32 %v948, %v949
    %v951 = vsel %vm887, %v885, 0.0
    %v952 = vsel %vm887, %v886, 0.0
    %v953 = vadd.f32 %v951, %v952
    %v954 = vrot.slane %v953, 4
    %v955 = vadd.f32 %v953, %v954
    %v956 = vrot.slane %v955, 2
    %v957 = vadd.f32 %v955, %v956
    %v958 = vrot.slane %v957, 1
    %v959 = vadd.f32 %v957, %v958
    %v968 = vsel %vm471, %v905, %v896
    %v969 = vsel %vm473, %v914, %v968
    %v970 = vsel %vm475, %v923, %v969
    %v971 = vsel %vm477, %v932, %v970
    %v972 = vsel %vm479, %v941, %v971
    %v973 = vsel %vm481, %v950, %v972
    %v974 = vsel %vm483, %v959, %v973
    %975 = vrot.lane.b32.xlu0 %v974, 32
    %v976 = vpop.permute.xlu0 %975
    %979 = vrot.lane.b32.xlu0 %v183, 104
    %v980 = vpop.permute.xlu0 %979
    %v982 = vsel %vm330, %v185, %v976
    %vm983 = vcmask 850944
    %v984 = vsel %vm983, %v982, %v980
    %v986 = vlaneseq
    %v987 = vshrl.u32 %v986, 7
    %v988 = vsub.s32 0, %v987
    %v989 = vrot.slane %v177, %v988
    %vm991 = vcmask 64512
    %v992 = vsel %vm991, %v980, 0
    %994 = vmatprep.subr.mxu0 0.0
    %995 = vmatpush1.msra.mxu0 %v160
    %996 = vmatprep.subr.mxu0 0.0
    %997 = vmatpush1.msra.mxu0 %v161
    %998 = vmatprep.subr.mxu0 0.0
    %999 = vmatpush1.msra.mxu0 %v162
    %1000 = vmatprep.subr.mxu0 0.0
    %1001 = vmatpush1.msra.mxu0 %v163
    %1002 = vmatprep.subr.mxu0 0.0
    %1003 = vmatpush1.msra.mxu0 %v164
    %1004 = vmatprep.subr.mxu0 0.0
    %1005 = vmatpush1.msra.mxu0 %v165
    %1006 = vmatprep.subr.mxu0 0.0
    %1007 = vmatpush1.msra.mxu0 %v166
    %1008 = vmatprep.subr.mxu0 0.0
    %1009 = vmatpush1.msra.mxu0 %v167
    %1010 = vmatprep.subr.mxu0 0.0
    %1011 = vmatpush1.msra.mxu0 %v168
    %1012 = vmatprep.subr.mxu0 0.0
    %1013 = vmatpush1.msra.mxu0 %v169
    %1014 = vmatprep.subr.mxu0 0.0
    %1015 = vmatpush1.msra.mxu0 %v170
    %1016 = vmatprep.subr.mxu0 0.0
    %1017 = vmatpush1.msra.mxu0 %v171
    %1018 = vmatprep.subr.mxu0 0.0
    %1019 = vmatpush1.msra.mxu0 %v172
    %1020 = vmatprep.subr.mxu0 0.0
    %1021 = vmatpush1.msra.mxu0 %v173
    %1022 = vmatprep.subr.mxu0 0.0
    %1023 = vmatpush1.msra.mxu0 %v174
    %1024 = vmatprep.subr.mxu0 0.0
    %1025 = vmatpush1.msra.mxu0 %v175
    %1026 = vmatprep.subr.mxu0 0.0
    %1027 = vmatpush1.msra.mxu0 %v176
    %1028 = vmatprep.subr.mxu0 0.0
    %1029 = vmatpush1.msra.mxu0 0.0
    %1030 = vmatprep.subr.mxu0 0.0
    %1031 = vmatpush1.msra.mxu0 0.0
    %1032 = vmatprep.subr.mxu0 0.0
    %1033 = vmatpush1.msra.mxu0 0.0
    %1034 = vmatprep.subr.mxu0 0.0
    %1035 = vmatpush1.msra.mxu0 0.0
    %1036 = vmatprep.subr.mxu0 0.0
    %1037 = vmatpush1.msra.mxu0 0.0
    %1038 = vmatprep.subr.mxu0 0.0
    %1039 = vmatpush1.msra.mxu0 0.0
    %1040 = vmatprep.subr.mxu0 0.0
    %1041 = vmatpush1.msra.mxu0 0.0
    %1042 = vmatprep.subr.mxu0 0.0
    %1043 = vmatpush1.msra.mxu0 0.0
    %1044 = vmatprep.subr.mxu0 0.0
    %1045 = vmatpush1.msra.mxu0 0.0
    %1046 = vmatprep.subr.mxu0 0.0
    %1047 = vmatpush1.msra.mxu0 0.0
    %1048 = vmatprep.subr.mxu0 0.0
    %1049 = vmatpush1.msra.mxu0 0.0
    %1050 = vmatprep.subr.mxu0 0.0
    %1051 = vmatpush1.msra.mxu0 0.0
    %1052 = vmatprep.subr.mxu0 0.0
    %1053 = vmatpush1.msra.mxu0 0.0
    %1054 = vmatprep.subr.mxu0 0.0
    %1055 = vmatpush1.msra.mxu0 0.0
    %1056 = vmatprep.subr.mxu0 0.0
    %1057 = vmatpush1.msra.mxu0 0.0
    %1058 = vmatprep.mubr.f32.mxu0 %v992
    %1059 = vmatmul.mubr.f32.gmra.mrb[0].mxu0 %v984
    %v1060 = vpop.f32.mrb[0].mxu0
    %v1061 = vadd.f32 %v989, %v1060
    %v1062 = vpop.f32.mrb[0].mxu0
    %1063 = vdwg.mxu0
    %v1064 = vxor.u32 %v1061, 2147483648
    %v1065 = vmul.f32 %v1064, 1.442695
    %v1066 = vpow.pop %v1065
    %v1067 = vadd.f32 %v1066, 1.0
    %v1068 = vrcp.pop %v1067
    %v1069 = vmul.f32 1.0, %v1068
    %1071 = vrot.lane.b32.xlu0 %v1061, 32
    %v1072 = vpop.permute.xlu0 %1071
    %v1074 = vmul.f32 %v1069, %v1072
    %1076 = vrot.lane.b32.xlu0 %v1074, 64
    %v1077 = vpop.permute.xlu0 %1076
    %v1079 = vadd.f32 %v1061, %v1077
    %v1080 = vtanh.pop %v1079
    %v1081 = vsub.f32 1.0, %v1069
    %1083 = vrot.lane.b32.xlu0 %v1080, 96
    %v1084 = vpop.permute.xlu0 %1083
    %v1086 = vmul.f32 %v1081, %v1084
    %1087 = vrot.lane.b32.xlu0 %v183, 32
    %v1088 = vpop.permute.xlu0 %1087
    %v1090 = vmul.f32 %v1069, %v1088
    %v1091 = vadd.f32 %v1086, %v1090
    %v1093 = vlaneseq
    %v1094 = vshrl.u32 %v1093, 7
    %v1095 = vsub.s32 0, %v1094
    %v1096 = vrot.slane %v182, %v1095
    %1099 = vrot.lane.b32.xlu0 %v1091, 96
    %v1100 = vpop.permute.xlu0 %1099
    %v1101 = vsel %vm330, %v1100, 0
    %1103 = vmatprep.subr.mxu0 0.0
    %1104 = vmatpush1.msra.mxu0 %v178
    %1105 = vmatprep.subr.mxu0 0.0
    %1106 = vmatpush1.msra.mxu0 %v179
    %1107 = vmatprep.subr.mxu0 0.0
    %1108 = vmatpush1.msra.mxu0 %v180
    %1109 = vmatprep.subr.mxu0 0.0
    %1110 = vmatpush1.msra.mxu0 %v181
    %1111 = vmatprep.subr.mxu0 0.0
    %1112 = vmatpush1.msra.mxu0 0.0
    %1113 = vmatprep.subr.mxu0 0.0
    %1114 = vmatpush1.msra.mxu0 0.0
    %1115 = vmatprep.subr.mxu0 0.0
    %1116 = vmatpush1.msra.mxu0 0.0
    %1117 = vmatprep.subr.mxu0 0.0
    %1118 = vmatpush1.msra.mxu0 0.0
    %1119 = vmatprep.subr.mxu0 0.0
    %1120 = vmatpush1.msra.mxu0 0.0
    %1121 = vmatprep.subr.mxu0 0.0
    %1122 = vmatpush1.msra.mxu0 0.0
    %1123 = vmatprep.subr.mxu0 0.0
    %1124 = vmatpush1.msra.mxu0 0.0
    %1125 = vmatprep.subr.mxu0 0.0
    %1126 = vmatpush1.msra.mxu0 0.0
    %1127 = vmatprep.subr.mxu0 0.0
    %1128 = vmatpush1.msra.mxu0 0.0
    %1129 = vmatprep.subr.mxu0 0.0
    %1130 = vmatpush1.msra.mxu0 0.0
    %1131 = vmatprep.subr.mxu0 0.0
    %1132 = vmatpush1.msra.mxu0 0.0
    %1133 = vmatprep.subr.mxu0 0.0
    %1134 = vmatpush1.msra.mxu0 0.0
    %1135 = vmatprep.subr.mxu0 0.0
    %1136 = vmatpush1.msra.mxu0 0.0
    %1137 = vmatprep.subr.mxu0 0.0
    %1138 = vmatpush1.msra.mxu0 0.0
    %1139 = vmatprep.subr.mxu0 0.0
    %1140 = vmatpush1.msra.mxu0 0.0
    %1141 = vmatprep.subr.mxu0 0.0
    %1142 = vmatpush1.msra.mxu0 0.0
    %1143 = vmatprep.subr.mxu0 0.0
    %1144 = vmatpush1.msra.mxu0 0.0
    %1145 = vmatprep.subr.mxu0 0.0
    %1146 = vmatpush1.msra.mxu0 0.0
    %1147 = vmatprep.subr.mxu0 0.0
    %1148 = vmatpush1.msra.mxu0 0.0
    %1149 = vmatprep.subr.mxu0 0.0
    %1150 = vmatpush1.msra.mxu0 0.0
    %1151 = vmatprep.subr.mxu0 0.0
    %1152 = vmatpush1.msra.mxu0 0.0
    %1153 = vmatprep.subr.mxu0 0.0
    %1154 = vmatpush1.msra.mxu0 0.0
    %1155 = vmatprep.subr.mxu0 0.0
    %1156 = vmatpush1.msra.mxu0 0.0
    %1157 = vmatprep.subr.mxu0 0.0
    %1158 = vmatpush1.msra.mxu0 0.0
    %1159 = vmatprep.subr.mxu0 0.0
    %1160 = vmatpush1.msra.mxu0 0.0
    %1161 = vmatprep.subr.mxu0 0.0
    %1162 = vmatpush1.msra.mxu0 0.0
    %1163 = vmatprep.subr.mxu0 0.0
    %1164 = vmatpush1.msra.mxu0 0.0
    %1165 = vmatprep.subr.mxu0 0.0
    %1166 = vmatpush1.msra.mxu0 0.0
    %1167 = vmatprep.mubr.f32.mxu0 0.0
    %1168 = vmatmul.mubr.f32.gmra.mrb[0].mxu0 %v1101
    %v1169 = vpop.f32.mrb[0].mxu0
    %v1170 = vadd.f32 %v1096, %v1169
    %v1171 = vpop.f32.mrb[0].mxu0
    %1172 = vdwg.mxu0
    %v1173 = vsel %vm330, %v1170, -inf
    %1174 = vmax.xlane.f32.xlu0 %v1173
    %v1175 = vpop.xlane.xlu0 %1174
    %v1176 = vsub.f32 %v1170, %v1175
    %v1177 = vmul.f32 %v1176, 1.442695
    %v1178 = vpow.pop %v1177
    %v1179 = vsel %vm330, %v1178, 0.0
    %1180 = vadd.xlane.f32.xlu0 %v1179
    %v1181 = vpop.xlane.xlu0 %1180
    %v1182 = vrcp.pop %v1181
    %v1183 = vmul.f32 %v1178, %v1182
    %v1184 = vadd.s32 %v396, 4294967232
    %v1185 = vlaneseq
    %v1186 = vshrl.u32 %v1185, 7
    %v1187 = vsub.s32 %v1184, %v1186
    %v1188 = vrot.slane %v794, %v1187
    %v1189 = vadd.s32 %v396, 4294967224
    %v1190 = vlaneseq
    %v1191 = vshrl.u32 %v1190, 7
    %v1192 = vsub.s32 %v1189, %v1191
    %v1193 = vrot.slane %v799, %v1192
    %vm1194 = vcmask 654912
    %v1195 = vsel %vm1194, %v1193, %v1188
    %v1196 = vlaneseq
    %v1197 = vshrl.u32 %v1196, 7
    %v1198 = vsub.s32 %v1184, %v1197
    %v1199 = vrot.slane %v804, %v1198
    %v1200 = vlaneseq
    %v1201 = vshrl.u32 %v1200, 7
    %v1202 = vsub.s32 %v1189, %v1201
    %v1203 = vrot.slane %v809, %v1202
    %v1204 = vsel %vm1194, %v1203, %v1199
    %v1205 = vlaneseq
    %v1206 = vshrl.u32 %v1205, 7
    %v1207 = vsub.s32 %v1184, %v1206
    %v1208 = vrot.slane %v814, %v1207
    %v1209 = vlaneseq
    %v1210 = vshrl.u32 %v1209, 7
    %v1211 = vsub.s32 %v1189, %v1210
    %v1212 = vrot.slane %v819, %v1211
    %v1213 = vsel %vm1194, %v1212, %v1208
    %v1214 = vlaneseq
    %v1215 = vshrl.u32 %v1214, 7
    %v1216 = vsub.s32 %v1184, %v1215
    %v1217 = vrot.slane %v824, %v1216
    %v1218 = vlaneseq
    %v1219 = vshrl.u32 %v1218, 7
    %v1220 = vsub.s32 %v1189, %v1219
    %v1221 = vrot.slane %v829, %v1220
    %v1222 = vsel %vm1194, %v1221, %v1217
    %v1223 = vlaneseq
    %v1224 = vshrl.u32 %v1223, 7
    %v1225 = vsub.s32 %v1184, %v1224
    %v1226 = vrot.slane %v834, %v1225
    %v1227 = vlaneseq
    %v1228 = vshrl.u32 %v1227, 7
    %v1229 = vsub.s32 %v1189, %v1228
    %v1230 = vrot.slane %v839, %v1229
    %v1231 = vsel %vm1194, %v1230, %v1226
    %v1232 = vlaneseq
    %v1233 = vshrl.u32 %v1232, 7
    %v1234 = vsub.s32 %v1184, %v1233
    %v1235 = vrot.slane %v844, %v1234
    %v1236 = vlaneseq
    %v1237 = vshrl.u32 %v1236, 7
    %v1238 = vsub.s32 %v1189, %v1237
    %v1239 = vrot.slane %v849, %v1238
    %v1240 = vsel %vm1194, %v1239, %v1235
    %v1241 = vlaneseq
    %v1242 = vshrl.u32 %v1241, 7
    %v1243 = vsub.s32 %v1184, %v1242
    %v1244 = vrot.slane %v854, %v1243
    %v1245 = vlaneseq
    %v1246 = vshrl.u32 %v1245, 7
    %v1247 = vsub.s32 %v1189, %v1246
    %v1248 = vrot.slane %v859, %v1247
    %v1249 = vsel %vm1194, %v1248, %v1244
    %v1250 = vlaneseq
    %v1251 = vshrl.u32 %v1250, 7
    %v1252 = vsub.s32 %v1184, %v1251
    %v1253 = vrot.slane %v864, %v1252
    %v1254 = vlaneseq
    %v1255 = vshrl.u32 %v1254, 7
    %v1256 = vsub.s32 %v1189, %v1255
    %v1257 = vrot.slane %v869, %v1256
    %v1258 = vsel %vm1194, %v1257, %v1253
    %v1259 = vsel %vm471, %v1204, %v1195
    %v1260 = vsel %vm473, %v1213, %v1259
    %v1261 = vsel %vm475, %v1222, %v1260
    %v1262 = vsel %vm477, %v1231, %v1261
    %v1263 = vsel %vm479, %v1240, %v1262
    %v1264 = vsel %vm481, %v1249, %v1263
    %v1265 = vsel %vm483, %v1258, %v1264
    %v1267 = vsel %vm330, %v1183, %v1091
    %vm1268 = vcmask 523264
    %v1269 = vsel %vm1268, %v1267, %v1265
    %vm1270 = vcmask 654336
    %v1271 = vsel %vm1270, %v1269, 0.0
    %1272 = vst [vmem:[#allocation14] sm:$0xff] %v1271
    %s1273 = scalar_lea.vmem [#allocation2], 8
    %v1274 = vld [vmem:[%s1273] sm:$0xff]
    %v1276 = vcombine.high %v1170, %v1170
    %v1278 = vunpack.c.l.s4 1966171168
    %v1279 = vunpack.c.0.s8 %v1278
    %v1280 = vlaneseq
    %v1281 = vshrl.u32 %v1280, 7
    %v1282 = vsub.s32 %v1279, %v1281
    %v1283 = vrot.slane %v1170, %v1282
    %v1285 = vunpack.c.l.s4 1966171168
    %v1286 = vunpack.c.0.s8 %v1285
    %v1287 = vlaneseq
    %v1288 = vshrl.u32 %v1287, 7
    %v1289 = vsub.s32 %v1286, %v1288
    %v1290 = vrot.slane %v1276, %v1289
    %v1291 = vcombine.high %v1283, %v1283
    %v1292 = vcombine.high %v1290, %v1290
    %v1294 = vunpack.c.l.s4 1966171168
    %v1295 = vunpack.c.0.s8 %v1294
    %v1296 = vlaneseq
    %v1297 = vshrl.u32 %v1296, 7
    %v1298 = vsub.s32 %v1295, %v1297
    %v1299 = vrot.slane %v1283, %v1298
    %v1301 = vunpack.c.l.s4 1966171168
    %v1302 = vunpack.c.0.s8 %v1301
    %v1303 = vlaneseq
    %v1304 = vshrl.u32 %v1303, 7
    %v1305 = vsub.s32 %v1302, %v1304
    %v1306 = vrot.slane %v1290, %v1305
    %v1308 = vunpack.c.l.s4 1966171168
    %v1309 = vunpack.c.0.s8 %v1308
    %v1310 = vlaneseq
    %v1311 = vshrl.u32 %v1310, 7
    %v1312 = vsub.s32 %v1309, %v1311
    %v1313 = vrot.slane %v1291, %v1312
    %v1315 = vunpack.c.l.s4 1966171168
    %v1316 = vunpack.c.0.s8 %v1315
    %v1317 = vlaneseq
    %v1318 = vshrl.u32 %v1317, 7
    %v1319 = vsub.s32 %v1316, %v1318
    %v1320 = vrot.slane %v1292, %v1319
    %v1321 = vcombine.high %v1299, %v1299
    %v1322 = vcombine.high %v1306, %v1306
    %v1323 = vcombine.high %v1313, %v1313
    %v1324 = vcombine.high %v1320, %v1320
    %v1325 = vlaneseq
    %v1326 = vshrl.u32 %v1325, 7
    %v1327 = vsub.s32 0, %v1326
    %v1328 = vrot.slane %v1299, %v1327
    %v1329 = vlaneseq
    %v1330 = vshrl.u32 %v1329, 7
    %v1331 = vsub.s32 0, %v1330
    %v1332 = vrot.slane %v1313, %v1331
    %v1333 = vlaneseq
    %v1334 = vshrl.u32 %v1333, 7
    %v1335 = vsub.s32 0, %v1334
    %v1336 = vrot.slane %v1321, %v1335
    %v1337 = vlaneseq
    %v1338 = vshrl.u32 %v1337, 7
    %v1339 = vsub.s32 0, %v1338
    %v1340 = vrot.slane %v1323, %v1339
    %v1341 = vlaneseq
    %v1342 = vshrl.u32 %v1341, 7
    %v1343 = vsub.s32 0, %v1342
    %v1344 = vrot.slane %v1306, %v1343
    %v1345 = vlaneseq
    %v1346 = vshrl.u32 %v1345, 7
    %v1347 = vsub.s32 0, %v1346
    %v1348 = vrot.slane %v1320, %v1347
    %v1349 = vlaneseq
    %v1350 = vshrl.u32 %v1349, 7
    %v1351 = vsub.s32 0, %v1350
    %v1352 = vrot.slane %v1322, %v1351
    %v1353 = vlaneseq
    %v1354 = vshrl.u32 %v1353, 7
    %v1355 = vsub.s32 0, %v1354
    %v1356 = vrot.slane %v1324, %v1355
    %1357 = vrot.lane.b32.xlu0 %v1328, 96
    %v1358 = vpop.permute.xlu0 %1357
    %1359 = vrot.lane.b32.xlu0 %v1332, 96
    %v1360 = vpop.permute.xlu0 %1359
    %1361 = vrot.lane.b32.xlu0 %v1336, 96
    %v1362 = vpop.permute.xlu0 %1361
    %1363 = vrot.lane.b32.xlu0 %v1340, 96
    %v1364 = vpop.permute.xlu0 %1363
    %1365 = vrot.lane.b32.xlu0 %v1344, 96
    %v1366 = vpop.permute.xlu0 %1365
    %1367 = vrot.lane.b32.xlu0 %v1348, 96
    %v1368 = vpop.permute.xlu0 %1367
    %1369 = vrot.lane.b32.xlu0 %v1352, 96
    %v1370 = vpop.permute.xlu0 %1369
    %1371 = vrot.lane.b32.xlu0 %v1356, 96
    %v1372 = vpop.permute.xlu0 %1371
    %v1381 = vadd.f32 %v143, %v1358
    %v1382 = vadd.f32 %v144, %v1358
    %v1383 = vadd.f32 %v145, %v1360
    %v1384 = vadd.f32 %v146, %v1360
    %v1385 = vadd.f32 %v147, %v1362
    %v1386 = vadd.f32 %v148, %v1362
    %v1387 = vadd.f32 %v149, %v1364
    %v1388 = vadd.f32 %v150, %v1364
    %v1389 = vadd.f32 %v151, %v1366
    %v1390 = vadd.f32 %v152, %v1366
    %v1391 = vadd.f32 %v153, %v1368
    %v1392 = vadd.f32 %v154, %v1368
    %v1393 = vadd.f32 %v155, %v1370
    %v1394 = vadd.f32 %v156, %v1370
    %v1395 = vadd.f32 %v157, %v1372
    %v1396 = vadd.f32 %v158, %v1372
    %v1397 = vtanh.pop %v1381
    %v1398 = vtanh.pop %v1382
    %v1399 = vtanh.pop %v1383
    %v1400 = vtanh.pop %v1384
    %v1401 = vtanh.pop %v1385
    %v1402 = vtanh.pop %v1386
    %v1403 = vtanh.pop %v1387
    %v1404 = vtanh.pop %v1388
    %v1405 = vtanh.pop %v1389
    %v1406 = vtanh.pop %v1390
    %v1407 = vtanh.pop %v1391
    %v1408 = vtanh.pop %v1392
    %v1409 = vtanh.pop %v1393
    %v1410 = vtanh.pop %v1394
    %v1411 = vtanh.pop %v1395
    %v1412 = vtanh.pop %v1396
    %v1413 = vmul.f32 %v1397, %v312
    %v1414 = vmul.f32 %v1398, %v312
    %v1415 = vmul.f32 %v1399, %v312
    %v1416 = vmul.f32 %v1400, %v312
    %v1417 = vmul.f32 %v1401, %v312
    %v1418 = vmul.f32 %v1402, %v312
    %v1419 = vmul.f32 %v1403, %v312
    %v1420 = vmul.f32 %v1404, %v312
    %v1421 = vmul.f32 %v1405, %v312
    %v1422 = vmul.f32 %v1406, %v312
    %v1423 = vmul.f32 %v1407, %v312
    %v1424 = vmul.f32 %v1408, %v312
    %v1425 = vmul.f32 %v1409, %v312
    %v1426 = vmul.f32 %v1410, %v312
    %v1427 = vmul.f32 %v1411, %v312
    %v1428 = vmul.f32 %v1412, %v312
    %v1429 = vsel %vm330, %v1413, 0.0
    %1430 = vadd.xlane.f32.xlu0 %v1429
    %v1431 = vpop.xlane.xlu0 %1430
    %v1432 = vsel %vm330, %v1414, 0.0
    %1433 = vadd.xlane.f32.xlu0 %v1432
    %v1434 = vpop.xlane.xlu0 %1433
    %v1435 = vsel %vm330, %v1415, 0.0
    %1436 = vadd.xlane.f32.xlu0 %v1435
    %v1437 = vpop.xlane.xlu0 %1436
    %v1438 = vsel %vm330, %v1416, 0.0
    %1439 = vadd.xlane.f32.xlu0 %v1438
    %v1440 = vpop.xlane.xlu0 %1439
    %v1441 = vsel %vm330, %v1417, 0.0
    %1442 = vadd.xlane.f32.xlu0 %v1441
    %v1443 = vpop.xlane.xlu0 %1442
    %v1444 = vsel %vm330, %v1418, 0.0
    %1445 = vadd.xlane.f32.xlu0 %v1444
    %v1446 = vpop.xlane.xlu0 %1445
    %v1447 = vsel %vm330, %v1419, 0.0
    %1448 = vadd.xlane.f32.xlu0 %v1447
    %v1449 = vpop.xlane.xlu0 %1448
    %v1450 = vsel %vm330, %v1420, 0.0
    %1451 = vadd.xlane.f32.xlu0 %v1450
    %v1452 = vpop.xlane.xlu0 %1451
    %v1453 = vsel %vm330, %v1421, 0.0
    %1454 = vadd.xlane.f32.xlu0 %v1453
    %v1455 = vpop.xlane.xlu0 %1454
    %v1456 = vsel %vm330, %v1422, 0.0
    %1457 = vadd.xlane.f32.xlu0 %v1456
    %v1458 = vpop.xlane.xlu0 %1457
    %v1459 = vsel %vm330, %v1423, 0.0
    %1460 = vadd.xlane.f32.xlu0 %v1459
    %v1461 = vpop.xlane.xlu0 %1460
    %v1462 = vsel %vm330, %v1424, 0.0
    %1463 = vadd.xlane.f32.xlu0 %v1462
    %v1464 = vpop.xlane.xlu0 %1463
    %v1465 = vsel %vm330, %v1425, 0.0
    %1466 = vadd.xlane.f32.xlu0 %v1465
    %v1467 = vpop.xlane.xlu0 %1466
    %v1468 = vsel %vm330, %v1426, 0.0
    %1469 = vadd.xlane.f32.xlu0 %v1468
    %v1470 = vpop.xlane.xlu0 %1469
    %v1471 = vsel %vm330, %v1427, 0.0
    %1472 = vadd.xlane.f32.xlu0 %v1471
    %v1473 = vpop.xlane.xlu0 %1472
    %v1474 = vsel %vm330, %v1428, 0.0
    %1475 = vadd.xlane.f32.xlu0 %v1474
    %v1476 = vpop.xlane.xlu0 %1475
    %v1493 = vlaneseq
    %v1494 = vshrl.u32 %v1493, 7
    %v1495 = vsub.s32 %v396, %v1494
    %v1496 = vrot.slane %v1431, %v1495
    %v1497 = vlaneseq
    %v1498 = vshrl.u32 %v1497, 7
    %v1499 = vsub.s32 %v401, %v1498
    %v1500 = vrot.slane %v1434, %v1499
    %v1501 = vsel %vm406, %v1500, %v1496
    %v1502 = vlaneseq
    %v1503 = vshrl.u32 %v1502, 7
    %v1504 = vsub.s32 %v396, %v1503
    %v1505 = vrot.slane %v1437, %v1504
    %v1506 = vlaneseq
    %v1507 = vshrl.u32 %v1506, 7
    %v1508 = vsub.s32 %v401, %v1507
    %v1509 = vrot.slane %v1440, %v1508
    %v1510 = vsel %vm406, %v1509, %v1505
    %v1511 = vlaneseq
    %v1512 = vshrl.u32 %v1511, 7
    %v1513 = vsub.s32 %v396, %v1512
    %v1514 = vrot.slane %v1443, %v1513
    %v1515 = vlaneseq
    %v1516 = vshrl.u32 %v1515, 7
    %v1517 = vsub.s32 %v401, %v1516
    %v1518 = vrot.slane %v1446, %v1517
    %v1519 = vsel %vm406, %v1518, %v1514
    %v1520 = vlaneseq
    %v1521 = vshrl.u32 %v1520, 7
    %v1522 = vsub.s32 %v396, %v1521
    %v1523 = vrot.slane %v1449, %v1522
    %v1524 = vlaneseq
    %v1525 = vshrl.u32 %v1524, 7
    %v1526 = vsub.s32 %v401, %v1525
    %v1527 = vrot.slane %v1452, %v1526
    %v1528 = vsel %vm406, %v1527, %v1523
    %v1529 = vlaneseq
    %v1530 = vshrl.u32 %v1529, 7
    %v1531 = vsub.s32 %v396, %v1530
    %v1532 = vrot.slane %v1455, %v1531
    %v1533 = vlaneseq
    %v1534 = vshrl.u32 %v1533, 7
    %v1535 = vsub.s32 %v401, %v1534
    %v1536 = vrot.slane %v1458, %v1535
    %v1537 = vsel %vm406, %v1536, %v1532
    %v1538 = vlaneseq
    %v1539 = vshrl.u32 %v1538, 7
    %v1540 = vsub.s32 %v396, %v1539
    %v1541 = vrot.slane %v1461, %v1540
    %v1542 = vlaneseq
    %v1543 = vshrl.u32 %v1542, 7
    %v1544 = vsub.s32 %v401, %v1543
    %v1545 = vrot.slane %v1464, %v1544
    %v1546 = vsel %vm406, %v1545, %v1541
    %v1547 = vlaneseq
    %v1548 = vshrl.u32 %v1547, 7
    %v1549 = vsub.s32 %v396, %v1548
    %v1550 = vrot.slane %v1467, %v1549
    %v1551 = vlaneseq
    %v1552 = vshrl.u32 %v1551, 7
    %v1553 = vsub.s32 %v401, %v1552
    %v1554 = vrot.slane %v1470, %v1553
    %v1555 = vsel %vm406, %v1554, %v1550
    %v1556 = vlaneseq
    %v1557 = vshrl.u32 %v1556, 7
    %v1558 = vsub.s32 %v396, %v1557
    %v1559 = vrot.slane %v1473, %v1558
    %v1560 = vlaneseq
    %v1561 = vshrl.u32 %v1560, 7
    %v1562 = vsub.s32 %v401, %v1561
    %v1563 = vrot.slane %v1476, %v1562
    %v1564 = vsel %vm406, %v1563, %v1559
    %v1565 = vsel %vm471, %v1510, %v1501
    %v1566 = vsel %vm473, %v1519, %v1565
    %v1567 = vsel %vm475, %v1528, %v1566
    %v1568 = vsel %vm477, %v1537, %v1567
    %v1569 = vsel %vm479, %v1546, %v1568
    %v1570 = vsel %vm481, %v1555, %v1569
    %v1571 = vsel %vm483, %v1564, %v1570
    %v1573 = vsel %vm486, %v1571, -inf
    %1574 = vmax.xlane.f32.xlu0 %v1573
    %v1575 = vpop.xlane.xlu0 %1574
    %v1577 = vlaneseq
    %v1578 = vshrl.u32 %v1577, 7
    %v1579 = vsub.s32 0, %v1578
    %v1580 = vrot.slane %v1575, %v1579
    %v1581 = vlaneseq
    %v1582 = vshrl.u32 %v1581, 7
    %v1583 = vsub.s32 1, %v1582
    %v1584 = vrot.slane %v1575, %v1583
    %v1585 = vlaneseq
    %v1586 = vshrl.u32 %v1585, 7
    %v1587 = vsub.s32 2, %v1586
    %v1588 = vrot.slane %v1575, %v1587
    %v1589 = vlaneseq
    %v1590 = vshrl.u32 %v1589, 7
    %v1591 = vsub.s32 3, %v1590
    %v1592 = vrot.slane %v1575, %v1591
    %v1593 = vlaneseq
    %v1594 = vshrl.u32 %v1593, 7
    %v1595 = vsub.s32 4, %v1594
    %v1596 = vrot.slane %v1575, %v1595
    %v1597 = vlaneseq
    %v1598 = vshrl.u32 %v1597, 7
    %v1599 = vsub.s32 5, %v1598
    %v1600 = vrot.slane %v1575, %v1599
    %v1601 = vlaneseq
    %v1602 = vshrl.u32 %v1601, 7
    %v1603 = vsub.s32 6, %v1602
    %v1604 = vrot.slane %v1575, %v1603
    %v1605 = vlaneseq
    %v1606 = vshrl.u32 %v1605, 7
    %v1607 = vsub.s32 7, %v1606
    %v1608 = vrot.slane %v1575, %v1607
    %v1617 = vsub.f32 %v1431, %v1580
    %v1618 = vsub.f32 %v1434, %v1580
    %v1619 = vsub.f32 %v1437, %v1584
    %v1620 = vsub.f32 %v1440, %v1584
    %v1621 = vsub.f32 %v1443, %v1588
    %v1622 = vsub.f32 %v1446, %v1588
    %v1623 = vsub.f32 %v1449, %v1592
    %v1624 = vsub.f32 %v1452, %v1592
    %v1625 = vsub.f32 %v1455, %v1596
    %v1626 = vsub.f32 %v1458, %v1596
    %v1627 = vsub.f32 %v1461, %v1600
    %v1628 = vsub.f32 %v1464, %v1600
    %v1629 = vsub.f32 %v1467, %v1604
    %v1630 = vsub.f32 %v1470, %v1604
    %v1631 = vsub.f32 %v1473, %v1608
    %v1632 = vsub.f32 %v1476, %v1608
    %v1633 = vmul.f32 %v1617, 1.442695
    %v1634 = vpow.pop %v1633
    %v1635 = vmul.f32 %v1618, 1.442695
    %v1636 = vpow.pop %v1635
    %v1637 = vmul.f32 %v1619, 1.442695
    %v1638 = vpow.pop %v1637
    %v1639 = vmul.f32 %v1620, 1.442695
    %v1640 = vpow.pop %v1639
    %v1641 = vmul.f32 %v1621, 1.442695
    %v1642 = vpow.pop %v1641
    %v1643 = vmul.f32 %v1622, 1.442695
    %v1644 = vpow.pop %v1643
    %v1645 = vmul.f32 %v1623, 1.442695
    %v1646 = vpow.pop %v1645
    %v1647 = vmul.f32 %v1624, 1.442695
    %v1648 = vpow.pop %v1647
    %v1649 = vmul.f32 %v1625, 1.442695
    %v1650 = vpow.pop %v1649
    %v1651 = vmul.f32 %v1626, 1.442695
    %v1652 = vpow.pop %v1651
    %v1653 = vmul.f32 %v1627, 1.442695
    %v1654 = vpow.pop %v1653
    %v1655 = vmul.f32 %v1628, 1.442695
    %v1656 = vpow.pop %v1655
    %v1657 = vmul.f32 %v1629, 1.442695
    %v1658 = vpow.pop %v1657
    %v1659 = vmul.f32 %v1630, 1.442695
    %v1660 = vpow.pop %v1659
    %v1661 = vmul.f32 %v1631, 1.442695
    %v1662 = vpow.pop %v1661
    %v1663 = vmul.f32 %v1632, 1.442695
    %v1664 = vpow.pop %v1663
    %1681 = vset.pattern.permute.xlu0 0
    %1682 = vperm.xlu0 %1681, %v1634
    %v1683 = vpop.permute.xlu0 %1682
    %1684 = vset.pattern.permute.xlu0 0
    %1685 = vperm.xlu0 %1684, %v1636
    %v1686 = vpop.permute.xlu0 %1685
    %1687 = vset.pattern.permute.xlu0 0
    %1688 = vperm.xlu0 %1687, %v1638
    %v1689 = vpop.permute.xlu0 %1688
    %1690 = vset.pattern.permute.xlu0 0
    %1691 = vperm.xlu0 %1690, %v1640
    %v1692 = vpop.permute.xlu0 %1691
    %1693 = vset.pattern.permute.xlu0 0
    %1694 = vperm.xlu0 %1693, %v1642
    %v1695 = vpop.permute.xlu0 %1694
    %1696 = vset.pattern.permute.xlu0 0
    %1697 = vperm.xlu0 %1696, %v1644
    %v1698 = vpop.permute.xlu0 %1697
    %1699 = vset.pattern.permute.xlu0 0
    %1700 = vperm.xlu0 %1699, %v1646
    %v1701 = vpop.permute.xlu0 %1700
    %1702 = vset.pattern.permute.xlu0 0
    %1703 = vperm.xlu0 %1702, %v1648
    %v1704 = vpop.permute.xlu0 %1703
    %1705 = vset.pattern.permute.xlu0 0
    %1706 = vperm.xlu0 %1705, %v1650
    %v1707 = vpop.permute.xlu0 %1706
    %1708 = vset.pattern.permute.xlu0 0
    %1709 = vperm.xlu0 %1708, %v1652
    %v1710 = vpop.permute.xlu0 %1709
    %1711 = vset.pattern.permute.xlu0 0
    %1712 = vperm.xlu0 %1711, %v1654
    %v1713 = vpop.permute.xlu0 %1712
    %1714 = vset.pattern.permute.xlu0 0
    %1715 = vperm.xlu0 %1714, %v1656
    %v1716 = vpop.permute.xlu0 %1715
    %1717 = vset.pattern.permute.xlu0 0
    %1718 = vperm.xlu0 %1717, %v1658
    %v1719 = vpop.permute.xlu0 %1718
    %1720 = vset.pattern.permute.xlu0 0
    %1721 = vperm.xlu0 %1720, %v1660
    %v1722 = vpop.permute.xlu0 %1721
    %1723 = vset.pattern.permute.xlu0 0
    %1724 = vperm.xlu0 %1723, %v1662
    %v1725 = vpop.permute.xlu0 %1724
    %1726 = vset.pattern.permute.xlu0 0
    %1727 = vperm.xlu0 %1726, %v1664
    %v1728 = vpop.permute.xlu0 %1727
    %v1729 = vlaneseq
    %v1730 = vshrl.u32 %v1729, 7
    %v1731 = vsub.s32 %v396, %v1730
    %v1732 = vrot.slane %v1683, %v1731
    %v1733 = vlaneseq
    %v1734 = vshrl.u32 %v1733, 7
    %v1735 = vsub.s32 %v401, %v1734
    %v1736 = vrot.slane %v1686, %v1735
    %v1737 = vsel %vm406, %v1736, %v1732
    %v1738 = vlaneseq
    %v1739 = vshrl.u32 %v1738, 7
    %v1740 = vsub.s32 %v396, %v1739
    %v1741 = vrot.slane %v1689, %v1740
    %v1742 = vlaneseq
    %v1743 = vshrl.u32 %v1742, 7
    %v1744 = vsub.s32 %v401, %v1743
    %v1745 = vrot.slane %v1692, %v1744
    %v1746 = vsel %vm406, %v1745, %v1741
    %v1747 = vlaneseq
    %v1748 = vshrl.u32 %v1747, 7
    %v1749 = vsub.s32 %v396, %v1748
    %v1750 = vrot.slane %v1695, %v1749
    %v1751 = vlaneseq
    %v1752 = vshrl.u32 %v1751, 7
    %v1753 = vsub.s32 %v401, %v1752
    %v1754 = vrot.slane %v1698, %v1753
    %v1755 = vsel %vm406, %v1754, %v1750
    %v1756 = vlaneseq
    %v1757 = vshrl.u32 %v1756, 7
    %v1758 = vsub.s32 %v396, %v1757
    %v1759 = vrot.slane %v1701, %v1758
    %v1760 = vlaneseq
    %v1761 = vshrl.u32 %v1760, 7
    %v1762 = vsub.s32 %v401, %v1761
    %v1763 = vrot.slane %v1704, %v1762
    %v1764 = vsel %vm406, %v1763, %v1759
    %v1765 = vlaneseq
    %v1766 = vshrl.u32 %v1765, 7
    %v1767 = vsub.s32 %v396, %v1766
    %v1768 = vrot.slane %v1707, %v1767
    %v1769 = vlaneseq
    %v1770 = vshrl.u32 %v1769, 7
    %v1771 = vsub.s32 %v401, %v1770
    %v1772 = vrot.slane %v1710, %v1771
    %v1773 = vsel %vm406, %v1772, %v1768
    %v1774 = vlaneseq
    %v1775 = vshrl.u32 %v1774, 7
    %v1776 = vsub.s32 %v396, %v1775
    %v1777 = vrot.slane %v1713, %v1776
    %v1778 = vlaneseq
    %v1779 = vshrl.u32 %v1778, 7
    %v1780 = vsub.s32 %v401, %v1779
    %v1781 = vrot.slane %v1716, %v1780
    %v1782 = vsel %vm406, %v1781, %v1777
    %v1783 = vlaneseq
    %v1784 = vshrl.u32 %v1783, 7
    %v1785 = vsub.s32 %v396, %v1784
    %v1786 = vrot.slane %v1719, %v1785
    %v1787 = vlaneseq
    %v1788 = vshrl.u32 %v1787, 7
    %v1789 = vsub.s32 %v401, %v1788
    %v1790 = vrot.slane %v1722, %v1789
    %v1791 = vsel %vm406, %v1790, %v1786
    %v1792 = vlaneseq
    %v1793 = vshrl.u32 %v1792, 7
    %v1794 = vsub.s32 %v396, %v1793
    %v1795 = vrot.slane %v1725, %v1794
    %v1796 = vlaneseq
    %v1797 = vshrl.u32 %v1796, 7
    %v1798 = vsub.s32 %v401, %v1797
    %v1799 = vrot.slane %v1728, %v1798
    %v1800 = vsel %vm406, %v1799, %v1795
    %v1801 = vsel %vm471, %v1746, %v1737
    %v1802 = vsel %vm473, %v1755, %v1801
    %v1803 = vsel %vm475, %v1764, %v1802
    %v1804 = vsel %vm477, %v1773, %v1803
    %v1805 = vsel %vm479, %v1782, %v1804
    %v1806 = vsel %vm481, %v1791, %v1805
    %v1807 = vsel %vm483, %v1800, %v1806
    %v1809 = vsel %vm486, %v1807, 0.0
    %1810 = vadd.xlane.f32.xlu0 %v1809
    %v1811 = vpop.xlane.xlu0 %1810
    %v1813 = vlaneseq
    %v1814 = vshrl.u32 %v1813, 7
    %v1815 = vsub.s32 0, %v1814
    %v1816 = vrot.slane %v1811, %v1815
    %v1817 = vlaneseq
    %v1818 = vshrl.u32 %v1817, 7
    %v1819 = vsub.s32 1, %v1818
    %v1820 = vrot.slane %v1811, %v1819
    %v1821 = vlaneseq
    %v1822 = vshrl.u32 %v1821, 7
    %v1823 = vsub.s32 2, %v1822
    %v1824 = vrot.slane %v1811, %v1823
    %v1825 = vlaneseq
    %v1826 = vshrl.u32 %v1825, 7
    %v1827 = vsub.s32 3, %v1826
    %v1828 = vrot.slane %v1811, %v1827
    %v1829 = vlaneseq
    %v1830 = vshrl.u32 %v1829, 7
    %v1831 = vsub.s32 4, %v1830
    %v1832 = vrot.slane %v1811, %v1831
    %v1833 = vlaneseq
    %v1834 = vshrl.u32 %v1833, 7
    %v1835 = vsub.s32 5, %v1834
    %v1836 = vrot.slane %v1811, %v1835
    %v1837 = vlaneseq
    %v1838 = vshrl.u32 %v1837, 7
    %v1839 = vsub.s32 6, %v1838
    %v1840 = vrot.slane %v1811, %v1839
    %v1841 = vlaneseq
    %v1842 = vshrl.u32 %v1841, 7
    %v1843 = vsub.s32 7, %v1842
    %v1844 = vrot.slane %v1811, %v1843
    %v1853 = vrcp.pop %v1816
    %v1854 = vmul.f32 %v1634, %v1853
    %v1855 = vmul.f32 %v1636, %v1853
    %v1856 = vrcp.pop %v1820
    %v1857 = vmul.f32 %v1638, %v1856
    %v1858 = vmul.f32 %v1640, %v1856
    %v1859 = vrcp.pop %v1824
    %v1860 = vmul.f32 %v1642, %v1859
    %v1861 = vmul.f32 %v1644, %v1859
    %v1862 = vrcp.pop %v1828
    %v1863 = vmul.f32 %v1646, %v1862
    %v1864 = vmul.f32 %v1648, %v1862
    %v1865 = vrcp.pop %v1832
    %v1866 = vmul.f32 %v1650, %v1865
    %v1867 = vmul.f32 %v1652, %v1865
    %v1868 = vrcp.pop %v1836
    %v1869 = vmul.f32 %v1654, %v1868
    %v1870 = vmul.f32 %v1656, %v1868
    %v1871 = vrcp.pop %v1840
    %v1872 = vmul.f32 %v1658, %v1871
    %v1873 = vmul.f32 %v1660, %v1871
    %v1874 = vrcp.pop %v1844
    %v1875 = vmul.f32 %v1662, %v1874
    %v1876 = vmul.f32 %v1664, %v1874
    %1878 = vset.pattern.permute.xlu0 0
    %1879 = vperm.xlu0 %1878, %v1854
    %v1880 = vpop.permute.xlu0 %1879
    %1883 = vset.pattern.permute.xlu0 0
    %1884 = vperm.xlu0 %1883, %v1855
    %v1885 = vpop.permute.xlu0 %1884
    %1888 = vset.pattern.permute.xlu0 0
    %1889 = vperm.xlu0 %1888, %v1857
    %v1890 = vpop.permute.xlu0 %1889
    %1893 = vset.pattern.permute.xlu0 0
    %1894 = vperm.xlu0 %1893, %v1858
    %v1895 = vpop.permute.xlu0 %1894
    %1898 = vset.pattern.permute.xlu0 0
    %1899 = vperm.xlu0 %1898, %v1860
    %v1900 = vpop.permute.xlu0 %1899
    %1903 = vset.pattern.permute.xlu0 0
    %1904 = vperm.xlu0 %1903, %v1861
    %v1905 = vpop.permute.xlu0 %1904
    %1908 = vset.pattern.permute.xlu0 0
    %1909 = vperm.xlu0 %1908, %v1863
    %v1910 = vpop.permute.xlu0 %1909
    %1913 = vset.pattern.permute.xlu0 0
    %1914 = vperm.xlu0 %1913, %v1864
    %v1915 = vpop.permute.xlu0 %1914
    %1918 = vset.pattern.permute.xlu0 0
    %1919 = vperm.xlu0 %1918, %v1866
    %v1920 = vpop.permute.xlu0 %1919
    %1923 = vset.pattern.permute.xlu0 0
    %1924 = vperm.xlu0 %1923, %v1867
    %v1925 = vpop.permute.xlu0 %1924
    %1928 = vset.pattern.permute.xlu0 0
    %1929 = vperm.xlu0 %1928, %v1869
    %v1930 = vpop.permute.xlu0 %1929
    %1933 = vset.pattern.permute.xlu0 0
    %1934 = vperm.xlu0 %1933, %v1870
    %v1935 = vpop.permute.xlu0 %1934
    %1938 = vset.pattern.permute.xlu0 0
    %1939 = vperm.xlu0 %1938, %v1872
    %v1940 = vpop.permute.xlu0 %1939
    %1943 = vset.pattern.permute.xlu0 0
    %1944 = vperm.xlu0 %1943, %v1873
    %v1945 = vpop.permute.xlu0 %1944
    %1948 = vset.pattern.permute.xlu0 0
    %1949 = vperm.xlu0 %1948, %v1875
    %v1950 = vpop.permute.xlu0 %1949
    %1953 = vset.pattern.permute.xlu0 0
    %1954 = vperm.xlu0 %1953, %v1876
    %v1955 = vpop.permute.xlu0 %1954
    %v1957 = vmul.f32 %v1880, %v127
    %v1958 = vmul.f32 %v1885, %v128
    %v1959 = vmul.f32 %v1890, %v129
    %v1960 = vmul.f32 %v1895, %v130
    %v1961 = vmul.f32 %v1900, %v131
    %v1962 = vmul.f32 %v1905, %v132
    %v1963 = vmul.f32 %v1910, %v133
    %v1964 = vmul.f32 %v1915, %v134
    %v1965 = vmul.f32 %v1920, %v135
    %v1966 = vmul.f32 %v1925, %v136
    %v1967 = vmul.f32 %v1930, %v137
    %v1968 = vmul.f32 %v1935, %v138
    %v1969 = vmul.f32 %v1940, %v139
    %v1970 = vmul.f32 %v1945, %v140
    %v1971 = vmul.f32 %v1950, %v141
    %v1972 = vmul.f32 %v1955, %v142
    %v1973 = vsel %vm887, %v1957, 0.0
    %v1974 = vsel %vm887, %v1958, 0.0
    %v1975 = vadd.f32 %v1973, %v1974
    %v1976 = vrot.slane %v1975, 4
    %v1977 = vadd.f32 %v1975, %v1976
    %v1978 = vrot.slane %v1977, 2
    %v1979 = vadd.f32 %v1977, %v1978
    %v1980 = vrot.slane %v1979, 1
    %v1981 = vadd.f32 %v1979, %v1980
    %v1982 = vsel %vm887, %v1959, 0.0
    %v1983 = vsel %vm887, %v1960, 0.0
    %v1984 = vadd.f32 %v1982, %v1983
    %v1985 = vrot.slane %v1984, 4
    %v1986 = vadd.f32 %v1984, %v1985
    %v1987 = vrot.slane %v1986, 2
    %v1988 = vadd.f32 %v1986, %v1987
    %v1989 = vrot.slane %v1988, 1
    %v1990 = vadd.f32 %v1988, %v1989
    %v1991 = vsel %vm887, %v1961, 0.0
    %v1992 = vsel %vm887, %v1962, 0.0
    %v1993 = vadd.f32 %v1991, %v1992
    %v1994 = vrot.slane %v1993, 4
    %v1995 = vadd.f32 %v1993, %v1994
    %v1996 = vrot.slane %v1995, 2
    %v1997 = vadd.f32 %v1995, %v1996
    %v1998 = vrot.slane %v1997, 1
    %v1999 = vadd.f32 %v1997, %v1998
    %v2000 = vsel %vm887, %v1963, 0.0
    %v2001 = vsel %vm887, %v1964, 0.0
    %v2002 = vadd.f32 %v2000, %v2001
    %v2003 = vrot.slane %v2002, 4
    %v2004 = vadd.f32 %v2002, %v2003
    %v2005 = vrot.slane %v2004, 2
    %v2006 = vadd.f32 %v2004, %v2005
    %v2007 = vrot.slane %v2006, 1
    %v2008 = vadd.f32 %v2006, %v2007
    %v2009 = vsel %vm887, %v1965, 0.0
    %v2010 = vsel %vm887, %v1966, 0.0
    %v2011 = vadd.f32 %v2009, %v2010
    %v2012 = vrot.slane %v2011, 4
    %v2013 = vadd.f32 %v2011, %v2012
    %v2014 = vrot.slane %v2013, 2
    %v2015 = vadd.f32 %v2013, %v2014
    %v2016 = vrot.slane %v2015, 1
    %v2017 = vadd.f32 %v2015, %v2016
    %v2018 = vsel %vm887, %v1967, 0.0
    %v2019 = vsel %vm887, %v1968, 0.0
    %v2020 = vadd.f32 %v2018, %v2019
    %v2021 = vrot.slane %v2020, 4
    %v2022 = vadd.f32 %v2020, %v2021
    %v2023 = vrot.slane %v2022, 2
    %v2024 = vadd.f32 %v2022, %v2023
    %v2025 = vrot.slane %v2024, 1
    %v2026 = vadd.f32 %v2024, %v2025
    %v2027 = vsel %vm887, %v1969, 0.0
    %v2028 = vsel %vm887, %v1970, 0.0
    %v2029 = vadd.f32 %v2027, %v2028
    %v2030 = vrot.slane %v2029, 4
    %v2031 = vadd.f32 %v2029, %v2030
    %v2032 = vrot.slane %v2031, 2
    %v2033 = vadd.f32 %v2031, %v2032
    %v2034 = vrot.slane %v2033, 1
    %v2035 = vadd.f32 %v2033, %v2034
    %v2036 = vsel %vm887, %v1971, 0.0
    %v2037 = vsel %vm887, %v1972, 0.0
    %v2038 = vadd.f32 %v2036, %v2037
    %v2039 = vrot.slane %v2038, 4
    %v2040 = vadd.f32 %v2038, %v2039
    %v2041 = vrot.slane %v2040, 2
    %v2042 = vadd.f32 %v2040, %v2041
    %v2043 = vrot.slane %v2042, 1
    %v2044 = vadd.f32 %v2042, %v2043
    %v2053 = vsel %vm471, %v1990, %v1981
    %v2054 = vsel %vm473, %v1999, %v2053
    %v2055 = vsel %vm475, %v2008, %v2054
    %v2056 = vsel %vm477, %v2017, %v2055
    %v2057 = vsel %vm479, %v2026, %v2056
    %v2058 = vsel %vm481, %v2035, %v2057
    %v2059 = vsel %vm483, %v2044, %v2058
    %2060 = vrot.lane.b32.xlu0 %v2059, 32
    %v2061 = vpop.permute.xlu0 %2060
    %2063 = vrot.lane.b32.xlu0 %v1091, 72
    %v2064 = vpop.permute.xlu0 %2063
    %v2066 = vsel %vm330, %v1274, %v2061
    %v2067 = vsel %vm983, %v2066, %v2064
    %v2068 = vsel %vm991, %v2064, 0
    %2070 = vmatprep.subr.mxu0 0.0
    %2071 = vmatpush1.msra.mxu0 %v160
    %2072 = vmatprep.subr.mxu0 0.0
    %2073 = vmatpush1.msra.mxu0 %v161
    %2074 = vmatprep.subr.mxu0 0.0
    %2075 = vmatpush1.msra.mxu0 %v162
    %2076 = vmatprep.subr.mxu0 0.0
    %2077 = vmatpush1.msra.mxu0 %v163
    %2078 = vmatprep.subr.mxu0 0.0
    %2079 = vmatpush1.msra.mxu0 %v164
    %2080 = vmatprep.subr.mxu0 0.0
    %2081 = vmatpush1.msra.mxu0 %v165
    %2082 = vmatprep.subr.mxu0 0.0
    %2083 = vmatpush1.msra.mxu0 %v166
    %2084 = vmatprep.subr.mxu0 0.0
    %2085 = vmatpush1.msra.mxu0 %v167
    %2086 = vmatprep.subr.mxu0 0.0
    %2087 = vmatpush1.msra.mxu0 %v168
    %2088 = vmatprep.subr.mxu0 0.0
    %2089 = vmatpush1.msra.mxu0 %v169
    %2090 = vmatprep.subr.mxu0 0.0
    %2091 = vmatpush1.msra.mxu0 %v170
    %2092 = vmatprep.subr.mxu0 0.0
    %2093 = vmatpush1.msra.mxu0 %v171
    %2094 = vmatprep.subr.mxu0 0.0
    %2095 = vmatpush1.msra.mxu0 %v172
    %2096 = vmatprep.subr.mxu0 0.0
    %2097 = vmatpush1.msra.mxu0 %v173
    %2098 = vmatprep.subr.mxu0 0.0
    %2099 = vmatpush1.msra.mxu0 %v174
    %2100 = vmatprep.subr.mxu0 0.0
    %2101 = vmatpush1.msra.mxu0 %v175
    %2102 = vmatprep.subr.mxu0 0.0
    %2103 = vmatpush1.msra.mxu0 %v176
    %2104 = vmatprep.subr.mxu0 0.0
    %2105 = vmatpush1.msra.mxu0 0.0
    %2106 = vmatprep.subr.mxu0 0.0
    %2107 = vmatpush1.msra.mxu0 0.0
    %2108 = vmatprep.subr.mxu0 0.0
    %2109 = vmatpush1.msra.mxu0 0.0
    %2110 = vmatprep.subr.mxu0 0.0
    %2111 = vmatpush1.msra.mxu0 0.0
    %2112 = vmatprep.subr.mxu0 0.0
    %2113 = vmatpush1.msra.mxu0 0.0
    %2114 = vmatprep.subr.mxu0 0.0
    %2115 = vmatpush1.msra.mxu0 0.0
    %2116 = vmatprep.subr.mxu0 0.0
    %2117 = vmatpush1.msra.mxu0 0.0
    %2118 = vmatprep.subr.mxu0 0.0
    %2119 = vmatpush1.msra.mxu0 0.0
    %2120 = vmatprep.subr.mxu0 0.0
    %2121 = vmatpush1.msra.mxu0 0.0
    %2122 = vmatprep.subr.mxu0 0.0
    %2123 = vmatpush1.msra.mxu0 0.0
    %2124 = vmatprep.subr.mxu0 0.0
    %2125 = vmatpush1.msra.mxu0 0.0
    %2126 = vmatprep.subr.mxu0 0.0
    %2127 = vmatpush1.msra.mxu0 0.0
    %2128 = vmatprep.subr.mxu0 0.0
    %2129 = vmatpush1.msra.mxu0 0.0
    %2130 = vmatprep.subr.mxu0 0.0
    %2131 = vmatpush1.msra.mxu0 0.0
    %2132 = vmatprep.subr.mxu0 0.0
    %2133 = vmatpush1.msra.mxu0 0.0
    %2134 = vmatprep.mubr.f32.mxu0 %v2068
    %2135 = vmatmul.mubr.f32.gmra.mrb[0].mxu0 %v2067
    %v2136 = vpop.f32.mrb[0].mxu0
    %v2137 = vadd.f32 %v989, %v2136
    %v2138 = vpop.f32.mrb[0].mxu0
    %2139 = vdwg.mxu0
    %v2140 = vxor.u32 %v2137, 2147483648
    %v2141 = vmul.f32 %v2140, 1.442695
    %v2142 = vpow.pop %v2141
    %v2143 = vadd.f32 %v2142, 1.0
    %v2144 = vrcp.pop %v2143
    %v2145 = vmul.f32 1.0, %v2144
    %2147 = vrot.lane.b32.xlu0 %v2137, 32
    %v2148 = vpop.permute.xlu0 %2147
    %v2150 = vmul.f32 %v2145, %v2148
    %2152 = vrot.lane.b32.xlu0 %v2150, 64
    %v2153 = vpop.permute.xlu0 %2152
    %v2155 = vadd.f32 %v2137, %v2153
    %v2156 = vtanh.pop %v2155
    %v2157 = vsub.f32 1.0, %v2145
    %2159 = vrot.lane.b32.xlu0 %v2156, 96
    %v2160 = vpop.permute.xlu0 %2159
    %v2162 = vmul.f32 %v2157, %v2160
    %v2163 = vmul.f32 %v2145, %v1091
    %v2164 = vadd.f32 %v2162, %v2163
    %2166 = vrot.lane.b32.xlu0 %v2164, 96
    %v2167 = vpop.permute.xlu0 %2166
    %v2168 = vsel %vm330, %v2167, 0
    %2170 = vmatprep.subr.mxu0 0.0
    %2171 = vmatpush1.msra.mxu0 %v178
    %2172 = vmatprep.subr.mxu0 0.0
    %2173 = vmatpush1.msra.mxu0 %v179
    %2174 = vmatprep.subr.mxu0 0.0
    %2175 = vmatpush1.msra.mxu0 %v180
    %2176 = vmatprep.subr.mxu0 0.0
    %2177 = vmatpush1.msra.mxu0 %v181
    %2178 = vmatprep.subr.mxu0 0.0
    %2179 = vmatpush1.msra.mxu0 0.0
    %2180 = vmatprep.subr.mxu0 0.0
    %2181 = vmatpush1.msra.mxu0 0.0
    %2182 = vmatprep.subr.mxu0 0.0
    %2183 = vmatpush1.msra.mxu0 0.0
    %2184 = vmatprep.subr.mxu0 0.0
    %2185 = vmatpush1.msra.mxu0 0.0
    %2186 = vmatprep.subr.mxu0 0.0
    %2187 = vmatpush1.msra.mxu0 0.0
    %2188 = vmatprep.subr.mxu0 0.0
    %2189 = vmatpush1.msra.mxu0 0.0
    %2190 = vmatprep.subr.mxu0 0.0
    %2191 = vmatpush1.msra.mxu0 0.0
    %2192 = vmatprep.subr.mxu0 0.0
    %2193 = vmatpush1.msra.mxu0 0.0
    %2194 = vmatprep.subr.mxu0 0.0
    %2195 = vmatpush1.msra.mxu0 0.0
    %2196 = vmatprep.subr.mxu0 0.0
    %2197 = vmatpush1.msra.mxu0 0.0
    %2198 = vmatprep.subr.mxu0 0.0
    %2199 = vmatpush1.msra.mxu0 0.0
    %2200 = vmatprep.subr.mxu0 0.0
    %2201 = vmatpush1.msra.mxu0 0.0
    %2202 = vmatprep.subr.mxu0 0.0
    %2203 = vmatpush1.msra.mxu0 0.0
    %2204 = vmatprep.subr.mxu0 0.0
    %2205 = vmatpush1.msra.mxu0 0.0
    %2206 = vmatprep.subr.mxu0 0.0
    %2207 = vmatpush1.msra.mxu0 0.0
    %2208 = vmatprep.subr.mxu0 0.0
    %2209 = vmatpush1.msra.mxu0 0.0
    %2210 = vmatprep.subr.mxu0 0.0
    %2211 = vmatpush1.msra.mxu0 0.0
    %2212 = vmatprep.subr.mxu0 0.0
    %2213 = vmatpush1.msra.mxu0 0.0
    %2214 = vmatprep.subr.mxu0 0.0
    %2215 = vmatpush1.msra.mxu0 0.0
    %2216 = vmatprep.subr.mxu0 0.0
    %2217 = vmatpush1.msra.mxu0 0.0
    %2218 = vmatprep.subr.mxu0 0.0
    %2219 = vmatpush1.msra.mxu0 0.0
    %2220 = vmatprep.subr.mxu0 0.0
    %2221 = vmatpush1.msra.mxu0 0.0
    %2222 = vmatprep.subr.mxu0 0.0
    %2223 = vmatpush1.msra.mxu0 0.0
    %2224 = vmatprep.subr.mxu0 0.0
    %2225 = vmatpush1.msra.mxu0 0.0
    %2226 = vmatprep.subr.mxu0 0.0
    %2227 = vmatpush1.msra.mxu0 0.0
    %2228 = vmatprep.subr.mxu0 0.0
    %2229 = vmatpush1.msra.mxu0 0.0
    %2230 = vmatprep.subr.mxu0 0.0
    %2231 = vmatpush1.msra.mxu0 0.0
    %2232 = vmatprep.subr.mxu0 0.0
    %2233 = vmatpush1.msra.mxu0 0.0
    %2234 = vmatprep.mubr.f32.mxu0 0.0
    %2235 = vmatmul.mubr.f32.gmra.mrb[0].mxu0 %v2168
    %v2236 = vpop.f32.mrb[0].mxu0
    %v2237 = vadd.f32 %v1096, %v2236
    %v2238 = vpop.f32.mrb[0].mxu0
    %2239 = vdwg.mxu0
    %v2240 = vsel %vm330, %v2237, -inf
    %2241 = vmax.xlane.f32.xlu0 %v2240
    %v2242 = vpop.xlane.xlu0 %2241
    %v2243 = vsub.f32 %v2237, %v2242
    %v2244 = vmul.f32 %v2243, 1.442695
    %v2245 = vpow.pop %v2244
    %v2246 = vsel %vm330, %v2245, 0.0
    %2247 = vadd.xlane.f32.xlu0 %v2246
    %v2248 = vpop.xlane.xlu0 %2247
    %v2249 = vrcp.pop %v2248
    %v2250 = vmul.f32 %v2245, %v2249
    %v2251 = vlaneseq
    %v2252 = vshrl.u32 %v2251, 7
    %v2253 = vsub.s32 %v1184, %v2252
    %v2254 = vrot.slane %v1880, %v2253
    %v2255 = vlaneseq
    %v2256 = vshrl.u32 %v2255, 7
    %v2257 = vsub.s32 %v1189, %v2256
    %v2258 = vrot.slane %v1885, %v2257
    %v2259 = vsel %vm1194, %v2258, %v2254
    %v2260 = vlaneseq
    %v2261 = vshrl.u32 %v2260, 7
    %v2262 = vsub.s32 %v1184, %v2261
    %v2263 = vrot.slane %v1890, %v2262
    %v2264 = vlaneseq
    %v2265 = vshrl.u32 %v2264, 7
    %v2266 = vsub.s32 %v1189, %v2265
    %v2267 = vrot.slane %v1895, %v2266
    %v2268 = vsel %vm1194, %v2267, %v2263
    %v2269 = vlaneseq
    %v2270 = vshrl.u32 %v2269, 7
    %v2271 = vsub.s32 %v1184, %v2270
    %v2272 = vrot.slane %v1900, %v2271
    %v2273 = vlaneseq
    %v2274 = vshrl.u32 %v2273, 7
    %v2275 = vsub.s32 %v1189, %v2274
    %v2276 = vrot.slane %v1905, %v2275
    %v2277 = vsel %vm1194, %v2276, %v2272
    %v2278 = vlaneseq
    %v2279 = vshrl.u32 %v2278, 7
    %v2280 = vsub.s32 %v1184, %v2279
    %v2281 = vrot.slane %v1910, %v2280
    %v2282 = vlaneseq
    %v2283 = vshrl.u32 %v2282, 7
    %v2284 = vsub.s32 %v1189, %v2283
    %v2285 = vrot.slane %v1915, %v2284
    %v2286 = vsel %vm1194, %v2285, %v2281
    %v2287 = vlaneseq
    %v2288 = vshrl.u32 %v2287, 7
    %v2289 = vsub.s32 %v1184, %v2288
    %v2290 = vrot.slane %v1920, %v2289
    %v2291 = vlaneseq
    %v2292 = vshrl.u32 %v2291, 7
    %v2293 = vsub.s32 %v1189, %v2292
    %v2294 = vrot.slane %v1925, %v2293
    %v2295 = vsel %vm1194, %v2294, %v2290
    %v2296 = vlaneseq
    %v2297 = vshrl.u32 %v2296, 7
    %v2298 = vsub.s32 %v1184, %v2297
    %v2299 = vrot.slane %v1930, %v2298
    %v2300 = vlaneseq
    %v2301 = vshrl.u32 %v2300, 7
    %v2302 = vsub.s32 %v1189, %v2301
    %v2303 = vrot.slane %v1935, %v2302
    %v2304 = vsel %vm1194, %v2303, %v2299
    %v2305 = vlaneseq
    %v2306 = vshrl.u32 %v2305, 7
    %v2307 = vsub.s32 %v1184, %v2306
    %v2308 = vrot.slane %v1940, %v2307
    %v2309 = vlaneseq
    %v2310 = vshrl.u32 %v2309, 7
    %v2311 = vsub.s32 %v1189, %v2310
    %v2312 = vrot.slane %v1945, %v2311
    %v2313 = vsel %vm1194, %v2312, %v2308
    %v2314 = vlaneseq
    %v2315 = vshrl.u32 %v2314, 7
    %v2316 = vsub.s32 %v1184, %v2315
    %v2317 = vrot.slane %v1950, %v2316
    %v2318 = vlaneseq
    %v2319 = vshrl.u32 %v2318, 7
    %v2320 = vsub.s32 %v1189, %v2319
    %v2321 = vrot.slane %v1955, %v2320
    %v2322 = vsel %vm1194, %v2321, %v2317
    %v2323 = vsel %vm471, %v2268, %v2259
    %v2324 = vsel %vm473, %v2277, %v2323
    %v2325 = vsel %vm475, %v2286, %v2324
    %v2326 = vsel %vm477, %v2295, %v2325
    %v2327 = vsel %vm479, %v2304, %v2326
    %v2328 = vsel %vm481, %v2313, %v2327
    %v2329 = vsel %vm483, %v2322, %v2328
    %v2331 = vsel %vm330, %v2250, %v2164
    %v2332 = vsel %vm1268, %v2331, %v2329
    %v2333 = vsel %vm1270, %v2332, 0.0
    %s2334 = scalar_lea.vmem [#allocation14], 8
    %2335 = vst [vmem:[%s2334] sm:$0xff] %v2333
    %s2336 = scalar_lea.vmem [#allocation2], 16
    %v2337 = vld [vmem:[%s2336] sm:$0xff]
    %v2339 = vcombine.high %v2237, %v2237
    %v2341 = vunpack.c.l.s4 1966171168
    %v2342 = vunpack.c.0.s8 %v2341
    %v2343 = vlaneseq
    %v2344 = vshrl.u32 %v2343, 7
    %v2345 = vsub.s32 %v2342, %v2344
    %v2346 = vrot.slane %v2237, %v2345
    %v2348 = vunpack.c.l.s4 1966171168
    %v2349 = vunpack.c.0.s8 %v2348
    %v2350 = vlaneseq
    %v2351 = vshrl.u32 %v2350, 7
    %v2352 = vsub.s32 %v2349, %v2351
    %v2353 = vrot.slane %v2339, %v2352
    %v2354 = vcombine.high %v2346, %v2346
    %v2355 = vcombine.high %v2353, %v2353
    %v2357 = vunpack.c.l.s4 1966171168
    %v2358 = vunpack.c.0.s8 %v2357
    %v2359 = vlaneseq
    %v2360 = vshrl.u32 %v2359, 7
    %v2361 = vsub.s32 %v2358, %v2360
    %v2362 = vrot.slane %v2346, %v2361
    %v2364 = vunpack.c.l.s4 1966171168
    %v2365 = vunpack.c.0.s8 %v2364
    %v2366 = vlaneseq
    %v2367 = vshrl.u32 %v2366, 7
    %v2368 = vsub.s32 %v2365, %v2367
    %v2369 = vrot.slane %v2353, %v2368
    %v2371 = vunpack.c.l.s4 1966171168
    %v2372 = vunpack.c.0.s8 %v2371
    %v2373 = vlaneseq
    %v2374 = vshrl.u32 %v2373, 7
    %v2375 = vsub.s32 %v2372, %v2374
    %v2376 = vrot.slane %v2354, %v2375
    %v2378 = vunpack.c.l.s4 1966171168
    %v2379 = vunpack.c.0.s8 %v2378
    %v2380 = vlaneseq
    %v2381 = vshrl.u32 %v2380, 7
    %v2382 = vsub.s32 %v2379, %v2381
    %v2383 = vrot.slane %v2355, %v2382
    %v2384 = vcombine.high %v2362, %v2362
    %v2385 = vcombine.high %v2369, %v2369
    %v2386 = vcombine.high %v2376, %v2376
    %v2387 = vcombine.high %v2383, %v2383
    %v2388 = vlaneseq
    %v2389 = vshrl.u32 %v2388, 7
    %v2390 = vsub.s32 0, %v2389
    %v2391 = vrot.slane %v2362, %v2390
    %v2392 = vlaneseq
    %v2393 = vshrl.u32 %v2392, 7
    %v2394 = vsub.s32 0, %v2393
    %v2395 = vrot.slane %v2376, %v2394
    %v2396 = vlaneseq
    %v2397 = vshrl.u32 %v2396, 7
    %v2398 = vsub.s32 0, %v2397
    %v2399 = vrot.slane %v2384, %v2398
    %v2400 = vlaneseq
    %v2401 = vshrl.u32 %v2400, 7
    %v2402 = vsub.s32 0, %v2401
    %v2403 = vrot.slane %v2386, %v2402
    %v2404 = vlaneseq
    %v2405 = vshrl.u32 %v2404, 7
    %v2406 = vsub.s32 0, %v2405
    %v2407 = vrot.slane %v2369, %v2406
    %v2408 = vlaneseq
    %v2409 = vshrl.u32 %v2408, 7
    %v2410 = vsub.s32 0, %v2409
    %v2411 = vrot.slane %v2383, %v2410
    %v2412 = vlaneseq
    %v2413 = vshrl.u32 %v2412, 7
    %v2414 = vsub.s32 0, %v2413
    %v2415 = vrot.slane %v2385, %v2414
    %v2416 = vlaneseq
    %v2417 = vshrl.u32 %v2416, 7
    %v2418 = vsub.s32 0, %v2417
    %v2419 = vrot.slane %v2387, %v2418
    %2420 = vrot.lane.b32.xlu0 %v2391, 96
    %v2421 = vpop.permute.xlu0 %2420
    %2422 = vrot.lane.b32.xlu0 %v2395, 96
    %v2423 = vpop.permute.xlu0 %2422
    %2424 = vrot.lane.b32.xlu0 %v2399, 96
    %v2425 = vpop.permute.xlu0 %2424
    %2426 = vrot.lane.b32.xlu0 %v2403, 96
    %v2427 = vpop.permute.xlu0 %2426
    %2428 = vrot.lane.b32.xlu0 %v2407, 96
    %v2429 = vpop.permute.xlu0 %2428
    %2430 = vrot.lane.b32.xlu0 %v2411, 96
    %v2431 = vpop.permute.xlu0 %2430
    %2432 = vrot.lane.b32.xlu0 %v2415, 96
    %v2433 = vpop.permute.xlu0 %2432
    %2434 = vrot.lane.b32.xlu0 %v2419, 96
    %v2435 = vpop.permute.xlu0 %2434
    %v2444 = vadd.f32 %v143, %v2421
    %v2445 = vadd.f32 %v144, %v2421
    %v2446 = vadd.f32 %v145, %v2423
    %v2447 = vadd.f32 %v146, %v2423
    %v2448 = vadd.f32 %v147, %v2425
    %v2449 = vadd.f32 %v148, %v2425
    %v2450 = vadd.f32 %v149, %v2427
    %v2451 = vadd.f32 %v150, %v2427
    %v2452 = vadd.f32 %v151, %v2429
    %v2453 = vadd.f32 %v152, %v2429
    %v2454 = vadd.f32 %v153, %v2431
    %v2455 = vadd.f32 %v154, %v2431
    %v2456 = vadd.f32 %v155, %v2433
    %v2457 = vadd.f32 %v156, %v2433
    %v2458 = vadd.f32 %v157, %v2435
    %v2459 = vadd.f32 %v158, %v2435
    %v2460 = vtanh.pop %v2444
    %v2461 = vtanh.pop %v2445
    %v2462 = vtanh.pop %v2446
    %v2463 = vtanh.pop %v2447
    %v2464 = vtanh.pop %v2448
    %v2465 = vtanh.pop %v2449
    %v2466 = vtanh.pop %v2450
    %v2467 = vtanh.pop %v2451
    %v2468 = vtanh.pop %v2452
    %v2469 = vtanh.pop %v2453
    %v2470 = vtanh.pop %v2454
    %v2471 = vtanh.pop %v2455
    %v2472 = vtanh.pop %v2456
    %v2473 = vtanh.pop %v2457
    %v2474 = vtanh.pop %v2458
    %v2475 = vtanh.pop %v2459
    %v2476 = vmul.f32 %v2460, %v312
    %v2477 = vmul.f32 %v2461, %v312
    %v2478 = vmul.f32 %v2462, %v312
    %v2479 = vmul.f32 %v2463, %v312
    %v2480 = vmul.f32 %v2464, %v312
    %v2481 = vmul.f32 %v2465, %v312
    %v2482 = vmul.f32 %v2466, %v312
    %v2483 = vmul.f32 %v2467, %v312
    %v2484 = vmul.f32 %v2468, %v312
    %v2485 = vmul.f32 %v2469, %v312
    %v2486 = vmul.f32 %v2470, %v312
    %v2487 = vmul.f32 %v2471, %v312
    %v2488 = vmul.f32 %v2472, %v312
    %v2489 = vmul.f32 %v2473, %v312
    %v2490 = vmul.f32 %v2474, %v312
    %v2491 = vmul.f32 %v2475, %v312
    %v2492 = vsel %vm330, %v2476, 0.0
    %2493 = vadd.xlane.f32.xlu0 %v2492
    %v2494 = vpop.xlane.xlu0 %2493
    %v2495 = vsel %vm330, %v2477, 0.0
    %2496 = vadd.xlane.f32.xlu0 %v2495
    %v2497 = vpop.xlane.xlu0 %2496
    %v2498 = vsel %vm330, %v2478, 0.0
    %2499 = vadd.xlane.f32.xlu0 %v2498
    %v2500 = vpop.xlane.xlu0 %2499
    %v2501 = vsel %vm330, %v2479, 0.0
    %2502 = vadd.xlane.f32.xlu0 %v2501
    %v2503 = vpop.xlane.xlu0 %2502
    %v2504 = vsel %vm330, %v2480, 0.0
    %2505 = vadd.xlane.f32.xlu0 %v2504
    %v2506 = vpop.xlane.xlu0 %2505
    %v2507 = vsel %vm330, %v2481, 0.0
    %2508 = vadd.xlane.f32.xlu0 %v2507
    %v2509 = vpop.xlane.xlu0 %2508
    %v2510 = vsel %vm330, %v2482, 0.0
    %2511 = vadd.xlane.f32.xlu0 %v2510
    %v2512 = vpop.xlane.xlu0 %2511
    %v2513 = vsel %vm330, %v2483, 0.0
    %2514 = vadd.xlane.f32.xlu0 %v2513
    %v2515 = vpop.xlane.xlu0 %2514
    %v2516 = vsel %vm330, %v2484, 0.0
    %2517 = vadd.xlane.f32.xlu0 %v2516
    %v2518 = vpop.xlane.xlu0 %2517
    %v2519 = vsel %vm330, %v2485, 0.0
    %2520 = vadd.xlane.f32.xlu0 %v2519
    %v2521 = vpop.xlane.xlu0 %2520
    %v2522 = vsel %vm330, %v2486, 0.0
    %2523 = vadd.xlane.f32.xlu0 %v2522
    %v2524 = vpop.xlane.xlu0 %2523
    %v2525 = vsel %vm330, %v2487, 0.0
    %2526 = vadd.xlane.f32.xlu0 %v2525
    %v2527 = vpop.xlane.xlu0 %2526
    %v2528 = vsel %vm330, %v2488, 0.0
    %2529 = vadd.xlane.f32.xlu0 %v2528
    %v2530 = vpop.xlane.xlu0 %2529
    %v2531 = vsel %vm330, %v2489, 0.0
    %2532 = vadd.xlane.f32.xlu0 %v2531
    %v2533 = vpop.xlane.xlu0 %2532
    %v2534 = vsel %vm330, %v2490, 0.0
    %2535 = vadd.xlane.f32.xlu0 %v2534
    %v2536 = vpop.xlane.xlu0 %2535
    %v2537 = vsel %vm330, %v2491, 0.0
    %2538 = vadd.xlane.f32.xlu0 %v2537
    %v2539 = vpop.xlane.xlu0 %2538
    %v2556 = vlaneseq
    %v2557 = vshrl.u32 %v2556, 7
    %v2558 = vsub.s32 %v396, %v2557
    %v2559 = vrot.slane %v2494, %v2558
    %v2560 = vlaneseq
    %v2561 = vshrl.u32 %v2560, 7
    %v2562 = vsub.s32 %v401, %v2561
    %v2563 = vrot.slane %v2497, %v2562
    %v2564 = vsel %vm406, %v2563, %v2559
    %v2565 = vlaneseq
    %v2566 = vshrl.u32 %v2565, 7
    %v2567 = vsub.s32 %v396, %v2566
    %v2568 = vrot.slane %v2500, %v2567
    %v2569 = vlaneseq
    %v2570 = vshrl.u32 %v2569, 7
    %v2571 = vsub.s32 %v401, %v2570
    %v2572 = vrot.slane %v2503, %v2571
    %v2573 = vsel %vm406, %v2572, %v2568
    %v2574 = vlaneseq
    %v2575 = vshrl.u32 %v2574, 7
    %v2576 = vsub.s32 %v396, %v2575
    %v2577 = vrot.slane %v2506, %v2576
    %v2578 = vlaneseq
    %v2579 = vshrl.u32 %v2578, 7
    %v2580 = vsub.s32 %v401, %v2579
    %v2581 = vrot.slane %v2509, %v2580
    %v2582 = vsel %vm406, %v2581, %v2577
    %v2583 = vlaneseq
    %v2584 = vshrl.u32 %v2583, 7
    %v2585 = vsub.s32 %v396, %v2584
    %v2586 = vrot.slane %v2512, %v2585
    %v2587 = vlaneseq
    %v2588 = vshrl.u32 %v2587, 7
    %v2589 = vsub.s32 %v401, %v2588
    %v2590 = vrot.slane %v2515, %v2589
    %v2591 = vsel %vm406, %v2590, %v2586
    %v2592 = vlaneseq
    %v2593 = vshrl.u32 %v2592, 7
    %v2594 = vsub.s32 %v396, %v2593
    %v2595 = vrot.slane %v2518, %v2594
    %v2596 = vlaneseq
    %v2597 = vshrl.u32 %v2596, 7
    %v2598 = vsub.s32 %v401, %v2597
    %v2599 = vrot.slane %v2521, %v2598
    %v2600 = vsel %vm406, %v2599, %v2595
    %v2601 = vlaneseq
    %v2602 = vshrl.u32 %v2601, 7
    %v2603 = vsub.s32 %v396, %v2602
    %v2604 = vrot.slane %v2524, %v2603
    %v2605 = vlaneseq
    %v2606 = vshrl.u32 %v2605, 7
    %v2607 = vsub.s32 %v401, %v2606
    %v2608 = vrot.slane %v2527, %v2607
    %v2609 = vsel %vm406, %v2608, %v2604
    %v2610 = vlaneseq
    %v2611 = vshrl.u32 %v2610, 7
    %v2612 = vsub.s32 %v396, %v2611
    %v2613 = vrot.slane %v2530, %v2612
    %v2614 = vlaneseq
    %v2615 = vshrl.u32 %v2614, 7
    %v2616 = vsub.s32 %v401, %v2615
    %v2617 = vrot.slane %v2533, %v2616
    %v2618 = vsel %vm406, %v2617, %v2613
    %v2619 = vlaneseq
    %v2620 = vshrl.u32 %v2619, 7
    %v2621 = vsub.s32 %v396, %v2620
    %v2622 = vrot.slane %v2536, %v2621
    %v2623 = vlaneseq
    %v2624 = vshrl.u32 %v2623, 7
    %v2625 = vsub.s32 %v401, %v2624
    %v2626 = vrot.slane %v2539, %v2625
    %v2627 = vsel %vm406, %v2626, %v2622
    %v2628 = vsel %vm471, %v2573, %v2564
    %v2629 = vsel %vm473, %v2582, %v2628
    %v2630 = vsel %vm475, %v2591, %v2629
    %v2631 = vsel %vm477, %v2600, %v2630
    %v2632 = vsel %vm479, %v2609, %v2631
    %v2633 = vsel %vm481, %v2618, %v2632
    %v2634 = vsel %vm483, %v2627, %v2633
    %v2636 = vsel %vm486, %v2634, -inf
    %2637 = vmax.xlane.f32.xlu0 %v2636
    %v2638 = vpop.xlane.xlu0 %2637
    %v2640 = vlaneseq
    %v2641 = vshrl.u32 %v2640, 7
    %v2642 = vsub.s32 0, %v2641
    %v2643 = vrot.slane %v2638, %v2642
    %v2644 = vlaneseq
    %v2645 = vshrl.u32 %v2644, 7
    %v2646 = vsub.s32 1, %v2645
    %v2647 = vrot.slane %v2638, %v2646
    %v2648 = vlaneseq
    %v2649 = vshrl.u32 %v2648, 7
    %v2650 = vsub.s32 2, %v2649
    %v2651 = vrot.slane %v2638, %v2650
    %v2652 = vlaneseq
    %v2653 = vshrl.u32 %v2652, 7
    %v2654 = vsub.s32 3, %v2653
    %v2655 = vrot.slane %v2638, %v2654
    %v2656 = vlaneseq
    %v2657 = vshrl.u32 %v2656, 7
    %v2658 = vsub.s32 4, %v2657
    %v2659 = vrot.slane %v2638, %v2658
    %v2660 = vlaneseq
    %v2661 = vshrl.u32 %v2660, 7
    %v2662 = vsub.s32 5, %v2661
    %v2663 = vrot.slane %v2638, %v2662
    %v2664 = vlaneseq
    %v2665 = vshrl.u32 %v2664, 7
    %v2666 = vsub.s32 6, %v2665
    %v2667 = vrot.slane %v2638, %v2666
    %v2668 = vlaneseq
    %v2669 = vshrl.u32 %v2668, 7
    %v2670 = vsub.s32 7, %v2669
    %v2671 = vrot.slane %v2638, %v2670
    %v2680 = vsub.f32 %v2494, %v2643
    %v2681 = vsub.f32 %v2497, %v2643
    %v2682 = vsub.f32 %v2500, %v2647
    %v2683 = vsub.f32 %v2503, %v2647
    %v2684 = vsub.f32 %v2506, %v2651
    %v2685 = vsub.f32 %v2509, %v2651
    %v2686 = vsub.f32 %v2512, %v2655
    %v2687 = vsub.f32 %v2515, %v2655
    %v2688 = vsub.f32 %v2518, %v2659
    %v2689 = vsub.f32 %v2521, %v2659
    %v2690 = vsub.f32 %v2524, %v2663
    %v2691 = vsub.f32 %v2527, %v2663
    %v2692 = vsub.f32 %v2530, %v2667
    %v2693 = vsub.f32 %v2533, %v2667
    %v2694 = vsub.f32 %v2536, %v2671
    %v2695 = vsub.f32 %v2539, %v2671
    %v2696 = vmul.f32 %v2680, 1.442695
    %v2697 = vpow.pop %v2696
    %v2698 = vmul.f32 %v2681, 1.442695
    %v2699 = vpow.pop %v2698
    %v2700 = vmul.f32 %v2682, 1.442695
    %v2701 = vpow.pop %v2700
    %v2702 = vmul.f32 %v2683, 1.442695
    %v2703 = vpow.pop %v2702
    %v2704 = vmul.f32 %v2684, 1.442695
    %v2705 = vpow.pop %v2704
    %v2706 = vmul.f32 %v2685, 1.442695
    %v2707 = vpow.pop %v2706
    %v2708 = vmul.f32 %v2686, 1.442695
    %v2709 = vpow.pop %v2708
    %v2710 = vmul.f32 %v2687, 1.442695
    %v2711 = vpow.pop %v2710
    %v2712 = vmul.f32 %v2688, 1.442695
    %v2713 = vpow.pop %v2712
    %v2714 = vmul.f32 %v2689, 1.442695
    %v2715 = vpow.pop %v2714
    %v2716 = vmul.f32 %v2690, 1.442695
    %v2717 = vpow.pop %v2716
    %v2718 = vmul.f32 %v2691, 1.442695
    %v2719 = vpow.pop %v2718
    %v2720 = vmul.f32 %v2692, 1.442695
    %v2721 = vpow.pop %v2720
    %v2722 = vmul.f32 %v2693, 1.442695
    %v2723 = vpow.pop %v2722
    %v2724 = vmul.f32 %v2694, 1.442695
    %v2725 = vpow.pop %v2724
    %v2726 = vmul.f32 %v2695, 1.442695
    %v2727 = vpow.pop %v2726
    %2744 = vset.pattern.permute.xlu0 0
    %2745 = vperm.xlu0 %2744, %v2697
    %v2746 = vpop.permute.xlu0 %2745
    %2747 = vset.pattern.permute.xlu0 0
    %2748 = vperm.xlu0 %2747, %v2699
    %v2749 = vpop.permute.xlu0 %2748
    %2750 = vset.pattern.permute.xlu0 0
    %2751 = vperm.xlu0 %2750, %v2701
    %v2752 = vpop.permute.xlu0 %2751
    %2753 = vset.pattern.permute.xlu0 0
    %2754 = vperm.xlu0 %2753, %v2703
    %v2755 = vpop.permute.xlu0 %2754
    %2756 = vset.pattern.permute.xlu0 0
    %2757 = vperm.xlu0 %2756, %v2705
    %v2758 = vpop.permute.xlu0 %2757
    %2759 = vset.pattern.permute.xlu0 0
    %2760 = vperm.xlu0 %2759, %v2707
    %v2761 = vpop.permute.xlu0 %2760
    %2762 = vset.pattern.permute.xlu0 0
    %2763 = vperm.xlu0 %2762, %v2709
    %v2764 = vpop.permute.xlu0 %2763
    %2765 = vset.pattern.permute.xlu0 0
    %2766 = vperm.xlu0 %2765, %v2711
    %v2767 = vpop.permute.xlu0 %2766
    %2768 = vset.pattern.permute.xlu0 0
    %2769 = vperm.xlu0 %2768, %v2713
    %v2770 = vpop.permute.xlu0 %2769
    %2771 = vset.pattern.permute.xlu0 0
    %2772 = vperm.xlu0 %2771, %v2715
    %v2773 = vpop.permute.xlu0 %2772
    %2774 = vset.pattern.permute.xlu0 0
    %2775 = vperm.xlu0 %2774, %v2717
    %v2776 = vpop.permute.xlu0 %2775
    %2777 = vset.pattern.permute.xlu0 0
    %2778 = vperm.xlu0 %2777, %v2719
    %v2779 = vpop.permute.xlu0 %2778
    %2780 = vset.pattern.permute.xlu0 0
    %2781 = vperm.xlu0 %2780, %v2721
    %v2782 = vpop.permute.xlu0 %2781
    %2783 = vset.pattern.permute.xlu0 0
    %2784 = vperm.xlu0 %2783, %v2723
    %v2785 = vpop.permute.xlu0 %2784
    %2786 = vset.pattern.permute.xlu0 0
    %2787 = vperm.xlu0 %2786, %v2725
    %v2788 = vpop.permute.xlu0 %2787
    %2789 = vset.pattern.permute.xlu0 0
    %2790 = vperm.xlu0 %2789, %v2727
    %v2791 = vpop.permute.xlu0 %2790
    %v2792 = vlaneseq
    %v2793 = vshrl.u32 %v2792, 7
    %v2794 = vsub.s32 %v396, %v2793
    %v2795 = vrot.slane %v2746, %v2794
    %v2796 = vlaneseq
    %v2797 = vshrl.u32 %v2796, 7
    %v2798 = vsub.s32 %v401, %v2797
    %v2799 = vrot.slane %v2749, %v2798
    %v2800 = vsel %vm406, %v2799, %v2795
    %v2801 = vlaneseq
    %v2802 = vshrl.u32 %v2801, 7
    %v2803 = vsub.s32 %v396, %v2802
    %v2804 = vrot.slane %v2752, %v2803
    %v2805 = vlaneseq
    %v2806 = vshrl.u32 %v2805, 7
    %v2807 = vsub.s32 %v401, %v2806
    %v2808 = vrot.slane %v2755, %v2807
    %v2809 = vsel %vm406, %v2808, %v2804
    %v2810 = vlaneseq
    %v2811 = vshrl.u32 %v2810, 7
    %v2812 = vsub.s32 %v396, %v2811
    %v2813 = vrot.slane %v2758, %v2812
    %v2814 = vlaneseq
    %v2815 = vshrl.u32 %v2814, 7
    %v2816 = vsub.s32 %v401, %v2815
    %v2817 = vrot.slane %v2761, %v2816
    %v2818 = vsel %vm406, %v2817, %v2813
    %v2819 = vlaneseq
    %v2820 = vshrl.u32 %v2819, 7
    %v2821 = vsub.s32 %v396, %v2820
    %v2822 = vrot.slane %v2764, %v2821
    %v2823 = vlaneseq
    %v2824 = vshrl.u32 %v2823, 7
    %v2825 = vsub.s32 %v401, %v2824
    %v2826 = vrot.slane %v2767, %v2825
    %v2827 = vsel %vm406, %v2826, %v2822
    %v2828 = vlaneseq
    %v2829 = vshrl.u32 %v2828, 7
    %v2830 = vsub.s32 %v396, %v2829
    %v2831 = vrot.slane %v2770, %v2830
    %v2832 = vlaneseq
    %v2833 = vshrl.u32 %v2832, 7
    %v2834 = vsub.s32 %v401, %v2833
    %v2835 = vrot.slane %v2773, %v2834
    %v2836 = vsel %vm406, %v2835, %v2831
    %v2837 = vlaneseq
    %v2838 = vshrl.u32 %v2837, 7
    %v2839 = vsub.s32 %v396, %v2838
    %v2840 = vrot.slane %v2776, %v2839
    %v2841 = vlaneseq
    %v2842 = vshrl.u32 %v2841, 7
    %v2843 = vsub.s32 %v401, %v2842
    %v2844 = vrot.slane %v2779, %v2843
    %v2845 = vsel %vm406, %v2844, %v2840
    %v2846 = vlaneseq
    %v2847 = vshrl.u32 %v2846, 7
    %v2848 = vsub.s32 %v396, %v2847
    %v2849 = vrot.slane %v2782, %v2848
    %v2850 = vlaneseq
    %v2851 = vshrl.u32 %v2850, 7
    %v2852 = vsub.s32 %v401, %v2851
    %v2853 = vrot.slane %v2785, %v2852
    %v2854 = vsel %vm406, %v2853, %v2849
    %v2855 = vlaneseq
    %v2856 = vshrl.u32 %v2855, 7
    %v2857 = vsub.s32 %v396, %v2856
    %v2858 = vrot.slane %v2788, %v2857
    %v2859 = vlaneseq
    %v2860 = vshrl.u32 %v2859, 7
    %v2861 = vsub.s32 %v401, %v2860
    %v2862 = vrot.slane %v2791, %v2861
    %v2863 = vsel %vm406, %v2862, %v2858
    %v2864 = vsel %vm471, %v2809, %v2800
    %v2865 = vsel %vm473, %v2818, %v2864
    %v2866 = vsel %vm475, %v2827, %v2865
    %v2867 = vsel %vm477, %v2836, %v2866
    %v2868 = vsel %vm479, %v2845, %v2867
    %v2869 = vsel %vm481, %v2854, %v2868
    %v2870 = vsel %vm483, %v2863, %v2869
    %v2872 = vsel %vm486, %v2870, 0.0
    %2873 = vadd.xlane.f32.xlu0 %v2872
    %v2874 = vpop.xlane.xlu0 %2873
    %v2876 = vlaneseq
    %v2877 = vshrl.u32 %v2876, 7
    %v2878 = vsub.s32 0, %v2877
    %v2879 = vrot.slane %v2874, %v2878
    %v2880 = vlaneseq
    %v2881 = vshrl.u32 %v2880, 7
    %v2882 = vsub.s32 1, %v2881
    %v2883 = vrot.slane %v2874, %v2882
    %v2884 = vlaneseq
    %v2885 = vshrl.u32 %v2884, 7
    %v2886 = vsub.s32 2, %v2885
    %v2887 = vrot.slane %v2874, %v2886
    %v2888 = vlaneseq
    %v2889 = vshrl.u32 %v2888, 7
    %v2890 = vsub.s32 3, %v2889
    %v2891 = vrot.slane %v2874, %v2890
    %v2892 = vlaneseq
    %v2893 = vshrl.u32 %v2892, 7
    %v2894 = vsub.s32 4, %v2893
    %v2895 = vrot.slane %v2874, %v2894
    %v2896 = vlaneseq
    %v2897 = vshrl.u32 %v2896, 7
    %v2898 = vsub.s32 5, %v2897
    %v2899 = vrot.slane %v2874, %v2898
    %v2900 = vlaneseq
    %v2901 = vshrl.u32 %v2900, 7
    %v2902 = vsub.s32 6, %v2901
    %v2903 = vrot.slane %v2874, %v2902
    %v2904 = vlaneseq
    %v2905 = vshrl.u32 %v2904, 7
    %v2906 = vsub.s32 7, %v2905
    %v2907 = vrot.slane %v2874, %v2906
    %v2916 = vrcp.pop %v2879
    %v2917 = vmul.f32 %v2697, %v2916
    %v2918 = vmul.f32 %v2699, %v2916
    %v2919 = vrcp.pop %v2883
    %v2920 = vmul.f32 %v2701, %v2919
    %v2921 = vmul.f32 %v2703, %v2919
    %v2922 = vrcp.pop %v2887
    %v2923 = vmul.f32 %v2705, %v2922
    %v2924 = vmul.f32 %v2707, %v2922
    %v2925 = vrcp.pop %v2891
    %v2926 = vmul.f32 %v2709, %v2925
    %v2927 = vmul.f32 %v2711, %v2925
    %v2928 = vrcp.pop %v2895
    %v2929 = vmul.f32 %v2713, %v2928
    %v2930 = vmul.f32 %v2715, %v2928
    %v2931 = vrcp.pop %v2899
    %v2932 = vmul.f32 %v2717, %v2931
    %v2933 = vmul.f32 %v2719, %v2931
    %v2934 = vrcp.pop %v2903
    %v2935 = vmul.f32 %v2721, %v2934
    %v2936 = vmul.f32 %v2723, %v2934
    %v2937 = vrcp.pop %v2907
    %v2938 = vmul.f32 %v2725, %v2937
    %v2939 = vmul.f32 %v2727, %v2937
    %2941 = vset.pattern.permute.xlu0 0
    %2942 = vperm.xlu0 %2941, %v2917
    %v2943 = vpop.permute.xlu0 %2942
    %2946 = vset.pattern.permute.xlu0 0
    %2947 = vperm.xlu0 %2946, %v2918
    %v2948 = vpop.permute.xlu0 %2947
    %2951 = vset.pattern.permute.xlu0 0
    %2952 = vperm.xlu0 %2951, %v2920
    %v2953 = vpop.permute.xlu0 %2952
    %2956 = vset.pattern.permute.xlu0 0
    %2957 = vperm.xlu0 %2956, %v2921
    %v2958 = vpop.permute.xlu0 %2957
    %2961 = vset.pattern.permute.xlu0 0
    %2962 = vperm.xlu0 %2961, %v2923
    %v2963 = vpop.permute.xlu0 %2962
    %2966 = vset.pattern.permute.xlu0 0
    %2967 = vperm.xlu0 %2966, %v2924
    %v2968 = vpop.permute.xlu0 %2967
    %2971 = vset.pattern.permute.xlu0 0
    %2972 = vperm.xlu0 %2971, %v2926
    %v2973 = vpop.permute.xlu0 %2972
    %2976 = vset.pattern.permute.xlu0 0
    %2977 = vperm.xlu0 %2976, %v2927
    %v2978 = vpop.permute.xlu0 %2977
    %2981 = vset.pattern.permute.xlu0 0
    %2982 = vperm.xlu0 %2981, %v2929
    %v2983 = vpop.permute.xlu0 %2982
    %2986 = vset.pattern.permute.xlu0 0
    %2987 = vperm.xlu0 %2986, %v2930
    %v2988 = vpop.permute.xlu0 %2987
    %2991 = vset.pattern.permute.xlu0 0
    %2992 = vperm.xlu0 %2991, %v2932
    %v2993 = vpop.permute.xlu0 %2992
    %2996 = vset.pattern.permute.xlu0 0
    %2997 = vperm.xlu0 %2996, %v2933
    %v2998 = vpop.permute.xlu0 %2997
    %3001 = vset.pattern.permute.xlu0 0
    %3002 = vperm.xlu0 %3001, %v2935
    %v3003 = vpop.permute.xlu0 %3002
    %3006 = vset.pattern.permute.xlu0 0
    %3007 = vperm.xlu0 %3006, %v2936
    %v3008 = vpop.permute.xlu0 %3007
    %3011 = vset.pattern.permute.xlu0 0
    %3012 = vperm.xlu0 %3011, %v2938
    %v3013 = vpop.permute.xlu0 %3012
    %3016 = vset.pattern.permute.xlu0 0
    %3017 = vperm.xlu0 %3016, %v2939
    %v3018 = vpop.permute.xlu0 %3017
    %v3020 = vmul.f32 %v2943, %v127
    %v3021 = vmul.f32 %v2948, %v128
    %v3022 = vmul.f32 %v2953, %v129
    %v3023 = vmul.f32 %v2958, %v130
    %v3024 = vmul.f32 %v2963, %v131
    %v3025 = vmul.f32 %v2968, %v132
    %v3026 = vmul.f32 %v2973, %v133
    %v3027 = vmul.f32 %v2978, %v134
    %v3028 = vmul.f32 %v2983, %v135
    %v3029 = vmul.f32 %v2988, %v136
    %v3030 = vmul.f32 %v2993, %v137
    %v3031 = vmul.f32 %v2998, %v138
    %v3032 = vmul.f32 %v3003, %v139
    %v3033 = vmul.f32 %v3008, %v140
    %v3034 = vmul.f32 %v3013, %v141
    %v3035 = vmul.f32 %v3018, %v142
    %v3036 = vsel %vm887, %v3020, 0.0
    %v3037 = vsel %vm887, %v3021, 0.0
    %v3038 = vadd.f32 %v3036, %v3037
    %v3039 = vrot.slane %v3038, 4
    %v3040 = vadd.f32 %v3038, %v3039
    %v3041 = vrot.slane %v3040, 2
    %v3042 = vadd.f32 %v3040, %v3041
    %v3043 = vrot.slane %v3042, 1
    %v3044 = vadd.f32 %v3042, %v3043
    %v3045 = vsel %vm887, %v3022, 0.0
    %v3046 = vsel %vm887, %v3023, 0.0
    %v3047 = vadd.f32 %v3045, %v3046
    %v3048 = vrot.slane %v3047, 4
    %v3049 = vadd.f32 %v3047, %v3048
    %v3050 = vrot.slane %v3049, 2
    %v3051 = vadd.f32 %v3049, %v3050
    %v3052 = vrot.slane %v3051, 1
    %v3053 = vadd.f32 %v3051, %v3052
    %v3054 = vsel %vm887, %v3024, 0.0
    %v3055 = vsel %vm887, %v3025, 0.0
    %v3056 = vadd.f32 %v3054, %v3055
    %v3057 = vrot.slane %v3056, 4
    %v3058 = vadd.f32 %v3056, %v3057
    %v3059 = vrot.slane %v3058, 2
    %v3060 = vadd.f32 %v3058, %v3059
    %v3061 = vrot.slane %v3060, 1
    %v3062 = vadd.f32 %v3060, %v3061
    %v3063 = vsel %vm887, %v3026, 0.0
    %v3064 = vsel %vm887, %v3027, 0.0
    %v3065 = vadd.f32 %v3063, %v3064
    %v3066 = vrot.slane %v3065, 4
    %v3067 = vadd.f32 %v3065, %v3066
    %v3068 = vrot.slane %v3067, 2
    %v3069 = vadd.f32 %v3067, %v3068
    %v3070 = vrot.slane %v3069, 1
    %v3071 = vadd.f32 %v3069, %v3070
    %v3072 = vsel %vm887, %v3028, 0.0
    %v3073 = vsel %vm887, %v3029, 0.0
    %v3074 = vadd.f32 %v3072, %v3073
    %v3075 = vrot.slane %v3074, 4
    %v3076 = vadd.f32 %v3074, %v3075
    %v3077 = vrot.slane %v3076, 2
    %v3078 = vadd.f32 %v3076, %v3077
    %v3079 = vrot.slane %v3078, 1
    %v3080 = vadd.f32 %v3078, %v3079
    %v3081 = vsel %vm887, %v3030, 0.0
    %v3082 = vsel %vm887, %v3031, 0.0
    %v3083 = vadd.f32 %v3081, %v3082
    %v3084 = vrot.slane %v3083, 4
    %v3085 = vadd.f32 %v3083, %v3084
    %v3086 = vrot.slane %v3085, 2
    %v3087 = vadd.f32 %v3085, %v3086
    %v3088 = vrot.slane %v3087, 1
    %v3089 = vadd.f32 %v3087, %v3088
    %v3090 = vsel %vm887, %v3032, 0.0
    %v3091 = vsel %vm887, %v3033, 0.0
    %v3092 = vadd.f32 %v3090, %v3091
    %v3093 = vrot.slane %v3092, 4
    %v3094 = vadd.f32 %v3092, %v3093
    %v3095 = vrot.slane %v3094, 2
    %v3096 = vadd.f32 %v3094, %v3095
    %v3097 = vrot.slane %v3096, 1
    %v3098 = vadd.f32 %v3096, %v3097
    %v3099 = vsel %vm887, %v3034, 0.0
    %v3100 = vsel %vm887, %v3035, 0.0
    %v3101 = vadd.f32 %v3099, %v3100
    %v3102 = vrot.slane %v3101, 4
    %v3103 = vadd.f32 %v3101, %v3102
    %v3104 = vrot.slane %v3103, 2
    %v3105 = vadd.f32 %v3103, %v3104
    %v3106 = vrot.slane %v3105, 1
    %v3107 = vadd.f32 %v3105, %v3106
    %v3116 = vsel %vm471, %v3053, %v3044
    %v3117 = vsel %vm473, %v3062, %v3116
    %v3118 = vsel %vm475, %v3071, %v3117
    %v3119 = vsel %vm477, %v3080, %v3118
    %v3120 = vsel %vm479, %v3089, %v3119
    %v3121 = vsel %vm481, %v3098, %v3120
    %v3122 = vsel %vm483, %v3107, %v3121
    %3123 = vrot.lane.b32.xlu0 %v3122, 32
    %v3124 = vpop.permute.xlu0 %3123
    %3126 = vrot.lane.b32.xlu0 %v2164, 72
    %v3127 = vpop.permute.xlu0 %3126
    %v3129 = vsel %vm330, %v2337, %v3124
    %v3130 = vsel %vm983, %v3129, %v3127
    %v3131 = vsel %vm991, %v3127, 0
    %3133 = vmatprep.subr.mxu0 0.0
    %3134 = vmatpush1.msra.mxu0 %v160
    %3135 = vmatprep.subr.mxu0 0.0
    %3136 = vmatpush1.msra.mxu0 %v161
    %3137 = vmatprep.subr.mxu0 0.0
    %3138 = vmatpush1.msra.mxu0 %v162
    %3139 = vmatprep.subr.mxu0 0.0
    %3140 = vmatpush1.msra.mxu0 %v163
    %3141 = vmatprep.subr.mxu0 0.0
    %3142 = vmatpush1.msra.mxu0 %v164
    %3143 = vmatprep.subr.mxu0 0.0
    %3144 = vmatpush1.msra.mxu0 %v165
    %3145 = vmatprep.subr.mxu0 0.0
    %3146 = vmatpush1.msra.mxu0 %v166
    %3147 = vmatprep.subr.mxu0 0.0
    %3148 = vmatpush1.msra.mxu0 %v167
    %3149 = vmatprep.subr.mxu0 0.0
    %3150 = vmatpush1.msra.mxu0 %v168
    %3151 = vmatprep.subr.mxu0 0.0
    %3152 = vmatpush1.msra.mxu0 %v169
    %3153 = vmatprep.subr.mxu0 0.0
    %3154 = vmatpush1.msra.mxu0 %v170
    %3155 = vmatprep.subr.mxu0 0.0
    %3156 = vmatpush1.msra.mxu0 %v171
    %3157 = vmatprep.subr.mxu0 0.0
    %3158 = vmatpush1.msra.mxu0 %v172
    %3159 = vmatprep.subr.mxu0 0.0
    %3160 = vmatpush1.msra.mxu0 %v173
    %3161 = vmatprep.subr.mxu0 0.0
    %3162 = vmatpush1.msra.mxu0 %v174
    %3163 = vmatprep.subr.mxu0 0.0
    %3164 = vmatpush1.msra.mxu0 %v175
    %3165 = vmatprep.subr.mxu0 0.0
    %3166 = vmatpush1.msra.mxu0 %v176
    %3167 = vmatprep.subr.mxu0 0.0
    %3168 = vmatpush1.msra.mxu0 0.0
    %3169 = vmatprep.subr.mxu0 0.0
    %3170 = vmatpush1.msra.mxu0 0.0
    %3171 = vmatprep.subr.mxu0 0.0
    %3172 = vmatpush1.msra.mxu0 0.0
    %3173 = vmatprep.subr.mxu0 0.0
    %3174 = vmatpush1.msra.mxu0 0.0
    %3175 = vmatprep.subr.mxu0 0.0
    %3176 = vmatpush1.msra.mxu0 0.0
    %3177 = vmatprep.subr.mxu0 0.0
    %3178 = vmatpush1.msra.mxu0 0.0
    %3179 = vmatprep.subr.mxu0 0.0
    %3180 = vmatpush1.msra.mxu0 0.0
    %3181 = vmatprep.subr.mxu0 0.0
    %3182 = vmatpush1.msra.mxu0 0.0
    %3183 = vmatprep.subr.mxu0 0.0
    %3184 = vmatpush1.msra.mxu0 0.0
    %3185 = vmatprep.subr.mxu0 0.0
    %3186 = vmatpush1.msra.mxu0 0.0
    %3187 = vmatprep.subr.mxu0 0.0
    %3188 = vmatpush1.msra.mxu0 0.0
    %3189 = vmatprep.subr.mxu0 0.0
    %3190 = vmatpush1.msra.mxu0 0.0
    %3191 = vmatprep.subr.mxu0 0.0
    %3192 = vmatpush1.msra.mxu0 0.0
    %3193 = vmatprep.subr.mxu0 0.0
    %3194 = vmatpush1.msra.mxu0 0.0
    %3195 = vmatprep.subr.mxu0 0.0
    %3196 = vmatpush1.msra.mxu0 0.0
    %3197 = vmatprep.mubr.f32.mxu0 %v3131
    %3198 = vmatmul.mubr.f32.gmra.mrb[0].mxu0 %v3130
    %v3199 = vpop.f32.mrb[0].mxu0
    %v3200 = vadd.f32 %v989, %v3199
    %v3201 = vpop.f32.mrb[0].mxu0
    %3202 = vdwg.mxu0
    %v3203 = vxor.u32 %v3200, 2147483648
    %v3204 = vmul.f32 %v3203, 1.442695
    %v3205 = vpow.pop %v3204
    %v3206 = vadd.f32 %v3205, 1.0
    %v3207 = vrcp.pop %v3206
    %v3208 = vmul.f32 1.0, %v3207
    %3210 = vrot.lane.b32.xlu0 %v3200, 32
    %v3211 = vpop.permute.xlu0 %3210
    %v3213 = vmul.f32 %v3208, %v3211
    %3215 = vrot.lane.b32.xlu0 %v3213, 64
    %v3216 = vpop.permute.xlu0 %3215
    %v3218 = vadd.f32 %v3200, %v3216
    %v3219 = vtanh.pop %v3218
    %v3220 = vsub.f32 1.0, %v3208
    %3222 = vrot.lane.b32.xlu0 %v3219, 96
    %v3223 = vpop.permute.xlu0 %3222
    %v3225 = vmul.f32 %v3220, %v3223
    %v3226 = vmul.f32 %v3208, %v2164
    %v3227 = vadd.f32 %v3225, %v3226
    %3229 = vrot.lane.b32.xlu0 %v3227, 96
    %v3230 = vpop.permute.xlu0 %3229
    %v3231 = vsel %vm330, %v3230, 0
    %3233 = vmatprep.subr.mxu0 0.0
    %3234 = vmatpush1.msra.mxu0 %v178
    %3235 = vmatprep.subr.mxu0 0.0
    %3236 = vmatpush1.msra.mxu0 %v179
    %3237 = vmatprep.subr.mxu0 0.0
    %3238 = vmatpush1.msra.mxu0 %v180
    %3239 = vmatprep.subr.mxu0 0.0
    %3240 = vmatpush1.msra.mxu0 %v181
    %3241 = vmatprep.subr.mxu0 0.0
    %3242 = vmatpush1.msra.mxu0 0.0
    %3243 = vmatprep.subr.mxu0 0.0
    %3244 = vmatpush1.msra.mxu0 0.0
    %3245 = vmatprep.subr.mxu0 0.0
    %3246 = vmatpush1.msra.mxu0 0.0
    %3247 = vmatprep.subr.mxu0 0.0
    %3248 = vmatpush1.msra.mxu0 0.0
    %3249 = vmatprep.subr.mxu0 0.0
    %3250 = vmatpush1.msra.mxu0 0.0
    %3251 = vmatprep.subr.mxu0 0.0
    %3252 = vmatpush1.msra.mxu0 0.0
    %3253 = vmatprep.subr.mxu0 0.0
    %3254 = vmatpush1.msra.mxu0 0.0
    %3255 = vmatprep.subr.mxu0 0.0
    %3256 = vmatpush1.msra.mxu0 0.0
    %3257 = vmatprep.subr.mxu0 0.0
    %3258 = vmatpush1.msra.mxu0 0.0
    %3259 = vmatprep.subr.mxu0 0.0
    %3260 = vmatpush1.msra.mxu0 0.0
    %3261 = vmatprep.subr.mxu0 0.0
    %3262 = vmatpush1.msra.mxu0 0.0
    %3263 = vmatprep.subr.mxu0 0.0
    %3264 = vmatpush1.msra.mxu0 0.0
    %3265 = vmatprep.subr.mxu0 0.0
    %3266 = vmatpush1.msra.mxu0 0.0
    %3267 = vmatprep.subr.mxu0 0.0
    %3268 = vmatpush1.msra.mxu0 0.0
    %3269 = vmatprep.subr.mxu0 0.0
    %3270 = vmatpush1.msra.mxu0 0.0
    %3271 = vmatprep.subr.mxu0 0.0
    %3272 = vmatpush1.msra.mxu0 0.0
    %3273 = vmatprep.subr.mxu0 0.0
    %3274 = vmatpush1.msra.mxu0 0.0
    %3275 = vmatprep.subr.mxu0 0.0
    %3276 = vmatpush1.msra.mxu0 0.0
    %3277 = vmatprep.subr.mxu0 0.0
    %3278 = vmatpush1.msra.mxu0 0.0
    %3279 = vmatprep.subr.mxu0 0.0
    %3280 = vmatpush1.msra.mxu0 0.0
    %3281 = vmatprep.subr.mxu0 0.0
    %3282 = vmatpush1.msra.mxu0 0.0
    %3283 = vmatprep.subr.mxu0 0.0
    %3284 = vmatpush1.msra.mxu0 0.0
    %3285 = vmatprep.subr.mxu0 0.0
    %3286 = vmatpush1.msra.mxu0 0.0
    %3287 = vmatprep.subr.mxu0 0.0
    %3288 = vmatpush1.msra.mxu0 0.0
    %3289 = vmatprep.subr.mxu0 0.0
    %3290 = vmatpush1.msra.mxu0 0.0
    %3291 = vmatprep.subr.mxu0 0.0
    %3292 = vmatpush1.msra.mxu0 0.0
    %3293 = vmatprep.subr.mxu0 0.0
    %3294 = vmatpush1.msra.mxu0 0.0
    %3295 = vmatprep.subr.mxu0 0.0
    %3296 = vmatpush1.msra.mxu0 0.0
    %3297 = vmatprep.mubr.f32.mxu0 0.0
    %3298 = vmatmul.mubr.f32.gmra.mrb[0].mxu0 %v3231
    %v3299 = vpop.f32.mrb[0].mxu0
    %v3300 = vadd.f32 %v1096, %v3299
    %v3301 = vpop.f32.mrb[0].mxu0
    %3302 = vdwg.mxu0
    %v3303 = vsel %vm330, %v3300, -inf
    %3304 = vmax.xlane.f32.xlu0 %v3303
    %v3305 = vpop.xlane.xlu0 %3304
    %v3306 = vsub.f32 %v3300, %v3305
    %v3307 = vmul.f32 %v3306, 1.442695
    %v3308 = vpow.pop %v3307
    %v3309 = vsel %vm330, %v3308, 0.0
    %3310 = vadd.xlane.f32.xlu0 %v3309
    %v3311 = vpop.xlane.xlu0 %3310
    %v3312 = vrcp.pop %v3311
    %v3313 = vmul.f32 %v3308, %v3312
    %v3314 = vlaneseq
    %v3315 = vshrl.u32 %v3314, 7
    %v3316 = vsub.s32 %v1184, %v3315
    %v3317 = vrot.slane %v2943, %v3316
    %v3318 = vlaneseq
    %v3319 = vshrl.u32 %v3318, 7
    %v3320 = vsub.s32 %v1189, %v3319
    %v3321 = vrot.slane %v2948, %v3320
    %v3322 = vsel %vm1194, %v3321, %v3317
    %v3323 = vlaneseq
    %v3324 = vshrl.u32 %v3323, 7
    %v3325 = vsub.s32 %v1184, %v3324
    %v3326 = vrot.slane %v2953, %v3325
    %v3327 = vlaneseq
    %v3328 = vshrl.u32 %v3327, 7
    %v3329 = vsub.s32 %v1189, %v3328
    %v3330 = vrot.slane %v2958, %v3329
    %v3331 = vsel %vm1194, %v3330, %v3326
    %v3332 = vlaneseq
    %v3333 = vshrl.u32 %v3332, 7
    %v3334 = vsub.s32 %v1184, %v3333
    %v3335 = vrot.slane %v2963, %v3334
    %v3336 = vlaneseq
    %v3337 = vshrl.u32 %v3336, 7
    %v3338 = vsub.s32 %v1189, %v3337
    %v3339 = vrot.slane %v2968, %v3338
    %v3340 = vsel %vm1194, %v3339, %v3335
    %v3341 = vlaneseq
    %v3342 = vshrl.u32 %v3341, 7
    %v3343 = vsub.s32 %v1184, %v3342
    %v3344 = vrot.slane %v2973, %v3343
    %v3345 = vlaneseq
    %v3346 = vshrl.u32 %v3345, 7
    %v3347 = vsub.s32 %v1189, %v3346
    %v3348 = vrot.slane %v2978, %v3347
    %v3349 = vsel %vm1194, %v3348, %v3344
    %v3350 = vlaneseq
    %v3351 = vshrl.u32 %v3350, 7
    %v3352 = vsub.s32 %v1184, %v3351
    %v3353 = vrot.slane %v2983, %v3352
    %v3354 = vlaneseq
    %v3355 = vshrl.u32 %v3354, 7
    %v3356 = vsub.s32 %v1189, %v3355
    %v3357 = vrot.slane %v2988, %v3356
    %v3358 = vsel %vm1194, %v3357, %v3353
    %v3359 = vlaneseq
    %v3360 = vshrl.u32 %v3359, 7
    %v3361 = vsub.s32 %v1184, %v3360
    %v3362 = vrot.slane %v2993, %v3361
    %v3363 = vlaneseq
    %v3364 = vshrl.u32 %v3363, 7
    %v3365 = vsub.s32 %v1189, %v3364
    %v3366 = vrot.slane %v2998, %v3365
    %v3367 = vsel %vm1194, %v3366, %v3362
    %v3368 = vlaneseq
    %v3369 = vshrl.u32 %v3368, 7
    %v3370 = vsub.s32 %v1184, %v3369
    %v3371 = vrot.slane %v3003, %v3370
    %v3372 = vlaneseq
    %v3373 = vshrl.u32 %v3372, 7
    %v3374 = vsub.s32 %v1189, %v3373
    %v3375 = vrot.slane %v3008, %v3374
    %v3376 = vsel %vm1194, %v3375, %v3371
    %v3377 = vlaneseq
    %v3378 = vshrl.u32 %v3377, 7
    %v3379 = vsub.s32 %v1184, %v3378
    %v3380 = vrot.slane %v3013, %v3379
    %v3381 = vlaneseq
    %v3382 = vshrl.u32 %v3381, 7
    %v3383 = vsub.s32 %v1189, %v3382
    %v3384 = vrot.slane %v3018, %v3383
    %v3385 = vsel %vm1194, %v3384, %v3380
    %v3386 = vsel %vm471, %v3331, %v3322
    %v3387 = vsel %vm473, %v3340, %v3386
    %v3388 = vsel %vm475, %v3349, %v3387
    %v3389 = vsel %vm477, %v3358, %v3388
    %v3390 = vsel %vm479, %v3367, %v3389
    %v3391 = vsel %vm481, %v3376, %v3390
    %v3392 = vsel %vm483, %v3385, %v3391
    %v3394 = vsel %vm330, %v3313, %v3227
    %v3395 = vsel %vm1268, %v3394, %v3392
    %v3396 = vsel %vm1270, %v3395, 0.0
    %s3397 = scalar_lea.vmem [#allocation14], 16
    %3398 = vst [vmem:[%s3397] sm:$0xff] %v3396
    %s3399 = scalar_lea.vmem [#allocation2], 24
    %v3400 = vld [vmem:[%s3399] sm:$0xff]
    %v3402 = vcombine.high %v3300, %v3300
    %v3404 = vunpack.c.l.s4 1966171168
    %v3405 = vunpack.c.0.s8 %v3404
    %v3406 = vlaneseq
    %v3407 = vshrl.u32 %v3406, 7
    %v3408 = vsub.s32 %v3405, %v3407
    %v3409 = vrot.slane %v3300, %v3408
    %v3411 = vunpack.c.l.s4 1966171168
    %v3412 = vunpack.c.0.s8 %v3411
    %v3413 = vlaneseq
    %v3414 = vshrl.u32 %v3413, 7
    %v3415 = vsub.s32 %v3412, %v3414
    %v3416 = vrot.slane %v3402, %v3415
    %v3417 = vcombine.high %v3409, %v3409
    %v3418 = vcombine.high %v3416, %v3416
    %v3420 = vunpack.c.l.s4 1966171168
    %v3421 = vunpack.c.0.s8 %v3420
    %v3422 = vlaneseq
    %v3423 = vshrl.u32 %v3422, 7
    %v3424 = vsub.s32 %v3421, %v3423
    %v3425 = vrot.slane %v3409, %v3424
    %v3427 = vunpack.c.l.s4 1966171168
    %v3428 = vunpack.c.0.s8 %v3427
    %v3429 = vlaneseq
    %v3430 = vshrl.u32 %v3429, 7
    %v3431 = vsub.s32 %v3428, %v3430
    %v3432 = vrot.slane %v3416, %v3431
    %v3434 = vunpack.c.l.s4 1966171168
    %v3435 = vunpack.c.0.s8 %v3434
    %v3436 = vlaneseq
    %v3437 = vshrl.u32 %v3436, 7
    %v3438 = vsub.s32 %v3435, %v3437
    %v3439 = vrot.slane %v3417, %v3438
    %v3441 = vunpack.c.l.s4 1966171168
    %v3442 = vunpack.c.0.s8 %v3441
    %v3443 = vlaneseq
    %v3444 = vshrl.u32 %v3443, 7
    %v3445 = vsub.s32 %v3442, %v3444
    %v3446 = vrot.slane %v3418, %v3445
    %v3447 = vcombine.high %v3425, %v3425
    %v3448 = vcombine.high %v3432, %v3432
    %v3449 = vcombine.high %v3439, %v3439
    %v3450 = vcombine.high %v3446, %v3446
    %v3451 = vlaneseq
    %v3452 = vshrl.u32 %v3451, 7
    %v3453 = vsub.s32 0, %v3452
    %v3454 = vrot.slane %v3425, %v3453
    %v3455 = vlaneseq
    %v3456 = vshrl.u32 %v3455, 7
    %v3457 = vsub.s32 0, %v3456
    %v3458 = vrot.slane %v3439, %v3457
    %v3459 = vlaneseq
    %v3460 = vshrl.u32 %v3459, 7
    %v3461 = vsub.s32 0, %v3460
    %v3462 = vrot.slane %v3447, %v3461
    %v3463 = vlaneseq
    %v3464 = vshrl.u32 %v3463, 7
    %v3465 = vsub.s32 0, %v3464
    %v3466 = vrot.slane %v3449, %v3465
    %v3467 = vlaneseq
    %v3468 = vshrl.u32 %v3467, 7
    %v3469 = vsub.s32 0, %v3468
    %v3470 = vrot.slane %v3432, %v3469
    %v3471 = vlaneseq
    %v3472 = vshrl.u32 %v3471, 7
    %v3473 = vsub.s32 0, %v3472
    %v3474 = vrot.slane %v3446, %v3473
    %v3475 = vlaneseq
    %v3476 = vshrl.u32 %v3475, 7
    %v3477 = vsub.s32 0, %v3476
    %v3478 = vrot.slane %v3448, %v3477
    %v3479 = vlaneseq
    %v3480 = vshrl.u32 %v3479, 7
    %v3481 = vsub.s32 0, %v3480
    %v3482 = vrot.slane %v3450, %v3481
    %3483 = vrot.lane.b32.xlu0 %v3454, 96
    %v3484 = vpop.permute.xlu0 %3483
    %3485 = vrot.lane.b32.xlu0 %v3458, 96
    %v3486 = vpop.permute.xlu0 %3485
    %3487 = vrot.lane.b32.xlu0 %v3462, 96
    %v3488 = vpop.permute.xlu0 %3487
    %3489 = vrot.lane.b32.xlu0 %v3466, 96
    %v3490 = vpop.permute.xlu0 %3489
    %3491 = vrot.lane.b32.xlu0 %v3470, 96
    %v3492 = vpop.permute.xlu0 %3491
    %3493 = vrot.lane.b32.xlu0 %v3474, 96
    %v3494 = vpop.permute.xlu0 %3493
    %3495 = vrot.lane.b32.xlu0 %v3478, 96
    %v3496 = vpop.permute.xlu0 %3495
    %3497 = vrot.lane.b32.xlu0 %v3482, 96
    %v3498 = vpop.permute.xlu0 %3497
    %v3507 = vadd.f32 %v143, %v3484
    %v3508 = vadd.f32 %v144, %v3484
    %v3509 = vadd.f32 %v145, %v3486
    %v3510 = vadd.f32 %v146, %v3486
    %v3511 = vadd.f32 %v147, %v3488
    %v3512 = vadd.f32 %v148, %v3488
    %v3513 = vadd.f32 %v149, %v3490
    %v3514 = vadd.f32 %v150, %v3490
    %v3515 = vadd.f32 %v151, %v3492
    %v3516 = vadd.f32 %v152, %v3492
    %v3517 = vadd.f32 %v153, %v3494
    %v3518 = vadd.f32 %v154, %v3494
    %v3519 = vadd.f32 %v155, %v3496
    %v3520 = vadd.f32 %v156, %v3496
    %v3521 = vadd.f32 %v157, %v3498
    %v3522 = vadd.f32 %v158, %v3498
    %v3523 = vtanh.pop %v3507
    %v3524 = vtanh.pop %v3508
    %v3525 = vtanh.pop %v3509
    %v3526 = vtanh.pop %v3510
    %v3527 = vtanh.pop %v3511
    %v3528 = vtanh.pop %v3512
    %v3529 = vtanh.pop %v3513
    %v3530 = vtanh.pop %v3514
    %v3531 = vtanh.pop %v3515
    %v3532 = vtanh.pop %v3516
    %v3533 = vtanh.pop %v3517
    %v3534 = vtanh.pop %v3518
    %v3535 = vtanh.pop %v3519
    %v3536 = vtanh.pop %v3520
    %v3537 = vtanh.pop %v3521
    %v3538 = vtanh.pop %v3522
    %v3539 = vmul.f32 %v3523, %v312
    %v3540 = vmul.f32 %v3524, %v312
    %v3541 = vmul.f32 %v3525, %v312
    %v3542 = vmul.f32 %v3526, %v312
    %v3543 = vmul.f32 %v3527, %v312
    %v3544 = vmul.f32 %v3528, %v312
    %v3545 = vmul.f32 %v3529, %v312
    %v3546 = vmul.f32 %v3530, %v312
    %v3547 = vmul.f32 %v3531, %v312
    %v3548 = vmul.f32 %v3532, %v312
    %v3549 = vmul.f32 %v3533, %v312
    %v3550 = vmul.f32 %v3534, %v312
    %v3551 = vmul.f32 %v3535, %v312
    %v3552 = vmul.f32 %v3536, %v312
    %v3553 = vmul.f32 %v3537, %v312
    %v3554 = vmul.f32 %v3538, %v312
    %v3555 = vsel %vm330, %v3539, 0.0
    %3556 = vadd.xlane.f32.xlu0 %v3555
    %v3557 = vpop.xlane.xlu0 %3556
    %v3558 = vsel %vm330, %v3540, 0.0
    %3559 = vadd.xlane.f32.xlu0 %v3558
    %v3560 = vpop.xlane.xlu0 %3559
    %v3561 = vsel %vm330, %v3541, 0.0
    %3562 = vadd.xlane.f32.xlu0 %v3561
    %v3563 = vpop.xlane.xlu0 %3562
    %v3564 = vsel %vm330, %v3542, 0.0
    %3565 = vadd.xlane.f32.xlu0 %v3564
    %v3566 = vpop.xlane.xlu0 %3565
    %v3567 = vsel %vm330, %v3543, 0.0
    %3568 = vadd.xlane.f32.xlu0 %v3567
    %v3569 = vpop.xlane.xlu0 %3568
    %v3570 = vsel %vm330, %v3544, 0.0
    %3571 = vadd.xlane.f32.xlu0 %v3570
    %v3572 = vpop.xlane.xlu0 %3571
    %v3573 = vsel %vm330, %v3545, 0.0
    %3574 = vadd.xlane.f32.xlu0 %v3573
    %v3575 = vpop.xlane.xlu0 %3574
    %v3576 = vsel %vm330, %v3546, 0.0
    %3577 = vadd.xlane.f32.xlu0 %v3576
    %v3578 = vpop.xlane.xlu0 %3577
    %v3579 = vsel %vm330, %v3547, 0.0
    %3580 = vadd.xlane.f32.xlu0 %v3579
    %v3581 = vpop.xlane.xlu0 %3580
    %v3582 = vsel %vm330, %v3548, 0.0
    %3583 = vadd.xlane.f32.xlu0 %v3582
    %v3584 = vpop.xlane.xlu0 %3583
    %v3585 = vsel %vm330, %v3549, 0.0
    %3586 = vadd.xlane.f32.xlu0 %v3585
    %v3587 = vpop.xlane.xlu0 %3586
    %v3588 = vsel %vm330, %v3550, 0.0
    %3589 = vadd.xlane.f32.xlu0 %v3588
    %v3590 = vpop.xlane.xlu0 %3589
    %v3591 = vsel %vm330, %v3551, 0.0
    %3592 = vadd.xlane.f32.xlu0 %v3591
    %v3593 = vpop.xlane.xlu0 %3592
    %v3594 = vsel %vm330, %v3552, 0.0
    %3595 = vadd.xlane.f32.xlu0 %v3594
    %v3596 = vpop.xlane.xlu0 %3595
    %v3597 = vsel %vm330, %v3553, 0.0
    %3598 = vadd.xlane.f32.xlu0 %v3597
    %v3599 = vpop.xlane.xlu0 %3598
    %v3600 = vsel %vm330, %v3554, 0.0
    %3601 = vadd.xlane.f32.xlu0 %v3600
    %v3602 = vpop.xlane.xlu0 %3601
    %v3619 = vlaneseq
    %v3620 = vshrl.u32 %v3619, 7
    %v3621 = vsub.s32 %v396, %v3620
    %v3622 = vrot.slane %v3557, %v3621
    %v3623 = vlaneseq
    %v3624 = vshrl.u32 %v3623, 7
    %v3625 = vsub.s32 %v401, %v3624
    %v3626 = vrot.slane %v3560, %v3625
    %v3627 = vsel %vm406, %v3626, %v3622
    %v3628 = vlaneseq
    %v3629 = vshrl.u32 %v3628, 7
    %v3630 = vsub.s32 %v396, %v3629
    %v3631 = vrot.slane %v3563, %v3630
    %v3632 = vlaneseq
    %v3633 = vshrl.u32 %v3632, 7
    %v3634 = vsub.s32 %v401, %v3633
    %v3635 = vrot.slane %v3566, %v3634
    %v3636 = vsel %vm406, %v3635, %v3631
    %v3637 = vlaneseq
    %v3638 = vshrl.u32 %v3637, 7
    %v3639 = vsub.s32 %v396, %v3638
    %v3640 = vrot.slane %v3569, %v3639
    %v3641 = vlaneseq
    %v3642 = vshrl.u32 %v3641, 7
    %v3643 = vsub.s32 %v401, %v3642
    %v3644 = vrot.slane %v3572, %v3643
    %v3645 = vsel %vm406, %v3644, %v3640
    %v3646 = vlaneseq
    %v3647 = vshrl.u32 %v3646, 7
    %v3648 = vsub.s32 %v396, %v3647
    %v3649 = vrot.slane %v3575, %v3648
    %v3650 = vlaneseq
    %v3651 = vshrl.u32 %v3650, 7
    %v3652 = vsub.s32 %v401, %v3651
    %v3653 = vrot.slane %v3578, %v3652
    %v3654 = vsel %vm406, %v3653, %v3649
    %v3655 = vlaneseq
    %v3656 = vshrl.u32 %v3655, 7
    %v3657 = vsub.s32 %v396, %v3656
    %v3658 = vrot.slane %v3581, %v3657
    %v3659 = vlaneseq
    %v3660 = vshrl.u32 %v3659, 7
    %v3661 = vsub.s32 %v401, %v3660
    %v3662 = vrot.slane %v3584, %v3661
    %v3663 = vsel %vm406, %v3662, %v3658
    %v3664 = vlaneseq
    %v3665 = vshrl.u32 %v3664, 7
    %v3666 = vsub.s32 %v396, %v3665
    %v3667 = vrot.slane %v3587, %v3666
    %v3668 = vlaneseq
    %v3669 = vshrl.u32 %v3668, 7
    %v3670 = vsub.s32 %v401, %v3669
    %v3671 = vrot.slane %v3590, %v3670
    %v3672 = vsel %vm406, %v3671, %v3667
    %v3673 = vlaneseq
    %v3674 = vshrl.u32 %v3673, 7
    %v3675 = vsub.s32 %v396, %v3674
    %v3676 = vrot.slane %v3593, %v3675
    %v3677 = vlaneseq
    %v3678 = vshrl.u32 %v3677, 7
    %v3679 = vsub.s32 %v401, %v3678
    %v3680 = vrot.slane %v3596, %v3679
    %v3681 = vsel %vm406, %v3680, %v3676
    %v3682 = vlaneseq
    %v3683 = vshrl.u32 %v3682, 7
    %v3684 = vsub.s32 %v396, %v3683
    %v3685 = vrot.slane %v3599, %v3684
    %v3686 = vlaneseq
    %v3687 = vshrl.u32 %v3686, 7
    %v3688 = vsub.s32 %v401, %v3687
    %v3689 = vrot.slane %v3602, %v3688
    %v3690 = vsel %vm406, %v3689, %v3685
    %v3691 = vsel %vm471, %v3636, %v3627
    %v3692 = vsel %vm473, %v3645, %v3691
    %v3693 = vsel %vm475, %v3654, %v3692
    %v3694 = vsel %vm477, %v3663, %v3693
    %v3695 = vsel %vm479, %v3672, %v3694
    %v3696 = vsel %vm481, %v3681, %v3695
    %v3697 = vsel %vm483, %v3690, %v3696
    %v3699 = vsel %vm486, %v3697, -inf
    %3700 = vmax.xlane.f32.xlu0 %v3699
    %v3701 = vpop.xlane.xlu0 %3700
    %v3703 = vlaneseq
    %v3704 = vshrl.u32 %v3703, 7
    %v3705 = vsub.s32 0, %v3704
    %v3706 = vrot.slane %v3701, %v3705
    %v3707 = vlaneseq
    %v3708 = vshrl.u32 %v3707, 7
    %v3709 = vsub.s32 1, %v3708
    %v3710 = vrot.slane %v3701, %v3709
    %v3711 = vlaneseq
    %v3712 = vshrl.u32 %v3711, 7
    %v3713 = vsub.s32 2, %v3712
    %v3714 = vrot.slane %v3701, %v3713
    %v3715 = vlaneseq
    %v3716 = vshrl.u32 %v3715, 7
    %v3717 = vsub.s32 3, %v3716
    %v3718 = vrot.slane %v3701, %v3717
    %v3719 = vlaneseq
    %v3720 = vshrl.u32 %v3719, 7
    %v3721 = vsub.s32 4, %v3720
    %v3722 = vrot.slane %v3701, %v3721
    %v3723 = vlaneseq
    %v3724 = vshrl.u32 %v3723, 7
    %v3725 = vsub.s32 5, %v3724
    %v3726 = vrot.slane %v3701, %v3725
    %v3727 = vlaneseq
    %v3728 = vshrl.u32 %v3727, 7
    %v3729 = vsub.s32 6, %v3728
    %v3730 = vrot.slane %v3701, %v3729
    %v3731 = vlaneseq
    %v3732 = vshrl.u32 %v3731, 7
    %v3733 = vsub.s32 7, %v3732
    %v3734 = vrot.slane %v3701, %v3733
    %v3743 = vsub.f32 %v3557, %v3706
    %v3744 = vsub.f32 %v3560, %v3706
    %v3745 = vsub.f32 %v3563, %v3710
    %v3746 = vsub.f32 %v3566, %v3710
    %v3747 = vsub.f32 %v3569, %v3714
    %v3748 = vsub.f32 %v3572, %v3714
    %v3749 = vsub.f32 %v3575, %v3718
    %v3750 = vsub.f32 %v3578, %v3718
    %v3751 = vsub.f32 %v3581, %v3722
    %v3752 = vsub.f32 %v3584, %v3722
    %v3753 = vsub.f32 %v3587, %v3726
    %v3754 = vsub.f32 %v3590, %v3726
    %v3755 = vsub.f32 %v3593, %v3730
    %v3756 = vsub.f32 %v3596, %v3730
    %v3757 = vsub.f32 %v3599, %v3734
    %v3758 = vsub.f32 %v3602, %v3734
    %v3759 = vmul.f32 %v3743, 1.442695
    %v3760 = vpow.pop %v3759
    %v3761 = vmul.f32 %v3744, 1.442695
    %v3762 = vpow.pop %v3761
    %v3763 = vmul.f32 %v3745, 1.442695
    %v3764 = vpow.pop %v3763
    %v3765 = vmul.f32 %v3746, 1.442695
    %v3766 = vpow.pop %v3765
    %v3767 = vmul.f32 %v3747, 1.442695
    %v3768 = vpow.pop %v3767
    %v3769 = vmul.f32 %v3748, 1.442695
    %v3770 = vpow.pop %v3769
    %v3771 = vmul.f32 %v3749, 1.442695
    %v3772 = vpow.pop %v3771
    %v3773 = vmul.f32 %v3750, 1.442695
    %v3774 = vpow.pop %v3773
    %v3775 = vmul.f32 %v3751, 1.442695
    %v3776 = vpow.pop %v3775
    %v3777 = vmul.f32 %v3752, 1.442695
    %v3778 = vpow.pop %v3777
    %v3779 = vmul.f32 %v3753, 1.442695
    %v3780 = vpow.pop %v3779
    %v3781 = vmul.f32 %v3754, 1.442695
    %v3782 = vpow.pop %v3781
    %v3783 = vmul.f32 %v3755, 1.442695
    %v3784 = vpow.pop %v3783
    %v3785 = vmul.f32 %v3756, 1.442695
    %v3786 = vpow.pop %v3785
    %v3787 = vmul.f32 %v3757, 1.442695
    %v3788 = vpow.pop %v3787
    %v3789 = vmul.f32 %v3758, 1.442695
    %v3790 = vpow.pop %v3789
    %3807 = vset.pattern.permute.xlu0 0
    %3808 = vperm.xlu0 %3807, %v3760
    %v3809 = vpop.permute.xlu0 %3808
    %3810 = vset.pattern.permute.xlu0 0
    %3811 = vperm.xlu0 %3810, %v3762
    %v3812 = vpop.permute.xlu0 %3811
    %3813 = vset.pattern.permute.xlu0 0
    %3814 = vperm.xlu0 %3813, %v3764
    %v3815 = vpop.permute.xlu0 %3814
    %3816 = vset.pattern.permute.xlu0 0
    %3817 = vperm.xlu0 %3816, %v3766
    %v3818 = vpop.permute.xlu0 %3817
    %3819 = vset.pattern.permute.xlu0 0
    %3820 = vperm.xlu0 %3819, %v3768
    %v3821 = vpop.permute.xlu0 %3820
    %3822 = vset.pattern.permute.xlu0 0
    %3823 = vperm.xlu0 %3822, %v3770
    %v3824 = vpop.permute.xlu0 %3823
    %3825 = vset.pattern.permute.xlu0 0
    %3826 = vperm.xlu0 %3825, %v3772
    %v3827 = vpop.permute.xlu0 %3826
    %3828 = vset.pattern.permute.xlu0 0
    %3829 = vperm.xlu0 %3828, %v3774
    %v3830 = vpop.permute.xlu0 %3829
    %3831 = vset.pattern.permute.xlu0 0
    %3832 = vperm.xlu0 %3831, %v3776
    %v3833 = vpop.permute.xlu0 %3832
    %3834 = vset.pattern.permute.xlu0 0
    %3835 = vperm.xlu0 %3834, %v3778
    %v3836 = vpop.permute.xlu0 %3835
    %3837 = vset.pattern.permute.xlu0 0
    %3838 = vperm.xlu0 %3837, %v3780
    %v3839 = vpop.permute.xlu0 %3838
    %3840 = vset.pattern.permute.xlu0 0
    %3841 = vperm.xlu0 %3840, %v3782
    %v3842 = vpop.permute.xlu0 %3841
    %3843 = vset.pattern.permute.xlu0 0
    %3844 = vperm.xlu0 %3843, %v3784
    %v3845 = vpop.permute.xlu0 %3844
    %3846 = vset.pattern.permute.xlu0 0
    %3847 = vperm.xlu0 %3846, %v3786
    %v3848 = vpop.permute.xlu0 %3847
    %3849 = vset.pattern.permute.xlu0 0
    %3850 = vperm.xlu0 %3849, %v3788
    %v3851 = vpop.permute.xlu0 %3850
    %3852 = vset.pattern.permute.xlu0 0
    %3853 = vperm.xlu0 %3852, %v3790
    %v3854 = vpop.permute.xlu0 %3853
    %v3855 = vlaneseq
    %v3856 = vshrl.u32 %v3855, 7
    %v3857 = vsub.s32 %v396, %v3856
    %v3858 = vrot.slane %v3809, %v3857
    %v3859 = vlaneseq
    %v3860 = vshrl.u32 %v3859, 7
    %v3861 = vsub.s32 %v401, %v3860
    %v3862 = vrot.slane %v3812, %v3861
    %v3863 = vsel %vm406, %v3862, %v3858
    %v3864 = vlaneseq
    %v3865 = vshrl.u32 %v3864, 7
    %v3866 = vsub.s32 %v396, %v3865
    %v3867 = vrot.slane %v3815, %v3866
    %v3868 = vlaneseq
    %v3869 = vshrl.u32 %v3868, 7
    %v3870 = vsub.s32 %v401, %v3869
    %v3871 = vrot.slane %v3818, %v3870
    %v3872 = vsel %vm406, %v3871, %v3867
    %v3873 = vlaneseq
    %v3874 = vshrl.u32 %v3873, 7
    %v3875 = vsub.s32 %v396, %v3874
    %v3876 = vrot.slane %v3821, %v3875
    %v3877 = vlaneseq
    %v3878 = vshrl.u32 %v3877, 7
    %v3879 = vsub.s32 %v401, %v3878
    %v3880 = vrot.slane %v3824, %v3879
    %v3881 = vsel %vm406, %v3880, %v3876
    %v3882 = vlaneseq
    %v3883 = vshrl.u32 %v3882, 7
    %v3884 = vsub.s32 %v396, %v3883
    %v3885 = vrot.slane %v3827, %v3884
    %v3886 = vlaneseq
    %v3887 = vshrl.u32 %v3886, 7
    %v3888 = vsub.s32 %v401, %v3887
    %v3889 = vrot.slane %v3830, %v3888
    %v3890 = vsel %vm406, %v3889, %v3885
    %v3891 = vlaneseq
    %v3892 = vshrl.u32 %v3891, 7
    %v3893 = vsub.s32 %v396, %v3892
    %v3894 = vrot.slane %v3833, %v3893
    %v3895 = vlaneseq
    %v3896 = vshrl.u32 %v3895, 7
    %v3897 = vsub.s32 %v401, %v3896
    %v3898 = vrot.slane %v3836, %v3897
    %v3899 = vsel %vm406, %v3898, %v3894
    %v3900 = vlaneseq
    %v3901 = vshrl.u32 %v3900, 7
    %v3902 = vsub.s32 %v396, %v3901
    %v3903 = vrot.slane %v3839, %v3902
    %v3904 = vlaneseq
    %v3905 = vshrl.u32 %v3904, 7
    %v3906 = vsub.s32 %v401, %v3905
    %v3907 = vrot.slane %v3842, %v3906
    %v3908 = vsel %vm406, %v3907, %v3903
    %v3909 = vlaneseq
    %v3910 = vshrl.u32 %v3909, 7
    %v3911 = vsub.s32 %v396, %v3910
    %v3912 = vrot.slane %v3845, %v3911
    %v3913 = vlaneseq
    %v3914 = vshrl.u32 %v3913, 7
    %v3915 = vsub.s32 %v401, %v3914
    %v3916 = vrot.slane %v3848, %v3915
    %v3917 = vsel %vm406, %v3916, %v3912
    %v3918 = vlaneseq
    %v3919 = vshrl.u32 %v3918, 7
    %v3920 = vsub.s32 %v396, %v3919
    %v3921 = vrot.slane %v3851, %v3920
    %v3922 = vlaneseq
    %v3923 = vshrl.u32 %v3922, 7
    %v3924 = vsub.s32 %v401, %v3923
    %v3925 = vrot.slane %v3854, %v3924
    %v3926 = vsel %vm406, %v3925, %v3921
    %v3927 = vsel %vm471, %v3872, %v3863
    %v3928 = vsel %vm473, %v3881, %v3927
    %v3929 = vsel %vm475, %v3890, %v3928
    %v3930 = vsel %vm477, %v3899, %v3929
    %v3931 = vsel %vm479, %v3908, %v3930
    %v3932 = vsel %vm481, %v3917, %v3931
    %v3933 = vsel %vm483, %v3926, %v3932
    %v3935 = vsel %vm486, %v3933, 0.0
    %3936 = vadd.xlane.f32.xlu0 %v3935
    %v3937 = vpop.xlane.xlu0 %3936
    %v3939 = vlaneseq
    %v3940 = vshrl.u32 %v3939, 7
    %v3941 = vsub.s32 0, %v3940
    %v3942 = vrot.slane %v3937, %v3941
    %v3943 = vlaneseq
    %v3944 = vshrl.u32 %v3943, 7
    %v3945 = vsub.s32 1, %v3944
    %v3946 = vrot.slane %v3937, %v3945
    %v3947 = vlaneseq
    %v3948 = vshrl.u32 %v3947, 7
    %v3949 = vsub.s32 2, %v3948
    %v3950 = vrot.slane %v3937, %v3949
    %v3951 = vlaneseq
    %v3952 = vshrl.u32 %v3951, 7
    %v3953 = vsub.s32 3, %v3952
    %v3954 = vrot.slane %v3937, %v3953
    %v3955 = vlaneseq
    %v3956 = vshrl.u32 %v3955, 7
    %v3957 = vsub.s32 4, %v3956
    %v3958 = vrot.slane %v3937, %v3957
    %v3959 = vlaneseq
    %v3960 = vshrl.u32 %v3959, 7
    %v3961 = vsub.s32 5, %v3960
    %v3962 = vrot.slane %v3937, %v3961
    %v3963 = vlaneseq
    %v3964 = vshrl.u32 %v3963, 7
    %v3965 = vsub.s32 6, %v3964
    %v3966 = vrot.slane %v3937, %v3965
    %v3967 = vlaneseq
    %v3968 = vshrl.u32 %v3967, 7
    %v3969 = vsub.s32 7, %v3968
    %v3970 = vrot.slane %v3937, %v3969
    %v3979 = vrcp.pop %v3942
    %v3980 = vmul.f32 %v3760, %v3979
    %v3981 = vmul.f32 %v3762, %v3979
    %v3982 = vrcp.pop %v3946
    %v3983 = vmul.f32 %v3764, %v3982
    %v3984 = vmul.f32 %v3766, %v3982
    %v3985 = vrcp.pop %v3950
    %v3986 = vmul.f32 %v3768, %v3985
    %v3987 = vmul.f32 %v3770, %v3985
    %v3988 = vrcp.pop %v3954
    %v3989 = vmul.f32 %v3772, %v3988
    %v3990 = vmul.f32 %v3774, %v3988
    %v3991 = vrcp.pop %v3958
    %v3992 = vmul.f32 %v3776, %v3991
    %v3993 = vmul.f32 %v3778, %v3991
    %v3994 = vrcp.pop %v3962
    %v3995 = vmul.f32 %v3780, %v3994
    %v3996 = vmul.f32 %v3782, %v3994
    %v3997 = vrcp.pop %v3966
    %v3998 = vmul.f32 %v3784, %v3997
    %v3999 = vmul.f32 %v3786, %v3997
    %v4000 = vrcp.pop %v3970
    %v4001 = vmul.f32 %v3788, %v4000
    %v4002 = vmul.f32 %v3790, %v4000
    %4004 = vset.pattern.permute.xlu0 0
    %4005 = vperm.xlu0 %4004, %v3980
    %v4006 = vpop.permute.xlu0 %4005
    %4009 = vset.pattern.permute.xlu0 0
    %4010 = vperm.xlu0 %4009, %v3981
    %v4011 = vpop.permute.xlu0 %4010
    %4014 = vset.pattern.permute.xlu0 0
    %4015 = vperm.xlu0 %4014, %v3983
    %v4016 = vpop.permute.xlu0 %4015
    %4019 = vset.pattern.permute.xlu0 0
    %4020 = vperm.xlu0 %4019, %v3984
    %v4021 = vpop.permute.xlu0 %4020
    %4024 = vset.pattern.permute.xlu0 0
    %4025 = vperm.xlu0 %4024, %v3986
    %v4026 = vpop.permute.xlu0 %4025
    %4029 = vset.pattern.permute.xlu0 0
    %4030 = vperm.xlu0 %4029, %v3987
    %v4031 = vpop.permute.xlu0 %4030
    %4034 = vset.pattern.permute.xlu0 0
    %4035 = vperm.xlu0 %4034, %v3989
    %v4036 = vpop.permute.xlu0 %4035
    %4039 = vset.pattern.permute.xlu0 0
    %4040 = vperm.xlu0 %4039, %v3990
    %v4041 = vpop.permute.xlu0 %4040
    %4044 = vset.pattern.permute.xlu0 0
    %4045 = vperm.xlu0 %4044, %v3992
    %v4046 = vpop.permute.xlu0 %4045
    %4049 = vset.pattern.permute.xlu0 0
    %4050 = vperm.xlu0 %4049, %v3993
    %v4051 = vpop.permute.xlu0 %4050
    %4054 = vset.pattern.permute.xlu0 0
    %4055 = vperm.xlu0 %4054, %v3995
    %v4056 = vpop.permute.xlu0 %4055
    %4059 = vset.pattern.permute.xlu0 0
    %4060 = vperm.xlu0 %4059, %v3996
    %v4061 = vpop.permute.xlu0 %4060
    %4064 = vset.pattern.permute.xlu0 0
    %4065 = vperm.xlu0 %4064, %v3998
    %v4066 = vpop.permute.xlu0 %4065
    %4069 = vset.pattern.permute.xlu0 0
    %4070 = vperm.xlu0 %4069, %v3999
    %v4071 = vpop.permute.xlu0 %4070
    %4074 = vset.pattern.permute.xlu0 0
    %4075 = vperm.xlu0 %4074, %v4001
    %v4076 = vpop.permute.xlu0 %4075
    %4079 = vset.pattern.permute.xlu0 0
    %4080 = vperm.xlu0 %4079, %v4002
    %v4081 = vpop.permute.xlu0 %4080
    %v4083 = vmul.f32 %v4006, %v127
    %v4084 = vmul.f32 %v4011, %v128
    %v4085 = vmul.f32 %v4016, %v129
    %v4086 = vmul.f32 %v4021, %v130
    %v4087 = vmul.f32 %v4026, %v131
    %v4088 = vmul.f32 %v4031, %v132
    %v4089 = vmul.f32 %v4036, %v133
    %v4090 = vmul.f32 %v4041, %v134
    %v4091 = vmul.f32 %v4046, %v135
    %v4092 = vmul.f32 %v4051, %v136
    %v4093 = vmul.f32 %v4056, %v137
    %v4094 = vmul.f32 %v4061, %v138
    %v4095 = vmul.f32 %v4066, %v139
    %v4096 = vmul.f32 %v4071, %v140
    %v4097 = vmul.f32 %v4076, %v141
    %v4098 = vmul.f32 %v4081, %v142
    %v4099 = vsel %vm887, %v4083, 0.0
    %v4100 = vsel %vm887, %v4084, 0.0
    %v4101 = vadd.f32 %v4099, %v4100
    %v4102 = vrot.slane %v4101, 4
    %v4103 = vadd.f32 %v4101, %v4102
    %v4104 = vrot.slane %v4103, 2
    %v4105 = vadd.f32 %v4103, %v4104
    %v4106 = vrot.slane %v4105, 1
    %v4107 = vadd.f32 %v4105, %v4106
    %v4108 = vsel %vm887, %v4085, 0.0
    %v4109 = vsel %vm887, %v4086, 0.0
    %v4110 = vadd.f32 %v4108, %v4109
    %v4111 = vrot.slane %v4110, 4
    %v4112 = vadd.f32 %v4110, %v4111
    %v4113 = vrot.slane %v4112, 2
    %v4114 = vadd.f32 %v4112, %v4113
    %v4115 = vrot.slane %v4114, 1
    %v4116 = vadd.f32 %v4114, %v4115
    %v4117 = vsel %vm887, %v4087, 0.0
    %v4118 = vsel %vm887, %v4088, 0.0
    %v4119 = vadd.f32 %v4117, %v4118
    %v4120 = vrot.slane %v4119, 4
    %v4121 = vadd.f32 %v4119, %v4120
    %v4122 = vrot.slane %v4121, 2
    %v4123 = vadd.f32 %v4121, %v4122
    %v4124 = vrot.slane %v4123, 1
    %v4125 = vadd.f32 %v4123, %v4124
    %v4126 = vsel %vm887, %v4089, 0.0
    %v4127 = vsel %vm887, %v4090, 0.0
    %v4128 = vadd.f32 %v4126, %v4127
    %v4129 = vrot.slane %v4128, 4
    %v4130 = vadd.f32 %v4128, %v4129
    %v4131 = vrot.slane %v4130, 2
    %v4132 = vadd.f32 %v4130, %v4131
    %v4133 = vrot.slane %v4132, 1
    %v4134 = vadd.f32 %v4132, %v4133
    %v4135 = vsel %vm887, %v4091, 0.0
    %v4136 = vsel %vm887, %v4092, 0.0
    %v4137 = vadd.f32 %v4135, %v4136
    %v4138 = vrot.slane %v4137, 4
    %v4139 = vadd.f32 %v4137, %v4138
    %v4140 = vrot.slane %v4139, 2
    %v4141 = vadd.f32 %v4139, %v4140
    %v4142 = vrot.slane %v4141, 1
    %v4143 = vadd.f32 %v4141, %v4142
    %v4144 = vsel %vm887, %v4093, 0.0
    %v4145 = vsel %vm887, %v4094, 0.0
    %v4146 = vadd.f32 %v4144, %v4145
    %v4147 = vrot.slane %v4146, 4
    %v4148 = vadd.f32 %v4146, %v4147
    %v4149 = vrot.slane %v4148, 2
    %v4150 = vadd.f32 %v4148, %v4149
    %v4151 = vrot.slane %v4150, 1
    %v4152 = vadd.f32 %v4150, %v4151
    %v4153 = vsel %vm887, %v4095, 0.0
    %v4154 = vsel %vm887, %v4096, 0.0
    %v4155 = vadd.f32 %v4153, %v4154
    %v4156 = vrot.slane %v4155, 4
    %v4157 = vadd.f32 %v4155, %v4156
    %v4158 = vrot.slane %v4157, 2
    %v4159 = vadd.f32 %v4157, %v4158
    %v4160 = vrot.slane %v4159, 1
    %v4161 = vadd.f32 %v4159, %v4160
    %v4162 = vsel %vm887, %v4097, 0.0
    %v4163 = vsel %vm887, %v4098, 0.0
    %v4164 = vadd.f32 %v4162, %v4163
    %v4165 = vrot.slane %v4164, 4
    %v4166 = vadd.f32 %v4164, %v4165
    %v4167 = vrot.slane %v4166, 2
    %v4168 = vadd.f32 %v4166, %v4167
    %v4169 = vrot.slane %v4168, 1
    %v4170 = vadd.f32 %v4168, %v4169
    %v4179 = vsel %vm471, %v4116, %v4107
    %v4180 = vsel %vm473, %v4125, %v4179
    %v4181 = vsel %vm475, %v4134, %v4180
    %v4182 = vsel %vm477, %v4143, %v4181
    %v4183 = vsel %vm479, %v4152, %v4182
    %v4184 = vsel %vm481, %v4161, %v4183
    %v4185 = vsel %vm483, %v4170, %v4184
    %4186 = vrot.lane.b32.xlu0 %v4185, 32
    %v4187 = vpop.permute.xlu0 %4186
    %4189 = vrot.lane.b32.xlu0 %v3227, 72
    %v4190 = vpop.permute.xlu0 %4189
    %v4192 = vsel %vm330, %v3400, %v4187
    %v4193 = vsel %vm983, %v4192, %v4190
    %v4194 = vsel %vm991, %v4190, 0
    %4196 = vmatprep.subr.mxu0 0.0
    %4197 = vmatpush1.msra.mxu0 %v160
    %4198 = vmatprep.subr.mxu0 0.0
    %4199 = vmatpush1.msra.mxu0 %v161
    %4200 = vmatprep.subr.mxu0 0.0
    %4201 = vmatpush1.msra.mxu0 %v162
    %4202 = vmatprep.subr.mxu0 0.0
    %4203 = vmatpush1.msra.mxu0 %v163
    %4204 = vmatprep.subr.mxu0 0.0
    %4205 = vmatpush1.msra.mxu0 %v164
    %4206 = vmatprep.subr.mxu0 0.0
    %4207 = vmatpush1.msra.mxu0 %v165
    %4208 = vmatprep.subr.mxu0 0.0
    %4209 = vmatpush1.msra.mxu0 %v166
    %4210 = vmatprep.subr.mxu0 0.0
    %4211 = vmatpush1.msra.mxu0 %v167
    %4212 = vmatprep.subr.mxu0 0.0
    %4213 = vmatpush1.msra.mxu0 %v168
    %4214 = vmatprep.subr.mxu0 0.0
    %4215 = vmatpush1.msra.mxu0 %v169
    %4216 = vmatprep.subr.mxu0 0.0
    %4217 = vmatpush1.msra.mxu0 %v170
    %4218 = vmatprep.subr.mxu0 0.0
    %4219 = vmatpush1.msra.mxu0 %v171
    %4220 = vmatprep.subr.mxu0 0.0
    %4221 = vmatpush1.msra.mxu0 %v172
    %4222 = vmatprep.subr.mxu0 0.0
    %4223 = vmatpush1.msra.mxu0 %v173
    %4224 = vmatprep.subr.mxu0 0.0
    %4225 = vmatpush1.msra.mxu0 %v174
    %4226 = vmatprep.subr.mxu0 0.0
    %4227 = vmatpush1.msra.mxu0 %v175
    %4228 = vmatprep.subr.mxu0 0.0
    %4229 = vmatpush1.msra.mxu0 %v176
    %4230 = vmatprep.subr.mxu0 0.0
    %4231 = vmatpush1.msra.mxu0 0.0
    %4232 = vmatprep.subr.mxu0 0.0
    %4233 = vmatpush1.msra.mxu0 0.0
    %4234 = vmatprep.subr.mxu0 0.0
    %4235 = vmatpush1.msra.mxu0 0.0
    %4236 = vmatprep.subr.mxu0 0.0
    %4237 = vmatpush1.msra.mxu0 0.0
    %4238 = vmatprep.subr.mxu0 0.0
    %4239 = vmatpush1.msra.mxu0 0.0
    %4240 = vmatprep.subr.mxu0 0.0
    %4241 = vmatpush1.msra.mxu0 0.0
    %4242 = vmatprep.subr.mxu0 0.0
    %4243 = vmatpush1.msra.mxu0 0.0
    %4244 = vmatprep.subr.mxu0 0.0
    %4245 = vmatpush1.msra.mxu0 0.0
    %4246 = vmatprep.subr.mxu0 0.0
    %4247 = vmatpush1.msra.mxu0 0.0
    %4248 = vmatprep.subr.mxu0 0.0
    %4249 = vmatpush1.msra.mxu0 0.0
    %4250 = vmatprep.subr.mxu0 0.0
    %4251 = vmatpush1.msra.mxu0 0.0
    %4252 = vmatprep.subr.mxu0 0.0
    %4253 = vmatpush1.msra.mxu0 0.0
    %4254 = vmatprep.subr.mxu0 0.0
    %4255 = vmatpush1.msra.mxu0 0.0
    %4256 = vmatprep.subr.mxu0 0.0
    %4257 = vmatpush1.msra.mxu0 0.0
    %4258 = vmatprep.subr.mxu0 0.0
    %4259 = vmatpush1.msra.mxu0 0.0
    %4260 = vmatprep.mubr.f32.mxu0 %v4194
    %4261 = vmatmul.mubr.f32.gmra.mrb[0].mxu0 %v4193
    %v4262 = vpop.f32.mrb[0].mxu0
    %v4263 = vadd.f32 %v989, %v4262
    %v4264 = vpop.f32.mrb[0].mxu0
    %4265 = vdwg.mxu0
    %v4266 = vxor.u32 %v4263, 2147483648
    %v4267 = vmul.f32 %v4266, 1.442695
    %v4268 = vpow.pop %v4267
    %v4269 = vadd.f32 %v4268, 1.0
    %v4270 = vrcp.pop %v4269
    %v4271 = vmul.f32 1.0, %v4270
    %4273 = vrot.lane.b32.xlu0 %v4263, 32
    %v4274 = vpop.permute.xlu0 %4273
    %v4276 = vmul.f32 %v4271, %v4274
    %4278 = vrot.lane.b32.xlu0 %v4276, 64
    %v4279 = vpop.permute.xlu0 %4278
    %v4281 = vadd.f32 %v4263, %v4279
    %v4282 = vtanh.pop %v4281
    %v4283 = vsub.f32 1.0, %v4271
    %4285 = vrot.lane.b32.xlu0 %v4282, 96
    %v4286 = vpop.permute.xlu0 %4285
    %v4288 = vmul.f32 %v4283, %v4286
    %v4289 = vmul.f32 %v4271, %v3227
    %v4290 = vadd.f32 %v4288, %v4289
    %4292 = vrot.lane.b32.xlu0 %v4290, 96
    %v4293 = vpop.permute.xlu0 %4292
    %v4294 = vsel %vm330, %v4293, 0
    %4296 = vmatprep.subr.mxu0 0.0
    %4297 = vmatpush1.msra.mxu0 %v178
    %4298 = vmatprep.subr.mxu0 0.0
    %4299 = vmatpush1.msra.mxu0 %v179
    %4300 = vmatprep.subr.mxu0 0.0
    %4301 = vmatpush1.msra.mxu0 %v180
    %4302 = vmatprep.subr.mxu0 0.0
    %4303 = vmatpush1.msra.mxu0 %v181
    %4304 = vmatprep.subr.mxu0 0.0
    %4305 = vmatpush1.msra.mxu0 0.0
    %4306 = vmatprep.subr.mxu0 0.0
    %4307 = vmatpush1.msra.mxu0 0.0
    %4308 = vmatprep.subr.mxu0 0.0
    %4309 = vmatpush1.msra.mxu0 0.0
    %4310 = vmatprep.subr.mxu0 0.0
    %4311 = vmatpush1.msra.mxu0 0.0
    %4312 = vmatprep.subr.mxu0 0.0
    %4313 = vmatpush1.msra.mxu0 0.0
    %4314 = vmatprep.subr.mxu0 0.0
    %4315 = vmatpush1.msra.mxu0 0.0
    %4316 = vmatprep.subr.mxu0 0.0
    %4317 = vmatpush1.msra.mxu0 0.0
    %4318 = vmatprep.subr.mxu0 0.0
    %4319 = vmatpush1.msra.mxu0 0.0
    %4320 = vmatprep.subr.mxu0 0.0
    %4321 = vmatpush1.msra.mxu0 0.0
    %4322 = vmatprep.subr.mxu0 0.0
    %4323 = vmatpush1.msra.mxu0 0.0
    %4324 = vmatprep.subr.mxu0 0.0
    %4325 = vmatpush1.msra.mxu0 0.0
    %4326 = vmatprep.subr.mxu0 0.0
    %4327 = vmatpush1.msra.mxu0 0.0
    %4328 = vmatprep.subr.mxu0 0.0
    %4329 = vmatpush1.msra.mxu0 0.0
    %4330 = vmatprep.subr.mxu0 0.0
    %4331 = vmatpush1.msra.mxu0 0.0
    %4332 = vmatprep.subr.mxu0 0.0
    %4333 = vmatpush1.msra.mxu0 0.0
    %4334 = vmatprep.subr.mxu0 0.0
    %4335 = vmatpush1.msra.mxu0 0.0
    %4336 = vmatprep.subr.mxu0 0.0
    %4337 = vmatpush1.msra.mxu0 0.0
    %4338 = vmatprep.subr.mxu0 0.0
    %4339 = vmatpush1.msra.mxu0 0.0
    %4340 = vmatprep.subr.mxu0 0.0
    %4341 = vmatpush1.msra.mxu0 0.0
    %4342 = vmatprep.subr.mxu0 0.0
    %4343 = vmatpush1.msra.mxu0 0.0
    %4344 = vmatprep.subr.mxu0 0.0
    %4345 = vmatpush1.msra.mxu0 0.0
    %4346 = vmatprep.subr.mxu0 0.0
    %4347 = vmatpush1.msra.mxu0 0.0
    %4348 = vmatprep.subr.mxu0 0.0
    %4349 = vmatpush1.msra.mxu0 0.0
    %4350 = vmatprep.subr.mxu0 0.0
    %4351 = vmatpush1.msra.mxu0 0.0
    %4352 = vmatprep.subr.mxu0 0.0
    %4353 = vmatpush1.msra.mxu0 0.0
    %4354 = vmatprep.subr.mxu0 0.0
    %4355 = vmatpush1.msra.mxu0 0.0
    %4356 = vmatprep.subr.mxu0 0.0
    %4357 = vmatpush1.msra.mxu0 0.0
    %4358 = vmatprep.subr.mxu0 0.0
    %4359 = vmatpush1.msra.mxu0 0.0
    %4360 = vmatprep.mubr.f32.mxu0 0.0
    %4361 = vmatmul.mubr.f32.gmra.mrb[0].mxu0 %v4294
    %v4362 = vpop.f32.mrb[0].mxu0
    %v4363 = vadd.f32 %v1096, %v4362
    %v4364 = vpop.f32.mrb[0].mxu0
    %4365 = vdwg.mxu0
    %v4366 = vsel %vm330, %v4363, -inf
    %4367 = vmax.xlane.f32.xlu0 %v4366
    %v4368 = vpop.xlane.xlu0 %4367
    %v4369 = vsub.f32 %v4363, %v4368
    %v4370 = vmul.f32 %v4369, 1.442695
    %v4371 = vpow.pop %v4370
    %v4372 = vsel %vm330, %v4371, 0.0
    %4373 = vadd.xlane.f32.xlu0 %v4372
    %v4374 = vpop.xlane.xlu0 %4373
    %v4375 = vrcp.pop %v4374
    %v4376 = vmul.f32 %v4371, %v4375
    %v4377 = vlaneseq
    %v4378 = vshrl.u32 %v4377, 7
    %v4379 = vsub.s32 %v1184, %v4378
    %v4380 = vrot.slane %v4006, %v4379
    %v4381 = vlaneseq
    %v4382 = vshrl.u32 %v4381, 7
    %v4383 = vsub.s32 %v1189, %v4382
    %v4384 = vrot.slane %v4011, %v4383
    %v4385 = vsel %vm1194, %v4384, %v4380
    %v4386 = vlaneseq
    %v4387 = vshrl.u32 %v4386, 7
    %v4388 = vsub.s32 %v1184, %v4387
    %v4389 = vrot.slane %v4016, %v4388
    %v4390 = vlaneseq
    %v4391 = vshrl.u32 %v4390, 7
    %v4392 = vsub.s32 %v1189, %v4391
    %v4393 = vrot.slane %v4021, %v4392
    %v4394 = vsel %vm1194, %v4393, %v4389
    %v4395 = vlaneseq
    %v4396 = vshrl.u32 %v4395, 7
    %v4397 = vsub.s32 %v1184, %v4396
    %v4398 = vrot.slane %v4026, %v4397
    %v4399 = vlaneseq
    %v4400 = vshrl.u32 %v4399, 7
    %v4401 = vsub.s32 %v1189, %v4400
    %v4402 = vrot.slane %v4031, %v4401
    %v4403 = vsel %vm1194, %v4402, %v4398
    %v4404 = vlaneseq
    %v4405 = vshrl.u32 %v4404, 7
    %v4406 = vsub.s32 %v1184, %v4405
    %v4407 = vrot.slane %v4036, %v4406
    %v4408 = vlaneseq
    %v4409 = vshrl.u32 %v4408, 7
    %v4410 = vsub.s32 %v1189, %v4409
    %v4411 = vrot.slane %v4041, %v4410
    %v4412 = vsel %vm1194, %v4411, %v4407
    %v4413 = vlaneseq
    %v4414 = vshrl.u32 %v4413, 7
    %v4415 = vsub.s32 %v1184, %v4414
    %v4416 = vrot.slane %v4046, %v4415
    %v4417 = vlaneseq
    %v4418 = vshrl.u32 %v4417, 7
    %v4419 = vsub.s32 %v1189, %v4418
    %v4420 = vrot.slane %v4051, %v4419
    %v4421 = vsel %vm1194, %v4420, %v4416
    %v4422 = vlaneseq
    %v4423 = vshrl.u32 %v4422, 7
    %v4424 = vsub.s32 %v1184, %v4423
    %v4425 = vrot.slane %v4056, %v4424
    %v4426 = vlaneseq
    %v4427 = vshrl.u32 %v4426, 7
    %v4428 = vsub.s32 %v1189, %v4427
    %v4429 = vrot.slane %v4061, %v4428
    %v4430 = vsel %vm1194, %v4429, %v4425
    %v4431 = vlaneseq
    %v4432 = vshrl.u32 %v4431, 7
    %v4433 = vsub.s32 %v1184, %v4432
    %v4434 = vrot.slane %v4066, %v4433
    %v4435 = vlaneseq
    %v4436 = vshrl.u32 %v4435, 7
    %v4437 = vsub.s32 %v1189, %v4436
    %v4438 = vrot.slane %v4071, %v4437
    %v4439 = vsel %vm1194, %v4438, %v4434
    %v4440 = vlaneseq
    %v4441 = vshrl.u32 %v4440, 7
    %v4442 = vsub.s32 %v1184, %v4441
    %v4443 = vrot.slane %v4076, %v4442
    %v4444 = vlaneseq
    %v4445 = vshrl.u32 %v4444, 7
    %v4446 = vsub.s32 %v1189, %v4445
    %v4447 = vrot.slane %v4081, %v4446
    %v4448 = vsel %vm1194, %v4447, %v4443
    %v4449 = vsel %vm471, %v4394, %v4385
    %v4450 = vsel %vm473, %v4403, %v4449
    %v4451 = vsel %vm475, %v4412, %v4450
    %v4452 = vsel %vm477, %v4421, %v4451
    %v4453 = vsel %vm479, %v4430, %v4452
    %v4454 = vsel %vm481, %v4439, %v4453
    %v4455 = vsel %vm483, %v4448, %v4454
    %v4457 = vsel %vm330, %v4376, %v4290
    %v4458 = vsel %vm1268, %v4457, %v4455
    %v4459 = vsel %vm1270, %v4458, 0.0
    %s4460 = scalar_lea.vmem [#allocation14], 24
    %4461 = vst [vmem:[%s4460] sm:$0xff] %v4459
    %s4462 = scalar_lea.vmem [#allocation2], 32
    %v4463 = vld [vmem:[%s4462] sm:$0xff]
    %v4465 = vcombine.high %v4363, %v4363
    %v4467 = vunpack.c.l.s4 1966171168
    %v4468 = vunpack.c.0.s8 %v4467
    %v4469 = vlaneseq
    %v4470 = vshrl.u32 %v4469, 7
    %v4471 = vsub.s32 %v4468, %v4470
    %v4472 = vrot.slane %v4363, %v4471
    %v4474 = vunpack.c.l.s4 1966171168
    %v4475 = vunpack.c.0.s8 %v4474
    %v4476 = vlaneseq
    %v4477 = vshrl.u32 %v4476, 7
    %v4478 = vsub.s32 %v4475, %v4477
    %v4479 = vrot.slane %v4465, %v4478
    %v4480 = vcombine.high %v4472, %v4472
    %v4481 = vcombine.high %v4479, %v4479
    %v4483 = vunpack.c.l.s4 1966171168
    %v4484 = vunpack.c.0.s8 %v4483
    %v4485 = vlaneseq
    %v4486 = vshrl.u32 %v4485, 7
    %v4487 = vsub.s32 %v4484, %v4486
    %v4488 = vrot.slane %v4472, %v4487
    %v4490 = vunpack.c.l.s4 1966171168
    %v4491 = vunpack.c.0.s8 %v4490
    %v4492 = vlaneseq
    %v4493 = vshrl.u32 %v4492, 7
    %v4494 = vsub.s32 %v4491, %v4493
    %v4495 = vrot.slane %v4479, %v4494
    %v4497 = vunpack.c.l.s4 1966171168
    %v4498 = vunpack.c.0.s8 %v4497
    %v4499 = vlaneseq
    %v4500 = vshrl.u32 %v4499, 7
    %v4501 = vsub.s32 %v4498, %v4500
    %v4502 = vrot.slane %v4480, %v4501
    %v4504 = vunpack.c.l.s4 1966171168
    %v4505 = vunpack.c.0.s8 %v4504
    %v4506 = vlaneseq
    %v4507 = vshrl.u32 %v4506, 7
    %v4508 = vsub.s32 %v4505, %v4507
    %v4509 = vrot.slane %v4481, %v4508
    %v4510 = vcombine.high %v4488, %v4488
    %v4511 = vcombine.high %v4495, %v4495
    %v4512 = vcombine.high %v4502, %v4502
    %v4513 = vcombine.high %v4509, %v4509
    %v4514 = vlaneseq
    %v4515 = vshrl.u32 %v4514, 7
    %v4516 = vsub.s32 0, %v4515
    %v4517 = vrot.slane %v4488, %v4516
    %v4518 = vlaneseq
    %v4519 = vshrl.u32 %v4518, 7
    %v4520 = vsub.s32 0, %v4519
    %v4521 = vrot.slane %v4502, %v4520
    %v4522 = vlaneseq
    %v4523 = vshrl.u32 %v4522, 7
    %v4524 = vsub.s32 0, %v4523
    %v4525 = vrot.slane %v4510, %v4524
    %v4526 = vlaneseq
    %v4527 = vshrl.u32 %v4526, 7
    %v4528 = vsub.s32 0, %v4527
    %v4529 = vrot.slane %v4512, %v4528
    %v4530 = vlaneseq
    %v4531 = vshrl.u32 %v4530, 7
    %v4532 = vsub.s32 0, %v4531
    %v4533 = vrot.slane %v4495, %v4532
    %v4534 = vlaneseq
    %v4535 = vshrl.u32 %v4534, 7
    %v4536 = vsub.s32 0, %v4535
    %v4537 = vrot.slane %v4509, %v4536
    %v4538 = vlaneseq
    %v4539 = vshrl.u32 %v4538, 7
    %v4540 = vsub.s32 0, %v4539
    %v4541 = vrot.slane %v4511, %v4540
    %v4542 = vlaneseq
    %v4543 = vshrl.u32 %v4542, 7
    %v4544 = vsub.s32 0, %v4543
    %v4545 = vrot.slane %v4513, %v4544
    %4546 = vrot.lane.b32.xlu0 %v4517, 96
    %v4547 = vpop.permute.xlu0 %4546
    %4548 = vrot.lane.b32.xlu0 %v4521, 96
    %v4549 = vpop.permute.xlu0 %4548
    %4550 = vrot.lane.b32.xlu0 %v4525, 96
    %v4551 = vpop.permute.xlu0 %4550
    %4552 = vrot.lane.b32.xlu0 %v4529, 96
    %v4553 = vpop.permute.xlu0 %4552
    %4554 = vrot.lane.b32.xlu0 %v4533, 96
    %v4555 = vpop.permute.xlu0 %4554
    %4556 = vrot.lane.b32.xlu0 %v4537, 96
    %v4557 = vpop.permute.xlu0 %4556
    %4558 = vrot.lane.b32.xlu0 %v4541, 96
    %v4559 = vpop.permute.xlu0 %4558
    %4560 = vrot.lane.b32.xlu0 %v4545, 96
    %v4561 = vpop.permute.xlu0 %4560
    %v4570 = vadd.f32 %v143, %v4547
    %v4571 = vadd.f32 %v144, %v4547
    %v4572 = vadd.f32 %v145, %v4549
    %v4573 = vadd.f32 %v146, %v4549
    %v4574 = vadd.f32 %v147, %v4551
    %v4575 = vadd.f32 %v148, %v4551
    %v4576 = vadd.f32 %v149, %v4553
    %v4577 = vadd.f32 %v150, %v4553
    %v4578 = vadd.f32 %v151, %v4555
    %v4579 = vadd.f32 %v152, %v4555
    %v4580 = vadd.f32 %v153, %v4557
    %v4581 = vadd.f32 %v154, %v4557
    %v4582 = vadd.f32 %v155, %v4559
    %v4583 = vadd.f32 %v156, %v4559
    %v4584 = vadd.f32 %v157, %v4561
    %v4585 = vadd.f32 %v158, %v4561
    %v4586 = vtanh.pop %v4570
    %v4587 = vtanh.pop %v4571
    %v4588 = vtanh.pop %v4572
    %v4589 = vtanh.pop %v4573
    %v4590 = vtanh.pop %v4574
    %v4591 = vtanh.pop %v4575
    %v4592 = vtanh.pop %v4576
    %v4593 = vtanh.pop %v4577
    %v4594 = vtanh.pop %v4578
    %v4595 = vtanh.pop %v4579
    %v4596 = vtanh.pop %v4580
    %v4597 = vtanh.pop %v4581
    %v4598 = vtanh.pop %v4582
    %v4599 = vtanh.pop %v4583
    %v4600 = vtanh.pop %v4584
    %v4601 = vtanh.pop %v4585
    %v4602 = vmul.f32 %v4586, %v312
    %v4603 = vmul.f32 %v4587, %v312
    %v4604 = vmul.f32 %v4588, %v312
    %v4605 = vmul.f32 %v4589, %v312
    %v4606 = vmul.f32 %v4590, %v312
    %v4607 = vmul.f32 %v4591, %v312
    %v4608 = vmul.f32 %v4592, %v312
    %v4609 = vmul.f32 %v4593, %v312
    %v4610 = vmul.f32 %v4594, %v312
    %v4611 = vmul.f32 %v4595, %v312
    %v4612 = vmul.f32 %v4596, %v312
    %v4613 = vmul.f32 %v4597, %v312
    %v4614 = vmul.f32 %v4598, %v312
    %v4615 = vmul.f32 %v4599, %v312
    %v4616 = vmul.f32 %v4600, %v312
    %v4617 = vmul.f32 %v4601, %v312
    %v4618 = vsel %vm330, %v4602, 0.0
    %4619 = vadd.xlane.f32.xlu0 %v4618
    %v4620 = vpop.xlane.xlu0 %4619
    %v4621 = vsel %vm330, %v4603, 0.0
    %4622 = vadd.xlane.f32.xlu0 %v4621
    %v4623 = vpop.xlane.xlu0 %4622
    %v4624 = vsel %vm330, %v4604, 0.0
    %4625 = vadd.xlane.f32.xlu0 %v4624
    %v4626 = vpop.xlane.xlu0 %4625
    %v4627 = vsel %vm330, %v4605, 0.0
    %4628 = vadd.xlane.f32.xlu0 %v4627
    %v4629 = vpop.xlane.xlu0 %4628
    %v4630 = vsel %vm330, %v4606, 0.0
    %4631 = vadd.xlane.f32.xlu0 %v4630
    %v4632 = vpop.xlane.xlu0 %4631
    %v4633 = vsel %vm330, %v4607, 0.0
    %4634 = vadd.xlane.f32.xlu0 %v4633
    %v4635 = vpop.xlane.xlu0 %4634
    %v4636 = vsel %vm330, %v4608, 0.0
    %4637 = vadd.xlane.f32.xlu0 %v4636
    %v4638 = vpop.xlane.xlu0 %4637
    %v4639 = vsel %vm330, %v4609, 0.0
    %4640 = vadd.xlane.f32.xlu0 %v4639
    %v4641 = vpop.xlane.xlu0 %4640
    %v4642 = vsel %vm330, %v4610, 0.0
    %4643 = vadd.xlane.f32.xlu0 %v4642
    %v4644 = vpop.xlane.xlu0 %4643
    %v4645 = vsel %vm330, %v4611, 0.0
    %4646 = vadd.xlane.f32.xlu0 %v4645
    %v4647 = vpop.xlane.xlu0 %4646
    %v4648 = vsel %vm330, %v4612, 0.0
    %4649 = vadd.xlane.f32.xlu0 %v4648
    %v4650 = vpop.xlane.xlu0 %4649
    %v4651 = vsel %vm330, %v4613, 0.0
    %4652 = vadd.xlane.f32.xlu0 %v4651
    %v4653 = vpop.xlane.xlu0 %4652
    %v4654 = vsel %vm330, %v4614, 0.0
    %4655 = vadd.xlane.f32.xlu0 %v4654
    %v4656 = vpop.xlane.xlu0 %4655
    %v4657 = vsel %vm330, %v4615, 0.0
    %4658 = vadd.xlane.f32.xlu0 %v4657
    %v4659 = vpop.xlane.xlu0 %4658
    %v4660 = vsel %vm330, %v4616, 0.0
    %4661 = vadd.xlane.f32.xlu0 %v4660
    %v4662 = vpop.xlane.xlu0 %4661
    %v4663 = vsel %vm330, %v4617, 0.0
    %4664 = vadd.xlane.f32.xlu0 %v4663
    %v4665 = vpop.xlane.xlu0 %4664
    %v4682 = vlaneseq
    %v4683 = vshrl.u32 %v4682, 7
    %v4684 = vsub.s32 %v396, %v4683
    %v4685 = vrot.slane %v4620, %v4684
    %v4686 = vlaneseq
    %v4687 = vshrl.u32 %v4686, 7
    %v4688 = vsub.s32 %v401, %v4687
    %v4689 = vrot.slane %v4623, %v4688
    %v4690 = vsel %vm406, %v4689, %v4685
    %v4691 = vlaneseq
    %v4692 = vshrl.u32 %v4691, 7
    %v4693 = vsub.s32 %v396, %v4692
    %v4694 = vrot.slane %v4626, %v4693
    %v4695 = vlaneseq
    %v4696 = vshrl.u32 %v4695, 7
    %v4697 = vsub.s32 %v401, %v4696
    %v4698 = vrot.slane %v4629, %v4697
    %v4699 = vsel %vm406, %v4698, %v4694
    %v4700 = vlaneseq
    %v4701 = vshrl.u32 %v4700, 7
    %v4702 = vsub.s32 %v396, %v4701
    %v4703 = vrot.slane %v4632, %v4702
    %v4704 = vlaneseq
    %v4705 = vshrl.u32 %v4704, 7
    %v4706 = vsub.s32 %v401, %v4705
    %v4707 = vrot.slane %v4635, %v4706
    %v4708 = vsel %vm406, %v4707, %v4703
    %v4709 = vlaneseq
    %v4710 = vshrl.u32 %v4709, 7
    %v4711 = vsub.s32 %v396, %v4710
    %v4712 = vrot.slane %v4638, %v4711
    %v4713 = vlaneseq
    %v4714 = vshrl.u32 %v4713, 7
    %v4715 = vsub.s32 %v401, %v4714
    %v4716 = vrot.slane %v4641, %v4715
    %v4717 = vsel %vm406, %v4716, %v4712
    %v4718 = vlaneseq
    %v4719 = vshrl.u32 %v4718, 7
    %v4720 = vsub.s32 %v396, %v4719
    %v4721 = vrot.slane %v4644, %v4720
    %v4722 = vlaneseq
    %v4723 = vshrl.u32 %v4722, 7
    %v4724 = vsub.s32 %v401, %v4723
    %v4725 = vrot.slane %v4647, %v4724
    %v4726 = vsel %vm406, %v4725, %v4721
    %v4727 = vlaneseq
    %v4728 = vshrl.u32 %v4727, 7
    %v4729 = vsub.s32 %v396, %v4728
    %v4730 = vrot.slane %v4650, %v4729
    %v4731 = vlaneseq
    %v4732 = vshrl.u32 %v4731, 7
    %v4733 = vsub.s32 %v401, %v4732
    %v4734 = vrot.slane %v4653, %v4733
    %v4735 = vsel %vm406, %v4734, %v4730
    %v4736 = vlaneseq
    %v4737 = vshrl.u32 %v4736, 7
    %v4738 = vsub.s32 %v396, %v4737
    %v4739 = vrot.slane %v4656, %v4738
    %v4740 = vlaneseq
    %v4741 = vshrl.u32 %v4740, 7
    %v4742 = vsub.s32 %v401, %v4741
    %v4743 = vrot.slane %v4659, %v4742
    %v4744 = vsel %vm406, %v4743, %v4739
    %v4745 = vlaneseq
    %v4746 = vshrl.u32 %v4745, 7
    %v4747 = vsub.s32 %v396, %v4746
    %v4748 = vrot.slane %v4662, %v4747
    %v4749 = vlaneseq
    %v4750 = vshrl.u32 %v4749, 7
    %v4751 = vsub.s32 %v401, %v4750
    %v4752 = vrot.slane %v4665, %v4751
    %v4753 = vsel %vm406, %v4752, %v4748
    %v4754 = vsel %vm471, %v4699, %v4690
    %v4755 = vsel %vm473, %v4708, %v4754
    %v4756 = vsel %vm475, %v4717, %v4755
    %v4757 = vsel %vm477, %v4726, %v4756
    %v4758 = vsel %vm479, %v4735, %v4757
    %v4759 = vsel %vm481, %v4744, %v4758
    %v4760 = vsel %vm483, %v4753, %v4759
    %v4762 = vsel %vm486, %v4760, -inf
    %4763 = vmax.xlane.f32.xlu0 %v4762
    %v4764 = vpop.xlane.xlu0 %4763
    %v4766 = vlaneseq
    %v4767 = vshrl.u32 %v4766, 7
    %v4768 = vsub.s32 0, %v4767
    %v4769 = vrot.slane %v4764, %v4768
    %v4770 = vlaneseq
    %v4771 = vshrl.u32 %v4770, 7
    %v4772 = vsub.s32 1, %v4771
    %v4773 = vrot.slane %v4764, %v4772
    %v4774 = vlaneseq
    %v4775 = vshrl.u32 %v4774, 7
    %v4776 = vsub.s32 2, %v4775
    %v4777 = vrot.slane %v4764, %v4776
    %v4778 = vlaneseq
    %v4779 = vshrl.u32 %v4778, 7
    %v4780 = vsub.s32 3, %v4779
    %v4781 = vrot.slane %v4764, %v4780
    %v4782 = vlaneseq
    %v4783 = vshrl.u32 %v4782, 7
    %v4784 = vsub.s32 4, %v4783
    %v4785 = vrot.slane %v4764, %v4784
    %v4786 = vlaneseq
    %v4787 = vshrl.u32 %v4786, 7
    %v4788 = vsub.s32 5, %v4787
    %v4789 = vrot.slane %v4764, %v4788
    %v4790 = vlaneseq
    %v4791 = vshrl.u32 %v4790, 7
    %v4792 = vsub.s32 6, %v4791
    %v4793 = vrot.slane %v4764, %v4792
    %v4794 = vlaneseq
    %v4795 = vshrl.u32 %v4794, 7
    %v4796 = vsub.s32 7, %v4795
    %v4797 = vrot.slane %v4764, %v4796
    %v4806 = vsub.f32 %v4620, %v4769
    %v4807 = vsub.f32 %v4623, %v4769
    %v4808 = vsub.f32 %v4626, %v4773
    %v4809 = vsub.f32 %v4629, %v4773
    %v4810 = vsub.f32 %v4632, %v4777
    %v4811 = vsub.f32 %v4635, %v4777
    %v4812 = vsub.f32 %v4638, %v4781
    %v4813 = vsub.f32 %v4641, %v4781
    %v4814 = vsub.f32 %v4644, %v4785
    %v4815 = vsub.f32 %v4647, %v4785
    %v4816 = vsub.f32 %v4650, %v4789
    %v4817 = vsub.f32 %v4653, %v4789
    %v4818 = vsub.f32 %v4656, %v4793
    %v4819 = vsub.f32 %v4659, %v4793
    %v4820 = vsub.f32 %v4662, %v4797
    %v4821 = vsub.f32 %v4665, %v4797
    %v4822 = vmul.f32 %v4806, 1.442695
    %v4823 = vpow.pop %v4822
    %v4824 = vmul.f32 %v4807, 1.442695
    %v4825 = vpow.pop %v4824
    %v4826 = vmul.f32 %v4808, 1.442695
    %v4827 = vpow.pop %v4826
    %v4828 = vmul.f32 %v4809, 1.442695
    %v4829 = vpow.pop %v4828
    %v4830 = vmul.f32 %v4810, 1.442695
    %v4831 = vpow.pop %v4830
    %v4832 = vmul.f32 %v4811, 1.442695
    %v4833 = vpow.pop %v4832
    %v4834 = vmul.f32 %v4812, 1.442695
    %v4835 = vpow.pop %v4834
    %v4836 = vmul.f32 %v4813, 1.442695
    %v4837 = vpow.pop %v4836
    %v4838 = vmul.f32 %v4814, 1.442695
    %v4839 = vpow.pop %v4838
    %v4840 = vmul.f32 %v4815, 1.442695
    %v4841 = vpow.pop %v4840
    %v4842 = vmul.f32 %v4816, 1.442695
    %v4843 = vpow.pop %v4842
    %v4844 = vmul.f32 %v4817, 1.442695
    %v4845 = vpow.pop %v4844
    %v4846 = vmul.f32 %v4818, 1.442695
    %v4847 = vpow.pop %v4846
    %v4848 = vmul.f32 %v4819, 1.442695
    %v4849 = vpow.pop %v4848
    %v4850 = vmul.f32 %v4820, 1.442695
    %v4851 = vpow.pop %v4850
    %v4852 = vmul.f32 %v4821, 1.442695
    %v4853 = vpow.pop %v4852
    %4870 = vset.pattern.permute.xlu0 0
    %4871 = vperm.xlu0 %4870, %v4823
    %v4872 = vpop.permute.xlu0 %4871
    %4873 = vset.pattern.permute.xlu0 0
    %4874 = vperm.xlu0 %4873, %v4825
    %v4875 = vpop.permute.xlu0 %4874
    %4876 = vset.pattern.permute.xlu0 0
    %4877 = vperm.xlu0 %4876, %v4827
    %v4878 = vpop.permute.xlu0 %4877
    %4879 = vset.pattern.permute.xlu0 0
    %4880 = vperm.xlu0 %4879, %v4829
    %v4881 = vpop.permute.xlu0 %4880
    %4882 = vset.pattern.permute.xlu0 0
    %4883 = vperm.xlu0 %4882, %v4831
    %v4884 = vpop.permute.xlu0 %4883
    %4885 = vset.pattern.permute.xlu0 0
    %4886 = vperm.xlu0 %4885, %v4833
    %v4887 = vpop.permute.xlu0 %4886
    %4888 = vset.pattern.permute.xlu0 0
    %4889 = vperm.xlu0 %4888, %v4835
    %v4890 = vpop.permute.xlu0 %4889
    %4891 = vset.pattern.permute.xlu0 0
    %4892 = vperm.xlu0 %4891, %v4837
    %v4893 = vpop.permute.xlu0 %4892
    %4894 = vset.pattern.permute.xlu0 0
    %4895 = vperm.xlu0 %4894, %v4839
    %v4896 = vpop.permute.xlu0 %4895
    %4897 = vset.pattern.permute.xlu0 0
    %4898 = vperm.xlu0 %4897, %v4841
    %v4899 = vpop.permute.xlu0 %4898
    %4900 = vset.pattern.permute.xlu0 0
    %4901 = vperm.xlu0 %4900, %v4843
    %v4902 = vpop.permute.xlu0 %4901
    %4903 = vset.pattern.permute.xlu0 0
    %4904 = vperm.xlu0 %4903, %v4845
    %v4905 = vpop.permute.xlu0 %4904
    %4906 = vset.pattern.permute.xlu0 0
    %4907 = vperm.xlu0 %4906, %v4847
    %v4908 = vpop.permute.xlu0 %4907
    %4909 = vset.pattern.permute.xlu0 0
    %4910 = vperm.xlu0 %4909, %v4849
    %v4911 = vpop.permute.xlu0 %4910
    %4912 = vset.pattern.permute.xlu0 0
    %4913 = vperm.xlu0 %4912, %v4851
    %v4914 = vpop.permute.xlu0 %4913
    %4915 = vset.pattern.permute.xlu0 0
    %4916 = vperm.xlu0 %4915, %v4853
    %v4917 = vpop.permute.xlu0 %4916
    %v4918 = vlaneseq
    %v4919 = vshrl.u32 %v4918, 7
    %v4920 = vsub.s32 %v396, %v4919
    %v4921 = vrot.slane %v4872, %v4920
    %v4922 = vlaneseq
    %v4923 = vshrl.u32 %v4922, 7
    %v4924 = vsub.s32 %v401, %v4923
    %v4925 = vrot.slane %v4875, %v4924
    %v4926 = vsel %vm406, %v4925, %v4921
    %v4927 = vlaneseq
    %v4928 = vshrl.u32 %v4927, 7
    %v4929 = vsub.s32 %v396, %v4928
    %v4930 = vrot.slane %v4878, %v4929
    %v4931 = vlaneseq
    %v4932 = vshrl.u32 %v4931, 7
    %v4933 = vsub.s32 %v401, %v4932
    %v4934 = vrot.slane %v4881, %v4933
    %v4935 = vsel %vm406, %v4934, %v4930
    %v4936 = vlaneseq
    %v4937 = vshrl.u32 %v4936, 7
    %v4938 = vsub.s32 %v396, %v4937
    %v4939 = vrot.slane %v4884, %v4938
    %v4940 = vlaneseq
    %v4941 = vshrl.u32 %v4940, 7
    %v4942 = vsub.s32 %v401, %v4941
    %v4943 = vrot.slane %v4887, %v4942
    %v4944 = vsel %vm406, %v4943, %v4939
    %v4945 = vlaneseq
    %v4946 = vshrl.u32 %v4945, 7
    %v4947 = vsub.s32 %v396, %v4946
    %v4948 = vrot.slane %v4890, %v4947
    %v4949 = vlaneseq
    %v4950 = vshrl.u32 %v4949, 7
    %v4951 = vsub.s32 %v401, %v4950
    %v4952 = vrot.slane %v4893, %v4951
    %v4953 = vsel %vm406, %v4952, %v4948
    %v4954 = vlaneseq
    %v4955 = vshrl.u32 %v4954, 7
    %v4956 = vsub.s32 %v396, %v4955
    %v4957 = vrot.slane %v4896, %v4956
    %v4958 = vlaneseq
    %v4959 = vshrl.u32 %v4958, 7
    %v4960 = vsub.s32 %v401, %v4959
    %v4961 = vrot.slane %v4899, %v4960
    %v4962 = vsel %vm406, %v4961, %v4957
    %v4963 = vlaneseq
    %v4964 = vshrl.u32 %v4963, 7
    %v4965 = vsub.s32 %v396, %v4964
    %v4966 = vrot.slane %v4902, %v4965
    %v4967 = vlaneseq
    %v4968 = vshrl.u32 %v4967, 7
    %v4969 = vsub.s32 %v401, %v4968
    %v4970 = vrot.slane %v4905, %v4969
    %v4971 = vsel %vm406, %v4970, %v4966
    %v4972 = vlaneseq
    %v4973 = vshrl.u32 %v4972, 7
    %v4974 = vsub.s32 %v396, %v4973
    %v4975 = vrot.slane %v4908, %v4974
    %v4976 = vlaneseq
    %v4977 = vshrl.u32 %v4976, 7
    %v4978 = vsub.s32 %v401, %v4977
    %v4979 = vrot.slane %v4911, %v4978
    %v4980 = vsel %vm406, %v4979, %v4975
    %v4981 = vlaneseq
    %v4982 = vshrl.u32 %v4981, 7
    %v4983 = vsub.s32 %v396, %v4982
    %v4984 = vrot.slane %v4914, %v4983
    %v4985 = vlaneseq
    %v4986 = vshrl.u32 %v4985, 7
    %v4987 = vsub.s32 %v401, %v4986
    %v4988 = vrot.slane %v4917, %v4987
    %v4989 = vsel %vm406, %v4988, %v4984
    %v4990 = vsel %vm471, %v4935, %v4926
    %v4991 = vsel %vm473, %v4944, %v4990
    %v4992 = vsel %vm475, %v4953, %v4991
    %v4993 = vsel %vm477, %v4962, %v4992
    %v4994 = vsel %vm479, %v4971, %v4993
    %v4995 = vsel %vm481, %v4980, %v4994
    %v4996 = vsel %vm483, %v4989, %v4995
    %v4998 = vsel %vm486, %v4996, 0.0
    %4999 = vadd.xlane.f32.xlu0 %v4998
    %v5000 = vpop.xlane.xlu0 %4999
    %v5002 = vlaneseq
    %v5003 = vshrl.u32 %v5002, 7
    %v5004 = vsub.s32 0, %v5003
    %v5005 = vrot.slane %v5000, %v5004
    %v5006 = vlaneseq
    %v5007 = vshrl.u32 %v5006, 7
    %v5008 = vsub.s32 1, %v5007
    %v5009 = vrot.slane %v5000, %v5008
    %v5010 = vlaneseq
    %v5011 = vshrl.u32 %v5010, 7
    %v5012 = vsub.s32 2, %v5011
    %v5013 = vrot.slane %v5000, %v5012
    %v5014 = vlaneseq
    %v5015 = vshrl.u32 %v5014, 7
    %v5016 = vsub.s32 3, %v5015
    %v5017 = vrot.slane %v5000, %v5016
    %v5018 = vlaneseq
    %v5019 = vshrl.u32 %v5018, 7
    %v5020 = vsub.s32 4, %v5019
    %v5021 = vrot.slane %v5000, %v5020
    %v5022 = vlaneseq
    %v5023 = vshrl.u32 %v5022, 7
    %v5024 = vsub.s32 5, %v5023
    %v5025 = vrot.slane %v5000, %v5024
    %v5026 = vlaneseq
    %v5027 = vshrl.u32 %v5026, 7
    %v5028 = vsub.s32 6, %v5027
    %v5029 = vrot.slane %v5000, %v5028
    %v5030 = vlaneseq
    %v5031 = vshrl.u32 %v5030, 7
    %v5032 = vsub.s32 7, %v5031
    %v5033 = vrot.slane %v5000, %v5032
    %v5042 = vrcp.pop %v5005
    %v5043 = vmul.f32 %v4823, %v5042
    %v5044 = vmul.f32 %v4825, %v5042
    %v5045 = vrcp.pop %v5009
    %v5046 = vmul.f32 %v4827, %v5045
    %v5047 = vmul.f32 %v4829, %v5045
    %v5048 = vrcp.pop %v5013
    %v5049 = vmul.f32 %v4831, %v5048
    %v5050 = vmul.f32 %v4833, %v5048
    %v5051 = vrcp.pop %v5017
    %v5052 = vmul.f32 %v4835, %v5051
    %v5053 = vmul.f32 %v4837, %v5051
    %v5054 = vrcp.pop %v5021
    %v5055 = vmul.f32 %v4839, %v5054
    %v5056 = vmul.f32 %v4841, %v5054
    %v5057 = vrcp.pop %v5025
    %v5058 = vmul.f32 %v4843, %v5057
    %v5059 = vmul.f32 %v4845, %v5057
    %v5060 = vrcp.pop %v5029
    %v5061 = vmul.f32 %v4847, %v5060
    %v5062 = vmul.f32 %v4849, %v5060
    %v5063 = vrcp.pop %v5033
    %v5064 = vmul.f32 %v4851, %v5063
    %v5065 = vmul.f32 %v4853, %v5063
    %5067 = vset.pattern.permute.xlu0 0
    %5068 = vperm.xlu0 %5067, %v5043
    %v5069 = vpop.permute.xlu0 %5068
    %5072 = vset.pattern.permute.xlu0 0
    %5073 = vperm.xlu0 %5072, %v5044
    %v5074 = vpop.permute.xlu0 %5073
    %5077 = vset.pattern.permute.xlu0 0
    %5078 = vperm.xlu0 %5077, %v5046
    %v5079 = vpop.permute.xlu0 %5078
    %5082 = vset.pattern.permute.xlu0 0
    %5083 = vperm.xlu0 %5082, %v5047
    %v5084 = vpop.permute.xlu0 %5083
    %5087 = vset.pattern.permute.xlu0 0
    %5088 = vperm.xlu0 %5087, %v5049
    %v5089 = vpop.permute.xlu0 %5088
    %5092 = vset.pattern.permute.xlu0 0
    %5093 = vperm.xlu0 %5092, %v5050
    %v5094 = vpop.permute.xlu0 %5093
    %5097 = vset.pattern.permute.xlu0 0
    %5098 = vperm.xlu0 %5097, %v5052
    %v5099 = vpop.permute.xlu0 %5098
    %5102 = vset.pattern.permute.xlu0 0
    %5103 = vperm.xlu0 %5102, %v5053
    %v5104 = vpop.permute.xlu0 %5103
    %5107 = vset.pattern.permute.xlu0 0
    %5108 = vperm.xlu0 %5107, %v5055
    %v5109 = vpop.permute.xlu0 %5108
    %5112 = vset.pattern.permute.xlu0 0
    %5113 = vperm.xlu0 %5112, %v5056
    %v5114 = vpop.permute.xlu0 %5113
    %5117 = vset.pattern.permute.xlu0 0
    %5118 = vperm.xlu0 %5117, %v5058
    %v5119 = vpop.permute.xlu0 %5118
    %5122 = vset.pattern.permute.xlu0 0
    %5123 = vperm.xlu0 %5122, %v5059
    %v5124 = vpop.permute.xlu0 %5123
    %5127 = vset.pattern.permute.xlu0 0
    %5128 = vperm.xlu0 %5127, %v5061
    %v5129 = vpop.permute.xlu0 %5128
    %5132 = vset.pattern.permute.xlu0 0
    %5133 = vperm.xlu0 %5132, %v5062
    %v5134 = vpop.permute.xlu0 %5133
    %5137 = vset.pattern.permute.xlu0 0
    %5138 = vperm.xlu0 %5137, %v5064
    %v5139 = vpop.permute.xlu0 %5138
    %5142 = vset.pattern.permute.xlu0 0
    %5143 = vperm.xlu0 %5142, %v5065
    %v5144 = vpop.permute.xlu0 %5143
    %v5146 = vmul.f32 %v5069, %v127
    %v5147 = vmul.f32 %v5074, %v128
    %v5148 = vmul.f32 %v5079, %v129
    %v5149 = vmul.f32 %v5084, %v130
    %v5150 = vmul.f32 %v5089, %v131
    %v5151 = vmul.f32 %v5094, %v132
    %v5152 = vmul.f32 %v5099, %v133
    %v5153 = vmul.f32 %v5104, %v134
    %v5154 = vmul.f32 %v5109, %v135
    %v5155 = vmul.f32 %v5114, %v136
    %v5156 = vmul.f32 %v5119, %v137
    %v5157 = vmul.f32 %v5124, %v138
    %v5158 = vmul.f32 %v5129, %v139
    %v5159 = vmul.f32 %v5134, %v140
    %v5160 = vmul.f32 %v5139, %v141
    %v5161 = vmul.f32 %v5144, %v142
    %v5162 = vsel %vm887, %v5146, 0.0
    %v5163 = vsel %vm887, %v5147, 0.0
    %v5164 = vadd.f32 %v5162, %v5163
    %v5165 = vrot.slane %v5164, 4
    %v5166 = vadd.f32 %v5164, %v5165
    %v5167 = vrot.slane %v5166, 2
    %v5168 = vadd.f32 %v5166, %v5167
    %v5169 = vrot.slane %v5168, 1
    %v5170 = vadd.f32 %v5168, %v5169
    %v5171 = vsel %vm887, %v5148, 0.0
    %v5172 = vsel %vm887, %v5149, 0.0
    %v5173 = vadd.f32 %v5171, %v5172
    %v5174 = vrot.slane %v5173, 4
    %v5175 = vadd.f32 %v5173, %v5174
    %v5176 = vrot.slane %v5175, 2
    %v5177 = vadd.f32 %v5175, %v5176
    %v5178 = vrot.slane %v5177, 1
    %v5179 = vadd.f32 %v5177, %v5178
    %v5180 = vsel %vm887, %v5150, 0.0
    %v5181 = vsel %vm887, %v5151, 0.0
    %v5182 = vadd.f32 %v5180, %v5181
    %v5183 = vrot.slane %v5182, 4
    %v5184 = vadd.f32 %v5182, %v5183
    %v5185 = vrot.slane %v5184, 2
    %v5186 = vadd.f32 %v5184, %v5185
    %v5187 = vrot.slane %v5186, 1
    %v5188 = vadd.f32 %v5186, %v5187
    %v5189 = vsel %vm887, %v5152, 0.0
    %v5190 = vsel %vm887, %v5153, 0.0
    %v5191 = vadd.f32 %v5189, %v5190
    %v5192 = vrot.slane %v5191, 4
    %v5193 = vadd.f32 %v5191, %v5192
    %v5194 = vrot.slane %v5193, 2
    %v5195 = vadd.f32 %v5193, %v5194
    %v5196 = vrot.slane %v5195, 1
    %v5197 = vadd.f32 %v5195, %v5196
    %v5198 = vsel %vm887, %v5154, 0.0
    %v5199 = vsel %vm887, %v5155, 0.0
    %v5200 = vadd.f32 %v5198, %v5199
    %v5201 = vrot.slane %v5200, 4
    %v5202 = vadd.f32 %v5200, %v5201
    %v5203 = vrot.slane %v5202, 2
    %v5204 = vadd.f32 %v5202, %v5203
    %v5205 = vrot.slane %v5204, 1
    %v5206 = vadd.f32 %v5204, %v5205
    %v5207 = vsel %vm887, %v5156, 0.0
    %v5208 = vsel %vm887, %v5157, 0.0
    %v5209 = vadd.f32 %v5207, %v5208
    %v5210 = vrot.slane %v5209, 4
    %v5211 = vadd.f32 %v5209, %v5210
    %v5212 = vrot.slane %v5211, 2
    %v5213 = vadd.f32 %v5211, %v5212
    %v5214 = vrot.slane %v5213, 1
    %v5215 = vadd.f32 %v5213, %v5214
    %v5216 = vsel %vm887, %v5158, 0.0
    %v5217 = vsel %vm887, %v5159, 0.0
    %v5218 = vadd.f32 %v5216, %v5217
    %v5219 = vrot.slane %v5218, 4
    %v5220 = vadd.f32 %v5218, %v5219
    %v5221 = vrot.slane %v5220, 2
    %v5222 = vadd.f32 %v5220, %v5221
    %v5223 = vrot.slane %v5222, 1
    %v5224 = vadd.f32 %v5222, %v5223
    %v5225 = vsel %vm887, %v5160, 0.0
    %v5226 = vsel %vm887, %v5161, 0.0
    %v5227 = vadd.f32 %v5225, %v5226
    %v5228 = vrot.slane %v5227, 4
    %v5229 = vadd.f32 %v5227, %v5228
    %v5230 = vrot.slane %v5229, 2
    %v5231 = vadd.f32 %v5229, %v5230
    %v5232 = vrot.slane %v5231, 1
    %v5233 = vadd.f32 %v5231, %v5232
    %v5242 = vsel %vm471, %v5179, %v5170
    %v5243 = vsel %vm473, %v5188, %v5242
    %v5244 = vsel %vm475, %v5197, %v5243
    %v5245 = vsel %vm477, %v5206, %v5244
    %v5246 = vsel %vm479, %v5215, %v5245
    %v5247 = vsel %vm481, %v5224, %v5246
    %v5248 = vsel %vm483, %v5233, %v5247
    %5249 = vrot.lane.b32.xlu0 %v5248, 32
    %v5250 = vpop.permute.xlu0 %5249
    %5252 = vrot.lane.b32.xlu0 %v4290, 72
    %v5253 = vpop.permute.xlu0 %5252
    %v5255 = vsel %vm330, %v4463, %v5250
    %v5256 = vsel %vm983, %v5255, %v5253
    %v5257 = vsel %vm991, %v5253, 0
    %5259 = vmatprep.subr.mxu0 0.0
    %5260 = vmatpush1.msra.mxu0 %v160
    %5261 = vmatprep.subr.mxu0 0.0
    %5262 = vmatpush1.msra.mxu0 %v161
    %5263 = vmatprep.subr.mxu0 0.0
    %5264 = vmatpush1.msra.mxu0 %v162
    %5265 = vmatprep.subr.mxu0 0.0
    %5266 = vmatpush1.msra.mxu0 %v163
    %5267 = vmatprep.subr.mxu0 0.0
    %5268 = vmatpush1.msra.mxu0 %v164
    %5269 = vmatprep.subr.mxu0 0.0
    %5270 = vmatpush1.msra.mxu0 %v165
    %5271 = vmatprep.subr.mxu0 0.0
    %5272 = vmatpush1.msra.mxu0 %v166
    %5273 = vmatprep.subr.mxu0 0.0
    %5274 = vmatpush1.msra.mxu0 %v167
    %5275 = vmatprep.subr.mxu0 0.0
    %5276 = vmatpush1.msra.mxu0 %v168
    %5277 = vmatprep.subr.mxu0 0.0
    %5278 = vmatpush1.msra.mxu0 %v169
    %5279 = vmatprep.subr.mxu0 0.0
    %5280 = vmatpush1.msra.mxu0 %v170
    %5281 = vmatprep.subr.mxu0 0.0
    %5282 = vmatpush1.msra.mxu0 %v171
    %5283 = vmatprep.subr.mxu0 0.0
    %5284 = vmatpush1.msra.mxu0 %v172
    %5285 = vmatprep.subr.mxu0 0.0
    %5286 = vmatpush1.msra.mxu0 %v173
    %5287 = vmatprep.subr.mxu0 0.0
    %5288 = vmatpush1.msra.mxu0 %v174
    %5289 = vmatprep.subr.mxu0 0.0
    %5290 = vmatpush1.msra.mxu0 %v175
    %5291 = vmatprep.subr.mxu0 0.0
    %5292 = vmatpush1.msra.mxu0 %v176
    %5293 = vmatprep.subr.mxu0 0.0
    %5294 = vmatpush1.msra.mxu0 0.0
    %5295 = vmatprep.subr.mxu0 0.0
    %5296 = vmatpush1.msra.mxu0 0.0
    %5297 = vmatprep.subr.mxu0 0.0
    %5298 = vmatpush1.msra.mxu0 0.0
    %5299 = vmatprep.subr.mxu0 0.0
    %5300 = vmatpush1.msra.mxu0 0.0
    %5301 = vmatprep.subr.mxu0 0.0
    %5302 = vmatpush1.msra.mxu0 0.0
    %5303 = vmatprep.subr.mxu0 0.0
    %5304 = vmatpush1.msra.mxu0 0.0
    %5305 = vmatprep.subr.mxu0 0.0
    %5306 = vmatpush1.msra.mxu0 0.0
    %5307 = vmatprep.subr.mxu0 0.0
    %5308 = vmatpush1.msra.mxu0 0.0
    %5309 = vmatprep.subr.mxu0 0.0
    %5310 = vmatpush1.msra.mxu0 0.0
    %5311 = vmatprep.subr.mxu0 0.0
    %5312 = vmatpush1.msra.mxu0 0.0
    %5313 = vmatprep.subr.mxu0 0.0
    %5314 = vmatpush1.msra.mxu0 0.0
    %5315 = vmatprep.subr.mxu0 0.0
    %5316 = vmatpush1.msra.mxu0 0.0
    %5317 = vmatprep.subr.mxu0 0.0
    %5318 = vmatpush1.msra.mxu0 0.0
    %5319 = vmatprep.subr.mxu0 0.0
    %5320 = vmatpush1.msra.mxu0 0.0
    %5321 = vmatprep.subr.mxu0 0.0
    %5322 = vmatpush1.msra.mxu0 0.0
    %5323 = vmatprep.mubr.f32.mxu0 %v5257
    %5324 = vmatmul.mubr.f32.gmra.mrb[0].mxu0 %v5256
    %v5325 = vpop.f32.mrb[0].mxu0
    %v5326 = vadd.f32 %v989, %v5325
    %v5327 = vpop.f32.mrb[0].mxu0
    %5328 = vdwg.mxu0
    %v5329 = vxor.u32 %v5326, 2147483648
    %v5330 = vmul.f32 %v5329, 1.442695
    %v5331 = vpow.pop %v5330
    %v5332 = vadd.f32 %v5331, 1.0
    %v5333 = vrcp.pop %v5332
    %v5334 = vmul.f32 1.0, %v5333
    %5336 = vrot.lane.b32.xlu0 %v5326, 32
    %v5337 = vpop.permute.xlu0 %5336
    %v5339 = vmul.f32 %v5334, %v5337
    %5341 = vrot.lane.b32.xlu0 %v5339, 64
    %v5342 = vpop.permute.xlu0 %5341
    %v5344 = vadd.f32 %v5326, %v5342
    %v5345 = vtanh.pop %v5344
    %v5346 = vsub.f32 1.0, %v5334
    %5348 = vrot.lane.b32.xlu0 %v5345, 96
    %v5349 = vpop.permute.xlu0 %5348
    %v5351 = vmul.f32 %v5346, %v5349
    %v5352 = vmul.f32 %v5334, %v4290
    %v5353 = vadd.f32 %v5351, %v5352
    %5355 = vrot.lane.b32.xlu0 %v5353, 96
    %v5356 = vpop.permute.xlu0 %5355
    %v5357 = vsel %vm330, %v5356, 0
    %5359 = vmatprep.subr.mxu0 0.0
    %5360 = vmatpush1.msra.mxu0 %v178
    %5361 = vmatprep.subr.mxu0 0.0
    %5362 = vmatpush1.msra.mxu0 %v179
    %5363 = vmatprep.subr.mxu0 0.0
    %5364 = vmatpush1.msra.mxu0 %v180
    %5365 = vmatprep.subr.mxu0 0.0
    %5366 = vmatpush1.msra.mxu0 %v181
    %5367 = vmatprep.subr.mxu0 0.0
    %5368 = vmatpush1.msra.mxu0 0.0
    %5369 = vmatprep.subr.mxu0 0.0
    %5370 = vmatpush1.msra.mxu0 0.0
    %5371 = vmatprep.subr.mxu0 0.0
    %5372 = vmatpush1.msra.mxu0 0.0
    %5373 = vmatprep.subr.mxu0 0.0
    %5374 = vmatpush1.msra.mxu0 0.0
    %5375 = vmatprep.subr.mxu0 0.0
    %5376 = vmatpush1.msra.mxu0 0.0
    %5377 = vmatprep.subr.mxu0 0.0
    %5378 = vmatpush1.msra.mxu0 0.0
    %5379 = vmatprep.subr.mxu0 0.0
    %5380 = vmatpush1.msra.mxu0 0.0
    %5381 = vmatprep.subr.mxu0 0.0
    %5382 = vmatpush1.msra.mxu0 0.0
    %5383 = vmatprep.subr.mxu0 0.0
    %5384 = vmatpush1.msra.mxu0 0.0
    %5385 = vmatprep.subr.mxu0 0.0
    %5386 = vmatpush1.msra.mxu0 0.0
    %5387 = vmatprep.subr.mxu0 0.0
    %5388 = vmatpush1.msra.mxu0 0.0
    %5389 = vmatprep.subr.mxu0 0.0
    %5390 = vmatpush1.msra.mxu0 0.0
    %5391 = vmatprep.subr.mxu0 0.0
    %5392 = vmatpush1.msra.mxu0 0.0
    %5393 = vmatprep.subr.mxu0 0.0
    %5394 = vmatpush1.msra.mxu0 0.0
    %5395 = vmatprep.subr.mxu0 0.0
    %5396 = vmatpush1.msra.mxu0 0.0
    %5397 = vmatprep.subr.mxu0 0.0
    %5398 = vmatpush1.msra.mxu0 0.0
    %5399 = vmatprep.subr.mxu0 0.0
    %5400 = vmatpush1.msra.mxu0 0.0
    %5401 = vmatprep.subr.mxu0 0.0
    %5402 = vmatpush1.msra.mxu0 0.0
    %5403 = vmatprep.subr.mxu0 0.0
    %5404 = vmatpush1.msra.mxu0 0.0
    %5405 = vmatprep.subr.mxu0 0.0
    %5406 = vmatpush1.msra.mxu0 0.0
    %5407 = vmatprep.subr.mxu0 0.0
    %5408 = vmatpush1.msra.mxu0 0.0
    %5409 = vmatprep.subr.mxu0 0.0
    %5410 = vmatpush1.msra.mxu0 0.0
    %5411 = vmatprep.subr.mxu0 0.0
    %5412 = vmatpush1.msra.mxu0 0.0
    %5413 = vmatprep.subr.mxu0 0.0
    %5414 = vmatpush1.msra.mxu0 0.0
    %5415 = vmatprep.subr.mxu0 0.0
    %5416 = vmatpush1.msra.mxu0 0.0
    %5417 = vmatprep.subr.mxu0 0.0
    %5418 = vmatpush1.msra.mxu0 0.0
    %5419 = vmatprep.subr.mxu0 0.0
    %5420 = vmatpush1.msra.mxu0 0.0
    %5421 = vmatprep.subr.mxu0 0.0
    %5422 = vmatpush1.msra.mxu0 0.0
    %5423 = vmatprep.mubr.f32.mxu0 0.0
    %5424 = vmatmul.mubr.f32.gmra.mrb[0].mxu0 %v5357
    %v5425 = vpop.f32.mrb[0].mxu0
    %v5426 = vadd.f32 %v1096, %v5425
    %v5427 = vpop.f32.mrb[0].mxu0
    %5428 = vdwg.mxu0
    %v5429 = vsel %vm330, %v5426, -inf
    %5430 = vmax.xlane.f32.xlu0 %v5429
    %v5431 = vpop.xlane.xlu0 %5430
    %v5432 = vsub.f32 %v5426, %v5431
    %v5433 = vmul.f32 %v5432, 1.442695
    %v5434 = vpow.pop %v5433
    %v5435 = vsel %vm330, %v5434, 0.0
    %5436 = vadd.xlane.f32.xlu0 %v5435
    %v5437 = vpop.xlane.xlu0 %5436
    %v5438 = vrcp.pop %v5437
    %v5439 = vmul.f32 %v5434, %v5438
    %v5440 = vlaneseq
    %v5441 = vshrl.u32 %v5440, 7
    %v5442 = vsub.s32 %v1184, %v5441
    %v5443 = vrot.slane %v5069, %v5442
    %v5444 = vlaneseq
    %v5445 = vshrl.u32 %v5444, 7
    %v5446 = vsub.s32 %v1189, %v5445
    %v5447 = vrot.slane %v5074, %v5446
    %v5448 = vsel %vm1194, %v5447, %v5443
    %v5449 = vlaneseq
    %v5450 = vshrl.u32 %v5449, 7
    %v5451 = vsub.s32 %v1184, %v5450
    %v5452 = vrot.slane %v5079, %v5451
    %v5453 = vlaneseq
    %v5454 = vshrl.u32 %v5453, 7
    %v5455 = vsub.s32 %v1189, %v5454
    %v5456 = vrot.slane %v5084, %v5455
    %v5457 = vsel %vm1194, %v5456, %v5452
    %v5458 = vlaneseq
    %v5459 = vshrl.u32 %v5458, 7
    %v5460 = vsub.s32 %v1184, %v5459
    %v5461 = vrot.slane %v5089, %v5460
    %v5462 = vlaneseq
    %v5463 = vshrl.u32 %v5462, 7
    %v5464 = vsub.s32 %v1189, %v5463
    %v5465 = vrot.slane %v5094, %v5464
    %v5466 = vsel %vm1194, %v5465, %v5461
    %v5467 = vlaneseq
    %v5468 = vshrl.u32 %v5467, 7
    %v5469 = vsub.s32 %v1184, %v5468
    %v5470 = vrot.slane %v5099, %v5469
    %v5471 = vlaneseq
    %v5472 = vshrl.u32 %v5471, 7
    %v5473 = vsub.s32 %v1189, %v5472
    %v5474 = vrot.slane %v5104, %v5473
    %v5475 = vsel %vm1194, %v5474, %v5470
    %v5476 = vlaneseq
    %v5477 = vshrl.u32 %v5476, 7
    %v5478 = vsub.s32 %v1184, %v5477
    %v5479 = vrot.slane %v5109, %v5478
    %v5480 = vlaneseq
    %v5481 = vshrl.u32 %v5480, 7
    %v5482 = vsub.s32 %v1189, %v5481
    %v5483 = vrot.slane %v5114, %v5482
    %v5484 = vsel %vm1194, %v5483, %v5479
    %v5485 = vlaneseq
    %v5486 = vshrl.u32 %v5485, 7
    %v5487 = vsub.s32 %v1184, %v5486
    %v5488 = vrot.slane %v5119, %v5487
    %v5489 = vlaneseq
    %v5490 = vshrl.u32 %v5489, 7
    %v5491 = vsub.s32 %v1189, %v5490
    %v5492 = vrot.slane %v5124, %v5491
    %v5493 = vsel %vm1194, %v5492, %v5488
    %v5494 = vlaneseq
    %v5495 = vshrl.u32 %v5494, 7
    %v5496 = vsub.s32 %v1184, %v5495
    %v5497 = vrot.slane %v5129, %v5496
    %v5498 = vlaneseq
    %v5499 = vshrl.u32 %v5498, 7
    %v5500 = vsub.s32 %v1189, %v5499
    %v5501 = vrot.slane %v5134, %v5500
    %v5502 = vsel %vm1194, %v5501, %v5497
    %v5503 = vlaneseq
    %v5504 = vshrl.u32 %v5503, 7
    %v5505 = vsub.s32 %v1184, %v5504
    %v5506 = vrot.slane %v5139, %v5505
    %v5507 = vlaneseq
    %v5508 = vshrl.u32 %v5507, 7
    %v5509 = vsub.s32 %v1189, %v5508
    %v5510 = vrot.slane %v5144, %v5509
    %v5511 = vsel %vm1194, %v5510, %v5506
    %v5512 = vsel %vm471, %v5457, %v5448
    %v5513 = vsel %vm473, %v5466, %v5512
    %v5514 = vsel %vm475, %v5475, %v5513
    %v5515 = vsel %vm477, %v5484, %v5514
    %v5516 = vsel %vm479, %v5493, %v5515
    %v5517 = vsel %vm481, %v5502, %v5516
    %v5518 = vsel %vm483, %v5511, %v5517
    %v5520 = vsel %vm330, %v5439, %v5353
    %v5521 = vsel %vm1268, %v5520, %v5518
    %v5522 = vsel %vm1270, %v5521, 0.0
    %s5523 = scalar_lea.vmem [#allocation14], 32
    %5524 = vst [vmem:[%s5523] sm:$0xff] %v5522
    %s5525 = scalar_lea.vmem [#allocation2], 40
    %v5526 = vld [vmem:[%s5525] sm:$0xff]
    %v5528 = vcombine.high %v5426, %v5426
    %v5530 = vunpack.c.l.s4 1966171168
    %v5531 = vunpack.c.0.s8 %v5530
    %v5532 = vlaneseq
    %v5533 = vshrl.u32 %v5532, 7
    %v5534 = vsub.s32 %v5531, %v5533
    %v5535 = vrot.slane %v5426, %v5534
    %v5537 = vunpack.c.l.s4 1966171168
    %v5538 = vunpack.c.0.s8 %v5537
    %v5539 = vlaneseq
    %v5540 = vshrl.u32 %v5539, 7
    %v5541 = vsub.s32 %v5538, %v5540
    %v5542 = vrot.slane %v5528, %v5541
    %v5543 = vcombine.high %v5535, %v5535
    %v5544 = vcombine.high %v5542, %v5542
    %v5546 = vunpack.c.l.s4 1966171168
    %v5547 = vunpack.c.0.s8 %v5546
    %v5548 = vlaneseq
    %v5549 = vshrl.u32 %v5548, 7
    %v5550 = vsub.s32 %v5547, %v5549
    %v5551 = vrot.slane %v5535, %v5550
    %v5553 = vunpack.c.l.s4 1966171168
    %v5554 = vunpack.c.0.s8 %v5553
    %v5555 = vlaneseq
    %v5556 = vshrl.u32 %v5555, 7
    %v5557 = vsub.s32 %v5554, %v5556
    %v5558 = vrot.slane %v5542, %v5557
    %v5560 = vunpack.c.l.s4 1966171168
    %v5561 = vunpack.c.0.s8 %v5560
    %v5562 = vlaneseq
    %v5563 = vshrl.u32 %v5562, 7
    %v5564 = vsub.s32 %v5561, %v5563
    %v5565 = vrot.slane %v5543, %v5564
    %v5567 = vunpack.c.l.s4 1966171168
    %v5568 = vunpack.c.0.s8 %v5567
    %v5569 = vlaneseq
    %v5570 = vshrl.u32 %v5569, 7
    %v5571 = vsub.s32 %v5568, %v5570
    %v5572 = vrot.slane %v5544, %v5571
    %v5573 = vcombine.high %v5551, %v5551
    %v5574 = vcombine.high %v5558, %v5558
    %v5575 = vcombine.high %v5565, %v5565
    %v5576 = vcombine.high %v5572, %v5572
    %v5577 = vlaneseq
    %v5578 = vshrl.u32 %v5577, 7
    %v5579 = vsub.s32 0, %v5578
    %v5580 = vrot.slane %v5551, %v5579
    %v5581 = vlaneseq
    %v5582 = vshrl.u32 %v5581, 7
    %v5583 = vsub.s32 0, %v5582
    %v5584 = vrot.slane %v5565, %v5583
    %v5585 = vlaneseq
    %v5586 = vshrl.u32 %v5585, 7
    %v5587 = vsub.s32 0, %v5586
    %v5588 = vrot.slane %v5573, %v5587
    %v5589 = vlaneseq
    %v5590 = vshrl.u32 %v5589, 7
    %v5591 = vsub.s32 0, %v5590
    %v5592 = vrot.slane %v5575, %v5591
    %v5593 = vlaneseq
    %v5594 = vshrl.u32 %v5593, 7
    %v5595 = vsub.s32 0, %v5594
    %v5596 = vrot.slane %v5558, %v5595
    %v5597 = vlaneseq
    %v5598 = vshrl.u32 %v5597, 7
    %v5599 = vsub.s32 0, %v5598
    %v5600 = vrot.slane %v5572, %v5599
    %v5601 = vlaneseq
    %v5602 = vshrl.u32 %v5601, 7
    %v5603 = vsub.s32 0, %v5602
    %v5604 = vrot.slane %v5574, %v5603
    %v5605 = vlaneseq
    %v5606 = vshrl.u32 %v5605, 7
    %v5607 = vsub.s32 0, %v5606
    %v5608 = vrot.slane %v5576, %v5607
    %5609 = vrot.lane.b32.xlu0 %v5580, 96
    %v5610 = vpop.permute.xlu0 %5609
    %5611 = vrot.lane.b32.xlu0 %v5584, 96
    %v5612 = vpop.permute.xlu0 %5611
    %5613 = vrot.lane.b32.xlu0 %v5588, 96
    %v5614 = vpop.permute.xlu0 %5613
    %5615 = vrot.lane.b32.xlu0 %v5592, 96
    %v5616 = vpop.permute.xlu0 %5615
    %5617 = vrot.lane.b32.xlu0 %v5596, 96
    %v5618 = vpop.permute.xlu0 %5617
    %5619 = vrot.lane.b32.xlu0 %v5600, 96
    %v5620 = vpop.permute.xlu0 %5619
    %5621 = vrot.lane.b32.xlu0 %v5604, 96
    %v5622 = vpop.permute.xlu0 %5621
    %5623 = vrot.lane.b32.xlu0 %v5608, 96
    %v5624 = vpop.permute.xlu0 %5623
    %v5633 = vadd.f32 %v143, %v5610
    %v5634 = vadd.f32 %v144, %v5610
    %v5635 = vadd.f32 %v145, %v5612
    %v5636 = vadd.f32 %v146, %v5612
    %v5637 = vadd.f32 %v147, %v5614
    %v5638 = vadd.f32 %v148, %v5614
    %v5639 = vadd.f32 %v149, %v5616
    %v5640 = vadd.f32 %v150, %v5616
    %v5641 = vadd.f32 %v151, %v5618
    %v5642 = vadd.f32 %v152, %v5618
    %v5643 = vadd.f32 %v153, %v5620
    %v5644 = vadd.f32 %v154, %v5620
    %v5645 = vadd.f32 %v155, %v5622
    %v5646 = vadd.f32 %v156, %v5622
    %v5647 = vadd.f32 %v157, %v5624
    %v5648 = vadd.f32 %v158, %v5624
    %v5649 = vtanh.pop %v5633
    %v5650 = vtanh.pop %v5634
    %v5651 = vtanh.pop %v5635
    %v5652 = vtanh.pop %v5636
    %v5653 = vtanh.pop %v5637
    %v5654 = vtanh.pop %v5638
    %v5655 = vtanh.pop %v5639
    %v5656 = vtanh.pop %v5640
    %v5657 = vtanh.pop %v5641
    %v5658 = vtanh.pop %v5642
    %v5659 = vtanh.pop %v5643
    %v5660 = vtanh.pop %v5644
    %v5661 = vtanh.pop %v5645
    %v5662 = vtanh.pop %v5646
    %v5663 = vtanh.pop %v5647
    %v5664 = vtanh.pop %v5648
    %v5665 = vmul.f32 %v5649, %v312
    %v5666 = vmul.f32 %v5650, %v312
    %v5667 = vmul.f32 %v5651, %v312
    %v5668 = vmul.f32 %v5652, %v312
    %v5669 = vmul.f32 %v5653, %v312
    %v5670 = vmul.f32 %v5654, %v312
    %v5671 = vmul.f32 %v5655, %v312
    %v5672 = vmul.f32 %v5656, %v312
    %v5673 = vmul.f32 %v5657, %v312
    %v5674 = vmul.f32 %v5658, %v312
    %v5675 = vmul.f32 %v5659, %v312
    %v5676 = vmul.f32 %v5660, %v312
    %v5677 = vmul.f32 %v5661, %v312
    %v5678 = vmul.f32 %v5662, %v312
    %v5679 = vmul.f32 %v5663, %v312
    %v5680 = vmul.f32 %v5664, %v312
    %v5681 = vsel %vm330, %v5665, 0.0
    %5682 = vadd.xlane.f32.xlu0 %v5681
    %v5683 = vpop.xlane.xlu0 %5682
    %v5684 = vsel %vm330, %v5666, 0.0
    %5685 = vadd.xlane.f32.xlu0 %v5684
    %v5686 = vpop.xlane.xlu0 %5685
    %v5687 = vsel %vm330, %v5667, 0.0
    %5688 = vadd.xlane.f32.xlu0 %v5687
    %v5689 = vpop.xlane.xlu0 %5688
    %v5690 = vsel %vm330, %v5668, 0.0
    %5691 = vadd.xlane.f32.xlu0 %v5690
    %v5692 = vpop.xlane.xlu0 %5691
    %v5693 = vsel %vm330, %v5669, 0.0
    %5694 = vadd.xlane.f32.xlu0 %v5693
    %v5695 = vpop.xlane.xlu0 %5694
    %v5696 = vsel %vm330, %v5670, 0.0
    %5697 = vadd.xlane.f32.xlu0 %v5696
    %v5698 = vpop.xlane.xlu0 %5697
    %v5699 = vsel %vm330, %v5671, 0.0
    %5700 = vadd.xlane.f32.xlu0 %v5699
    %v5701 = vpop.xlane.xlu0 %5700
    %v5702 = vsel %vm330, %v5672, 0.0
    %5703 = vadd.xlane.f32.xlu0 %v5702
    %v5704 = vpop.xlane.xlu0 %5703
    %v5705 = vsel %vm330, %v5673, 0.0
    %5706 = vadd.xlane.f32.xlu0 %v5705
    %v5707 = vpop.xlane.xlu0 %5706
    %v5708 = vsel %vm330, %v5674, 0.0
    %5709 = vadd.xlane.f32.xlu0 %v5708
    %v5710 = vpop.xlane.xlu0 %5709
    %v5711 = vsel %vm330, %v5675, 0.0
    %5712 = vadd.xlane.f32.xlu0 %v5711
    %v5713 = vpop.xlane.xlu0 %5712
    %v5714 = vsel %vm330, %v5676, 0.0
    %5715 = vadd.xlane.f32.xlu0 %v5714
    %v5716 = vpop.xlane.xlu0 %5715
    %v5717 = vsel %vm330, %v5677, 0.0
    %5718 = vadd.xlane.f32.xlu0 %v5717
    %v5719 = vpop.xlane.xlu0 %5718
    %v5720 = vsel %vm330, %v5678, 0.0
    %5721 = vadd.xlane.f32.xlu0 %v5720
    %v5722 = vpop.xlane.xlu0 %5721
    %v5723 = vsel %vm330, %v5679, 0.0
    %5724 = vadd.xlane.f32.xlu0 %v5723
    %v5725 = vpop.xlane.xlu0 %5724
    %v5726 = vsel %vm330, %v5680, 0.0
    %5727 = vadd.xlane.f32.xlu0 %v5726
    %v5728 = vpop.xlane.xlu0 %5727
    %v5745 = vlaneseq
    %v5746 = vshrl.u32 %v5745, 7
    %v5747 = vsub.s32 %v396, %v5746
    %v5748 = vrot.slane %v5683, %v5747
    %v5749 = vlaneseq
    %v5750 = vshrl.u32 %v5749, 7
    %v5751 = vsub.s32 %v401, %v5750
    %v5752 = vrot.slane %v5686, %v5751
    %v5753 = vsel %vm406, %v5752, %v5748
    %v5754 = vlaneseq
    %v5755 = vshrl.u32 %v5754, 7
    %v5756 = vsub.s32 %v396, %v5755
    %v5757 = vrot.slane %v5689, %v5756
    %v5758 = vlaneseq
    %v5759 = vshrl.u32 %v5758, 7
    %v5760 = vsub.s32 %v401, %v5759
    %v5761 = vrot.slane %v5692, %v5760
    %v5762 = vsel %vm406, %v5761, %v5757
    %v5763 = vlaneseq
    %v5764 = vshrl.u32 %v5763, 7
    %v5765 = vsub.s32 %v396, %v5764
    %v5766 = vrot.slane %v5695, %v5765
    %v5767 = vlaneseq
    %v5768 = vshrl.u32 %v5767, 7
    %v5769 = vsub.s32 %v401, %v5768
    %v5770 = vrot.slane %v5698, %v5769
    %v5771 = vsel %vm406, %v5770, %v5766
    %v5772 = vlaneseq
    %v5773 = vshrl.u32 %v5772, 7
    %v5774 = vsub.s32 %v396, %v5773
    %v5775 = vrot.slane %v5701, %v5774
    %v5776 = vlaneseq
    %v5777 = vshrl.u32 %v5776, 7
    %v5778 = vsub.s32 %v401, %v5777
    %v5779 = vrot.slane %v5704, %v5778
    %v5780 = vsel %vm406, %v5779, %v5775
    %v5781 = vlaneseq
    %v5782 = vshrl.u32 %v5781, 7
    %v5783 = vsub.s32 %v396, %v5782
    %v5784 = vrot.slane %v5707, %v5783
    %v5785 = vlaneseq
    %v5786 = vshrl.u32 %v5785, 7
    %v5787 = vsub.s32 %v401, %v5786
    %v5788 = vrot.slane %v5710, %v5787
    %v5789 = vsel %vm406, %v5788, %v5784
    %v5790 = vlaneseq
    %v5791 = vshrl.u32 %v5790, 7
    %v5792 = vsub.s32 %v396, %v5791
    %v5793 = vrot.slane %v5713, %v5792
    %v5794 = vlaneseq
    %v5795 = vshrl.u32 %v5794, 7
    %v5796 = vsub.s32 %v401, %v5795
    %v5797 = vrot.slane %v5716, %v5796
    %v5798 = vsel %vm406, %v5797, %v5793
    %v5799 = vlaneseq
    %v5800 = vshrl.u32 %v5799, 7
    %v5801 = vsub.s32 %v396, %v5800
    %v5802 = vrot.slane %v5719, %v5801
    %v5803 = vlaneseq
    %v5804 = vshrl.u32 %v5803, 7
    %v5805 = vsub.s32 %v401, %v5804
    %v5806 = vrot.slane %v5722, %v5805
    %v5807 = vsel %vm406, %v5806, %v5802
    %v5808 = vlaneseq
    %v5809 = vshrl.u32 %v5808, 7
    %v5810 = vsub.s32 %v396, %v5809
    %v5811 = vrot.slane %v5725, %v5810
    %v5812 = vlaneseq
    %v5813 = vshrl.u32 %v5812, 7
    %v5814 = vsub.s32 %v401, %v5813
    %v5815 = vrot.slane %v5728, %v5814
    %v5816 = vsel %vm406, %v5815, %v5811
    %v5817 = vsel %vm471, %v5762, %v5753
    %v5818 = vsel %vm473, %v5771, %v5817
    %v5819 = vsel %vm475, %v5780, %v5818
    %v5820 = vsel %vm477, %v5789, %v5819
    %v5821 = vsel %vm479, %v5798, %v5820
    %v5822 = vsel %vm481, %v5807, %v5821
    %v5823 = vsel %vm483, %v5816, %v5822
    %v5825 = vsel %vm486, %v5823, -inf
    %5826 = vmax.xlane.f32.xlu0 %v5825
    %v5827 = vpop.xlane.xlu0 %5826
    %v5829 = vlaneseq
    %v5830 = vshrl.u32 %v5829, 7
    %v5831 = vsub.s32 0, %v5830
    %v5832 = vrot.slane %v5827, %v5831
    %v5833 = vlaneseq
    %v5834 = vshrl.u32 %v5833, 7
    %v5835 = vsub.s32 1, %v5834
    %v5836 = vrot.slane %v5827, %v5835
    %v5837 = vlaneseq
    %v5838 = vshrl.u32 %v5837, 7
    %v5839 = vsub.s32 2, %v5838
    %v5840 = vrot.slane %v5827, %v5839
    %v5841 = vlaneseq
    %v5842 = vshrl.u32 %v5841, 7
    %v5843 = vsub.s32 3, %v5842
    %v5844 = vrot.slane %v5827, %v5843
    %v5845 = vlaneseq
    %v5846 = vshrl.u32 %v5845, 7
    %v5847 = vsub.s32 4, %v5846
    %v5848 = vrot.slane %v5827, %v5847
    %v5849 = vlaneseq
    %v5850 = vshrl.u32 %v5849, 7
    %v5851 = vsub.s32 5, %v5850
    %v5852 = vrot.slane %v5827, %v5851
    %v5853 = vlaneseq
    %v5854 = vshrl.u32 %v5853, 7
    %v5855 = vsub.s32 6, %v5854
    %v5856 = vrot.slane %v5827, %v5855
    %v5857 = vlaneseq
    %v5858 = vshrl.u32 %v5857, 7
    %v5859 = vsub.s32 7, %v5858
    %v5860 = vrot.slane %v5827, %v5859
    %v5869 = vsub.f32 %v5683, %v5832
    %v5870 = vsub.f32 %v5686, %v5832
    %v5871 = vsub.f32 %v5689, %v5836
    %v5872 = vsub.f32 %v5692, %v5836
    %v5873 = vsub.f32 %v5695, %v5840
    %v5874 = vsub.f32 %v5698, %v5840
    %v5875 = vsub.f32 %v5701, %v5844
    %v5876 = vsub.f32 %v5704, %v5844
    %v5877 = vsub.f32 %v5707, %v5848
    %v5878 = vsub.f32 %v5710, %v5848
    %v5879 = vsub.f32 %v5713, %v5852
    %v5880 = vsub.f32 %v5716, %v5852
    %v5881 = vsub.f32 %v5719, %v5856
    %v5882 = vsub.f32 %v5722, %v5856
    %v5883 = vsub.f32 %v5725, %v5860
    %v5884 = vsub.f32 %v5728, %v5860
    %v5885 = vmul.f32 %v5869, 1.442695
    %v5886 = vpow.pop %v5885
    %v5887 = vmul.f32 %v5870, 1.442695
    %v5888 = vpow.pop %v5887
    %v5889 = vmul.f32 %v5871, 1.442695
    %v5890 = vpow.pop %v5889
    %v5891 = vmul.f32 %v5872, 1.442695
    %v5892 = vpow.pop %v5891
    %v5893 = vmul.f32 %v5873, 1.442695
    %v5894 = vpow.pop %v5893
    %v5895 = vmul.f32 %v5874, 1.442695
    %v5896 = vpow.pop %v5895
    %v5897 = vmul.f32 %v5875, 1.442695
    %v5898 = vpow.pop %v5897
    %v5899 = vmul.f32 %v5876, 1.442695
    %v5900 = vpow.pop %v5899
    %v5901 = vmul.f32 %v5877, 1.442695
    %v5902 = vpow.pop %v5901
    %v5903 = vmul.f32 %v5878, 1.442695
    %v5904 = vpow.pop %v5903
    %v5905 = vmul.f32 %v5879, 1.442695
    %v5906 = vpow.pop %v5905
    %v5907 = vmul.f32 %v5880, 1.442695
    %v5908 = vpow.pop %v5907
    %v5909 = vmul.f32 %v5881, 1.442695
    %v5910 = vpow.pop %v5909
    %v5911 = vmul.f32 %v5882, 1.442695
    %v5912 = vpow.pop %v5911
    %v5913 = vmul.f32 %v5883, 1.442695
    %v5914 = vpow.pop %v5913
    %v5915 = vmul.f32 %v5884, 1.442695
    %v5916 = vpow.pop %v5915
    %5933 = vset.pattern.permute.xlu0 0
    %5934 = vperm.xlu0 %5933, %v5886
    %v5935 = vpop.permute.xlu0 %5934
    %5936 = vset.pattern.permute.xlu0 0
    %5937 = vperm.xlu0 %5936, %v5888
    %v5938 = vpop.permute.xlu0 %5937
    %5939 = vset.pattern.permute.xlu0 0
    %5940 = vperm.xlu0 %5939, %v5890
    %v5941 = vpop.permute.xlu0 %5940
    %5942 = vset.pattern.permute.xlu0 0
    %5943 = vperm.xlu0 %5942, %v5892
    %v5944 = vpop.permute.xlu0 %5943
    %5945 = vset.pattern.permute.xlu0 0
    %5946 = vperm.xlu0 %5945, %v5894
    %v5947 = vpop.permute.xlu0 %5946
    %5948 = vset.pattern.permute.xlu0 0
    %5949 = vperm.xlu0 %5948, %v5896
    %v5950 = vpop.permute.xlu0 %5949
    %5951 = vset.pattern.permute.xlu0 0
    %5952 = vperm.xlu0 %5951, %v5898
    %v5953 = vpop.permute.xlu0 %5952
    %5954 = vset.pattern.permute.xlu0 0
    %5955 = vperm.xlu0 %5954, %v5900
    %v5956 = vpop.permute.xlu0 %5955
    %5957 = vset.pattern.permute.xlu0 0
    %5958 = vperm.xlu0 %5957, %v5902
    %v5959 = vpop.permute.xlu0 %5958
    %5960 = vset.pattern.permute.xlu0 0
    %5961 = vperm.xlu0 %5960, %v5904
    %v5962 = vpop.permute.xlu0 %5961
    %5963 = vset.pattern.permute.xlu0 0
    %5964 = vperm.xlu0 %5963, %v5906
    %v5965 = vpop.permute.xlu0 %5964
    %5966 = vset.pattern.permute.xlu0 0
    %5967 = vperm.xlu0 %5966, %v5908
    %v5968 = vpop.permute.xlu0 %5967
    %5969 = vset.pattern.permute.xlu0 0
    %5970 = vperm.xlu0 %5969, %v5910
    %v5971 = vpop.permute.xlu0 %5970
    %5972 = vset.pattern.permute.xlu0 0
    %5973 = vperm.xlu0 %5972, %v5912
    %v5974 = vpop.permute.xlu0 %5973
    %5975 = vset.pattern.permute.xlu0 0
    %5976 = vperm.xlu0 %5975, %v5914
    %v5977 = vpop.permute.xlu0 %5976
    %5978 = vset.pattern.permute.xlu0 0
    %5979 = vperm.xlu0 %5978, %v5916
    %v5980 = vpop.permute.xlu0 %5979
    %v5981 = vlaneseq
    %v5982 = vshrl.u32 %v5981, 7
    %v5983 = vsub.s32 %v396, %v5982
    %v5984 = vrot.slane %v5935, %v5983
    %v5985 = vlaneseq
    %v5986 = vshrl.u32 %v5985, 7
    %v5987 = vsub.s32 %v401, %v5986
    %v5988 = vrot.slane %v5938, %v5987
    %v5989 = vsel %vm406, %v5988, %v5984
    %v5990 = vlaneseq
    %v5991 = vshrl.u32 %v5990, 7
    %v5992 = vsub.s32 %v396, %v5991
    %v5993 = vrot.slane %v5941, %v5992
    %v5994 = vlaneseq
    %v5995 = vshrl.u32 %v5994, 7
    %v5996 = vsub.s32 %v401, %v5995
    %v5997 = vrot.slane %v5944, %v5996
    %v5998 = vsel %vm406, %v5997, %v5993
    %v5999 = vlaneseq
    %v6000 = vshrl.u32 %v5999, 7
    %v6001 = vsub.s32 %v396, %v6000
    %v6002 = vrot.slane %v5947, %v6001
    %v6003 = vlaneseq
    %v6004 = vshrl.u32 %v6003, 7
    %v6005 = vsub.s32 %v401, %v6004
    %v6006 = vrot.slane %v5950, %v6005
    %v6007 = vsel %vm406, %v6006, %v6002
    %v6008 = vlaneseq
    %v6009 = vshrl.u32 %v6008, 7
    %v6010 = vsub.s32 %v396, %v6009
    %v6011 = vrot.slane %v5953, %v6010
    %v6012 = vlaneseq
    %v6013 = vshrl.u32 %v6012, 7
    %v6014 = vsub.s32 %v401, %v6013
    %v6015 = vrot.slane %v5956, %v6014
    %v6016 = vsel %vm406, %v6015, %v6011
    %v6017 = vlaneseq
    %v6018 = vshrl.u32 %v6017, 7
    %v6019 = vsub.s32 %v396, %v6018
    %v6020 = vrot.slane %v5959, %v6019
    %v6021 = vlaneseq
    %v6022 = vshrl.u32 %v6021, 7
    %v6023 = vsub.s32 %v401, %v6022
    %v6024 = vrot.slane %v5962, %v6023
    %v6025 = vsel %vm406, %v6024, %v6020
    %v6026 = vlaneseq
    %v6027 = vshrl.u32 %v6026, 7
    %v6028 = vsub.s32 %v396, %v6027
    %v6029 = vrot.slane %v5965, %v6028
    %v6030 = vlaneseq
    %v6031 = vshrl.u32 %v6030, 7
    %v6032 = vsub.s32 %v401, %v6031
    %v6033 = vrot.slane %v5968, %v6032
    %v6034 = vsel %vm406, %v6033, %v6029
    %v6035 = vlaneseq
    %v6036 = vshrl.u32 %v6035, 7
    %v6037 = vsub.s32 %v396, %v6036
    %v6038 = vrot.slane %v5971, %v6037
    %v6039 = vlaneseq
    %v6040 = vshrl.u32 %v6039, 7
    %v6041 = vsub.s32 %v401, %v6040
    %v6042 = vrot.slane %v5974, %v6041
    %v6043 = vsel %vm406, %v6042, %v6038
    %v6044 = vlaneseq
    %v6045 = vshrl.u32 %v6044, 7
    %v6046 = vsub.s32 %v396, %v6045
    %v6047 = vrot.slane %v5977, %v6046
    %v6048 = vlaneseq
    %v6049 = vshrl.u32 %v6048, 7
    %v6050 = vsub.s32 %v401, %v6049
    %v6051 = vrot.slane %v5980, %v6050
    %v6052 = vsel %vm406, %v6051, %v6047
    %v6053 = vsel %vm471, %v5998, %v5989
    %v6054 = vsel %vm473, %v6007, %v6053
    %v6055 = vsel %vm475, %v6016, %v6054
    %v6056 = vsel %vm477, %v6025, %v6055
    %v6057 = vsel %vm479, %v6034, %v6056
    %v6058 = vsel %vm481, %v6043, %v6057
    %v6059 = vsel %vm483, %v6052, %v6058
    %v6061 = vsel %vm486, %v6059, 0.0
    %6062 = vadd.xlane.f32.xlu0 %v6061
    %v6063 = vpop.xlane.xlu0 %6062
    %v6065 = vlaneseq
    %v6066 = vshrl.u32 %v6065, 7
    %v6067 = vsub.s32 0, %v6066
    %v6068 = vrot.slane %v6063, %v6067
    %v6069 = vlaneseq
    %v6070 = vshrl.u32 %v6069, 7
    %v6071 = vsub.s32 1, %v6070
    %v6072 = vrot.slane %v6063, %v6071
    %v6073 = vlaneseq
    %v6074 = vshrl.u32 %v6073, 7
    %v6075 = vsub.s32 2, %v6074
    %v6076 = vrot.slane %v6063, %v6075
    %v6077 = vlaneseq
    %v6078 = vshrl.u32 %v6077, 7
    %v6079 = vsub.s32 3, %v6078
    %v6080 = vrot.slane %v6063, %v6079
    %v6081 = vlaneseq
    %v6082 = vshrl.u32 %v6081, 7
    %v6083 = vsub.s32 4, %v6082
    %v6084 = vrot.slane %v6063, %v6083
    %v6085 = vlaneseq
    %v6086 = vshrl.u32 %v6085, 7
    %v6087 = vsub.s32 5, %v6086
    %v6088 = vrot.slane %v6063, %v6087
    %v6089 = vlaneseq
    %v6090 = vshrl.u32 %v6089, 7
    %v6091 = vsub.s32 6, %v6090
    %v6092 = vrot.slane %v6063, %v6091
    %v6093 = vlaneseq
    %v6094 = vshrl.u32 %v6093, 7
    %v6095 = vsub.s32 7, %v6094
    %v6096 = vrot.slane %v6063, %v6095
    %v6105 = vrcp.pop %v6068
    %v6106 = vmul.f32 %v5886, %v6105
    %v6107 = vmul.f32 %v5888, %v6105
    %v6108 = vrcp.pop %v6072
    %v6109 = vmul.f32 %v5890, %v6108
    %v6110 = vmul.f32 %v5892, %v6108
    %v6111 = vrcp.pop %v6076
    %v6112 = vmul.f32 %v5894, %v6111
    %v6113 = vmul.f32 %v5896, %v6111
    %v6114 = vrcp.pop %v6080
    %v6115 = vmul.f32 %v5898, %v6114
    %v6116 = vmul.f32 %v5900, %v6114
    %v6117 = vrcp.pop %v6084
    %v6118 = vmul.f32 %v5902, %v6117
    %v6119 = vmul.f32 %v5904, %v6117
    %v6120 = vrcp.pop %v6088
    %v6121 = vmul.f32 %v5906, %v6120
    %v6122 = vmul.f32 %v5908, %v6120
    %v6123 = vrcp.pop %v6092
    %v6124 = vmul.f32 %v5910, %v6123
    %v6125 = vmul.f32 %v5912, %v6123
    %v6126 = vrcp.pop %v6096
    %v6127 = vmul.f32 %v5914, %v6126
    %v6128 = vmul.f32 %v5916, %v6126
    %6130 = vset.pattern.permute.xlu0 0
    %6131 = vperm.xlu0 %6130, %v6106
    %v6132 = vpop.permute.xlu0 %6131
    %6135 = vset.pattern.permute.xlu0 0
    %6136 = vperm.xlu0 %6135, %v6107
    %v6137 = vpop.permute.xlu0 %6136
    %6140 = vset.pattern.permute.xlu0 0
    %6141 = vperm.xlu0 %6140, %v6109
    %v6142 = vpop.permute.xlu0 %6141
    %6145 = vset.pattern.permute.xlu0 0
    %6146 = vperm.xlu0 %6145, %v6110
    %v6147 = vpop.permute.xlu0 %6146
    %6150 = vset.pattern.permute.xlu0 0
    %6151 = vperm.xlu0 %6150, %v6112
    %v6152 = vpop.permute.xlu0 %6151
    %6155 = vset.pattern.permute.xlu0 0
    %6156 = vperm.xlu0 %6155, %v6113
    %v6157 = vpop.permute.xlu0 %6156
    %6160 = vset.pattern.permute.xlu0 0
    %6161 = vperm.xlu0 %6160, %v6115
    %v6162 = vpop.permute.xlu0 %6161
    %6165 = vset.pattern.permute.xlu0 0
    %6166 = vperm.xlu0 %6165, %v6116
    %v6167 = vpop.permute.xlu0 %6166
    %6170 = vset.pattern.permute.xlu0 0
    %6171 = vperm.xlu0 %6170, %v6118
    %v6172 = vpop.permute.xlu0 %6171
    %6175 = vset.pattern.permute.xlu0 0
    %6176 = vperm.xlu0 %6175, %v6119
    %v6177 = vpop.permute.xlu0 %6176
    %6180 = vset.pattern.permute.xlu0 0
    %6181 = vperm.xlu0 %6180, %v6121
    %v6182 = vpop.permute.xlu0 %6181
    %6185 = vset.pattern.permute.xlu0 0
    %6186 = vperm.xlu0 %6185, %v6122
    %v6187 = vpop.permute.xlu0 %6186
    %6190 = vset.pattern.permute.xlu0 0
    %6191 = vperm.xlu0 %6190, %v6124
    %v6192 = vpop.permute.xlu0 %6191
    %6195 = vset.pattern.permute.xlu0 0
    %6196 = vperm.xlu0 %6195, %v6125
    %v6197 = vpop.permute.xlu0 %6196
    %6200 = vset.pattern.permute.xlu0 0
    %6201 = vperm.xlu0 %6200, %v6127
    %v6202 = vpop.permute.xlu0 %6201
    %6205 = vset.pattern.permute.xlu0 0
    %6206 = vperm.xlu0 %6205, %v6128
    %v6207 = vpop.permute.xlu0 %6206
    %v6209 = vmul.f32 %v6132, %v127
    %v6210 = vmul.f32 %v6137, %v128
    %v6211 = vmul.f32 %v6142, %v129
    %v6212 = vmul.f32 %v6147, %v130
    %v6213 = vmul.f32 %v6152, %v131
    %v6214 = vmul.f32 %v6157, %v132
    %v6215 = vmul.f32 %v6162, %v133
    %v6216 = vmul.f32 %v6167, %v134
    %v6217 = vmul.f32 %v6172, %v135
    %v6218 = vmul.f32 %v6177, %v136
    %v6219 = vmul.f32 %v6182, %v137
    %v6220 = vmul.f32 %v6187, %v138
    %v6221 = vmul.f32 %v6192, %v139
    %v6222 = vmul.f32 %v6197, %v140
    %v6223 = vmul.f32 %v6202, %v141
    %v6224 = vmul.f32 %v6207, %v142
    %v6225 = vsel %vm887, %v6209, 0.0
    %v6226 = vsel %vm887, %v6210, 0.0
    %v6227 = vadd.f32 %v6225, %v6226
    %v6228 = vrot.slane %v6227, 4
    %v6229 = vadd.f32 %v6227, %v6228
    %v6230 = vrot.slane %v6229, 2
    %v6231 = vadd.f32 %v6229, %v6230
    %v6232 = vrot.slane %v6231, 1
    %v6233 = vadd.f32 %v6231, %v6232
    %v6234 = vsel %vm887, %v6211, 0.0
    %v6235 = vsel %vm887, %v6212, 0.0
    %v6236 = vadd.f32 %v6234, %v6235
    %v6237 = vrot.slane %v6236, 4
    %v6238 = vadd.f32 %v6236, %v6237
    %v6239 = vrot.slane %v6238, 2
    %v6240 = vadd.f32 %v6238, %v6239
    %v6241 = vrot.slane %v6240, 1
    %v6242 = vadd.f32 %v6240, %v6241
    %v6243 = vsel %vm887, %v6213, 0.0
    %v6244 = vsel %vm887, %v6214, 0.0
    %v6245 = vadd.f32 %v6243, %v6244
    %v6246 = vrot.slane %v6245, 4
    %v6247 = vadd.f32 %v6245, %v6246
    %v6248 = vrot.slane %v6247, 2
    %v6249 = vadd.f32 %v6247, %v6248
    %v6250 = vrot.slane %v6249, 1
    %v6251 = vadd.f32 %v6249, %v6250
    %v6252 = vsel %vm887, %v6215, 0.0
    %v6253 = vsel %vm887, %v6216, 0.0
    %v6254 = vadd.f32 %v6252, %v6253
    %v6255 = vrot.slane %v6254, 4
    %v6256 = vadd.f32 %v6254, %v6255
    %v6257 = vrot.slane %v6256, 2
    %v6258 = vadd.f32 %v6256, %v6257
    %v6259 = vrot.slane %v6258, 1
    %v6260 = vadd.f32 %v6258, %v6259
    %v6261 = vsel %vm887, %v6217, 0.0
    %v6262 = vsel %vm887, %v6218, 0.0
    %v6263 = vadd.f32 %v6261, %v6262
    %v6264 = vrot.slane %v6263, 4
    %v6265 = vadd.f32 %v6263, %v6264
    %v6266 = vrot.slane %v6265, 2
    %v6267 = vadd.f32 %v6265, %v6266
    %v6268 = vrot.slane %v6267, 1
    %v6269 = vadd.f32 %v6267, %v6268
    %v6270 = vsel %vm887, %v6219, 0.0
    %v6271 = vsel %vm887, %v6220, 0.0
    %v6272 = vadd.f32 %v6270, %v6271
    %v6273 = vrot.slane %v6272, 4
    %v6274 = vadd.f32 %v6272, %v6273
    %v6275 = vrot.slane %v6274, 2
    %v6276 = vadd.f32 %v6274, %v6275
    %v6277 = vrot.slane %v6276, 1
    %v6278 = vadd.f32 %v6276, %v6277
    %v6279 = vsel %vm887, %v6221, 0.0
    %v6280 = vsel %vm887, %v6222, 0.0
    %v6281 = vadd.f32 %v6279, %v6280
    %v6282 = vrot.slane %v6281, 4
    %v6283 = vadd.f32 %v6281, %v6282
    %v6284 = vrot.slane %v6283, 2
    %v6285 = vadd.f32 %v6283, %v6284
    %v6286 = vrot.slane %v6285, 1
    %v6287 = vadd.f32 %v6285, %v6286
    %v6288 = vsel %vm887, %v6223, 0.0
    %v6289 = vsel %vm887, %v6224, 0.0
    %v6290 = vadd.f32 %v6288, %v6289
    %v6291 = vrot.slane %v6290, 4
    %v6292 = vadd.f32 %v6290, %v6291
    %v6293 = vrot.slane %v6292, 2
    %v6294 = vadd.f32 %v6292, %v6293
    %v6295 = vrot.slane %v6294, 1
    %v6296 = vadd.f32 %v6294, %v6295
    %v6305 = vsel %vm471, %v6242, %v6233
    %v6306 = vsel %vm473, %v6251, %v6305
    %v6307 = vsel %vm475, %v6260, %v6306
    %v6308 = vsel %vm477, %v6269, %v6307
    %v6309 = vsel %vm479, %v6278, %v6308
    %v6310 = vsel %vm481, %v6287, %v6309
    %v6311 = vsel %vm483, %v6296, %v6310
    %6312 = vrot.lane.b32.xlu0 %v6311, 32
    %v6313 = vpop.permute.xlu0 %6312
    %6315 = vrot.lane.b32.xlu0 %v5353, 72
    %v6316 = vpop.permute.xlu0 %6315
    %v6318 = vsel %vm330, %v5526, %v6313
    %v6319 = vsel %vm983, %v6318, %v6316
    %v6320 = vsel %vm991, %v6316, 0
    %6322 = vmatprep.subr.mxu0 0.0
    %6323 = vmatpush1.msra.mxu0 %v160
    %6324 = vmatprep.subr.mxu0 0.0
    %6325 = vmatpush1.msra.mxu0 %v161
    %6326 = vmatprep.subr.mxu0 0.0
    %6327 = vmatpush1.msra.mxu0 %v162
    %6328 = vmatprep.subr.mxu0 0.0
    %6329 = vmatpush1.msra.mxu0 %v163
    %6330 = vmatprep.subr.mxu0 0.0
    %6331 = vmatpush1.msra.mxu0 %v164
    %6332 = vmatprep.subr.mxu0 0.0
    %6333 = vmatpush1.msra.mxu0 %v165
    %6334 = vmatprep.subr.mxu0 0.0
    %6335 = vmatpush1.msra.mxu0 %v166
    %6336 = vmatprep.subr.mxu0 0.0
    %6337 = vmatpush1.msra.mxu0 %v167
    %6338 = vmatprep.subr.mxu0 0.0
    %6339 = vmatpush1.msra.mxu0 %v168
    %6340 = vmatprep.subr.mxu0 0.0
    %6341 = vmatpush1.msra.mxu0 %v169
    %6342 = vmatprep.subr.mxu0 0.0
    %6343 = vmatpush1.msra.mxu0 %v170
    %6344 = vmatprep.subr.mxu0 0.0
    %6345 = vmatpush1.msra.mxu0 %v171
    %6346 = vmatprep.subr.mxu0 0.0
    %6347 = vmatpush1.msra.mxu0 %v172
    %6348 = vmatprep.subr.mxu0 0.0
    %6349 = vmatpush1.msra.mxu0 %v173
    %6350 = vmatprep.subr.mxu0 0.0
    %6351 = vmatpush1.msra.mxu0 %v174
    %6352 = vmatprep.subr.mxu0 0.0
    %6353 = vmatpush1.msra.mxu0 %v175
    %6354 = vmatprep.subr.mxu0 0.0
    %6355 = vmatpush1.msra.mxu0 %v176
    %6356 = vmatprep.subr.mxu0 0.0
    %6357 = vmatpush1.msra.mxu0 0.0
    %6358 = vmatprep.subr.mxu0 0.0
    %6359 = vmatpush1.msra.mxu0 0.0
    %6360 = vmatprep.subr.mxu0 0.0
    %6361 = vmatpush1.msra.mxu0 0.0
    %6362 = vmatprep.subr.mxu0 0.0
    %6363 = vmatpush1.msra.mxu0 0.0
    %6364 = vmatprep.subr.mxu0 0.0
    %6365 = vmatpush1.msra.mxu0 0.0
    %6366 = vmatprep.subr.mxu0 0.0
    %6367 = vmatpush1.msra.mxu0 0.0
    %6368 = vmatprep.subr.mxu0 0.0
    %6369 = vmatpush1.msra.mxu0 0.0
    %6370 = vmatprep.subr.mxu0 0.0
    %6371 = vmatpush1.msra.mxu0 0.0
    %6372 = vmatprep.subr.mxu0 0.0
    %6373 = vmatpush1.msra.mxu0 0.0
    %6374 = vmatprep.subr.mxu0 0.0
    %6375 = vmatpush1.msra.mxu0 0.0
    %6376 = vmatprep.subr.mxu0 0.0
    %6377 = vmatpush1.msra.mxu0 0.0
    %6378 = vmatprep.subr.mxu0 0.0
    %6379 = vmatpush1.msra.mxu0 0.0
    %6380 = vmatprep.subr.mxu0 0.0
    %6381 = vmatpush1.msra.mxu0 0.0
    %6382 = vmatprep.subr.mxu0 0.0
    %6383 = vmatpush1.msra.mxu0 0.0
    %6384 = vmatprep.subr.mxu0 0.0
    %6385 = vmatpush1.msra.mxu0 0.0
    %6386 = vmatprep.mubr.f32.mxu0 %v6320
    %6387 = vmatmul.mubr.f32.gmra.mrb[0].mxu0 %v6319
    %v6388 = vpop.f32.mrb[0].mxu0
    %v6389 = vadd.f32 %v989, %v6388
    %v6390 = vpop.f32.mrb[0].mxu0
    %6391 = vdwg.mxu0
    %v6392 = vxor.u32 %v6389, 2147483648
    %v6393 = vmul.f32 %v6392, 1.442695
    %v6394 = vpow.pop %v6393
    %v6395 = vadd.f32 %v6394, 1.0
    %v6396 = vrcp.pop %v6395
    %v6397 = vmul.f32 1.0, %v6396
    %6399 = vrot.lane.b32.xlu0 %v6389, 32
    %v6400 = vpop.permute.xlu0 %6399
    %v6402 = vmul.f32 %v6397, %v6400
    %6404 = vrot.lane.b32.xlu0 %v6402, 64
    %v6405 = vpop.permute.xlu0 %6404
    %v6407 = vadd.f32 %v6389, %v6405
    %v6408 = vtanh.pop %v6407
    %v6409 = vsub.f32 1.0, %v6397
    %6411 = vrot.lane.b32.xlu0 %v6408, 96
    %v6412 = vpop.permute.xlu0 %6411
    %v6414 = vmul.f32 %v6409, %v6412
    %v6415 = vmul.f32 %v6397, %v5353
    %v6416 = vadd.f32 %v6414, %v6415
    %6418 = vrot.lane.b32.xlu0 %v6416, 96
    %v6419 = vpop.permute.xlu0 %6418
    %v6420 = vsel %vm330, %v6419, 0
    %6422 = vmatprep.subr.mxu0 0.0
    %6423 = vmatpush1.msra.mxu0 %v178
    %6424 = vmatprep.subr.mxu0 0.0
    %6425 = vmatpush1.msra.mxu0 %v179
    %6426 = vmatprep.subr.mxu0 0.0
    %6427 = vmatpush1.msra.mxu0 %v180
    %6428 = vmatprep.subr.mxu0 0.0
    %6429 = vmatpush1.msra.mxu0 %v181
    %6430 = vmatprep.subr.mxu0 0.0
    %6431 = vmatpush1.msra.mxu0 0.0
    %6432 = vmatprep.subr.mxu0 0.0
    %6433 = vmatpush1.msra.mxu0 0.0
    %6434 = vmatprep.subr.mxu0 0.0
    %6435 = vmatpush1.msra.mxu0 0.0
    %6436 = vmatprep.subr.mxu0 0.0
    %6437 = vmatpush1.msra.mxu0 0.0
    %6438 = vmatprep.subr.mxu0 0.0
    %6439 = vmatpush1.msra.mxu0 0.0
    %6440 = vmatprep.subr.mxu0 0.0
    %6441 = vmatpush1.msra.mxu0 0.0
    %6442 = vmatprep.subr.mxu0 0.0
    %6443 = vmatpush1.msra.mxu0 0.0
    %6444 = vmatprep.subr.mxu0 0.0
    %6445 = vmatpush1.msra.mxu0 0.0
    %6446 = vmatprep.subr.mxu0 0.0
    %6447 = vmatpush1.msra.mxu0 0.0
    %6448 = vmatprep.subr.mxu0 0.0
    %6449 = vmatpush1.msra.mxu0 0.0
    %6450 = vmatprep.subr.mxu0 0.0
    %6451 = vmatpush1.msra.mxu0 0.0
    %6452 = vmatprep.subr.mxu0 0.0
    %6453 = vmatpush1.msra.mxu0 0.0
    %6454 = vmatprep.subr.mxu0 0.0
    %6455 = vmatpush1.msra.mxu0 0.0
    %6456 = vmatprep.subr.mxu0 0.0
    %6457 = vmatpush1.msra.mxu0 0.0
    %6458 = vmatprep.subr.mxu0 0.0
    %6459 = vmatpush1.msra.mxu0 0.0
    %6460 = vmatprep.subr.mxu0 0.0
    %6461 = vmatpush1.msra.mxu0 0.0
    %6462 = vmatprep.subr.mxu0 0.0
    %6463 = vmatpush1.msra.mxu0 0.0
    %6464 = vmatprep.subr.mxu0 0.0
    %6465 = vmatpush1.msra.mxu0 0.0
    %6466 = vmatprep.subr.mxu0 0.0
    %6467 = vmatpush1.msra.mxu0 0.0
    %6468 = vmatprep.subr.mxu0 0.0
    %6469 = vmatpush1.msra.mxu0 0.0
    %6470 = vmatprep.subr.mxu0 0.0
    %6471 = vmatpush1.msra.mxu0 0.0
    %6472 = vmatprep.subr.mxu0 0.0
    %6473 = vmatpush1.msra.mxu0 0.0
    %6474 = vmatprep.subr.mxu0 0.0
    %6475 = vmatpush1.msra.mxu0 0.0
    %6476 = vmatprep.subr.mxu0 0.0
    %6477 = vmatpush1.msra.mxu0 0.0
    %6478 = vmatprep.subr.mxu0 0.0
    %6479 = vmatpush1.msra.mxu0 0.0
    %6480 = vmatprep.subr.mxu0 0.0
    %6481 = vmatpush1.msra.mxu0 0.0
    %6482 = vmatprep.subr.mxu0 0.0
    %6483 = vmatpush1.msra.mxu0 0.0
    %6484 = vmatprep.subr.mxu0 0.0
    %6485 = vmatpush1.msra.mxu0 0.0
    %6486 = vmatprep.mubr.f32.mxu0 0.0
    %6487 = vmatmul.mubr.f32.gmra.mrb[0].mxu0 %v6420
    %v6488 = vpop.f32.mrb[0].mxu0
    %v6489 = vadd.f32 %v1096, %v6488
    %v6490 = vpop.f32.mrb[0].mxu0
    %6491 = vdwg.mxu0
    %v6492 = vsel %vm330, %v6489, -inf
    %6493 = vmax.xlane.f32.xlu0 %v6492
    %v6494 = vpop.xlane.xlu0 %6493
    %v6495 = vsub.f32 %v6489, %v6494
    %v6496 = vmul.f32 %v6495, 1.442695
    %v6497 = vpow.pop %v6496
    %v6498 = vsel %vm330, %v6497, 0.0
    %6499 = vadd.xlane.f32.xlu0 %v6498
    %v6500 = vpop.xlane.xlu0 %6499
    %v6501 = vrcp.pop %v6500
    %v6502 = vmul.f32 %v6497, %v6501
    %v6503 = vlaneseq
    %v6504 = vshrl.u32 %v6503, 7
    %v6505 = vsub.s32 %v1184, %v6504
    %v6506 = vrot.slane %v6132, %v6505
    %v6507 = vlaneseq
    %v6508 = vshrl.u32 %v6507, 7
    %v6509 = vsub.s32 %v1189, %v6508
    %v6510 = vrot.slane %v6137, %v6509
    %v6511 = vsel %vm1194, %v6510, %v6506
    %v6512 = vlaneseq
    %v6513 = vshrl.u32 %v6512, 7
    %v6514 = vsub.s32 %v1184, %v6513
    %v6515 = vrot.slane %v6142, %v6514
    %v6516 = vlaneseq
    %v6517 = vshrl.u32 %v6516, 7
    %v6518 = vsub.s32 %v1189, %v6517
    %v6519 = vrot.slane %v6147, %v6518
    %v6520 = vsel %vm1194, %v6519, %v6515
    %v6521 = vlaneseq
    %v6522 = vshrl.u32 %v6521, 7
    %v6523 = vsub.s32 %v1184, %v6522
    %v6524 = vrot.slane %v6152, %v6523
    %v6525 = vlaneseq
    %v6526 = vshrl.u32 %v6525, 7
    %v6527 = vsub.s32 %v1189, %v6526
    %v6528 = vrot.slane %v6157, %v6527
    %v6529 = vsel %vm1194, %v6528, %v6524
    %v6530 = vlaneseq
    %v6531 = vshrl.u32 %v6530, 7
    %v6532 = vsub.s32 %v1184, %v6531
    %v6533 = vrot.slane %v6162, %v6532
    %v6534 = vlaneseq
    %v6535 = vshrl.u32 %v6534, 7
    %v6536 = vsub.s32 %v1189, %v6535
    %v6537 = vrot.slane %v6167, %v6536
    %v6538 = vsel %vm1194, %v6537, %v6533
    %v6539 = vlaneseq
    %v6540 = vshrl.u32 %v6539, 7
    %v6541 = vsub.s32 %v1184, %v6540
    %v6542 = vrot.slane %v6172, %v6541
    %v6543 = vlaneseq
    %v6544 = vshrl.u32 %v6543, 7
    %v6545 = vsub.s32 %v1189, %v6544
    %v6546 = vrot.slane %v6177, %v6545
    %v6547 = vsel %vm1194, %v6546, %v6542
    %v6548 = vlaneseq
    %v6549 = vshrl.u32 %v6548, 7
    %v6550 = vsub.s32 %v1184, %v6549
    %v6551 = vrot.slane %v6182, %v6550
    %v6552 = vlaneseq
    %v6553 = vshrl.u32 %v6552, 7
    %v6554 = vsub.s32 %v1189, %v6553
    %v6555 = vrot.slane %v6187, %v6554
    %v6556 = vsel %vm1194, %v6555, %v6551
    %v6557 = vlaneseq
    %v6558 = vshrl.u32 %v6557, 7
    %v6559 = vsub.s32 %v1184, %v6558
    %v6560 = vrot.slane %v6192, %v6559
    %v6561 = vlaneseq
    %v6562 = vshrl.u32 %v6561, 7
    %v6563 = vsub.s32 %v1189, %v6562
    %v6564 = vrot.slane %v6197, %v6563
    %v6565 = vsel %vm1194, %v6564, %v6560
    %v6566 = vlaneseq
    %v6567 = vshrl.u32 %v6566, 7
    %v6568 = vsub.s32 %v1184, %v6567
    %v6569 = vrot.slane %v6202, %v6568
    %v6570 = vlaneseq
    %v6571 = vshrl.u32 %v6570, 7
    %v6572 = vsub.s32 %v1189, %v6571
    %v6573 = vrot.slane %v6207, %v6572
    %v6574 = vsel %vm1194, %v6573, %v6569
    %v6575 = vsel %vm471, %v6520, %v6511
    %v6576 = vsel %vm473, %v6529, %v6575
    %v6577 = vsel %vm475, %v6538, %v6576
    %v6578 = vsel %vm477, %v6547, %v6577
    %v6579 = vsel %vm479, %v6556, %v6578
    %v6580 = vsel %vm481, %v6565, %v6579
    %v6581 = vsel %vm483, %v6574, %v6580
    %v6583 = vsel %vm330, %v6502, %v6416
    %v6584 = vsel %vm1268, %v6583, %v6581
    %v6585 = vsel %vm1270, %v6584, 0.0
    %s6586 = scalar_lea.vmem [#allocation14], 40
    %6587 = vst [vmem:[%s6586] sm:$0xff] %v6585
    %s6588 = scalar_lea.vmem [#allocation2], 48
    %v6589 = vld [vmem:[%s6588] sm:$0xff]
    %v6591 = vcombine.high %v6489, %v6489
    %v6593 = vunpack.c.l.s4 1966171168
    %v6594 = vunpack.c.0.s8 %v6593
    %v6595 = vlaneseq
    %v6596 = vshrl.u32 %v6595, 7
    %v6597 = vsub.s32 %v6594, %v6596
    %v6598 = vrot.slane %v6489, %v6597
    %v6600 = vunpack.c.l.s4 1966171168
    %v6601 = vunpack.c.0.s8 %v6600
    %v6602 = vlaneseq
    %v6603 = vshrl.u32 %v6602, 7
    %v6604 = vsub.s32 %v6601, %v6603
    %v6605 = vrot.slane %v6591, %v6604
    %v6606 = vcombine.high %v6598, %v6598
    %v6607 = vcombine.high %v6605, %v6605
    %v6609 = vunpack.c.l.s4 1966171168
    %v6610 = vunpack.c.0.s8 %v6609
    %v6611 = vlaneseq
    %v6612 = vshrl.u32 %v6611, 7
    %v6613 = vsub.s32 %v6610, %v6612
    %v6614 = vrot.slane %v6598, %v6613
    %v6616 = vunpack.c.l.s4 1966171168
    %v6617 = vunpack.c.0.s8 %v6616
    %v6618 = vlaneseq
    %v6619 = vshrl.u32 %v6618, 7
    %v6620 = vsub.s32 %v6617, %v6619
    %v6621 = vrot.slane %v6605, %v6620
    %v6623 = vunpack.c.l.s4 1966171168
    %v6624 = vunpack.c.0.s8 %v6623
    %v6625 = vlaneseq
    %v6626 = vshrl.u32 %v6625, 7
    %v6627 = vsub.s32 %v6624, %v6626
    %v6628 = vrot.slane %v6606, %v6627
    %v6630 = vunpack.c.l.s4 1966171168
    %v6631 = vunpack.c.0.s8 %v6630
    %v6632 = vlaneseq
    %v6633 = vshrl.u32 %v6632, 7
    %v6634 = vsub.s32 %v6631, %v6633
    %v6635 = vrot.slane %v6607, %v6634
    %v6636 = vcombine.high %v6614, %v6614
    %v6637 = vcombine.high %v6621, %v6621
    %v6638 = vcombine.high %v6628, %v6628
    %v6639 = vcombine.high %v6635, %v6635
    %v6640 = vlaneseq
    %v6641 = vshrl.u32 %v6640, 7
    %v6642 = vsub.s32 0, %v6641
    %v6643 = vrot.slane %v6614, %v6642
    %v6644 = vlaneseq
    %v6645 = vshrl.u32 %v6644, 7
    %v6646 = vsub.s32 0, %v6645
    %v6647 = vrot.slane %v6628, %v6646
    %v6648 = vlaneseq
    %v6649 = vshrl.u32 %v6648, 7
    %v6650 = vsub.s32 0, %v6649
    %v6651 = vrot.slane %v6636, %v6650
    %v6652 = vlaneseq
    %v6653 = vshrl.u32 %v6652, 7
    %v6654 = vsub.s32 0, %v6653
    %v6655 = vrot.slane %v6638, %v6654
    %v6656 = vlaneseq
    %v6657 = vshrl.u32 %v6656, 7
    %v6658 = vsub.s32 0, %v6657
    %v6659 = vrot.slane %v6621, %v6658
    %v6660 = vlaneseq
    %v6661 = vshrl.u32 %v6660, 7
    %v6662 = vsub.s32 0, %v6661
    %v6663 = vrot.slane %v6635, %v6662
    %v6664 = vlaneseq
    %v6665 = vshrl.u32 %v6664, 7
    %v6666 = vsub.s32 0, %v6665
    %v6667 = vrot.slane %v6637, %v6666
    %v6668 = vlaneseq
    %v6669 = vshrl.u32 %v6668, 7
    %v6670 = vsub.s32 0, %v6669
    %v6671 = vrot.slane %v6639, %v6670
    %6672 = vrot.lane.b32.xlu0 %v6643, 96
    %v6673 = vpop.permute.xlu0 %6672
    %6674 = vrot.lane.b32.xlu0 %v6647, 96
    %v6675 = vpop.permute.xlu0 %6674
    %6676 = vrot.lane.b32.xlu0 %v6651, 96
    %v6677 = vpop.permute.xlu0 %6676
    %6678 = vrot.lane.b32.xlu0 %v6655, 96
    %v6679 = vpop.permute.xlu0 %6678
    %6680 = vrot.lane.b32.xlu0 %v6659, 96
    %v6681 = vpop.permute.xlu0 %6680
    %6682 = vrot.lane.b32.xlu0 %v6663, 96
    %v6683 = vpop.permute.xlu0 %6682
    %6684 = vrot.lane.b32.xlu0 %v6667, 96
    %v6685 = vpop.permute.xlu0 %6684
    %6686 = vrot.lane.b32.xlu0 %v6671, 96
    %v6687 = vpop.permute.xlu0 %6686
    %v6696 = vadd.f32 %v143, %v6673
    %v6697 = vadd.f32 %v144, %v6673
    %v6698 = vadd.f32 %v145, %v6675
    %v6699 = vadd.f32 %v146, %v6675
    %v6700 = vadd.f32 %v147, %v6677
    %v6701 = vadd.f32 %v148, %v6677
    %v6702 = vadd.f32 %v149, %v6679
    %v6703 = vadd.f32 %v150, %v6679
    %v6704 = vadd.f32 %v151, %v6681
    %v6705 = vadd.f32 %v152, %v6681
    %v6706 = vadd.f32 %v153, %v6683
    %v6707 = vadd.f32 %v154, %v6683
    %v6708 = vadd.f32 %v155, %v6685
    %v6709 = vadd.f32 %v156, %v6685
    %v6710 = vadd.f32 %v157, %v6687
    %v6711 = vadd.f32 %v158, %v6687
    %v6712 = vtanh.pop %v6696
    %v6713 = vtanh.pop %v6697
    %v6714 = vtanh.pop %v6698
    %v6715 = vtanh.pop %v6699
    %v6716 = vtanh.pop %v6700
    %v6717 = vtanh.pop %v6701
    %v6718 = vtanh.pop %v6702
    %v6719 = vtanh.pop %v6703
    %v6720 = vtanh.pop %v6704
    %v6721 = vtanh.pop %v6705
    %v6722 = vtanh.pop %v6706
    %v6723 = vtanh.pop %v6707
    %v6724 = vtanh.pop %v6708
    %v6725 = vtanh.pop %v6709
    %v6726 = vtanh.pop %v6710
    %v6727 = vtanh.pop %v6711
    %v6728 = vmul.f32 %v6712, %v312
    %v6729 = vmul.f32 %v6713, %v312
    %v6730 = vmul.f32 %v6714, %v312
    %v6731 = vmul.f32 %v6715, %v312
    %v6732 = vmul.f32 %v6716, %v312
    %v6733 = vmul.f32 %v6717, %v312
    %v6734 = vmul.f32 %v6718, %v312
    %v6735 = vmul.f32 %v6719, %v312
    %v6736 = vmul.f32 %v6720, %v312
    %v6737 = vmul.f32 %v6721, %v312
    %v6738 = vmul.f32 %v6722, %v312
    %v6739 = vmul.f32 %v6723, %v312
    %v6740 = vmul.f32 %v6724, %v312
    %v6741 = vmul.f32 %v6725, %v312
    %v6742 = vmul.f32 %v6726, %v312
    %v6743 = vmul.f32 %v6727, %v312
    %v6744 = vsel %vm330, %v6728, 0.0
    %6745 = vadd.xlane.f32.xlu0 %v6744
    %v6746 = vpop.xlane.xlu0 %6745
    %v6747 = vsel %vm330, %v6729, 0.0
    %6748 = vadd.xlane.f32.xlu0 %v6747
    %v6749 = vpop.xlane.xlu0 %6748
    %v6750 = vsel %vm330, %v6730, 0.0
    %6751 = vadd.xlane.f32.xlu0 %v6750
    %v6752 = vpop.xlane.xlu0 %6751
    %v6753 = vsel %vm330, %v6731, 0.0
    %6754 = vadd.xlane.f32.xlu0 %v6753
    %v6755 = vpop.xlane.xlu0 %6754
    %v6756 = vsel %vm330, %v6732, 0.0
    %6757 = vadd.xlane.f32.xlu0 %v6756
    %v6758 = vpop.xlane.xlu0 %6757
    %v6759 = vsel %vm330, %v6733, 0.0
    %6760 = vadd.xlane.f32.xlu0 %v6759
    %v6761 = vpop.xlane.xlu0 %6760
    %v6762 = vsel %vm330, %v6734, 0.0
    %6763 = vadd.xlane.f32.xlu0 %v6762
    %v6764 = vpop.xlane.xlu0 %6763
    %v6765 = vsel %vm330, %v6735, 0.0
    %6766 = vadd.xlane.f32.xlu0 %v6765
    %v6767 = vpop.xlane.xlu0 %6766
    %v6768 = vsel %vm330, %v6736, 0.0
    %6769 = vadd.xlane.f32.xlu0 %v6768
    %v6770 = vpop.xlane.xlu0 %6769
    %v6771 = vsel %vm330, %v6737, 0.0
    %6772 = vadd.xlane.f32.xlu0 %v6771
    %v6773 = vpop.xlane.xlu0 %6772
    %v6774 = vsel %vm330, %v6738, 0.0
    %6775 = vadd.xlane.f32.xlu0 %v6774
    %v6776 = vpop.xlane.xlu0 %6775
    %v6777 = vsel %vm330, %v6739, 0.0
    %6778 = vadd.xlane.f32.xlu0 %v6777
    %v6779 = vpop.xlane.xlu0 %6778
    %v6780 = vsel %vm330, %v6740, 0.0
    %6781 = vadd.xlane.f32.xlu0 %v6780
    %v6782 = vpop.xlane.xlu0 %6781
    %v6783 = vsel %vm330, %v6741, 0.0
    %6784 = vadd.xlane.f32.xlu0 %v6783
    %v6785 = vpop.xlane.xlu0 %6784
    %v6786 = vsel %vm330, %v6742, 0.0
    %6787 = vadd.xlane.f32.xlu0 %v6786
    %v6788 = vpop.xlane.xlu0 %6787
    %v6789 = vsel %vm330, %v6743, 0.0
    %6790 = vadd.xlane.f32.xlu0 %v6789
    %v6791 = vpop.xlane.xlu0 %6790
    %v6808 = vlaneseq
    %v6809 = vshrl.u32 %v6808, 7
    %v6810 = vsub.s32 %v396, %v6809
    %v6811 = vrot.slane %v6746, %v6810
    %v6812 = vlaneseq
    %v6813 = vshrl.u32 %v6812, 7
    %v6814 = vsub.s32 %v401, %v6813
    %v6815 = vrot.slane %v6749, %v6814
    %v6816 = vsel %vm406, %v6815, %v6811
    %v6817 = vlaneseq
    %v6818 = vshrl.u32 %v6817, 7
    %v6819 = vsub.s32 %v396, %v6818
    %v6820 = vrot.slane %v6752, %v6819
    %v6821 = vlaneseq
    %v6822 = vshrl.u32 %v6821, 7
    %v6823 = vsub.s32 %v401, %v6822
    %v6824 = vrot.slane %v6755, %v6823
    %v6825 = vsel %vm406, %v6824, %v6820
    %v6826 = vlaneseq
    %v6827 = vshrl.u32 %v6826, 7
    %v6828 = vsub.s32 %v396, %v6827
    %v6829 = vrot.slane %v6758, %v6828
    %v6830 = vlaneseq
    %v6831 = vshrl.u32 %v6830, 7
    %v6832 = vsub.s32 %v401, %v6831
    %v6833 = vrot.slane %v6761, %v6832
    %v6834 = vsel %vm406, %v6833, %v6829
    %v6835 = vlaneseq
    %v6836 = vshrl.u32 %v6835, 7
    %v6837 = vsub.s32 %v396, %v6836
    %v6838 = vrot.slane %v6764, %v6837
    %v6839 = vlaneseq
    %v6840 = vshrl.u32 %v6839, 7
    %v6841 = vsub.s32 %v401, %v6840
    %v6842 = vrot.slane %v6767, %v6841
    %v6843 = vsel %vm406, %v6842, %v6838
    %v6844 = vlaneseq
    %v6845 = vshrl.u32 %v6844, 7
    %v6846 = vsub.s32 %v396, %v6845
    %v6847 = vrot.slane %v6770, %v6846
    %v6848 = vlaneseq
    %v6849 = vshrl.u32 %v6848, 7
    %v6850 = vsub.s32 %v401, %v6849
    %v6851 = vrot.slane %v6773, %v6850
    %v6852 = vsel %vm406, %v6851, %v6847
    %v6853 = vlaneseq
    %v6854 = vshrl.u32 %v6853, 7
    %v6855 = vsub.s32 %v396, %v6854
    %v6856 = vrot.slane %v6776, %v6855
    %v6857 = vlaneseq
    %v6858 = vshrl.u32 %v6857, 7
    %v6859 = vsub.s32 %v401, %v6858
    %v6860 = vrot.slane %v6779, %v6859
    %v6861 = vsel %vm406, %v6860, %v6856
    %v6862 = vlaneseq
    %v6863 = vshrl.u32 %v6862, 7
    %v6864 = vsub.s32 %v396, %v6863
    %v6865 = vrot.slane %v6782, %v6864
    %v6866 = vlaneseq
    %v6867 = vshrl.u32 %v6866, 7
    %v6868 = vsub.s32 %v401, %v6867
    %v6869 = vrot.slane %v6785, %v6868
    %v6870 = vsel %vm406, %v6869, %v6865
    %v6871 = vlaneseq
    %v6872 = vshrl.u32 %v6871, 7
    %v6873 = vsub.s32 %v396, %v6872
    %v6874 = vrot.slane %v6788, %v6873
    %v6875 = vlaneseq
    %v6876 = vshrl.u32 %v6875, 7
    %v6877 = vsub.s32 %v401, %v6876
    %v6878 = vrot.slane %v6791, %v6877
    %v6879 = vsel %vm406, %v6878, %v6874
    %v6880 = vsel %vm471, %v6825, %v6816
    %v6881 = vsel %vm473, %v6834, %v6880
    %v6882 = vsel %vm475, %v6843, %v6881
    %v6883 = vsel %vm477, %v6852, %v6882
    %v6884 = vsel %vm479, %v6861, %v6883
    %v6885 = vsel %vm481, %v6870, %v6884
    %v6886 = vsel %vm483, %v6879, %v6885
    %v6888 = vsel %vm486, %v6886, -inf
    %6889 = vmax.xlane.f32.xlu0 %v6888
    %v6890 = vpop.xlane.xlu0 %6889
    %v6892 = vlaneseq
    %v6893 = vshrl.u32 %v6892, 7
    %v6894 = vsub.s32 0, %v6893
    %v6895 = vrot.slane %v6890, %v6894
    %v6896 = vlaneseq
    %v6897 = vshrl.u32 %v6896, 7
    %v6898 = vsub.s32 1, %v6897
    %v6899 = vrot.slane %v6890, %v6898
    %v6900 = vlaneseq
    %v6901 = vshrl.u32 %v6900, 7
    %v6902 = vsub.s32 2, %v6901
    %v6903 = vrot.slane %v6890, %v6902
    %v6904 = vlaneseq
    %v6905 = vshrl.u32 %v6904, 7
    %v6906 = vsub.s32 3, %v6905
    %v6907 = vrot.slane %v6890, %v6906
    %v6908 = vlaneseq
    %v6909 = vshrl.u32 %v6908, 7
    %v6910 = vsub.s32 4, %v6909
    %v6911 = vrot.slane %v6890, %v6910
    %v6912 = vlaneseq
    %v6913 = vshrl.u32 %v6912, 7
    %v6914 = vsub.s32 5, %v6913
    %v6915 = vrot.slane %v6890, %v6914
    %v6916 = vlaneseq
    %v6917 = vshrl.u32 %v6916, 7
    %v6918 = vsub.s32 6, %v6917
    %v6919 = vrot.slane %v6890, %v6918
    %v6920 = vlaneseq
    %v6921 = vshrl.u32 %v6920, 7
    %v6922 = vsub.s32 7, %v6921
    %v6923 = vrot.slane %v6890, %v6922
    %v6932 = vsub.f32 %v6746, %v6895
    %v6933 = vsub.f32 %v6749, %v6895
    %v6934 = vsub.f32 %v6752, %v6899
    %v6935 = vsub.f32 %v6755, %v6899
    %v6936 = vsub.f32 %v6758, %v6903
    %v6937 = vsub.f32 %v6761, %v6903
    %v6938 = vsub.f32 %v6764, %v6907
    %v6939 = vsub.f32 %v6767, %v6907
    %v6940 = vsub.f32 %v6770, %v6911
    %v6941 = vsub.f32 %v6773, %v6911
    %v6942 = vsub.f32 %v6776, %v6915
    %v6943 = vsub.f32 %v6779, %v6915
    %v6944 = vsub.f32 %v6782, %v6919
    %v6945 = vsub.f32 %v6785, %v6919
    %v6946 = vsub.f32 %v6788, %v6923
    %v6947 = vsub.f32 %v6791, %v6923
    %v6948 = vmul.f32 %v6932, 1.442695
    %v6949 = vpow.pop %v6948
    %v6950 = vmul.f32 %v6933, 1.442695
    %v6951 = vpow.pop %v6950
    %v6952 = vmul.f32 %v6934, 1.442695
    %v6953 = vpow.pop %v6952
    %v6954 = vmul.f32 %v6935, 1.442695
    %v6955 = vpow.pop %v6954
    %v6956 = vmul.f32 %v6936, 1.442695
    %v6957 = vpow.pop %v6956
    %v6958 = vmul.f32 %v6937, 1.442695
    %v6959 = vpow.pop %v6958
    %v6960 = vmul.f32 %v6938, 1.442695
    %v6961 = vpow.pop %v6960
    %v6962 = vmul.f32 %v6939, 1.442695
    %v6963 = vpow.pop %v6962
    %v6964 = vmul.f32 %v6940, 1.442695
    %v6965 = vpow.pop %v6964
    %v6966 = vmul.f32 %v6941, 1.442695
    %v6967 = vpow.pop %v6966
    %v6968 = vmul.f32 %v6942, 1.442695
    %v6969 = vpow.pop %v6968
    %v6970 = vmul.f32 %v6943, 1.442695
    %v6971 = vpow.pop %v6970
    %v6972 = vmul.f32 %v6944, 1.442695
    %v6973 = vpow.pop %v6972
    %v6974 = vmul.f32 %v6945, 1.442695
    %v6975 = vpow.pop %v6974
    %v6976 = vmul.f32 %v6946, 1.442695
    %v6977 = vpow.pop %v6976
    %v6978 = vmul.f32 %v6947, 1.442695
    %v6979 = vpow.pop %v6978
    %6996 = vset.pattern.permute.xlu0 0
    %6997 = vperm.xlu0 %6996, %v6949
    %v6998 = vpop.permute.xlu0 %6997
    %6999 = vset.pattern.permute.xlu0 0
    %7000 = vperm.xlu0 %6999, %v6951
    %v7001 = vpop.permute.xlu0 %7000
    %7002 = vset.pattern.permute.xlu0 0
    %7003 = vperm.xlu0 %7002, %v6953
    %v7004 = vpop.permute.xlu0 %7003
    %7005 = vset.pattern.permute.xlu0 0
    %7006 = vperm.xlu0 %7005, %v6955
    %v7007 = vpop.permute.xlu0 %7006
    %7008 = vset.pattern.permute.xlu0 0
    %7009 = vperm.xlu0 %7008, %v6957
    %v7010 = vpop.permute.xlu0 %7009
    %7011 = vset.pattern.permute.xlu0 0
    %7012 = vperm.xlu0 %7011, %v6959
    %v7013 = vpop.permute.xlu0 %7012
    %7014 = vset.pattern.permute.xlu0 0
    %7015 = vperm.xlu0 %7014, %v6961
    %v7016 = vpop.permute.xlu0 %7015
    %7017 = vset.pattern.permute.xlu0 0
    %7018 = vperm.xlu0 %7017, %v6963
    %v7019 = vpop.permute.xlu0 %7018
    %7020 = vset.pattern.permute.xlu0 0
    %7021 = vperm.xlu0 %7020, %v6965
    %v7022 = vpop.permute.xlu0 %7021
    %7023 = vset.pattern.permute.xlu0 0
    %7024 = vperm.xlu0 %7023, %v6967
    %v7025 = vpop.permute.xlu0 %7024
    %7026 = vset.pattern.permute.xlu0 0
    %7027 = vperm.xlu0 %7026, %v6969
    %v7028 = vpop.permute.xlu0 %7027
    %7029 = vset.pattern.permute.xlu0 0
    %7030 = vperm.xlu0 %7029, %v6971
    %v7031 = vpop.permute.xlu0 %7030
    %7032 = vset.pattern.permute.xlu0 0
    %7033 = vperm.xlu0 %7032, %v6973
    %v7034 = vpop.permute.xlu0 %7033
    %7035 = vset.pattern.permute.xlu0 0
    %7036 = vperm.xlu0 %7035, %v6975
    %v7037 = vpop.permute.xlu0 %7036
    %7038 = vset.pattern.permute.xlu0 0
    %7039 = vperm.xlu0 %7038, %v6977
    %v7040 = vpop.permute.xlu0 %7039
    %7041 = vset.pattern.permute.xlu0 0
    %7042 = vperm.xlu0 %7041, %v6979
    %v7043 = vpop.permute.xlu0 %7042
    %v7044 = vlaneseq
    %v7045 = vshrl.u32 %v7044, 7
    %v7046 = vsub.s32 %v396, %v7045
    %v7047 = vrot.slane %v6998, %v7046
    %v7048 = vlaneseq
    %v7049 = vshrl.u32 %v7048, 7
    %v7050 = vsub.s32 %v401, %v7049
    %v7051 = vrot.slane %v7001, %v7050
    %v7052 = vsel %vm406, %v7051, %v7047
    %v7053 = vlaneseq
    %v7054 = vshrl.u32 %v7053, 7
    %v7055 = vsub.s32 %v396, %v7054
    %v7056 = vrot.slane %v7004, %v7055
    %v7057 = vlaneseq
    %v7058 = vshrl.u32 %v7057, 7
    %v7059 = vsub.s32 %v401, %v7058
    %v7060 = vrot.slane %v7007, %v7059
    %v7061 = vsel %vm406, %v7060, %v7056
    %v7062 = vlaneseq
    %v7063 = vshrl.u32 %v7062, 7
    %v7064 = vsub.s32 %v396, %v7063
    %v7065 = vrot.slane %v7010, %v7064
    %v7066 = vlaneseq
    %v7067 = vshrl.u32 %v7066, 7
    %v7068 = vsub.s32 %v401, %v7067
    %v7069 = vrot.slane %v7013, %v7068
    %v7070 = vsel %vm406, %v7069, %v7065
    %v7071 = vlaneseq
    %v7072 = vshrl.u32 %v7071, 7
    %v7073 = vsub.s32 %v396, %v7072
    %v7074 = vrot.slane %v7016, %v7073
    %v7075 = vlaneseq
    %v7076 = vshrl.u32 %v7075, 7
    %v7077 = vsub.s32 %v401, %v7076
    %v7078 = vrot.slane %v7019, %v7077
    %v7079 = vsel %vm406, %v7078, %v7074
    %v7080 = vlaneseq
    %v7081 = vshrl.u32 %v7080, 7
    %v7082 = vsub.s32 %v396, %v7081
    %v7083 = vrot.slane %v7022, %v7082
    %v7084 = vlaneseq
    %v7085 = vshrl.u32 %v7084, 7
    %v7086 = vsub.s32 %v401, %v7085
    %v7087 = vrot.slane %v7025, %v7086
    %v7088 = vsel %vm406, %v7087, %v7083
    %v7089 = vlaneseq
    %v7090 = vshrl.u32 %v7089, 7
    %v7091 = vsub.s32 %v396, %v7090
    %v7092 = vrot.slane %v7028, %v7091
    %v7093 = vlaneseq
    %v7094 = vshrl.u32 %v7093, 7
    %v7095 = vsub.s32 %v401, %v7094
    %v7096 = vrot.slane %v7031, %v7095
    %v7097 = vsel %vm406, %v7096, %v7092
    %v7098 = vlaneseq
    %v7099 = vshrl.u32 %v7098, 7
    %v7100 = vsub.s32 %v396, %v7099
    %v7101 = vrot.slane %v7034, %v7100
    %v7102 = vlaneseq
    %v7103 = vshrl.u32 %v7102, 7
    %v7104 = vsub.s32 %v401, %v7103
    %v7105 = vrot.slane %v7037, %v7104
    %v7106 = vsel %vm406, %v7105, %v7101
    %v7107 = vlaneseq
    %v7108 = vshrl.u32 %v7107, 7
    %v7109 = vsub.s32 %v396, %v7108
    %v7110 = vrot.slane %v7040, %v7109
    %v7111 = vlaneseq
    %v7112 = vshrl.u32 %v7111, 7
    %v7113 = vsub.s32 %v401, %v7112
    %v7114 = vrot.slane %v7043, %v7113
    %v7115 = vsel %vm406, %v7114, %v7110
    %v7116 = vsel %vm471, %v7061, %v7052
    %v7117 = vsel %vm473, %v7070, %v7116
    %v7118 = vsel %vm475, %v7079, %v7117
    %v7119 = vsel %vm477, %v7088, %v7118
    %v7120 = vsel %vm479, %v7097, %v7119
    %v7121 = vsel %vm481, %v7106, %v7120
    %v7122 = vsel %vm483, %v7115, %v7121
    %v7124 = vsel %vm486, %v7122, 0.0
    %7125 = vadd.xlane.f32.xlu0 %v7124
    %v7126 = vpop.xlane.xlu0 %7125
    %v7128 = vlaneseq
    %v7129 = vshrl.u32 %v7128, 7
    %v7130 = vsub.s32 0, %v7129
    %v7131 = vrot.slane %v7126, %v7130
    %v7132 = vlaneseq
    %v7133 = vshrl.u32 %v7132, 7
    %v7134 = vsub.s32 1, %v7133
    %v7135 = vrot.slane %v7126, %v7134
    %v7136 = vlaneseq
    %v7137 = vshrl.u32 %v7136, 7
    %v7138 = vsub.s32 2, %v7137
    %v7139 = vrot.slane %v7126, %v7138
    %v7140 = vlaneseq
    %v7141 = vshrl.u32 %v7140, 7
    %v7142 = vsub.s32 3, %v7141
    %v7143 = vrot.slane %v7126, %v7142
    %v7144 = vlaneseq
    %v7145 = vshrl.u32 %v7144, 7
    %v7146 = vsub.s32 4, %v7145
    %v7147 = vrot.slane %v7126, %v7146
    %v7148 = vlaneseq
    %v7149 = vshrl.u32 %v7148, 7
    %v7150 = vsub.s32 5, %v7149
    %v7151 = vrot.slane %v7126, %v7150
    %v7152 = vlaneseq
    %v7153 = vshrl.u32 %v7152, 7
    %v7154 = vsub.s32 6, %v7153
    %v7155 = vrot.slane %v7126, %v7154
    %v7156 = vlaneseq
    %v7157 = vshrl.u32 %v7156, 7
    %v7158 = vsub.s32 7, %v7157
    %v7159 = vrot.slane %v7126, %v7158
    %v7168 = vrcp.pop %v7131
    %v7169 = vmul.f32 %v6949, %v7168
    %v7170 = vmul.f32 %v6951, %v7168
    %v7171 = vrcp.pop %v7135
    %v7172 = vmul.f32 %v6953, %v7171
    %v7173 = vmul.f32 %v6955, %v7171
    %v7174 = vrcp.pop %v7139
    %v7175 = vmul.f32 %v6957, %v7174
    %v7176 = vmul.f32 %v6959, %v7174
    %v7177 = vrcp.pop %v7143
    %v7178 = vmul.f32 %v6961, %v7177
    %v7179 = vmul.f32 %v6963, %v7177
    %v7180 = vrcp.pop %v7147
    %v7181 = vmul.f32 %v6965, %v7180
    %v7182 = vmul.f32 %v6967, %v7180
    %v7183 = vrcp.pop %v7151
    %v7184 = vmul.f32 %v6969, %v7183
    %v7185 = vmul.f32 %v6971, %v7183
    %v7186 = vrcp.pop %v7155
    %v7187 = vmul.f32 %v6973, %v7186
    %v7188 = vmul.f32 %v6975, %v7186
    %v7189 = vrcp.pop %v7159
    %v7190 = vmul.f32 %v6977, %v7189
    %v7191 = vmul.f32 %v6979, %v7189
    %7193 = vset.pattern.permute.xlu0 0
    %7194 = vperm.xlu0 %7193, %v7169
    %v7195 = vpop.permute.xlu0 %7194
    %7198 = vset.pattern.permute.xlu0 0
    %7199 = vperm.xlu0 %7198, %v7170
    %v7200 = vpop.permute.xlu0 %7199
    %7203 = vset.pattern.permute.xlu0 0
    %7204 = vperm.xlu0 %7203, %v7172
    %v7205 = vpop.permute.xlu0 %7204
    %7208 = vset.pattern.permute.xlu0 0
    %7209 = vperm.xlu0 %7208, %v7173
    %v7210 = vpop.permute.xlu0 %7209
    %7213 = vset.pattern.permute.xlu0 0
    %7214 = vperm.xlu0 %7213, %v7175
    %v7215 = vpop.permute.xlu0 %7214
    %7218 = vset.pattern.permute.xlu0 0
    %7219 = vperm.xlu0 %7218, %v7176
    %v7220 = vpop.permute.xlu0 %7219
    %7223 = vset.pattern.permute.xlu0 0
    %7224 = vperm.xlu0 %7223, %v7178
    %v7225 = vpop.permute.xlu0 %7224
    %7228 = vset.pattern.permute.xlu0 0
    %7229 = vperm.xlu0 %7228, %v7179
    %v7230 = vpop.permute.xlu0 %7229
    %7233 = vset.pattern.permute.xlu0 0
    %7234 = vperm.xlu0 %7233, %v7181
    %v7235 = vpop.permute.xlu0 %7234
    %7238 = vset.pattern.permute.xlu0 0
    %7239 = vperm.xlu0 %7238, %v7182
    %v7240 = vpop.permute.xlu0 %7239
    %7243 = vset.pattern.permute.xlu0 0
    %7244 = vperm.xlu0 %7243, %v7184
    %v7245 = vpop.permute.xlu0 %7244
    %7248 = vset.pattern.permute.xlu0 0
    %7249 = vperm.xlu0 %7248, %v7185
    %v7250 = vpop.permute.xlu0 %7249
    %7253 = vset.pattern.permute.xlu0 0
    %7254 = vperm.xlu0 %7253, %v7187
    %v7255 = vpop.permute.xlu0 %7254
    %7258 = vset.pattern.permute.xlu0 0
    %7259 = vperm.xlu0 %7258, %v7188
    %v7260 = vpop.permute.xlu0 %7259
    %7263 = vset.pattern.permute.xlu0 0
    %7264 = vperm.xlu0 %7263, %v7190
    %v7265 = vpop.permute.xlu0 %7264
    %7268 = vset.pattern.permute.xlu0 0
    %7269 = vperm.xlu0 %7268, %v7191
    %v7270 = vpop.permute.xlu0 %7269
    %v7272 = vmul.f32 %v7195, %v127
    %v7273 = vmul.f32 %v7200, %v128
    %v7274 = vmul.f32 %v7205, %v129
    %v7275 = vmul.f32 %v7210, %v130
    %v7276 = vmul.f32 %v7215, %v131
    %v7277 = vmul.f32 %v7220, %v132
    %v7278 = vmul.f32 %v7225, %v133
    %v7279 = vmul.f32 %v7230, %v134
    %v7280 = vmul.f32 %v7235, %v135
    %v7281 = vmul.f32 %v7240, %v136
    %v7282 = vmul.f32 %v7245, %v137
    %v7283 = vmul.f32 %v7250, %v138
    %v7284 = vmul.f32 %v7255, %v139
    %v7285 = vmul.f32 %v7260, %v140
    %v7286 = vmul.f32 %v7265, %v141
    %v7287 = vmul.f32 %v7270, %v142
    %v7288 = vsel %vm887, %v7272, 0.0
    %v7289 = vsel %vm887, %v7273, 0.0
    %v7290 = vadd.f32 %v7288, %v7289
    %v7291 = vrot.slane %v7290, 4
    %v7292 = vadd.f32 %v7290, %v7291
    %v7293 = vrot.slane %v7292, 2
    %v7294 = vadd.f32 %v7292, %v7293
    %v7295 = vrot.slane %v7294, 1
    %v7296 = vadd.f32 %v7294, %v7295
    %v7297 = vsel %vm887, %v7274, 0.0
    %v7298 = vsel %vm887, %v7275, 0.0
    %v7299 = vadd.f32 %v7297, %v7298
    %v7300 = vrot.slane %v7299, 4
    %v7301 = vadd.f32 %v7299, %v7300
    %v7302 = vrot.slane %v7301, 2
    %v7303 = vadd.f32 %v7301, %v7302
    %v7304 = vrot.slane %v7303, 1
    %v7305 = vadd.f32 %v7303, %v7304
    %v7306 = vsel %vm887, %v7276, 0.0
    %v7307 = vsel %vm887, %v7277, 0.0
    %v7308 = vadd.f32 %v7306, %v7307
    %v7309 = vrot.slane %v7308, 4
    %v7310 = vadd.f32 %v7308, %v7309
    %v7311 = vrot.slane %v7310, 2
    %v7312 = vadd.f32 %v7310, %v7311
    %v7313 = vrot.slane %v7312, 1
    %v7314 = vadd.f32 %v7312, %v7313
    %v7315 = vsel %vm887, %v7278, 0.0
    %v7316 = vsel %vm887, %v7279, 0.0
    %v7317 = vadd.f32 %v7315, %v7316
    %v7318 = vrot.slane %v7317, 4
    %v7319 = vadd.f32 %v7317, %v7318
    %v7320 = vrot.slane %v7319, 2
    %v7321 = vadd.f32 %v7319, %v7320
    %v7322 = vrot.slane %v7321, 1
    %v7323 = vadd.f32 %v7321, %v7322
    %v7324 = vsel %vm887, %v7280, 0.0
    %v7325 = vsel %vm887, %v7281, 0.0
    %v7326 = vadd.f32 %v7324, %v7325
    %v7327 = vrot.slane %v7326, 4
    %v7328 = vadd.f32 %v7326, %v7327
    %v7329 = vrot.slane %v7328, 2
    %v7330 = vadd.f32 %v7328, %v7329
    %v7331 = vrot.slane %v7330, 1
    %v7332 = vadd.f32 %v7330, %v7331
    %v7333 = vsel %vm887, %v7282, 0.0
    %v7334 = vsel %vm887, %v7283, 0.0
    %v7335 = vadd.f32 %v7333, %v7334
    %v7336 = vrot.slane %v7335, 4
    %v7337 = vadd.f32 %v7335, %v7336
    %v7338 = vrot.slane %v7337, 2
    %v7339 = vadd.f32 %v7337, %v7338
    %v7340 = vrot.slane %v7339, 1
    %v7341 = vadd.f32 %v7339, %v7340
    %v7342 = vsel %vm887, %v7284, 0.0
    %v7343 = vsel %vm887, %v7285, 0.0
    %v7344 = vadd.f32 %v7342, %v7343
    %v7345 = vrot.slane %v7344, 4
    %v7346 = vadd.f32 %v7344, %v7345
    %v7347 = vrot.slane %v7346, 2
    %v7348 = vadd.f32 %v7346, %v7347
    %v7349 = vrot.slane %v7348, 1
    %v7350 = vadd.f32 %v7348, %v7349
    %v7351 = vsel %vm887, %v7286, 0.0
    %v7352 = vsel %vm887, %v7287, 0.0
    %v7353 = vadd.f32 %v7351, %v7352
    %v7354 = vrot.slane %v7353, 4
    %v7355 = vadd.f32 %v7353, %v7354
    %v7356 = vrot.slane %v7355, 2
    %v7357 = vadd.f32 %v7355, %v7356
    %v7358 = vrot.slane %v7357, 1
    %v7359 = vadd.f32 %v7357, %v7358
    %v7368 = vsel %vm471, %v7305, %v7296
    %v7369 = vsel %vm473, %v7314, %v7368
    %v7370 = vsel %vm475, %v7323, %v7369
    %v7371 = vsel %vm477, %v7332, %v7370
    %v7372 = vsel %vm479, %v7341, %v7371
    %v7373 = vsel %vm481, %v7350, %v7372
    %v7374 = vsel %vm483, %v7359, %v7373
    %7375 = vrot.lane.b32.xlu0 %v7374, 32
    %v7376 = vpop.permute.xlu0 %7375
    %7378 = vrot.lane.b32.xlu0 %v6416, 72
    %v7379 = vpop.permute.xlu0 %7378
    %v7381 = vsel %vm330, %v6589, %v7376
    %v7382 = vsel %vm983, %v7381, %v7379
    %v7383 = vsel %vm991, %v7379, 0
    %7385 = vmatprep.subr.mxu0 0.0
    %7386 = vmatpush1.msra.mxu0 %v160
    %7387 = vmatprep.subr.mxu0 0.0
    %7388 = vmatpush1.msra.mxu0 %v161
    %7389 = vmatprep.subr.mxu0 0.0
    %7390 = vmatpush1.msra.mxu0 %v162
    %7391 = vmatprep.subr.mxu0 0.0
    %7392 = vmatpush1.msra.mxu0 %v163
    %7393 = vmatprep.subr.mxu0 0.0
    %7394 = vmatpush1.msra.mxu0 %v164
    %7395 = vmatprep.subr.mxu0 0.0
    %7396 = vmatpush1.msra.mxu0 %v165
    %7397 = vmatprep.subr.mxu0 0.0
    %7398 = vmatpush1.msra.mxu0 %v166
    %7399 = vmatprep.subr.mxu0 0.0
    %7400 = vmatpush1.msra.mxu0 %v167
    %7401 = vmatprep.subr.mxu0 0.0
    %7402 = vmatpush1.msra.mxu0 %v168
    %7403 = vmatprep.subr.mxu0 0.0
    %7404 = vmatpush1.msra.mxu0 %v169
    %7405 = vmatprep.subr.mxu0 0.0
    %7406 = vmatpush1.msra.mxu0 %v170
    %7407 = vmatprep.subr.mxu0 0.0
    %7408 = vmatpush1.msra.mxu0 %v171
    %7409 = vmatprep.subr.mxu0 0.0
    %7410 = vmatpush1.msra.mxu0 %v172
    %7411 = vmatprep.subr.mxu0 0.0
    %7412 = vmatpush1.msra.mxu0 %v173
    %7413 = vmatprep.subr.mxu0 0.0
    %7414 = vmatpush1.msra.mxu0 %v174
    %7415 = vmatprep.subr.mxu0 0.0
    %7416 = vmatpush1.msra.mxu0 %v175
    %7417 = vmatprep.subr.mxu0 0.0
    %7418 = vmatpush1.msra.mxu0 %v176
    %7419 = vmatprep.subr.mxu0 0.0
    %7420 = vmatpush1.msra.mxu0 0.0
    %7421 = vmatprep.subr.mxu0 0.0
    %7422 = vmatpush1.msra.mxu0 0.0
    %7423 = vmatprep.subr.mxu0 0.0
    %7424 = vmatpush1.msra.mxu0 0.0
    %7425 = vmatprep.subr.mxu0 0.0
    %7426 = vmatpush1.msra.mxu0 0.0
    %7427 = vmatprep.subr.mxu0 0.0
    %7428 = vmatpush1.msra.mxu0 0.0
    %7429 = vmatprep.subr.mxu0 0.0
    %7430 = vmatpush1.msra.mxu0 0.0
    %7431 = vmatprep.subr.mxu0 0.0
    %7432 = vmatpush1.msra.mxu0 0.0
    %7433 = vmatprep.subr.mxu0 0.0
    %7434 = vmatpush1.msra.mxu0 0.0
    %7435 = vmatprep.subr.mxu0 0.0
    %7436 = vmatpush1.msra.mxu0 0.0
    %7437 = vmatprep.subr.mxu0 0.0
    %7438 = vmatpush1.msra.mxu0 0.0
    %7439 = vmatprep.subr.mxu0 0.0
    %7440 = vmatpush1.msra.mxu0 0.0
    %7441 = vmatprep.subr.mxu0 0.0
    %7442 = vmatpush1.msra.mxu0 0.0
    %7443 = vmatprep.subr.mxu0 0.0
    %7444 = vmatpush1.msra.mxu0 0.0
    %7445 = vmatprep.subr.mxu0 0.0
    %7446 = vmatpush1.msra.mxu0 0.0
    %7447 = vmatprep.subr.mxu0 0.0
    %7448 = vmatpush1.msra.mxu0 0.0
    %7449 = vmatprep.mubr.f32.mxu0 %v7383
    %7450 = vmatmul.mubr.f32.gmra.mrb[0].mxu0 %v7382
    %v7451 = vpop.f32.mrb[0].mxu0
    %v7452 = vadd.f32 %v989, %v7451
    %v7453 = vpop.f32.mrb[0].mxu0
    %7454 = vdwg.mxu0
    %v7455 = vxor.u32 %v7452, 2147483648
    %v7456 = vmul.f32 %v7455, 1.442695
    %v7457 = vpow.pop %v7456
    %v7458 = vadd.f32 %v7457, 1.0
    %v7459 = vrcp.pop %v7458
    %v7460 = vmul.f32 1.0, %v7459
    %7462 = vrot.lane.b32.xlu0 %v7452, 32
    %v7463 = vpop.permute.xlu0 %7462
    %v7465 = vmul.f32 %v7460, %v7463
    %7467 = vrot.lane.b32.xlu0 %v7465, 64
    %v7468 = vpop.permute.xlu0 %7467
    %v7470 = vadd.f32 %v7452, %v7468
    %v7471 = vtanh.pop %v7470
    %v7472 = vsub.f32 1.0, %v7460
    %7474 = vrot.lane.b32.xlu0 %v7471, 96
    %v7475 = vpop.permute.xlu0 %7474
    %v7477 = vmul.f32 %v7472, %v7475
    %v7478 = vmul.f32 %v7460, %v6416
    %v7479 = vadd.f32 %v7477, %v7478
    %7481 = vrot.lane.b32.xlu0 %v7479, 96
    %v7482 = vpop.permute.xlu0 %7481
    %v7483 = vsel %vm330, %v7482, 0
    %7485 = vmatprep.subr.mxu0 0.0
    %7486 = vmatpush1.msra.mxu0 %v178
    %7487 = vmatprep.subr.mxu0 0.0
    %7488 = vmatpush1.msra.mxu0 %v179
    %7489 = vmatprep.subr.mxu0 0.0
    %7490 = vmatpush1.msra.mxu0 %v180
    %7491 = vmatprep.subr.mxu0 0.0
    %7492 = vmatpush1.msra.mxu0 %v181
    %7493 = vmatprep.subr.mxu0 0.0
    %7494 = vmatpush1.msra.mxu0 0.0
    %7495 = vmatprep.subr.mxu0 0.0
    %7496 = vmatpush1.msra.mxu0 0.0
    %7497 = vmatprep.subr.mxu0 0.0
    %7498 = vmatpush1.msra.mxu0 0.0
    %7499 = vmatprep.subr.mxu0 0.0
    %7500 = vmatpush1.msra.mxu0 0.0
    %7501 = vmatprep.subr.mxu0 0.0
    %7502 = vmatpush1.msra.mxu0 0.0
    %7503 = vmatprep.subr.mxu0 0.0
    %7504 = vmatpush1.msra.mxu0 0.0
    %7505 = vmatprep.subr.mxu0 0.0
    %7506 = vmatpush1.msra.mxu0 0.0
    %7507 = vmatprep.subr.mxu0 0.0
    %7508 = vmatpush1.msra.mxu0 0.0
    %7509 = vmatprep.subr.mxu0 0.0
    %7510 = vmatpush1.msra.mxu0 0.0
    %7511 = vmatprep.subr.mxu0 0.0
    %7512 = vmatpush1.msra.mxu0 0.0
    %7513 = vmatprep.subr.mxu0 0.0
    %7514 = vmatpush1.msra.mxu0 0.0
    %7515 = vmatprep.subr.mxu0 0.0
    %7516 = vmatpush1.msra.mxu0 0.0
    %7517 = vmatprep.subr.mxu0 0.0
    %7518 = vmatpush1.msra.mxu0 0.0
    %7519 = vmatprep.subr.mxu0 0.0
    %7520 = vmatpush1.msra.mxu0 0.0
    %7521 = vmatprep.subr.mxu0 0.0
    %7522 = vmatpush1.msra.mxu0 0.0
    %7523 = vmatprep.subr.mxu0 0.0
    %7524 = vmatpush1.msra.mxu0 0.0
    %7525 = vmatprep.subr.mxu0 0.0
    %7526 = vmatpush1.msra.mxu0 0.0
    %7527 = vmatprep.subr.mxu0 0.0
    %7528 = vmatpush1.msra.mxu0 0.0
    %7529 = vmatprep.subr.mxu0 0.0
    %7530 = vmatpush1.msra.mxu0 0.0
    %7531 = vmatprep.subr.mxu0 0.0
    %7532 = vmatpush1.msra.mxu0 0.0
    %7533 = vmatprep.subr.mxu0 0.0
    %7534 = vmatpush1.msra.mxu0 0.0
    %7535 = vmatprep.subr.mxu0 0.0
    %7536 = vmatpush1.msra.mxu0 0.0
    %7537 = vmatprep.subr.mxu0 0.0
    %7538 = vmatpush1.msra.mxu0 0.0
    %7539 = vmatprep.subr.mxu0 0.0
    %7540 = vmatpush1.msra.mxu0 0.0
    %7541 = vmatprep.subr.mxu0 0.0
    %7542 = vmatpush1.msra.mxu0 0.0
    %7543 = vmatprep.subr.mxu0 0.0
    %7544 = vmatpush1.msra.mxu0 0.0
    %7545 = vmatprep.subr.mxu0 0.0
    %7546 = vmatpush1.msra.mxu0 0.0
    %7547 = vmatprep.subr.mxu0 0.0
    %7548 = vmatpush1.msra.mxu0 0.0
    %7549 = vmatprep.mubr.f32.mxu0 0.0
    %7550 = vmatmul.mubr.f32.gmra.mrb[0].mxu0 %v7483
    %v7551 = vpop.f32.mrb[0].mxu0
    %v7552 = vadd.f32 %v1096, %v7551
    %v7553 = vpop.f32.mrb[0].mxu0
    %7554 = vdwg.mxu0
    %v7555 = vsel %vm330, %v7552, -inf
    %7556 = vmax.xlane.f32.xlu0 %v7555
    %v7557 = vpop.xlane.xlu0 %7556
    %v7558 = vsub.f32 %v7552, %v7557
    %v7559 = vmul.f32 %v7558, 1.442695
    %v7560 = vpow.pop %v7559
    %v7561 = vsel %vm330, %v7560, 0.0
    %7562 = vadd.xlane.f32.xlu0 %v7561
    %v7563 = vpop.xlane.xlu0 %7562
    %v7564 = vrcp.pop %v7563
    %v7565 = vmul.f32 %v7560, %v7564
    %v7566 = vlaneseq
    %v7567 = vshrl.u32 %v7566, 7
    %v7568 = vsub.s32 %v1184, %v7567
    %v7569 = vrot.slane %v7195, %v7568
    %v7570 = vlaneseq
    %v7571 = vshrl.u32 %v7570, 7
    %v7572 = vsub.s32 %v1189, %v7571
    %v7573 = vrot.slane %v7200, %v7572
    %v7574 = vsel %vm1194, %v7573, %v7569
    %v7575 = vlaneseq
    %v7576 = vshrl.u32 %v7575, 7
    %v7577 = vsub.s32 %v1184, %v7576
    %v7578 = vrot.slane %v7205, %v7577
    %v7579 = vlaneseq
    %v7580 = vshrl.u32 %v7579, 7
    %v7581 = vsub.s32 %v1189, %v7580
    %v7582 = vrot.slane %v7210, %v7581
    %v7583 = vsel %vm1194, %v7582, %v7578
    %v7584 = vlaneseq
    %v7585 = vshrl.u32 %v7584, 7
    %v7586 = vsub.s32 %v1184, %v7585
    %v7587 = vrot.slane %v7215, %v7586
    %v7588 = vlaneseq
    %v7589 = vshrl.u32 %v7588, 7
    %v7590 = vsub.s32 %v1189, %v7589
    %v7591 = vrot.slane %v7220, %v7590
    %v7592 = vsel %vm1194, %v7591, %v7587
    %v7593 = vlaneseq
    %v7594 = vshrl.u32 %v7593, 7
    %v7595 = vsub.s32 %v1184, %v7594
    %v7596 = vrot.slane %v7225, %v7595
    %v7597 = vlaneseq
    %v7598 = vshrl.u32 %v7597, 7
    %v7599 = vsub.s32 %v1189, %v7598
    %v7600 = vrot.slane %v7230, %v7599
    %v7601 = vsel %vm1194, %v7600, %v7596
    %v7602 = vlaneseq
    %v7603 = vshrl.u32 %v7602, 7
    %v7604 = vsub.s32 %v1184, %v7603
    %v7605 = vrot.slane %v7235, %v7604
    %v7606 = vlaneseq
    %v7607 = vshrl.u32 %v7606, 7
    %v7608 = vsub.s32 %v1189, %v7607
    %v7609 = vrot.slane %v7240, %v7608
    %v7610 = vsel %vm1194, %v7609, %v7605
    %v7611 = vlaneseq
    %v7612 = vshrl.u32 %v7611, 7
    %v7613 = vsub.s32 %v1184, %v7612
    %v7614 = vrot.slane %v7245, %v7613
    %v7615 = vlaneseq
    %v7616 = vshrl.u32 %v7615, 7
    %v7617 = vsub.s32 %v1189, %v7616
    %v7618 = vrot.slane %v7250, %v7617
    %v7619 = vsel %vm1194, %v7618, %v7614
    %v7620 = vlaneseq
    %v7621 = vshrl.u32 %v7620, 7
    %v7622 = vsub.s32 %v1184, %v7621
    %v7623 = vrot.slane %v7255, %v7622
    %v7624 = vlaneseq
    %v7625 = vshrl.u32 %v7624, 7
    %v7626 = vsub.s32 %v1189, %v7625
    %v7627 = vrot.slane %v7260, %v7626
    %v7628 = vsel %vm1194, %v7627, %v7623
    %v7629 = vlaneseq
    %v7630 = vshrl.u32 %v7629, 7
    %v7631 = vsub.s32 %v1184, %v7630
    %v7632 = vrot.slane %v7265, %v7631
    %v7633 = vlaneseq
    %v7634 = vshrl.u32 %v7633, 7
    %v7635 = vsub.s32 %v1189, %v7634
    %v7636 = vrot.slane %v7270, %v7635
    %v7637 = vsel %vm1194, %v7636, %v7632
    %v7638 = vsel %vm471, %v7583, %v7574
    %v7639 = vsel %vm473, %v7592, %v7638
    %v7640 = vsel %vm475, %v7601, %v7639
    %v7641 = vsel %vm477, %v7610, %v7640
    %v7642 = vsel %vm479, %v7619, %v7641
    %v7643 = vsel %vm481, %v7628, %v7642
    %v7644 = vsel %vm483, %v7637, %v7643
    %v7646 = vsel %vm330, %v7565, %v7479
    %v7647 = vsel %vm1268, %v7646, %v7644
    %v7648 = vsel %vm1270, %v7647, 0.0
    %s7649 = scalar_lea.vmem [#allocation14], 48
    %7650 = vst [vmem:[%s7649] sm:$0xff] %v7648
    %s7651 = scalar_lea.vmem [#allocation2], 56
    %v7652 = vld [vmem:[%s7651] sm:$0xff]
    %v7654 = vcombine.high %v7552, %v7552
    %v7656 = vunpack.c.l.s4 1966171168
    %v7657 = vunpack.c.0.s8 %v7656
    %v7658 = vlaneseq
    %v7659 = vshrl.u32 %v7658, 7
    %v7660 = vsub.s32 %v7657, %v7659
    %v7661 = vrot.slane %v7552, %v7660
    %v7663 = vunpack.c.l.s4 1966171168
    %v7664 = vunpack.c.0.s8 %v7663
    %v7665 = vlaneseq
    %v7666 = vshrl.u32 %v7665, 7
    %v7667 = vsub.s32 %v7664, %v7666
    %v7668 = vrot.slane %v7654, %v7667
    %v7669 = vcombine.high %v7661, %v7661
    %v7670 = vcombine.high %v7668, %v7668
    %v7672 = vunpack.c.l.s4 1966171168
    %v7673 = vunpack.c.0.s8 %v7672
    %v7674 = vlaneseq
    %v7675 = vshrl.u32 %v7674, 7
    %v7676 = vsub.s32 %v7673, %v7675
    %v7677 = vrot.slane %v7661, %v7676
    %v7679 = vunpack.c.l.s4 1966171168
    %v7680 = vunpack.c.0.s8 %v7679
    %v7681 = vlaneseq
    %v7682 = vshrl.u32 %v7681, 7
    %v7683 = vsub.s32 %v7680, %v7682
    %v7684 = vrot.slane %v7668, %v7683
    %v7686 = vunpack.c.l.s4 1966171168
    %v7687 = vunpack.c.0.s8 %v7686
    %v7688 = vlaneseq
    %v7689 = vshrl.u32 %v7688, 7
    %v7690 = vsub.s32 %v7687, %v7689
    %v7691 = vrot.slane %v7669, %v7690
    %v7693 = vunpack.c.l.s4 1966171168
    %v7694 = vunpack.c.0.s8 %v7693
    %v7695 = vlaneseq
    %v7696 = vshrl.u32 %v7695, 7
    %v7697 = vsub.s32 %v7694, %v7696
    %v7698 = vrot.slane %v7670, %v7697
    %v7699 = vcombine.high %v7677, %v7677
    %v7700 = vcombine.high %v7684, %v7684
    %v7701 = vcombine.high %v7691, %v7691
    %v7702 = vcombine.high %v7698, %v7698
    %v7703 = vlaneseq
    %v7704 = vshrl.u32 %v7703, 7
    %v7705 = vsub.s32 0, %v7704
    %v7706 = vrot.slane %v7677, %v7705
    %v7707 = vlaneseq
    %v7708 = vshrl.u32 %v7707, 7
    %v7709 = vsub.s32 0, %v7708
    %v7710 = vrot.slane %v7691, %v7709
    %v7711 = vlaneseq
    %v7712 = vshrl.u32 %v7711, 7
    %v7713 = vsub.s32 0, %v7712
    %v7714 = vrot.slane %v7699, %v7713
    %v7715 = vlaneseq
    %v7716 = vshrl.u32 %v7715, 7
    %v7717 = vsub.s32 0, %v7716
    %v7718 = vrot.slane %v7701, %v7717
    %v7719 = vlaneseq
    %v7720 = vshrl.u32 %v7719, 7
    %v7721 = vsub.s32 0, %v7720
    %v7722 = vrot.slane %v7684, %v7721
    %v7723 = vlaneseq
    %v7724 = vshrl.u32 %v7723, 7
    %v7725 = vsub.s32 0, %v7724
    %v7726 = vrot.slane %v7698, %v7725
    %v7727 = vlaneseq
    %v7728 = vshrl.u32 %v7727, 7
    %v7729 = vsub.s32 0, %v7728
    %v7730 = vrot.slane %v7700, %v7729
    %v7731 = vlaneseq
    %v7732 = vshrl.u32 %v7731, 7
    %v7733 = vsub.s32 0, %v7732
    %v7734 = vrot.slane %v7702, %v7733
    %7735 = vrot.lane.b32.xlu0 %v7706, 96
    %v7736 = vpop.permute.xlu0 %7735
    %7737 = vrot.lane.b32.xlu0 %v7710, 96
    %v7738 = vpop.permute.xlu0 %7737
    %7739 = vrot.lane.b32.xlu0 %v7714, 96
    %v7740 = vpop.permute.xlu0 %7739
    %7741 = vrot.lane.b32.xlu0 %v7718, 96
    %v7742 = vpop.permute.xlu0 %7741
    %7743 = vrot.lane.b32.xlu0 %v7722, 96
    %v7744 = vpop.permute.xlu0 %7743
    %7745 = vrot.lane.b32.xlu0 %v7726, 96
    %v7746 = vpop.permute.xlu0 %7745
    %7747 = vrot.lane.b32.xlu0 %v7730, 96
    %v7748 = vpop.permute.xlu0 %7747
    %7749 = vrot.lane.b32.xlu0 %v7734, 96
    %v7750 = vpop.permute.xlu0 %7749
    %v7759 = vadd.f32 %v143, %v7736
    %v7760 = vadd.f32 %v144, %v7736
    %v7761 = vadd.f32 %v145, %v7738
    %v7762 = vadd.f32 %v146, %v7738
    %v7763 = vadd.f32 %v147, %v7740
    %v7764 = vadd.f32 %v148, %v7740
    %v7765 = vadd.f32 %v149, %v7742
    %v7766 = vadd.f32 %v150, %v7742
    %v7767 = vadd.f32 %v151, %v7744
    %v7768 = vadd.f32 %v152, %v7744
    %v7769 = vadd.f32 %v153, %v7746
    %v7770 = vadd.f32 %v154, %v7746
    %v7771 = vadd.f32 %v155, %v7748
    %v7772 = vadd.f32 %v156, %v7748
    %v7773 = vadd.f32 %v157, %v7750
    %v7774 = vadd.f32 %v158, %v7750
    %v7775 = vtanh.pop %v7759
    %v7776 = vtanh.pop %v7760
    %v7777 = vtanh.pop %v7761
    %v7778 = vtanh.pop %v7762
    %v7779 = vtanh.pop %v7763
    %v7780 = vtanh.pop %v7764
    %v7781 = vtanh.pop %v7765
    %v7782 = vtanh.pop %v7766
    %v7783 = vtanh.pop %v7767
    %v7784 = vtanh.pop %v7768
    %v7785 = vtanh.pop %v7769
    %v7786 = vtanh.pop %v7770
    %v7787 = vtanh.pop %v7771
    %v7788 = vtanh.pop %v7772
    %v7789 = vtanh.pop %v7773
    %v7790 = vtanh.pop %v7774
    %v7791 = vmul.f32 %v7775, %v312
    %v7792 = vmul.f32 %v7776, %v312
    %v7793 = vmul.f32 %v7777, %v312
    %v7794 = vmul.f32 %v7778, %v312
    %v7795 = vmul.f32 %v7779, %v312
    %v7796 = vmul.f32 %v7780, %v312
    %v7797 = vmul.f32 %v7781, %v312
    %v7798 = vmul.f32 %v7782, %v312
    %v7799 = vmul.f32 %v7783, %v312
    %v7800 = vmul.f32 %v7784, %v312
    %v7801 = vmul.f32 %v7785, %v312
    %v7802 = vmul.f32 %v7786, %v312
    %v7803 = vmul.f32 %v7787, %v312
    %v7804 = vmul.f32 %v7788, %v312
    %v7805 = vmul.f32 %v7789, %v312
    %v7806 = vmul.f32 %v7790, %v312
    %v7807 = vsel %vm330, %v7791, 0.0
    %7808 = vadd.xlane.f32.xlu0 %v7807
    %v7809 = vpop.xlane.xlu0 %7808
    %v7810 = vsel %vm330, %v7792, 0.0
    %7811 = vadd.xlane.f32.xlu0 %v7810
    %v7812 = vpop.xlane.xlu0 %7811
    %v7813 = vsel %vm330, %v7793, 0.0
    %7814 = vadd.xlane.f32.xlu0 %v7813
    %v7815 = vpop.xlane.xlu0 %7814
    %v7816 = vsel %vm330, %v7794, 0.0
    %7817 = vadd.xlane.f32.xlu0 %v7816
    %v7818 = vpop.xlane.xlu0 %7817
    %v7819 = vsel %vm330, %v7795, 0.0
    %7820 = vadd.xlane.f32.xlu0 %v7819
    %v7821 = vpop.xlane.xlu0 %7820
    %v7822 = vsel %vm330, %v7796, 0.0
    %7823 = vadd.xlane.f32.xlu0 %v7822
    %v7824 = vpop.xlane.xlu0 %7823
    %v7825 = vsel %vm330, %v7797, 0.0
    %7826 = vadd.xlane.f32.xlu0 %v7825
    %v7827 = vpop.xlane.xlu0 %7826
    %v7828 = vsel %vm330, %v7798, 0.0
    %7829 = vadd.xlane.f32.xlu0 %v7828
    %v7830 = vpop.xlane.xlu0 %7829
    %v7831 = vsel %vm330, %v7799, 0.0
    %7832 = vadd.xlane.f32.xlu0 %v7831
    %v7833 = vpop.xlane.xlu0 %7832
    %v7834 = vsel %vm330, %v7800, 0.0
    %7835 = vadd.xlane.f32.xlu0 %v7834
    %v7836 = vpop.xlane.xlu0 %7835
    %v7837 = vsel %vm330, %v7801, 0.0
    %7838 = vadd.xlane.f32.xlu0 %v7837
    %v7839 = vpop.xlane.xlu0 %7838
    %v7840 = vsel %vm330, %v7802, 0.0
    %7841 = vadd.xlane.f32.xlu0 %v7840
    %v7842 = vpop.xlane.xlu0 %7841
    %v7843 = vsel %vm330, %v7803, 0.0
    %7844 = vadd.xlane.f32.xlu0 %v7843
    %v7845 = vpop.xlane.xlu0 %7844
    %v7846 = vsel %vm330, %v7804, 0.0
    %7847 = vadd.xlane.f32.xlu0 %v7846
    %v7848 = vpop.xlane.xlu0 %7847
    %v7849 = vsel %vm330, %v7805, 0.0
    %7850 = vadd.xlane.f32.xlu0 %v7849
    %v7851 = vpop.xlane.xlu0 %7850
    %v7852 = vsel %vm330, %v7806, 0.0
    %7853 = vadd.xlane.f32.xlu0 %v7852
    %v7854 = vpop.xlane.xlu0 %7853
    %v7871 = vlaneseq
    %v7872 = vshrl.u32 %v7871, 7
    %v7873 = vsub.s32 %v396, %v7872
    %v7874 = vrot.slane %v7809, %v7873
    %v7875 = vlaneseq
    %v7876 = vshrl.u32 %v7875, 7
    %v7877 = vsub.s32 %v401, %v7876
    %v7878 = vrot.slane %v7812, %v7877
    %v7879 = vsel %vm406, %v7878, %v7874
    %v7880 = vlaneseq
    %v7881 = vshrl.u32 %v7880, 7
    %v7882 = vsub.s32 %v396, %v7881
    %v7883 = vrot.slane %v7815, %v7882
    %v7884 = vlaneseq
    %v7885 = vshrl.u32 %v7884, 7
    %v7886 = vsub.s32 %v401, %v7885
    %v7887 = vrot.slane %v7818, %v7886
    %v7888 = vsel %vm406, %v7887, %v7883
    %v7889 = vlaneseq
    %v7890 = vshrl.u32 %v7889, 7
    %v7891 = vsub.s32 %v396, %v7890
    %v7892 = vrot.slane %v7821, %v7891
    %v7893 = vlaneseq
    %v7894 = vshrl.u32 %v7893, 7
    %v7895 = vsub.s32 %v401, %v7894
    %v7896 = vrot.slane %v7824, %v7895
    %v7897 = vsel %vm406, %v7896, %v7892
    %v7898 = vlaneseq
    %v7899 = vshrl.u32 %v7898, 7
    %v7900 = vsub.s32 %v396, %v7899
    %v7901 = vrot.slane %v7827, %v7900
    %v7902 = vlaneseq
    %v7903 = vshrl.u32 %v7902, 7
    %v7904 = vsub.s32 %v401, %v7903
    %v7905 = vrot.slane %v7830, %v7904
    %v7906 = vsel %vm406, %v7905, %v7901
    %v7907 = vlaneseq
    %v7908 = vshrl.u32 %v7907, 7
    %v7909 = vsub.s32 %v396, %v7908
    %v7910 = vrot.slane %v7833, %v7909
    %v7911 = vlaneseq
    %v7912 = vshrl.u32 %v7911, 7
    %v7913 = vsub.s32 %v401, %v7912
    %v7914 = vrot.slane %v7836, %v7913
    %v7915 = vsel %vm406, %v7914, %v7910
    %v7916 = vlaneseq
    %v7917 = vshrl.u32 %v7916, 7
    %v7918 = vsub.s32 %v396, %v7917
    %v7919 = vrot.slane %v7839, %v7918
    %v7920 = vlaneseq
    %v7921 = vshrl.u32 %v7920, 7
    %v7922 = vsub.s32 %v401, %v7921
    %v7923 = vrot.slane %v7842, %v7922
    %v7924 = vsel %vm406, %v7923, %v7919
    %v7925 = vlaneseq
    %v7926 = vshrl.u32 %v7925, 7
    %v7927 = vsub.s32 %v396, %v7926
    %v7928 = vrot.slane %v7845, %v7927
    %v7929 = vlaneseq
    %v7930 = vshrl.u32 %v7929, 7
    %v7931 = vsub.s32 %v401, %v7930
    %v7932 = vrot.slane %v7848, %v7931
    %v7933 = vsel %vm406, %v7932, %v7928
    %v7934 = vlaneseq
    %v7935 = vshrl.u32 %v7934, 7
    %v7936 = vsub.s32 %v396, %v7935
    %v7937 = vrot.slane %v7851, %v7936
    %v7938 = vlaneseq
    %v7939 = vshrl.u32 %v7938, 7
    %v7940 = vsub.s32 %v401, %v7939
    %v7941 = vrot.slane %v7854, %v7940
    %v7942 = vsel %vm406, %v7941, %v7937
    %v7943 = vsel %vm471, %v7888, %v7879
    %v7944 = vsel %vm473, %v7897, %v7943
    %v7945 = vsel %vm475, %v7906, %v7944
    %v7946 = vsel %vm477, %v7915, %v7945
    %v7947 = vsel %vm479, %v7924, %v7946
    %v7948 = vsel %vm481, %v7933, %v7947
    %v7949 = vsel %vm483, %v7942, %v7948
    %v7951 = vsel %vm486, %v7949, -inf
    %7952 = vmax.xlane.f32.xlu0 %v7951
    %v7953 = vpop.xlane.xlu0 %7952
    %v7955 = vlaneseq
    %v7956 = vshrl.u32 %v7955, 7
    %v7957 = vsub.s32 0, %v7956
    %v7958 = vrot.slane %v7953, %v7957
    %v7959 = vlaneseq
    %v7960 = vshrl.u32 %v7959, 7
    %v7961 = vsub.s32 1, %v7960
    %v7962 = vrot.slane %v7953, %v7961
    %v7963 = vlaneseq
    %v7964 = vshrl.u32 %v7963, 7
    %v7965 = vsub.s32 2, %v7964
    %v7966 = vrot.slane %v7953, %v7965
    %v7967 = vlaneseq
    %v7968 = vshrl.u32 %v7967, 7
    %v7969 = vsub.s32 3, %v7968
    %v7970 = vrot.slane %v7953, %v7969
    %v7971 = vlaneseq
    %v7972 = vshrl.u32 %v7971, 7
    %v7973 = vsub.s32 4, %v7972
    %v7974 = vrot.slane %v7953, %v7973
    %v7975 = vlaneseq
    %v7976 = vshrl.u32 %v7975, 7
    %v7977 = vsub.s32 5, %v7976
    %v7978 = vrot.slane %v7953, %v7977
    %v7979 = vlaneseq
    %v7980 = vshrl.u32 %v7979, 7
    %v7981 = vsub.s32 6, %v7980
    %v7982 = vrot.slane %v7953, %v7981
    %v7983 = vlaneseq
    %v7984 = vshrl.u32 %v7983, 7
    %v7985 = vsub.s32 7, %v7984
    %v7986 = vrot.slane %v7953, %v7985
    %v7995 = vsub.f32 %v7809, %v7958
    %v7996 = vsub.f32 %v7812, %v7958
    %v7997 = vsub.f32 %v7815, %v7962
    %v7998 = vsub.f32 %v7818, %v7962
    %v7999 = vsub.f32 %v7821, %v7966
    %v8000 = vsub.f32 %v7824, %v7966
    %v8001 = vsub.f32 %v7827, %v7970
    %v8002 = vsub.f32 %v7830, %v7970
    %v8003 = vsub.f32 %v7833, %v7974
    %v8004 = vsub.f32 %v7836, %v7974
    %v8005 = vsub.f32 %v7839, %v7978
    %v8006 = vsub.f32 %v7842, %v7978
    %v8007 = vsub.f32 %v7845, %v7982
    %v8008 = vsub.f32 %v7848, %v7982
    %v8009 = vsub.f32 %v7851, %v7986
    %v8010 = vsub.f32 %v7854, %v7986
    %v8011 = vmul.f32 %v7995, 1.442695
    %v8012 = vpow.pop %v8011
    %v8013 = vmul.f32 %v7996, 1.442695
    %v8014 = vpow.pop %v8013
    %v8015 = vmul.f32 %v7997, 1.442695
    %v8016 = vpow.pop %v8015
    %v8017 = vmul.f32 %v7998, 1.442695
    %v8018 = vpow.pop %v8017
    %v8019 = vmul.f32 %v7999, 1.442695
    %v8020 = vpow.pop %v8019
    %v8021 = vmul.f32 %v8000, 1.442695
    %v8022 = vpow.pop %v8021
    %v8023 = vmul.f32 %v8001, 1.442695
    %v8024 = vpow.pop %v8023
    %v8025 = vmul.f32 %v8002, 1.442695
    %v8026 = vpow.pop %v8025
    %v8027 = vmul.f32 %v8003, 1.442695
    %v8028 = vpow.pop %v8027
    %v8029 = vmul.f32 %v8004, 1.442695
    %v8030 = vpow.pop %v8029
    %v8031 = vmul.f32 %v8005, 1.442695
    %v8032 = vpow.pop %v8031
    %v8033 = vmul.f32 %v8006, 1.442695
    %v8034 = vpow.pop %v8033
    %v8035 = vmul.f32 %v8007, 1.442695
    %v8036 = vpow.pop %v8035
    %v8037 = vmul.f32 %v8008, 1.442695
    %v8038 = vpow.pop %v8037
    %v8039 = vmul.f32 %v8009, 1.442695
    %v8040 = vpow.pop %v8039
    %v8041 = vmul.f32 %v8010, 1.442695
    %v8042 = vpow.pop %v8041
    %8059 = vset.pattern.permute.xlu0 0
    %8060 = vperm.xlu0 %8059, %v8012
    %v8061 = vpop.permute.xlu0 %8060
    %8062 = vset.pattern.permute.xlu0 0
    %8063 = vperm.xlu0 %8062, %v8014
    %v8064 = vpop.permute.xlu0 %8063
    %8065 = vset.pattern.permute.xlu0 0
    %8066 = vperm.xlu0 %8065, %v8016
    %v8067 = vpop.permute.xlu0 %8066
    %8068 = vset.pattern.permute.xlu0 0
    %8069 = vperm.xlu0 %8068, %v8018
    %v8070 = vpop.permute.xlu0 %8069
    %8071 = vset.pattern.permute.xlu0 0
    %8072 = vperm.xlu0 %8071, %v8020
    %v8073 = vpop.permute.xlu0 %8072
    %8074 = vset.pattern.permute.xlu0 0
    %8075 = vperm.xlu0 %8074, %v8022
    %v8076 = vpop.permute.xlu0 %8075
    %8077 = vset.pattern.permute.xlu0 0
    %8078 = vperm.xlu0 %8077, %v8024
    %v8079 = vpop.permute.xlu0 %8078
    %8080 = vset.pattern.permute.xlu0 0
    %8081 = vperm.xlu0 %8080, %v8026
    %v8082 = vpop.permute.xlu0 %8081
    %8083 = vset.pattern.permute.xlu0 0
    %8084 = vperm.xlu0 %8083, %v8028
    %v8085 = vpop.permute.xlu0 %8084
    %8086 = vset.pattern.permute.xlu0 0
    %8087 = vperm.xlu0 %8086, %v8030
    %v8088 = vpop.permute.xlu0 %8087
    %8089 = vset.pattern.permute.xlu0 0
    %8090 = vperm.xlu0 %8089, %v8032
    %v8091 = vpop.permute.xlu0 %8090
    %8092 = vset.pattern.permute.xlu0 0
    %8093 = vperm.xlu0 %8092, %v8034
    %v8094 = vpop.permute.xlu0 %8093
    %8095 = vset.pattern.permute.xlu0 0
    %8096 = vperm.xlu0 %8095, %v8036
    %v8097 = vpop.permute.xlu0 %8096
    %8098 = vset.pattern.permute.xlu0 0
    %8099 = vperm.xlu0 %8098, %v8038
    %v8100 = vpop.permute.xlu0 %8099
    %8101 = vset.pattern.permute.xlu0 0
    %8102 = vperm.xlu0 %8101, %v8040
    %v8103 = vpop.permute.xlu0 %8102
    %8104 = vset.pattern.permute.xlu0 0
    %8105 = vperm.xlu0 %8104, %v8042
    %v8106 = vpop.permute.xlu0 %8105
    %v8107 = vlaneseq
    %v8108 = vshrl.u32 %v8107, 7
    %v8109 = vsub.s32 %v396, %v8108
    %v8110 = vrot.slane %v8061, %v8109
    %v8111 = vlaneseq
    %v8112 = vshrl.u32 %v8111, 7
    %v8113 = vsub.s32 %v401, %v8112
    %v8114 = vrot.slane %v8064, %v8113
    %v8115 = vsel %vm406, %v8114, %v8110
    %v8116 = vlaneseq
    %v8117 = vshrl.u32 %v8116, 7
    %v8118 = vsub.s32 %v396, %v8117
    %v8119 = vrot.slane %v8067, %v8118
    %v8120 = vlaneseq
    %v8121 = vshrl.u32 %v8120, 7
    %v8122 = vsub.s32 %v401, %v8121
    %v8123 = vrot.slane %v8070, %v8122
    %v8124 = vsel %vm406, %v8123, %v8119
    %v8125 = vlaneseq
    %v8126 = vshrl.u32 %v8125, 7
    %v8127 = vsub.s32 %v396, %v8126
    %v8128 = vrot.slane %v8073, %v8127
    %v8129 = vlaneseq
    %v8130 = vshrl.u32 %v8129, 7
    %v8131 = vsub.s32 %v401, %v8130
    %v8132 = vrot.slane %v8076, %v8131
    %v8133 = vsel %vm406, %v8132, %v8128
    %v8134 = vlaneseq
    %v8135 = vshrl.u32 %v8134, 7
    %v8136 = vsub.s32 %v396, %v8135
    %v8137 = vrot.slane %v8079, %v8136
    %v8138 = vlaneseq
    %v8139 = vshrl.u32 %v8138, 7
    %v8140 = vsub.s32 %v401, %v8139
    %v8141 = vrot.slane %v8082, %v8140
    %v8142 = vsel %vm406, %v8141, %v8137
    %v8143 = vlaneseq
    %v8144 = vshrl.u32 %v8143, 7
    %v8145 = vsub.s32 %v396, %v8144
    %v8146 = vrot.slane %v8085, %v8145
    %v8147 = vlaneseq
    %v8148 = vshrl.u32 %v8147, 7
    %v8149 = vsub.s32 %v401, %v8148
    %v8150 = vrot.slane %v8088, %v8149
    %v8151 = vsel %vm406, %v8150, %v8146
    %v8152 = vlaneseq
    %v8153 = vshrl.u32 %v8152, 7
    %v8154 = vsub.s32 %v396, %v8153
    %v8155 = vrot.slane %v8091, %v8154
    %v8156 = vlaneseq
    %v8157 = vshrl.u32 %v8156, 7
    %v8158 = vsub.s32 %v401, %v8157
    %v8159 = vrot.slane %v8094, %v8158
    %v8160 = vsel %vm406, %v8159, %v8155
    %v8161 = vlaneseq
    %v8162 = vshrl.u32 %v8161, 7
    %v8163 = vsub.s32 %v396, %v8162
    %v8164 = vrot.slane %v8097, %v8163
    %v8165 = vlaneseq
    %v8166 = vshrl.u32 %v8165, 7
    %v8167 = vsub.s32 %v401, %v8166
    %v8168 = vrot.slane %v8100, %v8167
    %v8169 = vsel %vm406, %v8168, %v8164
    %v8170 = vlaneseq
    %v8171 = vshrl.u32 %v8170, 7
    %v8172 = vsub.s32 %v396, %v8171
    %v8173 = vrot.slane %v8103, %v8172
    %v8174 = vlaneseq
    %v8175 = vshrl.u32 %v8174, 7
    %v8176 = vsub.s32 %v401, %v8175
    %v8177 = vrot.slane %v8106, %v8176
    %v8178 = vsel %vm406, %v8177, %v8173
    %v8179 = vsel %vm471, %v8124, %v8115
    %v8180 = vsel %vm473, %v8133, %v8179
    %v8181 = vsel %vm475, %v8142, %v8180
    %v8182 = vsel %vm477, %v8151, %v8181
    %v8183 = vsel %vm479, %v8160, %v8182
    %v8184 = vsel %vm481, %v8169, %v8183
    %v8185 = vsel %vm483, %v8178, %v8184
    %v8187 = vsel %vm486, %v8185, 0.0
    %8188 = vadd.xlane.f32.xlu0 %v8187
    %v8189 = vpop.xlane.xlu0 %8188
    %v8191 = vlaneseq
    %v8192 = vshrl.u32 %v8191, 7
    %v8193 = vsub.s32 0, %v8192
    %v8194 = vrot.slane %v8189, %v8193
    %v8195 = vlaneseq
    %v8196 = vshrl.u32 %v8195, 7
    %v8197 = vsub.s32 1, %v8196
    %v8198 = vrot.slane %v8189, %v8197
    %v8199 = vlaneseq
    %v8200 = vshrl.u32 %v8199, 7
    %v8201 = vsub.s32 2, %v8200
    %v8202 = vrot.slane %v8189, %v8201
    %v8203 = vlaneseq
    %v8204 = vshrl.u32 %v8203, 7
    %v8205 = vsub.s32 3, %v8204
    %v8206 = vrot.slane %v8189, %v8205
    %v8207 = vlaneseq
    %v8208 = vshrl.u32 %v8207, 7
    %v8209 = vsub.s32 4, %v8208
    %v8210 = vrot.slane %v8189, %v8209
    %v8211 = vlaneseq
    %v8212 = vshrl.u32 %v8211, 7
    %v8213 = vsub.s32 5, %v8212
    %v8214 = vrot.slane %v8189, %v8213
    %v8215 = vlaneseq
    %v8216 = vshrl.u32 %v8215, 7
    %v8217 = vsub.s32 6, %v8216
    %v8218 = vrot.slane %v8189, %v8217
    %v8219 = vlaneseq
    %v8220 = vshrl.u32 %v8219, 7
    %v8221 = vsub.s32 7, %v8220
    %v8222 = vrot.slane %v8189, %v8221
    %v8231 = vrcp.pop %v8194
    %v8232 = vmul.f32 %v8012, %v8231
    %v8233 = vmul.f32 %v8014, %v8231
    %v8234 = vrcp.pop %v8198
    %v8235 = vmul.f32 %v8016, %v8234
    %v8236 = vmul.f32 %v8018, %v8234
    %v8237 = vrcp.pop %v8202
    %v8238 = vmul.f32 %v8020, %v8237
    %v8239 = vmul.f32 %v8022, %v8237
    %v8240 = vrcp.pop %v8206
    %v8241 = vmul.f32 %v8024, %v8240
    %v8242 = vmul.f32 %v8026, %v8240
    %v8243 = vrcp.pop %v8210
    %v8244 = vmul.f32 %v8028, %v8243
    %v8245 = vmul.f32 %v8030, %v8243
    %v8246 = vrcp.pop %v8214
    %v8247 = vmul.f32 %v8032, %v8246
    %v8248 = vmul.f32 %v8034, %v8246
    %v8249 = vrcp.pop %v8218
    %v8250 = vmul.f32 %v8036, %v8249
    %v8251 = vmul.f32 %v8038, %v8249
    %v8252 = vrcp.pop %v8222
    %v8253 = vmul.f32 %v8040, %v8252
    %v8254 = vmul.f32 %v8042, %v8252
    %8256 = vset.pattern.permute.xlu0 0
    %8257 = vperm.xlu0 %8256, %v8232
    %v8258 = vpop.permute.xlu0 %8257
    %8261 = vset.pattern.permute.xlu0 0
    %8262 = vperm.xlu0 %8261, %v8233
    %v8263 = vpop.permute.xlu0 %8262
    %8266 = vset.pattern.permute.xlu0 0
    %8267 = vperm.xlu0 %8266, %v8235
    %v8268 = vpop.permute.xlu0 %8267
    %8271 = vset.pattern.permute.xlu0 0
    %8272 = vperm.xlu0 %8271, %v8236
    %v8273 = vpop.permute.xlu0 %8272
    %8276 = vset.pattern.permute.xlu0 0
    %8277 = vperm.xlu0 %8276, %v8238
    %v8278 = vpop.permute.xlu0 %8277
    %8281 = vset.pattern.permute.xlu0 0
    %8282 = vperm.xlu0 %8281, %v8239
    %v8283 = vpop.permute.xlu0 %8282
    %8286 = vset.pattern.permute.xlu0 0
    %8287 = vperm.xlu0 %8286, %v8241
    %v8288 = vpop.permute.xlu0 %8287
    %8291 = vset.pattern.permute.xlu0 0
    %8292 = vperm.xlu0 %8291, %v8242
    %v8293 = vpop.permute.xlu0 %8292
    %8296 = vset.pattern.permute.xlu0 0
    %8297 = vperm.xlu0 %8296, %v8244
    %v8298 = vpop.permute.xlu0 %8297
    %8301 = vset.pattern.permute.xlu0 0
    %8302 = vperm.xlu0 %8301, %v8245
    %v8303 = vpop.permute.xlu0 %8302
    %8306 = vset.pattern.permute.xlu0 0
    %8307 = vperm.xlu0 %8306, %v8247
    %v8308 = vpop.permute.xlu0 %8307
    %8311 = vset.pattern.permute.xlu0 0
    %8312 = vperm.xlu0 %8311, %v8248
    %v8313 = vpop.permute.xlu0 %8312
    %8316 = vset.pattern.permute.xlu0 0
    %8317 = vperm.xlu0 %8316, %v8250
    %v8318 = vpop.permute.xlu0 %8317
    %8321 = vset.pattern.permute.xlu0 0
    %8322 = vperm.xlu0 %8321, %v8251
    %v8323 = vpop.permute.xlu0 %8322
    %8326 = vset.pattern.permute.xlu0 0
    %8327 = vperm.xlu0 %8326, %v8253
    %v8328 = vpop.permute.xlu0 %8327
    %8331 = vset.pattern.permute.xlu0 0
    %8332 = vperm.xlu0 %8331, %v8254
    %v8333 = vpop.permute.xlu0 %8332
    %v8335 = vmul.f32 %v8258, %v127
    %v8336 = vmul.f32 %v8263, %v128
    %v8337 = vmul.f32 %v8268, %v129
    %v8338 = vmul.f32 %v8273, %v130
    %v8339 = vmul.f32 %v8278, %v131
    %v8340 = vmul.f32 %v8283, %v132
    %v8341 = vmul.f32 %v8288, %v133
    %v8342 = vmul.f32 %v8293, %v134
    %v8343 = vmul.f32 %v8298, %v135
    %v8344 = vmul.f32 %v8303, %v136
    %v8345 = vmul.f32 %v8308, %v137
    %v8346 = vmul.f32 %v8313, %v138
    %v8347 = vmul.f32 %v8318, %v139
    %v8348 = vmul.f32 %v8323, %v140
    %v8349 = vmul.f32 %v8328, %v141
    %v8350 = vmul.f32 %v8333, %v142
    %v8351 = vsel %vm887, %v8335, 0.0
    %v8352 = vsel %vm887, %v8336, 0.0
    %v8353 = vadd.f32 %v8351, %v8352
    %v8354 = vrot.slane %v8353, 4
    %v8355 = vadd.f32 %v8353, %v8354
    %v8356 = vrot.slane %v8355, 2
    %v8357 = vadd.f32 %v8355, %v8356
    %v8358 = vrot.slane %v8357, 1
    %v8359 = vadd.f32 %v8357, %v8358
    %v8360 = vsel %vm887, %v8337, 0.0
    %v8361 = vsel %vm887, %v8338, 0.0
    %v8362 = vadd.f32 %v8360, %v8361
    %v8363 = vrot.slane %v8362, 4
    %v8364 = vadd.f32 %v8362, %v8363
    %v8365 = vrot.slane %v8364, 2
    %v8366 = vadd.f32 %v8364, %v8365
    %v8367 = vrot.slane %v8366, 1
    %v8368 = vadd.f32 %v8366, %v8367
    %v8369 = vsel %vm887, %v8339, 0.0
    %v8370 = vsel %vm887, %v8340, 0.0
    %v8371 = vadd.f32 %v8369, %v8370
    %v8372 = vrot.slane %v8371, 4
    %v8373 = vadd.f32 %v8371, %v8372
    %v8374 = vrot.slane %v8373, 2
    %v8375 = vadd.f32 %v8373, %v8374
    %v8376 = vrot.slane %v8375, 1
    %v8377 = vadd.f32 %v8375, %v8376
    %v8378 = vsel %vm887, %v8341, 0.0
    %v8379 = vsel %vm887, %v8342, 0.0
    %v8380 = vadd.f32 %v8378, %v8379
    %v8381 = vrot.slane %v8380, 4
    %v8382 = vadd.f32 %v8380, %v8381
    %v8383 = vrot.slane %v8382, 2
    %v8384 = vadd.f32 %v8382, %v8383
    %v8385 = vrot.slane %v8384, 1
    %v8386 = vadd.f32 %v8384, %v8385
    %v8387 = vsel %vm887, %v8343, 0.0
    %v8388 = vsel %vm887, %v8344, 0.0
    %v8389 = vadd.f32 %v8387, %v8388
    %v8390 = vrot.slane %v8389, 4
    %v8391 = vadd.f32 %v8389, %v8390
    %v8392 = vrot.slane %v8391, 2
    %v8393 = vadd.f32 %v8391, %v8392
    %v8394 = vrot.slane %v8393, 1
    %v8395 = vadd.f32 %v8393, %v8394
    %v8396 = vsel %vm887, %v8345, 0.0
    %v8397 = vsel %vm887, %v8346, 0.0
    %v8398 = vadd.f32 %v8396, %v8397
    %v8399 = vrot.slane %v8398, 4
    %v8400 = vadd.f32 %v8398, %v8399
    %v8401 = vrot.slane %v8400, 2
    %v8402 = vadd.f32 %v8400, %v8401
    %v8403 = vrot.slane %v8402, 1
    %v8404 = vadd.f32 %v8402, %v8403
    %v8405 = vsel %vm887, %v8347, 0.0
    %v8406 = vsel %vm887, %v8348, 0.0
    %v8407 = vadd.f32 %v8405, %v8406
    %v8408 = vrot.slane %v8407, 4
    %v8409 = vadd.f32 %v8407, %v8408
    %v8410 = vrot.slane %v8409, 2
    %v8411 = vadd.f32 %v8409, %v8410
    %v8412 = vrot.slane %v8411, 1
    %v8413 = vadd.f32 %v8411, %v8412
    %v8414 = vsel %vm887, %v8349, 0.0
    %v8415 = vsel %vm887, %v8350, 0.0
    %v8416 = vadd.f32 %v8414, %v8415
    %v8417 = vrot.slane %v8416, 4
    %v8418 = vadd.f32 %v8416, %v8417
    %v8419 = vrot.slane %v8418, 2
    %v8420 = vadd.f32 %v8418, %v8419
    %v8421 = vrot.slane %v8420, 1
    %v8422 = vadd.f32 %v8420, %v8421
    %v8431 = vsel %vm471, %v8368, %v8359
    %v8432 = vsel %vm473, %v8377, %v8431
    %v8433 = vsel %vm475, %v8386, %v8432
    %v8434 = vsel %vm477, %v8395, %v8433
    %v8435 = vsel %vm479, %v8404, %v8434
    %v8436 = vsel %vm481, %v8413, %v8435
    %v8437 = vsel %vm483, %v8422, %v8436
    %8438 = vrot.lane.b32.xlu0 %v8437, 32
    %v8439 = vpop.permute.xlu0 %8438
    %8441 = vrot.lane.b32.xlu0 %v7479, 72
    %v8442 = vpop.permute.xlu0 %8441
    %v8444 = vsel %vm330, %v7652, %v8439
    %v8445 = vsel %vm983, %v8444, %v8442
    %v8446 = vsel %vm991, %v8442, 0
    %8448 = vmatprep.subr.mxu0 0.0
    %8449 = vmatpush1.msra.mxu0 %v160
    %8450 = vmatprep.subr.mxu0 0.0
    %8451 = vmatpush1.msra.mxu0 %v161
    %8452 = vmatprep.subr.mxu0 0.0
    %8453 = vmatpush1.msra.mxu0 %v162
    %8454 = vmatprep.subr.mxu0 0.0
    %8455 = vmatpush1.msra.mxu0 %v163
    %8456 = vmatprep.subr.mxu0 0.0
    %8457 = vmatpush1.msra.mxu0 %v164
    %8458 = vmatprep.subr.mxu0 0.0
    %8459 = vmatpush1.msra.mxu0 %v165
    %8460 = vmatprep.subr.mxu0 0.0
    %8461 = vmatpush1.msra.mxu0 %v166
    %8462 = vmatprep.subr.mxu0 0.0
    %8463 = vmatpush1.msra.mxu0 %v167
    %8464 = vmatprep.subr.mxu0 0.0
    %8465 = vmatpush1.msra.mxu0 %v168
    %8466 = vmatprep.subr.mxu0 0.0
    %8467 = vmatpush1.msra.mxu0 %v169
    %8468 = vmatprep.subr.mxu0 0.0
    %8469 = vmatpush1.msra.mxu0 %v170
    %8470 = vmatprep.subr.mxu0 0.0
    %8471 = vmatpush1.msra.mxu0 %v171
    %8472 = vmatprep.subr.mxu0 0.0
    %8473 = vmatpush1.msra.mxu0 %v172
    %8474 = vmatprep.subr.mxu0 0.0
    %8475 = vmatpush1.msra.mxu0 %v173
    %8476 = vmatprep.subr.mxu0 0.0
    %8477 = vmatpush1.msra.mxu0 %v174
    %8478 = vmatprep.subr.mxu0 0.0
    %8479 = vmatpush1.msra.mxu0 %v175
    %8480 = vmatprep.subr.mxu0 0.0
    %8481 = vmatpush1.msra.mxu0 %v176
    %8482 = vmatprep.subr.mxu0 0.0
    %8483 = vmatpush1.msra.mxu0 0.0
    %8484 = vmatprep.subr.mxu0 0.0
    %8485 = vmatpush1.msra.mxu0 0.0
    %8486 = vmatprep.subr.mxu0 0.0
    %8487 = vmatpush1.msra.mxu0 0.0
    %8488 = vmatprep.subr.mxu0 0.0
    %8489 = vmatpush1.msra.mxu0 0.0
    %8490 = vmatprep.subr.mxu0 0.0
    %8491 = vmatpush1.msra.mxu0 0.0
    %8492 = vmatprep.subr.mxu0 0.0
    %8493 = vmatpush1.msra.mxu0 0.0
    %8494 = vmatprep.subr.mxu0 0.0
    %8495 = vmatpush1.msra.mxu0 0.0
    %8496 = vmatprep.subr.mxu0 0.0
    %8497 = vmatpush1.msra.mxu0 0.0
    %8498 = vmatprep.subr.mxu0 0.0
    %8499 = vmatpush1.msra.mxu0 0.0
    %8500 = vmatprep.subr.mxu0 0.0
    %8501 = vmatpush1.msra.mxu0 0.0
    %8502 = vmatprep.subr.mxu0 0.0
    %8503 = vmatpush1.msra.mxu0 0.0
    %8504 = vmatprep.subr.mxu0 0.0
    %8505 = vmatpush1.msra.mxu0 0.0
    %8506 = vmatprep.subr.mxu0 0.0
    %8507 = vmatpush1.msra.mxu0 0.0
    %8508 = vmatprep.subr.mxu0 0.0
    %8509 = vmatpush1.msra.mxu0 0.0
    %8510 = vmatprep.subr.mxu0 0.0
    %8511 = vmatpush1.msra.mxu0 0.0
    %8512 = vmatprep.mubr.f32.mxu0 %v8446
    %8513 = vmatmul.mubr.f32.gmra.mrb[0].mxu0 %v8445
    %v8514 = vpop.f32.mrb[0].mxu0
    %v8515 = vadd.f32 %v989, %v8514
    %v8516 = vpop.f32.mrb[0].mxu0
    %8517 = vdwg.mxu0
    %v8518 = vxor.u32 %v8515, 2147483648
    %v8519 = vmul.f32 %v8518, 1.442695
    %v8520 = vpow.pop %v8519
    %v8521 = vadd.f32 %v8520, 1.0
    %v8522 = vrcp.pop %v8521
    %v8523 = vmul.f32 1.0, %v8522
    %8525 = vrot.lane.b32.xlu0 %v8515, 32
    %v8526 = vpop.permute.xlu0 %8525
    %v8528 = vmul.f32 %v8523, %v8526
    %8530 = vrot.lane.b32.xlu0 %v8528, 64
    %v8531 = vpop.permute.xlu0 %8530
    %v8533 = vadd.f32 %v8515, %v8531
    %v8534 = vtanh.pop %v8533
    %v8535 = vsub.f32 1.0, %v8523
    %8537 = vrot.lane.b32.xlu0 %v8534, 96
    %v8538 = vpop.permute.xlu0 %8537
    %v8540 = vmul.f32 %v8535, %v8538
    %v8541 = vmul.f32 %v8523, %v7479
    %v8542 = vadd.f32 %v8540, %v8541
    %8544 = vrot.lane.b32.xlu0 %v8542, 96
    %v8545 = vpop.permute.xlu0 %8544
    %v8546 = vsel %vm330, %v8545, 0
    %8548 = vmatprep.subr.mxu0 0.0
    %8549 = vmatpush1.msra.mxu0 %v178
    %8550 = vmatprep.subr.mxu0 0.0
    %8551 = vmatpush1.msra.mxu0 %v179
    %8552 = vmatprep.subr.mxu0 0.0
    %8553 = vmatpush1.msra.mxu0 %v180
    %8554 = vmatprep.subr.mxu0 0.0
    %8555 = vmatpush1.msra.mxu0 %v181
    %8556 = vmatprep.subr.mxu0 0.0
    %8557 = vmatpush1.msra.mxu0 0.0
    %8558 = vmatprep.subr.mxu0 0.0
    %8559 = vmatpush1.msra.mxu0 0.0
    %8560 = vmatprep.subr.mxu0 0.0
    %8561 = vmatpush1.msra.mxu0 0.0
    %8562 = vmatprep.subr.mxu0 0.0
    %8563 = vmatpush1.msra.mxu0 0.0
    %8564 = vmatprep.subr.mxu0 0.0
    %8565 = vmatpush1.msra.mxu0 0.0
    %8566 = vmatprep.subr.mxu0 0.0
    %8567 = vmatpush1.msra.mxu0 0.0
    %8568 = vmatprep.subr.mxu0 0.0
    %8569 = vmatpush1.msra.mxu0 0.0
    %8570 = vmatprep.subr.mxu0 0.0
    %8571 = vmatpush1.msra.mxu0 0.0
    %8572 = vmatprep.subr.mxu0 0.0
    %8573 = vmatpush1.msra.mxu0 0.0
    %8574 = vmatprep.subr.mxu0 0.0
    %8575 = vmatpush1.msra.mxu0 0.0
    %8576 = vmatprep.subr.mxu0 0.0
    %8577 = vmatpush1.msra.mxu0 0.0
    %8578 = vmatprep.subr.mxu0 0.0
    %8579 = vmatpush1.msra.mxu0 0.0
    %8580 = vmatprep.subr.mxu0 0.0
    %8581 = vmatpush1.msra.mxu0 0.0
    %8582 = vmatprep.subr.mxu0 0.0
    %8583 = vmatpush1.msra.mxu0 0.0
    %8584 = vmatprep.subr.mxu0 0.0
    %8585 = vmatpush1.msra.mxu0 0.0
    %8586 = vmatprep.subr.mxu0 0.0
    %8587 = vmatpush1.msra.mxu0 0.0
    %8588 = vmatprep.subr.mxu0 0.0
    %8589 = vmatpush1.msra.mxu0 0.0
    %8590 = vmatprep.subr.mxu0 0.0
    %8591 = vmatpush1.msra.mxu0 0.0
    %8592 = vmatprep.subr.mxu0 0.0
    %8593 = vmatpush1.msra.mxu0 0.0
    %8594 = vmatprep.subr.mxu0 0.0
    %8595 = vmatpush1.msra.mxu0 0.0
    %8596 = vmatprep.subr.mxu0 0.0
    %8597 = vmatpush1.msra.mxu0 0.0
    %8598 = vmatprep.subr.mxu0 0.0
    %8599 = vmatpush1.msra.mxu0 0.0
    %8600 = vmatprep.subr.mxu0 0.0
    %8601 = vmatpush1.msra.mxu0 0.0
    %8602 = vmatprep.subr.mxu0 0.0
    %8603 = vmatpush1.msra.mxu0 0.0
    %8604 = vmatprep.subr.mxu0 0.0
    %8605 = vmatpush1.msra.mxu0 0.0
    %8606 = vmatprep.subr.mxu0 0.0
    %8607 = vmatpush1.msra.mxu0 0.0
    %8608 = vmatprep.subr.mxu0 0.0
    %8609 = vmatpush1.msra.mxu0 0.0
    %8610 = vmatprep.subr.mxu0 0.0
    %8611 = vmatpush1.msra.mxu0 0.0
    %8612 = vmatprep.mubr.f32.mxu0 0.0
    %8613 = vmatmul.mubr.f32.gmra.mrb[0].mxu0 %v8546
    %v8614 = vpop.f32.mrb[0].mxu0
    %v8615 = vadd.f32 %v1096, %v8614
    %v8616 = vpop.f32.mrb[0].mxu0
    %8617 = vdwg.mxu0
    %v8618 = vsel %vm330, %v8615, -inf
    %8619 = vmax.xlane.f32.xlu0 %v8618
    %v8620 = vpop.xlane.xlu0 %8619
    %v8621 = vsub.f32 %v8615, %v8620
    %v8622 = vmul.f32 %v8621, 1.442695
    %v8623 = vpow.pop %v8622
    %v8624 = vsel %vm330, %v8623, 0.0
    %8625 = vadd.xlane.f32.xlu0 %v8624
    %v8626 = vpop.xlane.xlu0 %8625
    %v8627 = vrcp.pop %v8626
    %v8628 = vmul.f32 %v8623, %v8627
    %v8629 = vlaneseq
    %v8630 = vshrl.u32 %v8629, 7
    %v8631 = vsub.s32 %v1184, %v8630
    %v8632 = vrot.slane %v8258, %v8631
    %v8633 = vlaneseq
    %v8634 = vshrl.u32 %v8633, 7
    %v8635 = vsub.s32 %v1189, %v8634
    %v8636 = vrot.slane %v8263, %v8635
    %v8637 = vsel %vm1194, %v8636, %v8632
    %v8638 = vlaneseq
    %v8639 = vshrl.u32 %v8638, 7
    %v8640 = vsub.s32 %v1184, %v8639
    %v8641 = vrot.slane %v8268, %v8640
    %v8642 = vlaneseq
    %v8643 = vshrl.u32 %v8642, 7
    %v8644 = vsub.s32 %v1189, %v8643
    %v8645 = vrot.slane %v8273, %v8644
    %v8646 = vsel %vm1194, %v8645, %v8641
    %v8647 = vlaneseq
    %v8648 = vshrl.u32 %v8647, 7
    %v8649 = vsub.s32 %v1184, %v8648
    %v8650 = vrot.slane %v8278, %v8649
    %v8651 = vlaneseq
    %v8652 = vshrl.u32 %v8651, 7
    %v8653 = vsub.s32 %v1189, %v8652
    %v8654 = vrot.slane %v8283, %v8653
    %v8655 = vsel %vm1194, %v8654, %v8650
    %v8656 = vlaneseq
    %v8657 = vshrl.u32 %v8656, 7
    %v8658 = vsub.s32 %v1184, %v8657
    %v8659 = vrot.slane %v8288, %v8658
    %v8660 = vlaneseq
    %v8661 = vshrl.u32 %v8660, 7
    %v8662 = vsub.s32 %v1189, %v8661
    %v8663 = vrot.slane %v8293, %v8662
    %v8664 = vsel %vm1194, %v8663, %v8659
    %v8665 = vlaneseq
    %v8666 = vshrl.u32 %v8665, 7
    %v8667 = vsub.s32 %v1184, %v8666
    %v8668 = vrot.slane %v8298, %v8667
    %v8669 = vlaneseq
    %v8670 = vshrl.u32 %v8669, 7
    %v8671 = vsub.s32 %v1189, %v8670
    %v8672 = vrot.slane %v8303, %v8671
    %v8673 = vsel %vm1194, %v8672, %v8668
    %v8674 = vlaneseq
    %v8675 = vshrl.u32 %v8674, 7
    %v8676 = vsub.s32 %v1184, %v8675
    %v8677 = vrot.slane %v8308, %v8676
    %v8678 = vlaneseq
    %v8679 = vshrl.u32 %v8678, 7
    %v8680 = vsub.s32 %v1189, %v8679
    %v8681 = vrot.slane %v8313, %v8680
    %v8682 = vsel %vm1194, %v8681, %v8677
    %v8683 = vlaneseq
    %v8684 = vshrl.u32 %v8683, 7
    %v8685 = vsub.s32 %v1184, %v8684
    %v8686 = vrot.slane %v8318, %v8685
    %v8687 = vlaneseq
    %v8688 = vshrl.u32 %v8687, 7
    %v8689 = vsub.s32 %v1189, %v8688
    %v8690 = vrot.slane %v8323, %v8689
    %v8691 = vsel %vm1194, %v8690, %v8686
    %v8692 = vlaneseq
    %v8693 = vshrl.u32 %v8692, 7
    %v8694 = vsub.s32 %v1184, %v8693
    %v8695 = vrot.slane %v8328, %v8694
    %v8696 = vlaneseq
    %v8697 = vshrl.u32 %v8696, 7
    %v8698 = vsub.s32 %v1189, %v8697
    %v8699 = vrot.slane %v8333, %v8698
    %v8700 = vsel %vm1194, %v8699, %v8695
    %v8701 = vsel %vm471, %v8646, %v8637
    %v8702 = vsel %vm473, %v8655, %v8701
    %v8703 = vsel %vm475, %v8664, %v8702
    %v8704 = vsel %vm477, %v8673, %v8703
    %v8705 = vsel %vm479, %v8682, %v8704
    %v8706 = vsel %vm481, %v8691, %v8705
    %v8707 = vsel %vm483, %v8700, %v8706
    %v8709 = vsel %vm330, %v8628, %v8542
    %v8710 = vsel %vm1268, %v8709, %v8707
    %v8711 = vsel %vm1270, %v8710, 0.0
    %s8712 = scalar_lea.vmem [#allocation14], 56
    %8713 = vst [vmem:[%s8712] sm:$0xff] %v8711
    // Predicated region
    $region70: #{tpu_custom_call.1} parent=1 // pred_check
      _
    $region71: #{tpu_custom_call.1} parent=1 // pred_check_branch
      %8715 = sbr.rel (0) target = $region73
    $region72: #{tpu_custom_call.1} parent=1 // pred_region
      %s8717 = ssub.s32 1024, 1024
      %8718 = vsyncadd [#allocation4], %s8717
      %s8719 = sshll.u32 [#allocation14], 4
      %s8720 = int_to_ptr.vmem [resolvable:$true] %s8719
      %8725 = dma.vmem_to_hbm [thread:$0]  %s8720, 1024, %s10, [#allocation4], 128, 128, 8
    $region73: #{tpu_custom_call.1} parent=1 // pred_fallthru
      _
    // Predicated region
    $region74: #{tpu_custom_call.1} parent=1 // pred_check
      _
    $region75: #{tpu_custom_call.1} parent=1 // pred_check_branch
      %8727 = sbr.rel (0) target = $region77
    $region76: #{tpu_custom_call.1} parent=1 // pred_region
      %8728 = dma.done [#allocation4], 1024
    $region77: #{tpu_custom_call.1} parent=1 // pred_fallthru
      _
    %8729 = vsyncpa [#allocation3], 1
    %8730 = vsyncpa [#allocation6], 1
    %8731 = vsyncpa [#allocation9], 1
    %8732 = vsyncpa [#allocation12], 1
    %8733 = vsyncpa [#allocation4], 1

</llo_original>
